<compile_context>
chip_gen: v6e
topology: v6e:2x2x1
jax: 0.10.0
libtpu: 0.0.40
codegen_flags: <defaults>
</compile_context>

<pallas_src>
import numpy as np
import jax
import jax.numpy as jnp
from jax.experimental import pallas as pl
from jax.experimental.pallas import tpu as pltpu

HIST = 50          # history_length
OBS = 50           # obs_dim == conv1 in_channels
C1, K1, S1 = 32, 8, 4
C2, K2 = 32, 5
C3, K3 = 32, 5
T1 = (HIST - K1) // S1 + 1      # 11
T2 = T1 - K2 + 1                # 7
T3 = T2 - K3 + 1                # 3
H_LIN = 32
Z_DIM = 12

D_IN = HIST * OBS               # 2500: time-major flattened input (t*OBS + o)
D_PAD = 2432                    # 19*128 columns actually DMA'd (conv1 only reads t<=47)
P1 = 384                        # T1*C1 = 352, padded to a lane multiple
P2 = 256                        # T2*C2 = 224, padded
P3 = 128                        # T3*C3 = 96,  padded
PH = 128                        # H_LIN = 32,  padded
PZ = 128                        # Z_DIM = 12,  padded (lane-dense output)

# conv1 grouped-window matmuls: (t_start, t_end, slab_col_start, slab_col_width)
# Each group's window is a 128-aligned, 128-multiple-wide column range of the
# (tb, D_PAD) input tile; weight rows outside the true window are zero.
CONV1_GROUPS = (
    (0, 4, 0, 1024),      # out t=0..3  needs slab cols    0..999
    (4, 8, 768, 1152),    # out t=4..7  needs slab cols  800..1799
    (8, 11, 1536, 896),   # out t=8..10 needs slab cols 1600..2399
)


def tcn_kernel(x_ref, w1a_ref, w1b_ref, w1c_ref, b1_ref, w2_ref, b2_ref,
               w3_ref, b3_ref, wl1_ref, bl1_ref, wl2_ref, bl2_ref, out_ref):
    # TODO(synk): if bundle dumps show vld/vst slots binding at large tb,
    # process the tile in 128-row sub-tiles through all five layers.
    cdt = w2_ref.dtype                       # MXU operand dtype (f32 or bf16)
    x = x_ref[...].astype(cdt)               # in-kernel cast: no wrapper HBM pass

    # conv1 as 3 lane-aligned grouped-window matmuls (t-major output layout).
    (s0, _, a0, w0), (s1b, _, a1, w1w), (s2, _, a2, w2w) = CONV1_GROUPS
    g0 = jnp.dot(x[:, a0:a0 + w0],  w1a_ref[...], preferred_element_type=jnp.float32)
    g1 = jnp.dot(x[:, a1:a1 + w1w], w1b_ref[...], preferred_element_type=jnp.float32)
    g2 = jnp.dot(x[:, a2:a2 + w2w], w1c_ref[...], preferred_element_type=jnp.float32)
    h = jnp.concatenate([g0, g1, g2], axis=1)            # (tb, 384)
    h = jnp.maximum(h + b1_ref[...], 0.0)

    # conv2: (tb, 384) @ (384, 256)
    h = jnp.dot(h.astype(cdt), w2_ref[...], preferred_element_type=jnp.float32)
    h = jnp.maximum(h + b2_ref[...], 0.0)

    # conv3: (tb, 256) @ (256, 128)
    h = jnp.dot(h.astype(cdt), w3_ref[...], preferred_element_type=jnp.float32)
    h = jnp.maximum(h + b3_ref[...], 0.0)

    # linear1 (torch flatten(1) permutation folded into the weight)
    h = jnp.dot(h.astype(cdt), wl1_ref[...], preferred_element_type=jnp.float32)
    h = jnp.maximum(h + bl1_ref[...], 0.0)

    # linear2, lane-padded output
    h = jnp.dot(h.astype(cdt), wl2_ref[...], preferred_element_type=jnp.float32)
    out_ref[...] = (h + bl2_ref[...]).astype(out_ref.dtype)


def init_params(key):
    """Deterministic PyTorch-style uniform init (shapes from the module)."""
    ks = jax.random.split(key, 10)

    def u(k, shape, fan_in):
        bound = 1.0 / np.sqrt(fan_in)
        return jax.random.uniform(k, shape, jnp.float32, -bound, bound)

    w1 = u(ks[0], (C1, OBS, K1), OBS * K1)
    b1 = u(ks[1], (C1,), OBS * K1)
    w2 = u(ks[2], (C2, C1, K2), C1 * K2)
    b2 = u(ks[3], (C2,), C1 * K2)
    w3 = u(ks[4], (C3, C2, K3), C2 * K3)
    b3 = u(ks[5], (C3,), C2 * K3)
    wl1 = u(ks[6], (H_LIN, C3 * T3), C3 * T3)
    bl1 = u(ks[7], (H_LIN,), C3 * T3)
    wl2 = u(ks[8], (Z_DIM, H_LIN), H_LIN)
    bl2 = u(ks[9], (Z_DIM,), H_LIN)
    return (w1, b1, w2, b2, w3, b3, wl1, bl1, wl2, bl2)


def prep_params(raw, dtype=jnp.float32):
    """Expand torch-layout weights into lane-aligned matmul weights.

    Matmul operands are cast to `dtype` (f32, or bf16 — fine on v5e/v6e/v7x);
    biases stay f32 (added after f32 accumulation)."""
    w1, b1, w2, b2, w3, b3, wl1, bl1, wl2, bl2 = [
        np.asarray(p, np.float32) for p in raw]

    # conv1: three grouped-window weights.  For group g with output steps
    # t0..t1-1 and slab-column window [start, start+width):
    #   Wg[(S1*t + k)*OBS + o - start, (t - t0)*C1 + c] = w1[c, o, k]
    W1g = []
    for (t0, t1, start, width) in CONV1_GROUPS:
        Wg = np.zeros((width, 128), np.float32)
        for t in range(t0, t1):
            for k in range(K1):
                r = (S1 * t + k) * OBS - start
                Wg[r:r + OBS, (t - t0) * C1:(t - t0 + 1) * C1] = w1[:, :, k].T
        W1g.append(Wg)
    B1 = np.zeros((1, P1), np.float32)
    for t in range(T1):
        B1[0, t * C1:(t + 1) * C1] = b1

    # conv2: W2[(t+k)*C1 + cin, t*C2 + c] = w2[c, cin, k]
    W2 = np.zeros((P1, P2), np.float32)
    B2 = np.zeros((1, P2), np.float32)
    for t in range(T2):
        for k in range(K2):
            r = (t + k) * C1
            W2[r:r + C1, t * C2:(t + 1) * C2] = w2[:, :, k].T
        B2[0, t * C2:(t + 1) * C2] = b2

    # conv3: W3[(t+k)*C2 + cin, t*C3 + c] = w3[c, cin, k]
    W3 = np.zeros((P2, P3), np.float32)
    B3 = np.zeros((1, P3), np.float32)
    for t in range(T3):
        for k in range(K3):
            r = (t + k) * C2
            W3[r:r + C2, t * C3:(t + 1) * C3] = w3[:, :, k].T
        B3[0, t * C3:(t + 1) * C3] = b3

    # linear1: torch flatten(1) of (B, C3, T3) is channel-major (c*T3 + l);
    # our h3 layout is time-major (l*C3 + c) -> WL1[l*C3 + c, j] = wl1[j, c*T3 + l]
    WL1 = np.zeros((P3, PH), np.float32)
    BL1 = np.zeros((1, PH), np.float32)
    for l in range(T3):
        WL1[l * C3:(l + 1) * C3, :H_LIN] = wl1[:, l::T3].T
    BL1[0, :H_LIN] = bl1

    # linear2, output zero-padded to 128 lanes
    WL2 = np.zeros((PH, PZ), np.float32)
    BL2 = np.zeros((1, PZ), np.float32)
    WL2[:H_LIN, :Z_DIM] = wl2.T
    BL2[0, :Z_DIM] = bl2

    jw = lambda a: jnp.asarray(a, dtype=dtype)
    jb = lambda a: jnp.asarray(a, dtype=jnp.float32)
    return (jw(W1g[0]), jw(W1g[1]), jw(W1g[2]), jb(B1),
            jw(W2), jb(B2), jw(W3), jb(B3),
            jw(WL1), jb(BL1), jw(WL2), jb(BL2))


def _default_tb(B):
    """Batch tile.  Small batches (<=256): grid=1 (one weight DMA, no per-step
    overhead, no duplicated weight fetch across v7x cores).  Larger batches:
    biggest tile <= 1024 giving grid >= 4, so each v7x TensorCore gets >= 2
    steps and the next input DMA hides under compute."""
    if B <= 256:
        return B
    for cand in (1024, 512, 256, 128, 64, 32, 16, 8):
        if B % cand == 0 and B // cand >= 4:
            return cand
    return B


def tcn_encoder(history, prepped, *, tb=None, single_buffer_weights="auto"):
    B = history.shape[0]
    tb = _default_tb(B) if tb is None else tb
    assert B % tb == 0, "batch must be divisible by tb"

    # Free reshape to the time-major (B, 2500) slab.  NO dtype cast here: the
    # kernel casts its (tb, 2432) tile to the weight dtype internally.
    x = history.reshape(B, D_IN)
    weights = prepped
    in_item = np.dtype(x.dtype).itemsize

    def run(single_buffer):
        def wspec(a):
            if single_buffer:
                return pl.BlockSpec(a.shape, lambda i: (0, 0),
                                    pipeline_mode=pl.Buffered(1))
            return pl.BlockSpec(a.shape, lambda i: (0, 0))

        w_bytes = sum(int(np.prod(w.shape)) * np.dtype(w.dtype).itemsize
                      for w in weights) * (1 if single_buffer else 2)
        need = (2 * tb * D_PAD * in_item        # double-buffered input tile
                + w_bytes                       # resident weights/biases
                + 2 * tb * PZ * 4               # double-buffered output tile
                + 6 * tb * P1 * 4               # in-kernel temporaries (rough)
                + (4 << 20))                    # slack
        vmem_limit = int(min(max(need, 32 << 20), 44 << 20))

        return pl.pallas_call(
            tcn_kernel,
            out_shape=jax.ShapeDtypeStruct((B, PZ), jnp.float32),
            grid=(B // tb,),
            in_specs=[pl.BlockSpec((tb, D_PAD), lambda i: (i, 0))]
                     + [wspec(w) for w in weights],
            out_specs=pl.BlockSpec((tb, PZ), lambda i: (i, 0)),
            compiler_params=pltpu.CompilerParams(
                dimension_semantics=("parallel",),
                vmem_limit_bytes=vmem_limit),
        )(x, *weights)

    if single_buffer_weights == "auto":
        try:
            out = run(True)
            out.block_until_ready()     # surface Buffered(1) issues eagerly
        except Exception:               # pipeline_mode unsupported -> default buffering
            out = run(False)
    else:
        out = run(bool(single_buffer_weights))
    return out[:, :Z_DIM]


def reference_forward(history, raw):
    """Pure numpy replica of the PyTorch forward (NCL convs + flatten)."""
    w1, b1, w2, b2, w3, b3, wl1, bl1, wl2, bl2 = [np.asarray(p) for p in raw]
    x = np.transpose(np.asarray(history), (0, 2, 1))   # permute(0, 2, 1)

    def conv1d(x, w, b, stride):
        B, Cin, L = x.shape
        Cout, _, K = w.shape
        T = (L - K) // stride + 1
        out = np.zeros((B, Cout, T), np.float32)
        for t in range(T):
            win = x[:, :, t * stride:t * stride + K]
            out[:, :, t] = np.einsum('bck,ock->bo', win, w) + b
        return out

    x = np.maximum(conv1d(x, w1, b1, S1), 0.0)
    x = np.maximum(conv1d(x, w2, b2, 1), 0.0)
    x = np.maximum(conv1d(x, w3, b3, 1), 0.0)
    x = x.reshape(x.shape[0], -1)                       # flatten(1)
    x = np.maximum(x @ wl1.T + bl1, 0.0)
    x = x @ wl2.T + bl2
    return x


if __name__ == "__main__":
    key = jax.random.PRNGKey(0)
    k_hist, k_params = jax.random.split(key)

    B = 64
    history = jax.random.normal(k_hist, (B, HIST, OBS), dtype=jnp.float32)

    raw_params = init_params(k_params)
    ref = reference_forward(history, raw_params)

    # float32 weights: tight check against the PyTorch-equivalent reference.
    prepped_f32 = prep_params(raw_params, dtype=jnp.float32)
    out_f32 = jax.block_until_ready(tcn_encoder(history, prepped_f32))
    np.testing.assert_allclose(np.asarray(out_f32), ref, rtol=1e-3, atol=1e-3)

    # bfloat16 operands (good on v5e/v6e/v7x), f32 accumulation: loose check.
    prepped_bf16 = prep_params(raw_params, dtype=jnp.bfloat16)
    out_bf16 = jax.block_until_ready(tcn_encoder(history, prepped_bf16))
    np.testing.assert_allclose(np.asarray(out_bf16), ref, rtol=5e-2, atol=5e-2)

    print("KERNEL_OK")
</pallas_src>

<mosaic_0001>
module attributes {stable_mosaic.version = 11 : i64} {
  func.func @tcn_kernel(%arg0: i32, %arg1: memref<64x2432xf32, #tpu.memory_space<vmem>>, %arg2: memref<1024x128xf32, #tpu.memory_space<vmem>>, %arg3: memref<1152x128xf32, #tpu.memory_space<vmem>>, %arg4: memref<896x128xf32, #tpu.memory_space<vmem>>, %arg5: memref<1x384xf32, #tpu.memory_space<vmem>>, %arg6: memref<384x256xf32, #tpu.memory_space<vmem>>, %arg7: memref<1x256xf32, #tpu.memory_space<vmem>>, %arg8: memref<256x128xf32, #tpu.memory_space<vmem>>, %arg9: memref<1x128xf32, #tpu.memory_space<vmem>>, %arg10: memref<128x128xf32, #tpu.memory_space<vmem>>, %arg11: memref<1x128xf32, #tpu.memory_space<vmem>>, %arg12: memref<128x128xf32, #tpu.memory_space<vmem>>, %arg13: memref<1x128xf32, #tpu.memory_space<vmem>>, %arg14: memref<64x128xf32, #tpu.memory_space<vmem>>) attributes {dimension_semantics = [#tpu.dimension_semantics<parallel>], iteration_bounds = array<i64: 1>, scalar_prefetch = 0 : i64, scratch_operands = 0 : i64, tpu.core_type = #tpu.core_type<tc>, window_params = [{transform_indices = @transform_0, window_bounds = array<i64: 64, 2432>}, {pipeline_mode = #tpu.pipeline_mode<synchronous>, transform_indices = @transform_1, window_bounds = array<i64: 1024, 128>}, {pipeline_mode = #tpu.pipeline_mode<synchronous>, transform_indices = @transform_2, window_bounds = array<i64: 1152, 128>}, {pipeline_mode = #tpu.pipeline_mode<synchronous>, transform_indices = @transform_3, window_bounds = array<i64: 896, 128>}, {pipeline_mode = #tpu.pipeline_mode<synchronous>, transform_indices = @transform_4, window_bounds = array<i64: 1, 384>}, {pipeline_mode = #tpu.pipeline_mode<synchronous>, transform_indices = @transform_5, window_bounds = array<i64: 384, 256>}, {pipeline_mode = #tpu.pipeline_mode<synchronous>, transform_indices = @transform_6, window_bounds = array<i64: 1, 256>}, {pipeline_mode = #tpu.pipeline_mode<synchronous>, transform_indices = @transform_7, window_bounds = array<i64: 256, 128>}, {pipeline_mode = #tpu.pipeline_mode<synchronous>, transform_indices = @transform_8, window_bounds = array<i64: 1, 128>}, {pipeline_mode = #tpu.pipeline_mode<synchronous>, transform_indices = @transform_9, window_bounds = array<i64: 128, 128>}, {pipeline_mode = #tpu.pipeline_mode<synchronous>, transform_indices = @transform_10, window_bounds = array<i64: 1, 128>}, {pipeline_mode = #tpu.pipeline_mode<synchronous>, transform_indices = @transform_11, window_bounds = array<i64: 128, 128>}, {pipeline_mode = #tpu.pipeline_mode<synchronous>, transform_indices = @transform_12, window_bounds = array<i64: 1, 128>}, {transform_indices = @transform_13, window_bounds = array<i64: 64, 128>}]} {
    %c0 = arith.constant 0 : index
    %c0_0 = arith.constant 0 : index
    %0 = vector.load %arg1[%c0, %c0_0] : memref<64x2432xf32, #tpu.memory_space<vmem>>, vector<64x2432xf32>
    %1 = vector.extract_strided_slice %0 {offsets = [0, 0], sizes = [64, 1024], strides = [1, 1]} : vector<64x2432xf32> to vector<64x1024xf32>
    %c0_1 = arith.constant 0 : index
    %c0_2 = arith.constant 0 : index
    %2 = vector.load %arg2[%c0_1, %c0_2] : memref<1024x128xf32, #tpu.memory_space<vmem>>, vector<1024x128xf32>
    %cst = arith.constant dense<0.000000e+00> : vector<64x128xf32>
    %3 = tpu.matmul %1, %2, %cst {dimension_numbers = #tpu.dot_dimension_numbers<[1], [0], [0], [1], [0, 0, 1, 1], [], []>} : vector<64x1024xf32>, vector<1024x128xf32>, vector<64x128xf32> -> vector<64x128xf32>
    %4 = vector.extract_strided_slice %0 {offsets = [0, 768], sizes = [64, 1152], strides = [1, 1]} : vector<64x2432xf32> to vector<64x1152xf32>
    %c0_3 = arith.constant 0 : index
    %c0_4 = arith.constant 0 : index
    %5 = vector.load %arg3[%c0_3, %c0_4] : memref<1152x128xf32, #tpu.memory_space<vmem>>, vector<1152x128xf32>
    %cst_5 = arith.constant dense<0.000000e+00> : vector<64x128xf32>
    %6 = tpu.matmul %4, %5, %cst_5 {dimension_numbers = #tpu.dot_dimension_numbers<[1], [0], [0], [1], [0, 0, 1, 1], [], []>} : vector<64x1152xf32>, vector<1152x128xf32>, vector<64x128xf32> -> vector<64x128xf32>
    %7 = vector.extract_strided_slice %0 {offsets = [0, 1536], sizes = [64, 896], strides = [1, 1]} : vector<64x2432xf32> to vector<64x896xf32>
    %c0_6 = arith.constant 0 : index
    %c0_7 = arith.constant 0 : index
    %8 = vector.load %arg4[%c0_6, %c0_7] : memref<896x128xf32, #tpu.memory_space<vmem>>, vector<896x128xf32>
    %cst_8 = arith.constant dense<0.000000e+00> : vector<64x128xf32>
    %9 = tpu.matmul %7, %8, %cst_8 {dimension_numbers = #tpu.dot_dimension_numbers<[1], [0], [0], [1], [0, 0, 1, 1], [], []>} : vector<64x896xf32>, vector<896x128xf32>, vector<64x128xf32> -> vector<64x128xf32>
    %10 = tpu.concatenate %3, %6, %9 in 1 : vector<64x128xf32>, vector<64x128xf32>, vector<64x128xf32> -> vector<64x384xf32>
    %c0_9 = arith.constant 0 : index
    %c0_10 = arith.constant 0 : index
    %11 = vector.load %arg5[%c0_9, %c0_10] : memref<1x384xf32, #tpu.memory_space<vmem>>, vector<1x384xf32>
    %12 = vector.broadcast %11 : vector<1x384xf32> to vector<64x384xf32>
    %13 = arith.addf %10, %12 : vector<64x384xf32>
    %cst_11 = arith.constant 0.000000e+00 : f32
    %14 = vector.broadcast %cst_11 : f32 to vector<64x384xf32>
    %15 = arith.maximumf %13, %14 : vector<64x384xf32>
    %c0_12 = arith.constant 0 : index
    %c0_13 = arith.constant 0 : index
    %16 = vector.load %arg6[%c0_12, %c0_13] : memref<384x256xf32, #tpu.memory_space<vmem>>, vector<384x256xf32>
    %cst_14 = arith.constant dense<0.000000e+00> : vector<64x256xf32>
    %17 = tpu.matmul %15, %16, %cst_14 {dimension_numbers = #tpu.dot_dimension_numbers<[1], [0], [0], [1], [0, 0, 1, 1], [], []>} : vector<64x384xf32>, vector<384x256xf32>, vector<64x256xf32> -> vector<64x256xf32>
    %c0_15 = arith.constant 0 : index
    %c0_16 = arith.constant 0 : index
    %18 = vector.load %arg7[%c0_15, %c0_16] : memref<1x256xf32, #tpu.memory_space<vmem>>, vector<1x256xf32>
    %19 = vector.broadcast %18 : vector<1x256xf32> to vector<64x256xf32>
    %20 = arith.addf %17, %19 : vector<64x256xf32>
    %cst_17 = arith.constant 0.000000e+00 : f32
    %21 = vector.broadcast %cst_17 : f32 to vector<64x256xf32>
    %22 = arith.maximumf %20, %21 : vector<64x256xf32>
    %c0_18 = arith.constant 0 : index
    %c0_19 = arith.constant 0 : index
    %23 = vector.load %arg8[%c0_18, %c0_19] : memref<256x128xf32, #tpu.memory_space<vmem>>, vector<256x128xf32>
    %cst_20 = arith.constant dense<0.000000e+00> : vector<64x128xf32>
    %24 = tpu.matmul %22, %23, %cst_20 {dimension_numbers = #tpu.dot_dimension_numbers<[1], [0], [0], [1], [0, 0, 1, 1], [], []>} : vector<64x256xf32>, vector<256x128xf32>, vector<64x128xf32> -> vector<64x128xf32>
    %c0_21 = arith.constant 0 : index
    %c0_22 = arith.constant 0 : index
    %25 = vector.load %arg9[%c0_21, %c0_22] : memref<1x128xf32, #tpu.memory_space<vmem>>, vector<1x128xf32>
    %26 = vector.broadcast %25 : vector<1x128xf32> to vector<64x128xf32>
    %27 = arith.addf %24, %26 : vector<64x128xf32>
    %cst_23 = arith.constant 0.000000e+00 : f32
    %28 = vector.broadcast %cst_23 : f32 to vector<64x128xf32>
    %29 = arith.maximumf %27, %28 : vector<64x128xf32>
    %c0_24 = arith.constant 0 : index
    %c0_25 = arith.constant 0 : index
    %30 = vector.load %arg10[%c0_24, %c0_25] : memref<128x128xf32, #tpu.memory_space<vmem>>, vector<128x128xf32>
    %cst_26 = arith.constant dense<0.000000e+00> : vector<64x128xf32>
    %31 = tpu.matmul %29, %30, %cst_26 {dimension_numbers = #tpu.dot_dimension_numbers<[1], [0], [0], [1], [0, 0, 1, 1], [], []>} : vector<64x128xf32>, vector<128x128xf32>, vector<64x128xf32> -> vector<64x128xf32>
    %c0_27 = arith.constant 0 : index
    %c0_28 = arith.constant 0 : index
    %32 = vector.load %arg11[%c0_27, %c0_28] : memref<1x128xf32, #tpu.memory_space<vmem>>, vector<1x128xf32>
    %33 = vector.broadcast %32 : vector<1x128xf32> to vector<64x128xf32>
    %34 = arith.addf %31, %33 : vector<64x128xf32>
    %cst_29 = arith.constant 0.000000e+00 : f32
    %35 = vector.broadcast %cst_29 : f32 to vector<64x128xf32>
    %36 = arith.maximumf %34, %35 : vector<64x128xf32>
    %c0_30 = arith.constant 0 : index
    %c0_31 = arith.constant 0 : index
    %37 = vector.load %arg12[%c0_30, %c0_31] : memref<128x128xf32, #tpu.memory_space<vmem>>, vector<128x128xf32>
    %cst_32 = arith.constant dense<0.000000e+00> : vector<64x128xf32>
    %38 = tpu.matmul %36, %37, %cst_32 {dimension_numbers = #tpu.dot_dimension_numbers<[1], [0], [0], [1], [0, 0, 1, 1], [], []>} : vector<64x128xf32>, vector<128x128xf32>, vector<64x128xf32> -> vector<64x128xf32>
    %c0_33 = arith.constant 0 : index
    %c0_34 = arith.constant 0 : index
    %39 = vector.load %arg13[%c0_33, %c0_34] : memref<1x128xf32, #tpu.memory_space<vmem>>, vector<1x128xf32>
    %40 = vector.broadcast %39 : vector<1x128xf32> to vector<64x128xf32>
    %41 = arith.addf %38, %40 : vector<64x128xf32>
    %c0_35 = arith.constant 0 : index
    %c0_36 = arith.constant 0 : index
    %42 = vector.load %arg14[%c0_35, %c0_36] : memref<64x128xf32, #tpu.memory_space<vmem>>, vector<64x128xf32>
    tpu.vector_store %arg14[%c0_35, %c0_36], %41 {strides = array<i32>} : memref<64x128xf32, #tpu.memory_space<vmem>>, vector<64x128xf32>,
    return
  }
  func.func @transform_0(%arg0: i32) -> (i32, i32) {
    %c0_i32 = arith.constant 0 : i32
    %c0_i32_0 = arith.constant 0 : i32
    return %arg0, %c0_i32 : i32, i32
  }
  func.func @transform_1(%arg0: i32) -> (i32, i32) {
    %c0_i32 = arith.constant 0 : i32
    %c0_i32_0 = arith.constant 0 : i32
    %c0_i32_1 = arith.constant 0 : i32
    return %c0_i32, %c0_i32_0 : i32, i32
  }
  func.func @transform_2(%arg0: i32) -> (i32, i32) {
    %c0_i32 = arith.constant 0 : i32
    %c0_i32_0 = arith.constant 0 : i32
    %c0_i32_1 = arith.constant 0 : i32
    return %c0_i32, %c0_i32_0 : i32, i32
  }
  func.func @transform_3(%arg0: i32) -> (i32, i32) {
    %c0_i32 = arith.constant 0 : i32
    %c0_i32_0 = arith.constant 0 : i32
    %c0_i32_1 = arith.constant 0 : i32
    return %c0_i32, %c0_i32_0 : i32, i32
  }
  func.func @transform_4(%arg0: i32) -> (i32, i32) {
    %c0_i32 = arith.constant 0 : i32
    %c0_i32_0 = arith.constant 0 : i32
    %c0_i32_1 = arith.constant 0 : i32
    return %c0_i32, %c0_i32_0 : i32, i32
  }
  func.func @transform_5(%arg0: i32) -> (i32, i32) {
    %c0_i32 = arith.constant 0 : i32
    %c0_i32_0 = arith.constant 0 : i32
    %c0_i32_1 = arith.constant 0 : i32
    return %c0_i32, %c0_i32_0 : i32, i32
  }
  func.func @transform_6(%arg0: i32) -> (i32, i32) {
    %c0_i32 = arith.constant 0 : i32
    %c0_i32_0 = arith.constant 0 : i32
    %c0_i32_1 = arith.constant 0 : i32
    return %c0_i32, %c0_i32_0 : i32, i32
  }
  func.func @transform_7(%arg0: i32) -> (i32, i32) {
    %c0_i32 = arith.constant 0 : i32
    %c0_i32_0 = arith.constant 0 : i32
    %c0_i32_1 = arith.constant 0 : i32
    return %c0_i32, %c0_i32_0 : i32, i32
  }
  func.func @transform_8(%arg0: i32) -> (i32, i32) {
    %c0_i32 = arith.constant 0 : i32
    %c0_i32_0 = arith.constant 0 : i32
    %c0_i32_1 = arith.constant 0 : i32
    return %c0_i32, %c0_i32_0 : i32, i32
  }
  func.func @transform_9(%arg0: i32) -> (i32, i32) {
    %c0_i32 = arith.constant 0 : i32
    %c0_i32_0 = arith.constant 0 : i32
    %c0_i32_1 = arith.constant 0 : i32
    return %c0_i32, %c0_i32_0 : i32, i32
  }
  func.func @transform_10(%arg0: i32) -> (i32, i32) {
    %c0_i32 = arith.constant 0 : i32
    %c0_i32_0 = arith.constant 0 : i32
    %c0_i32_1 = arith.constant 0 : i32
    return %c0_i32, %c0_i32_0 : i32, i32
  }
  func.func @transform_11(%arg0: i32) -> (i32, i32) {
    %c0_i32 = arith.constant 0 : i32
    %c0_i32_0 = arith.constant 0 : i32
    %c0_i32_1 = arith.constant 0 : i32
    return %c0_i32, %c0_i32_0 : i32, i32
  }
  func.func @transform_12(%arg0: i32) -> (i32, i32) {
    %c0_i32 = arith.constant 0 : i32
    %c0_i32_0 = arith.constant 0 : i32
    %c0_i32_1 = arith.constant 0 : i32
    return %c0_i32, %c0_i32_0 : i32, i32
  }
  func.func @transform_13(%arg0: i32) -> (i32, i32) {
    %c0_i32 = arith.constant 0 : i32
    %c0_i32_0 = arith.constant 0 : i32
    return %arg0, %c0_i32 : i32, i32
  }
}

module attributes {stable_mosaic.version = 11 : i64} {
  func.func @tcn_kernel(%arg0: i32, %arg1: memref<64x2432xf32, #tpu.memory_space<vmem>>, %arg2: memref<1024x128xf32, #tpu.memory_space<vmem>>, %arg3: memref<1152x128xf32, #tpu.memory_space<vmem>>, %arg4: memref<896x128xf32, #tpu.memory_space<vmem>>, %arg5: memref<1x384xf32, #tpu.memory_space<vmem>>, %arg6: memref<384x256xf32, #tpu.memory_space<vmem>>, %arg7: memref<1x256xf32, #tpu.memory_space<vmem>>, %arg8: memref<256x128xf32, #tpu.memory_space<vmem>>, %arg9: memref<1x128xf32, #tpu.memory_space<vmem>>, %arg10: memref<128x128xf32, #tpu.memory_space<vmem>>, %arg11: memref<1x128xf32, #tpu.memory_space<vmem>>, %arg12: memref<128x128xf32, #tpu.memory_space<vmem>>, %arg13: memref<1x128xf32, #tpu.memory_space<vmem>>, %arg14: memref<64x128xf32, #tpu.memory_space<vmem>>) attributes {dimension_semantics = [#tpu.dimension_semantics<parallel>], iteration_bounds = array<i64: 1>, scalar_prefetch = 0 : i64, scratch_operands = 0 : i64, tpu.core_type = #tpu.core_type<tc>, window_params = [{transform_indices = @transform_0, window_bounds = array<i64: 64, 2432>}, {pipeline_mode = #tpu.pipeline_mode<synchronous>, transform_indices = @transform_1, window_bounds = array<i64: 1024, 128>}, {pipeline_mode = #tpu.pipeline_mode<synchronous>, transform_indices = @transform_2, window_bounds = array<i64: 1152, 128>}, {pipeline_mode = #tpu.pipeline_mode<synchronous>, transform_indices = @transform_3, window_bounds = array<i64: 896, 128>}, {pipeline_mode = #tpu.pipeline_mode<synchronous>, transform_indices = @transform_4, window_bounds = array<i64: 1, 384>}, {pipeline_mode = #tpu.pipeline_mode<synchronous>, transform_indices = @transform_5, window_bounds = array<i64: 384, 256>}, {pipeline_mode = #tpu.pipeline_mode<synchronous>, transform_indices = @transform_6, window_bounds = array<i64: 1, 256>}, {pipeline_mode = #tpu.pipeline_mode<synchronous>, transform_indices = @transform_7, window_bounds = array<i64: 256, 128>}, {pipeline_mode = #tpu.pipeline_mode<synchronous>, transform_indices = @transform_8, window_bounds = array<i64: 1, 128>}, {pipeline_mode = #tpu.pipeline_mode<synchronous>, transform_indices = @transform_9, window_bounds = array<i64: 128, 128>}, {pipeline_mode = #tpu.pipeline_mode<synchronous>, transform_indices = @transform_10, window_bounds = array<i64: 1, 128>}, {pipeline_mode = #tpu.pipeline_mode<synchronous>, transform_indices = @transform_11, window_bounds = array<i64: 128, 128>}, {pipeline_mode = #tpu.pipeline_mode<synchronous>, transform_indices = @transform_12, window_bounds = array<i64: 1, 128>}, {transform_indices = @transform_13, window_bounds = array<i64: 64, 128>}]} {
    %c0 = arith.constant 0 : index
    %c0_0 = arith.constant 0 : index
    %0 = vector.load %arg1[%c0, %c0_0] : memref<64x2432xf32, #tpu.memory_space<vmem>>, vector<64x2432xf32>
    %1 = vector.extract_strided_slice %0 {offsets = [0, 0], sizes = [64, 1024], strides = [1, 1]} : vector<64x2432xf32> to vector<64x1024xf32>
    %c0_1 = arith.constant 0 : index
    %c0_2 = arith.constant 0 : index
    %2 = vector.load %arg2[%c0_1, %c0_2] : memref<1024x128xf32, #tpu.memory_space<vmem>>, vector<1024x128xf32>
    %cst = arith.constant dense<0.000000e+00> : vector<64x128xf32>
    %3 = tpu.matmul %1, %2, %cst {dimension_numbers = #tpu.dot_dimension_numbers<[1], [0], [0], [1], [0, 0, 1, 1], [], []>} : vector<64x1024xf32>, vector<1024x128xf32>, vector<64x128xf32> -> vector<64x128xf32>
    %4 = vector.extract_strided_slice %0 {offsets = [0, 768], sizes = [64, 1152], strides = [1, 1]} : vector<64x2432xf32> to vector<64x1152xf32>
    %c0_3 = arith.constant 0 : index
    %c0_4 = arith.constant 0 : index
    %5 = vector.load %arg3[%c0_3, %c0_4] : memref<1152x128xf32, #tpu.memory_space<vmem>>, vector<1152x128xf32>
    %cst_5 = arith.constant dense<0.000000e+00> : vector<64x128xf32>
    %6 = tpu.matmul %4, %5, %cst_5 {dimension_numbers = #tpu.dot_dimension_numbers<[1], [0], [0], [1], [0, 0, 1, 1], [], []>} : vector<64x1152xf32>, vector<1152x128xf32>, vector<64x128xf32> -> vector<64x128xf32>
    %7 = vector.extract_strided_slice %0 {offsets = [0, 1536], sizes = [64, 896], strides = [1, 1]} : vector<64x2432xf32> to vector<64x896xf32>
    %c0_6 = arith.constant 0 : index
    %c0_7 = arith.constant 0 : index
    %8 = vector.load %arg4[%c0_6, %c0_7] : memref<896x128xf32, #tpu.memory_space<vmem>>, vector<896x128xf32>
    %cst_8 = arith.constant dense<0.000000e+00> : vector<64x128xf32>
    %9 = tpu.matmul %7, %8, %cst_8 {dimension_numbers = #tpu.dot_dimension_numbers<[1], [0], [0], [1], [0, 0, 1, 1], [], []>} : vector<64x896xf32>, vector<896x128xf32>, vector<64x128xf32> -> vector<64x128xf32>
    %10 = tpu.concatenate %3, %6, %9 in 1 : vector<64x128xf32>, vector<64x128xf32>, vector<64x128xf32> -> vector<64x384xf32>
    %c0_9 = arith.constant 0 : index
    %c0_10 = arith.constant 0 : index
    %11 = vector.load %arg5[%c0_9, %c0_10] : memref<1x384xf32, #tpu.memory_space<vmem>>, vector<1x384xf32>
    %12 = vector.broadcast %11 : vector<1x384xf32> to vector<64x384xf32>
    %13 = arith.addf %10, %12 : vector<64x384xf32>
    %cst_11 = arith.constant 0.000000e+00 : f32
    %14 = vector.broadcast %cst_11 : f32 to vector<64x384xf32>
    %15 = arith.maximumf %13, %14 : vector<64x384xf32>
    %c0_12 = arith.constant 0 : index
    %c0_13 = arith.constant 0 : index
    %16 = vector.load %arg6[%c0_12, %c0_13] : memref<384x256xf32, #tpu.memory_space<vmem>>, vector<384x256xf32>
    %cst_14 = arith.constant dense<0.000000e+00> : vector<64x256xf32>
    %17 = tpu.matmul %15, %16, %cst_14 {dimension_numbers = #tpu.dot_dimension_numbers<[1], [0], [0], [1], [0, 0, 1, 1], [], []>} : vector<64x384xf32>, vector<384x256xf32>, vector<64x256xf32> -> vector<64x256xf32>
    %c0_15 = arith.constant 0 : index
    %c0_16 = arith.constant 0 : index
    %18 = vector.load %arg7[%c0_15, %c0_16] : memref<1x256xf32, #tpu.memory_space<vmem>>, vector<1x256xf32>
    %19 = vector.broadcast %18 : vector<1x256xf32> to vector<64x256xf32>
    %20 = arith.addf %17, %19 : vector<64x256xf32>
    %cst_17 = arith.constant 0.000000e+00 : f32
    %21 = vector.broadcast %cst_17 : f32 to vector<64x256xf32>
    %22 = arith.maximumf %20, %21 : vector<64x256xf32>
    %c0_18 = arith.constant 0 : index
    %c0_19 = arith.constant 0 : index
    %23 = vector.load %arg8[%c0_18, %c0_19] : memref<256x128xf32, #tpu.memory_space<vmem>>, vector<256x128xf32>
    %cst_20 = arith.constant dense<0.000000e+00> : vector<64x128xf32>
    %24 = tpu.matmul %22, %23, %cst_20 {dimension_numbers = #tpu.dot_dimension_numbers<[1], [0], [0], [1], [0, 0, 1, 1], [], []>} : vector<64x256xf32>, vector<256x128xf32>, vector<64x128xf32> -> vector<64x128xf32>
    %c0_21 = arith.constant 0 : index
    %c0_22 = arith.constant 0 : index
    %25 = vector.load %arg9[%c0_21, %c0_22] : memref<1x128xf32, #tpu.memory_space<vmem>>, vector<1x128xf32>
    %26 = vector.broadcast %25 : vector<1x128xf32> to vector<64x128xf32>
    %27 = arith.addf %24, %26 : vector<64x128xf32>
    %cst_23 = arith.constant 0.000000e+00 : f32
    %28 = vector.broadcast %cst_23 : f32 to vector<64x128xf32>
    %29 = arith.maximumf %27, %28 : vector<64x128xf32>
    %c0_24 = arith.constant 0 : index
    %c0_25 = arith.constant 0 : index
    %30 = vector.load %arg10[%c0_24, %c0_25] : memref<128x128xf32, #tpu.memory_space<vmem>>, vector<128x128xf32>
    %cst_26 = arith.constant dense<0.000000e+00> : vector<64x128xf32>
    %31 = tpu.matmul %29, %30, %cst_26 {dimension_numbers = #tpu.dot_dimension_numbers<[1], [0], [0], [1], [0, 0, 1, 1], [], []>} : vector<64x128xf32>, vector<128x128xf32>, vector<64x128xf32> -> vector<64x128xf32>
    %c0_27 = arith.constant 0 : index
    %c0_28 = arith.constant 0 : index
    %32 = vector.load %arg11[%c0_27, %c0_28] : memref<1x128xf32, #tpu.memory_space<vmem>>, vector<1x128xf32>
    %33 = vector.broadcast %32 : vector<1x128xf32> to vector<64x128xf32>
    %34 = arith.addf %31, %33 : vector<64x128xf32>
    %cst_29 = arith.constant 0.000000e+00 : f32
    %35 = vector.broadcast %cst_29 : f32 to vector<64x128xf32>
    %36 = arith.maximumf %34, %35 : vector<64x128xf32>
    %c0_30 = arith.constant 0 : index
    %c0_31 = arith.constant 0 : index
    %37 = vector.load %arg12[%c0_30, %c0_31] : memref<128x128xf32, #tpu.memory_space<vmem>>, vector<128x128xf32>
    %cst_32 = arith.constant dense<0.000000e+00> : vector<64x128xf32>
    %38 = tpu.matmul %36, %37, %cst_32 {dimension_numbers = #tpu.dot_dimension_numbers<[1], [0], [0], [1], [0, 0, 1, 1], [], []>} : vector<64x128xf32>, vector<128x128xf32>, vector<64x128xf32> -> vector<64x128xf32>
    %c0_33 = arith.constant 0 : index
    %c0_34 = arith.constant 0 : index
    %39 = vector.load %arg13[%c0_33, %c0_34] : memref<1x128xf32, #tpu.memory_space<vmem>>, vector<1x128xf32>
    %40 = vector.broadcast %39 : vector<1x128xf32> to vector<64x128xf32>
    %41 = arith.addf %38, %40 : vector<64x128xf32>
    %c0_35 = arith.constant 0 : index
    %c0_36 = arith.constant 0 : index
    %42 = vector.load %arg14[%c0_35, %c0_36] : memref<64x128xf32, #tpu.memory_space<vmem>>, vector<64x128xf32>
    tpu.vector_store %arg14[%c0_35, %c0_36], %41 {strides = array<i32>} : memref<64x128xf32, #tpu.memory_space<vmem>>, vector<64x128xf32>,
    return
  }
  func.func @transform_0(%arg0: i32) -> (i32, i32) {
    %c0_i32 = arith.constant 0 : i32
    %c0_i32_0 = arith.constant 0 : i32
    return %arg0, %c0_i32 : i32, i32
  }
  func.func @transform_1(%arg0: i32) -> (i32, i32) {
    %c0_i32 = arith.constant 0 : i32
    %c0_i32_0 = arith.constant 0 : i32
    %c0_i32_1 = arith.constant 0 : i32
    return %c0_i32, %c0_i32_0 : i32, i32
  }
  func.func @transform_2(%arg0: i32) -> (i32, i32) {
    %c0_i32 = arith.constant 0 : i32
    %c0_i32_0 = arith.constant 0 : i32
    %c0_i32_1 = arith.constant 0 : i32
    return %c0_i32, %c0_i32_0 : i32, i32
  }
  func.func @transform_3(%arg0: i32) -> (i32, i32) {
    %c0_i32 = arith.constant 0 : i32
    %c0_i32_0 = arith.constant 0 : i32
    %c0_i32_1 = arith.constant 0 : i32
    return %c0_i32, %c0_i32_0 : i32, i32
  }
  func.func @transform_4(%arg0: i32) -> (i32, i32) {
    %c0_i32 = arith.constant 0 : i32
    %c0_i32_0 = arith.constant 0 : i32
    %c0_i32_1 = arith.constant 0 : i32
    return %c0_i32, %c0_i32_0 : i32, i32
  }
  func.func @transform_5(%arg0: i32) -> (i32, i32) {
    %c0_i32 = arith.constant 0 : i32
    %c0_i32_0 = arith.constant 0 : i32
    %c0_i32_1 = arith.constant 0 : i32
    return %c0_i32, %c0_i32_0 : i32, i32
  }
  func.func @transform_6(%arg0: i32) -> (i32, i32) {
    %c0_i32 = arith.constant 0 : i32
    %c0_i32_0 = arith.constant 0 : i32
    %c0_i32_1 = arith.constant 0 : i32
    return %c0_i32, %c0_i32_0 : i32, i32
  }
  func.func @transform_7(%arg0: i32) -> (i32, i32) {
    %c0_i32 = arith.constant 0 : i32
    %c0_i32_0 = arith.constant 0 : i32
    %c0_i32_1 = arith.constant 0 : i32
    return %c0_i32, %c0_i32_0 : i32, i32
  }
  func.func @transform_8(%arg0: i32) -> (i32, i32) {
    %c0_i32 = arith.constant 0 : i32
    %c0_i32_0 = arith.constant 0 : i32
    %c0_i32_1 = arith.constant 0 : i32
    return %c0_i32, %c0_i32_0 : i32, i32
  }
  func.func @transform_9(%arg0: i32) -> (i32, i32) {
    %c0_i32 = arith.constant 0 : i32
    %c0_i32_0 = arith.constant 0 : i32
    %c0_i32_1 = arith.constant 0 : i32
    return %c0_i32, %c0_i32_0 : i32, i32
  }
  func.func @transform_10(%arg0: i32) -> (i32, i32) {
    %c0_i32 = arith.constant 0 : i32
    %c0_i32_0 = arith.constant 0 : i32
    %c0_i32_1 = arith.constant 0 : i32
    return %c0_i32, %c0_i32_0 : i32, i32
  }
  func.func @transform_11(%arg0: i32) -> (i32, i32) {
    %c0_i32 = arith.constant 0 : i32
    %c0_i32_0 = arith.constant 0 : i32
    %c0_i32_1 = arith.constant 0 : i32
    return %c0_i32, %c0_i32_0 : i32, i32
  }
  func.func @transform_12(%arg0: i32) -> (i32, i32) {
    %c0_i32 = arith.constant 0 : i32
    %c0_i32_0 = arith.constant 0 : i32
    %c0_i32_1 = arith.constant 0 : i32
    return %c0_i32, %c0_i32_0 : i32, i32
  }
  func.func @transform_13(%arg0: i32) -> (i32, i32) {
    %c0_i32 = arith.constant 0 : i32
    %c0_i32_0 = arith.constant 0 : i32
    return %arg0, %c0_i32 : i32, i32
  }
}

</mosaic_0001>

<llo_original>
// kernel: tpu_custom_call.1
$region0: #{tpu_custom_call.1}
  #allocation0 [shape = 'u32[]', space=smem, size = 0x4, offset = 0x4, fixed_abs, tag = 'smem constant byte address 0x4 - core index']
  #allocation1 [shape = 'u32[144,128]{1,0:T(1,128)}', space=vmem, size = 0x12000, scoped, tag = 'internal scratch']
  %s0 = inlined_call_operand.hbm [shape: f32[64,2500], index: 0, kind: input, shape index: {}]
  %s1 = inlined_call_operand.hbm [shape: f32[1024,128], index: 1, kind: input, shape index: {}]
  %s2 = inlined_call_operand.hbm [shape: f32[1152,128], index: 2, kind: input, shape index: {}]
  %s3 = inlined_call_operand.hbm [shape: f32[896,128], index: 3, kind: input, shape index: {}]
  %s4 = inlined_call_operand.vmem [shape: f32[1,384], index: 4, kind: input, shape index: {}]
  %s5 = inlined_call_operand.hbm [shape: f32[384,256], index: 5, kind: input, shape index: {}]
  %s6 = inlined_call_operand.vmem [shape: f32[1,256], index: 6, kind: input, shape index: {}]
  %s7 = inlined_call_operand.hbm [shape: f32[256,128], index: 7, kind: input, shape index: {}]
  %s8 = inlined_call_operand.vmem [shape: f32[1,128], index: 8, kind: input, shape index: {}]
  %s9 = inlined_call_operand.hbm [shape: f32[128,128], index: 9, kind: input, shape index: {}]
  %s10 = inlined_call_operand.vmem [shape: f32[1,128], index: 10, kind: input, shape index: {}]
  %s11 = inlined_call_operand.hbm [shape: f32[128,128], index: 11, kind: input, shape index: {}]
  %s12 = inlined_call_operand.vmem [shape: f32[1,128], index: 12, kind: input, shape index: {}]
  %s13 = inlined_call_operand.hbm [shape: f32[64,128], index: 13, kind: output, shape index: {}]
  %s14 = sld [smem:[#allocation0]]
  $region94: #{tpu_custom_call.1} parent=0
    _
  %s16 = ssub.s32 1, %s14
  %s17 = scalar_select 0, %s16, %s14
  $region1: #{tpu_custom_call.1} parent=0
    #allocation2 [shape = 'u8[622592]{0}', space=vmem, size = 0x98000, scoped, tag = 'input window, operand 0, single buffered']
    #allocation3 [shape = 's32[1]{0}', space=sflag, size = 0x4, scoped, tag = 'scoped memory for tpu_custom_call.1']
    #allocation4 [shape = 's32[1]{0}', space=sflag, size = 0x4, scoped, tag = 'scoped memory for tpu_custom_call.1']
    #allocation5 [shape = 'u8[524288]{0}', space=vmem, size = 0x80000, scoped, tag = 'input window, operand 1, single buffered']
    #allocation6 [shape = 's32[1]{0}', space=sflag, size = 0x4, scoped, tag = 'scoped memory for tpu_custom_call.1']
    #allocation7 [shape = 'u8[589824]{0}', space=vmem, size = 0x90000, scoped, tag = 'input window, operand 2, single buffered']
    #allocation8 [shape = 'u8[458752]{0}', space=vmem, size = 0x70000, scoped, tag = 'input window, operand 3, single buffered']
    #allocation9 [shape = 's32[1]{0}', space=sflag, size = 0x4, scoped, tag = 'scoped memory for tpu_custom_call.1']
    #allocation10 [shape = 'u8[393216]{0}', space=vmem, size = 0x60000, scoped, tag = 'input window, operand 5, single buffered']
    #allocation11 [shape = 'u8[131072]{0}', space=vmem, size = 0x20000, scoped, tag = 'input window, operand 7, single buffered']
    #allocation12 [shape = 's32[1]{0}', space=sflag, size = 0x4, scoped, tag = 'scoped memory for tpu_custom_call.1']
    #allocation13 [shape = 'u8[65536]{0}', space=vmem, size = 0x10000, scoped, tag = 'input window, operand 9, single buffered']
    #allocation14 [shape = 'u8[65536]{0}', space=vmem, size = 0x10000, scoped, tag = 'input window, operand 11, single buffered']
    #allocation15 [shape = 's32[1]{0}', space=sflag, size = 0x4, scoped, tag = 'scoped memory for tpu_custom_call.1']
    #allocation16 [shape = 'u8[32768]{0}', space=vmem, size = 0x8000, scoped, tag = 'output window, operand 0, single buffered']
    %18 = vsyncpa [#allocation3], 0
    %19 = vsyncpa [#allocation6], 0
    %20 = vsyncpa [#allocation9], 0
    %21 = vsyncpa [#allocation12], 0
    %22 = vsyncpa [#allocation15], 0
    %23 = vsyncpa [#allocation4], 0
    // Predicated region
    $region2: #{tpu_custom_call.1} parent=1 // pred_check
      _
    $region3: #{tpu_custom_call.1} parent=1 // pred_check_branch
      %25 = sbr.rel (0) target = $region5
    $region4: #{tpu_custom_call.1} parent=1 // pred_region
      %s27 = ssub.s32 19456, 19456
      %28 = vsyncadd [#allocation3], %s27
      %s29 = sshll.u32 [#allocation2], 4
      %s30 = int_to_ptr.vmem [resolvable:$true] %s29
      %35 = dma.hbm_to_vmem [thread:$0]  %s0, 19456, %s30, [#allocation3], 2560, 2432, 152
    $region5: #{tpu_custom_call.1} parent=1 // pred_fallthru
      _
    // Predicated region
    $region6: #{tpu_custom_call.1} parent=1 // pred_check
      _
    $region7: #{tpu_custom_call.1} parent=1 // pred_check_branch
      %37 = sbr.rel (0) target = $region9
    $region8: #{tpu_custom_call.1} parent=1 // pred_region
      %s39 = ssub.s32 16384, 16384
      %40 = vsyncadd [#allocation6], %s39
      %s41 = sshll.u32 [#allocation5], 4
      %s42 = int_to_ptr.vmem [resolvable:$true] %s41
      %47 = dma.hbm_to_vmem [thread:$0]  %s1, 16384, %s42, [#allocation6], 128, 128, 8
    $region9: #{tpu_custom_call.1} parent=1 // pred_fallthru
      _
    // Predicated region
    $region10: #{tpu_custom_call.1} parent=1 // pred_check
      _
    $region11: #{tpu_custom_call.1} parent=1 // pred_check_branch
      %49 = sbr.rel (0) target = $region13
    $region12: #{tpu_custom_call.1} parent=1 // pred_region
      %s51 = ssub.s32 18432, 18432
      %52 = vsyncadd [#allocation6], %s51
      %s53 = sshll.u32 [#allocation7], 4
      %s54 = int_to_ptr.vmem [resolvable:$true] %s53
      %59 = dma.hbm_to_vmem [thread:$0]  %s2, 18432, %s54, [#allocation6], 128, 128, 8
    $region13: #{tpu_custom_call.1} parent=1 // pred_fallthru
      _
    // Predicated region
    $region14: #{tpu_custom_call.1} parent=1 // pred_check
      _
    $region15: #{tpu_custom_call.1} parent=1 // pred_check_branch
      %61 = sbr.rel (0) target = $region17
    $region16: #{tpu_custom_call.1} parent=1 // pred_region
      %s63 = ssub.s32 14336, 14336
      %64 = vsyncadd [#allocation9], %s63
      %s65 = sshll.u32 [#allocation8], 4
      %s66 = int_to_ptr.vmem [resolvable:$true] %s65
      %71 = dma.hbm_to_vmem [thread:$0]  %s3, 14336, %s66, [#allocation9], 128, 128, 8
    $region17: #{tpu_custom_call.1} parent=1 // pred_fallthru
      _
    // Predicated region
    $region18: #{tpu_custom_call.1} parent=1 // pred_check
      _
    $region19: #{tpu_custom_call.1} parent=1 // pred_check_branch
      %73 = sbr.rel (0) target = $region21
    $region20: #{tpu_custom_call.1} parent=1 // pred_region
      _
    $region21: #{tpu_custom_call.1} parent=1 // pred_fallthru
      _
    // Predicated region
    $region22: #{tpu_custom_call.1} parent=1 // pred_check
      _
    $region23: #{tpu_custom_call.1} parent=1 // pred_check_branch
      %75 = sbr.rel (0) target = $region25
    $region24: #{tpu_custom_call.1} parent=1 // pred_region
      %s77 = ssub.s32 12288, 12288
      %78 = vsyncadd [#allocation9], %s77
      %s79 = sshll.u32 [#allocation10], 4
      %s80 = int_to_ptr.vmem [resolvable:$true] %s79
      %85 = dma.hbm_to_vmem [thread:$0]  %s5, 12288, %s80, [#allocation9], 256, 256, 16
    $region25: #{tpu_custom_call.1} parent=1 // pred_fallthru
      _
    // Predicated region
    $region26: #{tpu_custom_call.1} parent=1 // pred_check
      _
    $region27: #{tpu_custom_call.1} parent=1 // pred_check_branch
      %87 = sbr.rel (0) target = $region29
    $region28: #{tpu_custom_call.1} parent=1 // pred_region
      _
    $region29: #{tpu_custom_call.1} parent=1 // pred_fallthru
      _
    // Predicated region
    $region30: #{tpu_custom_call.1} parent=1 // pred_check
      _
    $region31: #{tpu_custom_call.1} parent=1 // pred_check_branch
      %89 = sbr.rel (0) target = $region33
    $region32: #{tpu_custom_call.1} parent=1 // pred_region
      %s91 = ssub.s32 4096, 4096
      %92 = vsyncadd [#allocation12], %s91
      %s93 = sshll.u32 [#allocation11], 4
      %s94 = int_to_ptr.vmem [resolvable:$true] %s93
      %99 = dma.hbm_to_vmem [thread:$0]  %s7, 4096, %s94, [#allocation12], 128, 128, 8
    $region33: #{tpu_custom_call.1} parent=1 // pred_fallthru
      _
    // Predicated region
    $region34: #{tpu_custom_call.1} parent=1 // pred_check
      _
    $region35: #{tpu_custom_call.1} parent=1 // pred_check_branch
      %101 = sbr.rel (0) target = $region37
    $region36: #{tpu_custom_call.1} parent=1 // pred_region
      _
    $region37: #{tpu_custom_call.1} parent=1 // pred_fallthru
      _
    // Predicated region
    $region38: #{tpu_custom_call.1} parent=1 // pred_check
      _
    $region39: #{tpu_custom_call.1} parent=1 // pred_check_branch
      %103 = sbr.rel (0) target = $region41
    $region40: #{tpu_custom_call.1} parent=1 // pred_region
      %s105 = ssub.s32 2048, 2048
      %106 = vsyncadd [#allocation12], %s105
      %s107 = sshll.u32 [#allocation13], 4
      %s108 = int_to_ptr.vmem [resolvable:$true] %s107
      %113 = dma.hbm_to_vmem [thread:$0]  %s9, 2048, %s108, [#allocation12], 128, 128, 8
    $region41: #{tpu_custom_call.1} parent=1 // pred_fallthru
      _
    // Predicated region
    $region42: #{tpu_custom_call.1} parent=1 // pred_check
      _
    $region43: #{tpu_custom_call.1} parent=1 // pred_check_branch
      %115 = sbr.rel (0) target = $region45
    $region44: #{tpu_custom_call.1} parent=1 // pred_region
      _
    $region45: #{tpu_custom_call.1} parent=1 // pred_fallthru
      _
    // Predicated region
    $region46: #{tpu_custom_call.1} parent=1 // pred_check
      _
    $region47: #{tpu_custom_call.1} parent=1 // pred_check_branch
      %117 = sbr.rel (0) target = $region49
    $region48: #{tpu_custom_call.1} parent=1 // pred_region
      %s119 = ssub.s32 2048, 2048
      %120 = vsyncadd [#allocation15], %s119
      %s121 = sshll.u32 [#allocation14], 4
      %s122 = int_to_ptr.vmem [resolvable:$true] %s121
      %127 = dma.hbm_to_vmem [thread:$0]  %s11, 2048, %s122, [#allocation15], 128, 128, 8
    $region49: #{tpu_custom_call.1} parent=1 // pred_fallthru
      _
    // Predicated region
    $region50: #{tpu_custom_call.1} parent=1 // pred_check
      _
    $region51: #{tpu_custom_call.1} parent=1 // pred_check_branch
      %129 = sbr.rel (0) target = $region53
    $region52: #{tpu_custom_call.1} parent=1 // pred_region
      _
    $region53: #{tpu_custom_call.1} parent=1 // pred_fallthru
      _
    // Predicated region
    $region54: #{tpu_custom_call.1} parent=1 // pred_check
      _
    $region55: #{tpu_custom_call.1} parent=1 // pred_check_branch
      %131 = sbr.rel (0) target = $region57
    $region56: #{tpu_custom_call.1} parent=1 // pred_region
      %132 = dma.done [#allocation3], 19456
    $region57: #{tpu_custom_call.1} parent=1 // pred_fallthru
      _
    // Predicated region
    $region58: #{tpu_custom_call.1} parent=1 // pred_check
      _
    $region59: #{tpu_custom_call.1} parent=1 // pred_check_branch
      %134 = sbr.rel (0) target = $region61
    $region60: #{tpu_custom_call.1} parent=1 // pred_region
      %135 = dma.done [#allocation6], 16384
    $region61: #{tpu_custom_call.1} parent=1 // pred_fallthru
      _
    // Predicated region
    $region62: #{tpu_custom_call.1} parent=1 // pred_check
      _
    $region63: #{tpu_custom_call.1} parent=1 // pred_check_branch
      %137 = sbr.rel (0) target = $region65
    $region64: #{tpu_custom_call.1} parent=1 // pred_region
      %138 = dma.done [#allocation6], 18432
    $region65: #{tpu_custom_call.1} parent=1 // pred_fallthru
      _
    // Predicated region
    $region66: #{tpu_custom_call.1} parent=1 // pred_check
      _
    $region67: #{tpu_custom_call.1} parent=1 // pred_check_branch
      %140 = sbr.rel (0) target = $region69
    $region68: #{tpu_custom_call.1} parent=1 // pred_region
      %141 = dma.done [#allocation9], 14336
    $region69: #{tpu_custom_call.1} parent=1 // pred_fallthru
      _
    // Predicated region
    $region70: #{tpu_custom_call.1} parent=1 // pred_check
      _
    $region71: #{tpu_custom_call.1} parent=1 // pred_check_branch
      %143 = sbr.rel (0) target = $region73
    $region72: #{tpu_custom_call.1} parent=1 // pred_region
      %144 = dma.done [#allocation9], 12288
    $region73: #{tpu_custom_call.1} parent=1 // pred_fallthru
      _
    // Predicated region
    $region74: #{tpu_custom_call.1} parent=1 // pred_check
      _
    $region75: #{tpu_custom_call.1} parent=1 // pred_check_branch
      %146 = sbr.rel (0) target = $region77
    $region76: #{tpu_custom_call.1} parent=1 // pred_region
      %147 = dma.done [#allocation12], 4096
    $region77: #{tpu_custom_call.1} parent=1 // pred_fallthru
      _
    // Predicated region
    $region78: #{tpu_custom_call.1} parent=1 // pred_check
      _
    $region79: #{tpu_custom_call.1} parent=1 // pred_check_branch
      %149 = sbr.rel (0) target = $region81
    $region80: #{tpu_custom_call.1} parent=1 // pred_region
      %150 = dma.done [#allocation12], 2048
    $region81: #{tpu_custom_call.1} parent=1 // pred_fallthru
      _
    // Predicated region
    $region82: #{tpu_custom_call.1} parent=1 // pred_check
      _
    $region83: #{tpu_custom_call.1} parent=1 // pred_check_branch
      %152 = sbr.rel (0) target = $region85
    $region84: #{tpu_custom_call.1} parent=1 // pred_region
      %153 = dma.done [#allocation15], 2048
    $region85: #{tpu_custom_call.1} parent=1 // pred_fallthru
      _
    %v154 = vld [vmem:[#allocation2] sm:$0xff]
    %v155 = vld [vmem:[#allocation2 + $0x8] sm:$0xff]
    %v156 = vld [vmem:[#allocation2 + $0x10] sm:$0xff]
    %v157 = vld [vmem:[#allocation2 + $0x18] sm:$0xff]
    %v158 = vld [vmem:[#allocation2 + $0x20] sm:$0xff]
    %v159 = vld [vmem:[#allocation2 + $0x28] sm:$0xff]
    %v160 = vld [vmem:[#allocation2 + $0x30] sm:$0xff]
    %v161 = vld [vmem:[#allocation2 + $0x38] sm:$0xff]
    %v162 = vld [vmem:[#allocation2 + $0x40] sm:$0xff]
    %v163 = vld [vmem:[#allocation2 + $0x48] sm:$0xff]
    %v164 = vld [vmem:[#allocation2 + $0x50] sm:$0xff]
    %v165 = vld [vmem:[#allocation2 + $0x58] sm:$0xff]
    %v166 = vld [vmem:[#allocation2 + $0x60] sm:$0xff]
    %v167 = vld [vmem:[#allocation2 + $0x68] sm:$0xff]
    %v168 = vld [vmem:[#allocation2 + $0x70] sm:$0xff]
    %v169 = vld [vmem:[#allocation2 + $0x78] sm:$0xff]
    %v170 = vld [vmem:[#allocation2 + $0x80] sm:$0xff]
    %v171 = vld [vmem:[#allocation2 + $0x88] sm:$0xff]
    %v172 = vld [vmem:[#allocation2 + $0x90] sm:$0xff]
    %v173 = vld [vmem:[#allocation2 + $0x98] sm:$0xff]
    %v174 = vld [vmem:[#allocation2 + $0xa0] sm:$0xff]
    %v175 = vld [vmem:[#allocation2 + $0xa8] sm:$0xff]
    %v176 = vld [vmem:[#allocation2 + $0xb0] sm:$0xff]
    %v177 = vld [vmem:[#allocation2 + $0xb8] sm:$0xff]
    %v178 = vld [vmem:[#allocation2 + $0xc0] sm:$0xff]
    %v179 = vld [vmem:[#allocation2 + $0xc8] sm:$0xff]
    %v180 = vld [vmem:[#allocation2 + $0xd0] sm:$0xff]
    %v181 = vld [vmem:[#allocation2 + $0xd8] sm:$0xff]
    %v182 = vld [vmem:[#allocation2 + $0xe0] sm:$0xff]
    %v183 = vld [vmem:[#allocation2 + $0xe8] sm:$0xff]
    %v184 = vld [vmem:[#allocation2 + $0xf0] sm:$0xff]
    %v185 = vld [vmem:[#allocation2 + $0xf8] sm:$0xff]
    %v186 = vld [vmem:[#allocation2 + $0x100] sm:$0xff]
    %v187 = vld [vmem:[#allocation2 + $0x108] sm:$0xff]
    %v188 = vld [vmem:[#allocation2 + $0x110] sm:$0xff]
    %v189 = vld [vmem:[#allocation2 + $0x118] sm:$0xff]
    %v190 = vld [vmem:[#allocation2 + $0x120] sm:$0xff]
    %v191 = vld [vmem:[#allocation2 + $0x128] sm:$0xff]
    %v192 = vld [vmem:[#allocation2 + $0x130] sm:$0xff]
    %v193 = vld [vmem:[#allocation2 + $0x138] sm:$0xff]
    %v194 = vld [vmem:[#allocation2 + $0x140] sm:$0xff]
    %v195 = vld [vmem:[#allocation2 + $0x148] sm:$0xff]
    %v196 = vld [vmem:[#allocation2 + $0x150] sm:$0xff]
    %v197 = vld [vmem:[#allocation2 + $0x158] sm:$0xff]
    %v198 = vld [vmem:[#allocation2 + $0x160] sm:$0xff]
    %v199 = vld [vmem:[#allocation2 + $0x168] sm:$0xff]
    %v200 = vld [vmem:[#allocation2 + $0x170] sm:$0xff]
    %v201 = vld [vmem:[#allocation2 + $0x178] sm:$0xff]
    %v202 = vld [vmem:[#allocation2 + $0x180] sm:$0xff]
    %v203 = vld [vmem:[#allocation2 + $0x188] sm:$0xff]
    %v204 = vld [vmem:[#allocation2 + $0x190] sm:$0xff]
    %v205 = vld [vmem:[#allocation2 + $0x198] sm:$0xff]
    %v206 = vld [vmem:[#allocation2 + $0x1a0] sm:$0xff]
    %v207 = vld [vmem:[#allocation2 + $0x1a8] sm:$0xff]
    %v208 = vld [vmem:[#allocation2 + $0x1b0] sm:$0xff]
    %v209 = vld [vmem:[#allocation2 + $0x1b8] sm:$0xff]
    %v210 = vld [vmem:[#allocation2 + $0x1c0] sm:$0xff]
    %v211 = vld [vmem:[#allocation2 + $0x1c8] sm:$0xff]
    %v212 = vld [vmem:[#allocation2 + $0x1d0] sm:$0xff]
    %v213 = vld [vmem:[#allocation2 + $0x1d8] sm:$0xff]
    %v214 = vld [vmem:[#allocation2 + $0x1e0] sm:$0xff]
    %v215 = vld [vmem:[#allocation2 + $0x1e8] sm:$0xff]
    %v216 = vld [vmem:[#allocation2 + $0x1f0] sm:$0xff]
    %v217 = vld [vmem:[#allocation2 + $0x1f8] sm:$0xff]
    %v218 = vld [vmem:[#allocation2 + $0x200] sm:$0xff]
    %v219 = vld [vmem:[#allocation2 + $0x208] sm:$0xff]
    %v220 = vld [vmem:[#allocation2 + $0x210] sm:$0xff]
    %v221 = vld [vmem:[#allocation2 + $0x218] sm:$0xff]
    %v222 = vld [vmem:[#allocation2 + $0x220] sm:$0xff]
    %v223 = vld [vmem:[#allocation2 + $0x228] sm:$0xff]
    %v224 = vld [vmem:[#allocation2 + $0x230] sm:$0xff]
    %v225 = vld [vmem:[#allocation2 + $0x238] sm:$0xff]
    %v226 = vld [vmem:[#allocation2 + $0x240] sm:$0xff]
    %v227 = vld [vmem:[#allocation2 + $0x248] sm:$0xff]
    %v228 = vld [vmem:[#allocation2 + $0x250] sm:$0xff]
    %v229 = vld [vmem:[#allocation2 + $0x258] sm:$0xff]
    %v230 = vld [vmem:[#allocation2 + $0x260] sm:$0xff]
    %v231 = vld [vmem:[#allocation2 + $0x268] sm:$0xff]
    %v232 = vld [vmem:[#allocation2 + $0x270] sm:$0xff]
    %v233 = vld [vmem:[#allocation2 + $0x278] sm:$0xff]
    %v234 = vld [vmem:[#allocation2 + $0x280] sm:$0xff]
    %v235 = vld [vmem:[#allocation2 + $0x288] sm:$0xff]
    %v236 = vld [vmem:[#allocation2 + $0x290] sm:$0xff]
    %v237 = vld [vmem:[#allocation2 + $0x298] sm:$0xff]
    %v238 = vld [vmem:[#allocation2 + $0x2a0] sm:$0xff]
    %v239 = vld [vmem:[#allocation2 + $0x2a8] sm:$0xff]
    %v240 = vld [vmem:[#allocation2 + $0x2b0] sm:$0xff]
    %v241 = vld [vmem:[#allocation2 + $0x2b8] sm:$0xff]
    %v242 = vld [vmem:[#allocation2 + $0x2c0] sm:$0xff]
    %v243 = vld [vmem:[#allocation2 + $0x2c8] sm:$0xff]
    %v244 = vld [vmem:[#allocation2 + $0x2d0] sm:$0xff]
    %v245 = vld [vmem:[#allocation2 + $0x2d8] sm:$0xff]
    %v246 = vld [vmem:[#allocation2 + $0x2e0] sm:$0xff]
    %v247 = vld [vmem:[#allocation2 + $0x2e8] sm:$0xff]
    %v248 = vld [vmem:[#allocation2 + $0x2f0] sm:$0xff]
    %v249 = vld [vmem:[#allocation2 + $0x2f8] sm:$0xff]
    %v250 = vld [vmem:[#allocation2 + $0x300] sm:$0xff]
    %v251 = vld [vmem:[#allocation2 + $0x308] sm:$0xff]
    %v252 = vld [vmem:[#allocation2 + $0x310] sm:$0xff]
    %v253 = vld [vmem:[#allocation2 + $0x318] sm:$0xff]
    %v254 = vld [vmem:[#allocation2 + $0x320] sm:$0xff]
    %v255 = vld [vmem:[#allocation2 + $0x328] sm:$0xff]
    %v256 = vld [vmem:[#allocation2 + $0x330] sm:$0xff]
    %v257 = vld [vmem:[#allocation2 + $0x338] sm:$0xff]
    %v258 = vld [vmem:[#allocation2 + $0x340] sm:$0xff]
    %v259 = vld [vmem:[#allocation2 + $0x348] sm:$0xff]
    %v260 = vld [vmem:[#allocation2 + $0x350] sm:$0xff]
    %v261 = vld [vmem:[#allocation2 + $0x358] sm:$0xff]
    %v262 = vld [vmem:[#allocation2 + $0x360] sm:$0xff]
    %v263 = vld [vmem:[#allocation2 + $0x368] sm:$0xff]
    %v264 = vld [vmem:[#allocation2 + $0x370] sm:$0xff]
    %v265 = vld [vmem:[#allocation2 + $0x378] sm:$0xff]
    %v266 = vld [vmem:[#allocation2 + $0x380] sm:$0xff]
    %v267 = vld [vmem:[#allocation2 + $0x388] sm:$0xff]
    %v268 = vld [vmem:[#allocation2 + $0x390] sm:$0xff]
    %v269 = vld [vmem:[#allocation2 + $0x398] sm:$0xff]
    %v270 = vld [vmem:[#allocation2 + $0x3a0] sm:$0xff]
    %v271 = vld [vmem:[#allocation2 + $0x3a8] sm:$0xff]
    %v272 = vld [vmem:[#allocation2 + $0x3b0] sm:$0xff]
    %v273 = vld [vmem:[#allocation2 + $0x3b8] sm:$0xff]
    %v274 = vld [vmem:[#allocation2 + $0x3c0] sm:$0xff]
    %v275 = vld [vmem:[#allocation2 + $0x3c8] sm:$0xff]
    %v276 = vld [vmem:[#allocation2 + $0x3d0] sm:$0xff]
    %v277 = vld [vmem:[#allocation2 + $0x3d8] sm:$0xff]
    %v278 = vld [vmem:[#allocation2 + $0x3e0] sm:$0xff]
    %v279 = vld [vmem:[#allocation2 + $0x3e8] sm:$0xff]
    %v280 = vld [vmem:[#allocation2 + $0x3f0] sm:$0xff]
    %v281 = vld [vmem:[#allocation2 + $0x3f8] sm:$0xff]
    %v282 = vld [vmem:[#allocation2 + $0x400] sm:$0xff]
    %v283 = vld [vmem:[#allocation2 + $0x408] sm:$0xff]
    %v284 = vld [vmem:[#allocation2 + $0x410] sm:$0xff]
    %v285 = vld [vmem:[#allocation2 + $0x418] sm:$0xff]
    %v286 = vld [vmem:[#allocation2 + $0x420] sm:$0xff]
    %v287 = vld [vmem:[#allocation2 + $0x428] sm:$0xff]
    %v288 = vld [vmem:[#allocation2 + $0x430] sm:$0xff]
    %v289 = vld [vmem:[#allocation2 + $0x438] sm:$0xff]
    %v290 = vld [vmem:[#allocation2 + $0x440] sm:$0xff]
    %v291 = vld [vmem:[#allocation2 + $0x448] sm:$0xff]
    %v292 = vld [vmem:[#allocation2 + $0x450] sm:$0xff]
    %v293 = vld [vmem:[#allocation2 + $0x458] sm:$0xff]
    %v294 = vld [vmem:[#allocation2 + $0x460] sm:$0xff]
    %v295 = vld [vmem:[#allocation2 + $0x468] sm:$0xff]
    %v296 = vld [vmem:[#allocation2 + $0x470] sm:$0xff]
    %v297 = vld [vmem:[#allocation2 + $0x478] sm:$0xff]
    %v298 = vld [vmem:[#allocation2 + $0x480] sm:$0xff]
    %v299 = vld [vmem:[#allocation2 + $0x488] sm:$0xff]
    %v300 = vld [vmem:[#allocation2 + $0x490] sm:$0xff]
    %v301 = vld [vmem:[#allocation2 + $0x498] sm:$0xff]
    %v302 = vld [vmem:[#allocation2 + $0x4a0] sm:$0xff]
    %v303 = vld [vmem:[#allocation2 + $0x4a8] sm:$0xff]
    %v304 = vld [vmem:[#allocation2 + $0x4b0] sm:$0xff]
    %v305 = vld [vmem:[#allocation2 + $0x4b8] sm:$0xff]
    %v306 = vld [vmem:[#allocation5] sm:$0xff]
    %v307 = vld [vmem:[#allocation5 + $0x8] sm:$0xff]
    %v308 = vld [vmem:[#allocation5 + $0x10] sm:$0xff]
    %v309 = vld [vmem:[#allocation5 + $0x18] sm:$0xff]
    %v310 = vld [vmem:[#allocation5 + $0x20] sm:$0xff]
    %v311 = vld [vmem:[#allocation5 + $0x28] sm:$0xff]
    %v312 = vld [vmem:[#allocation5 + $0x30] sm:$0xff]
    %v313 = vld [vmem:[#allocation5 + $0x38] sm:$0xff]
    %v314 = vld [vmem:[#allocation5 + $0x40] sm:$0xff]
    %v315 = vld [vmem:[#allocation5 + $0x48] sm:$0xff]
    %v316 = vld [vmem:[#allocation5 + $0x50] sm:$0xff]
    %v317 = vld [vmem:[#allocation5 + $0x58] sm:$0xff]
    %v318 = vld [vmem:[#allocation5 + $0x60] sm:$0xff]
    %v319 = vld [vmem:[#allocation5 + $0x68] sm:$0xff]
    %v320 = vld [vmem:[#allocation5 + $0x70] sm:$0xff]
    %v321 = vld [vmem:[#allocation5 + $0x78] sm:$0xff]
    %v322 = vld [vmem:[#allocation5 + $0x80] sm:$0xff]
    %v323 = vld [vmem:[#allocation5 + $0x88] sm:$0xff]
    %v324 = vld [vmem:[#allocation5 + $0x90] sm:$0xff]
    %v325 = vld [vmem:[#allocation5 + $0x98] sm:$0xff]
    %v326 = vld [vmem:[#allocation5 + $0xa0] sm:$0xff]
    %v327 = vld [vmem:[#allocation5 + $0xa8] sm:$0xff]
    %v328 = vld [vmem:[#allocation5 + $0xb0] sm:$0xff]
    %v329 = vld [vmem:[#allocation5 + $0xb8] sm:$0xff]
    %v330 = vld [vmem:[#allocation5 + $0xc0] sm:$0xff]
    %v331 = vld [vmem:[#allocation5 + $0xc8] sm:$0xff]
    %v332 = vld [vmem:[#allocation5 + $0xd0] sm:$0xff]
    %v333 = vld [vmem:[#allocation5 + $0xd8] sm:$0xff]
    %v334 = vld [vmem:[#allocation5 + $0xe0] sm:$0xff]
    %v335 = vld [vmem:[#allocation5 + $0xe8] sm:$0xff]
    %v336 = vld [vmem:[#allocation5 + $0xf0] sm:$0xff]
    %v337 = vld [vmem:[#allocation5 + $0xf8] sm:$0xff]
    %v338 = vld [vmem:[#allocation5 + $0x100] sm:$0xff]
    %v339 = vld [vmem:[#allocation5 + $0x108] sm:$0xff]
    %v340 = vld [vmem:[#allocation5 + $0x110] sm:$0xff]
    %v341 = vld [vmem:[#allocation5 + $0x118] sm:$0xff]
    %v342 = vld [vmem:[#allocation5 + $0x120] sm:$0xff]
    %v343 = vld [vmem:[#allocation5 + $0x128] sm:$0xff]
    %v344 = vld [vmem:[#allocation5 + $0x130] sm:$0xff]
    %v345 = vld [vmem:[#allocation5 + $0x138] sm:$0xff]
    %v346 = vld [vmem:[#allocation5 + $0x140] sm:$0xff]
    %v347 = vld [vmem:[#allocation5 + $0x148] sm:$0xff]
    %v348 = vld [vmem:[#allocation5 + $0x150] sm:$0xff]
    %v349 = vld [vmem:[#allocation5 + $0x158] sm:$0xff]
    %v350 = vld [vmem:[#allocation5 + $0x160] sm:$0xff]
    %v351 = vld [vmem:[#allocation5 + $0x168] sm:$0xff]
    %v352 = vld [vmem:[#allocation5 + $0x170] sm:$0xff]
    %v353 = vld [vmem:[#allocation5 + $0x178] sm:$0xff]
    %v354 = vld [vmem:[#allocation5 + $0x180] sm:$0xff]
    %v355 = vld [vmem:[#allocation5 + $0x188] sm:$0xff]
    %v356 = vld [vmem:[#allocation5 + $0x190] sm:$0xff]
    %v357 = vld [vmem:[#allocation5 + $0x198] sm:$0xff]
    %v358 = vld [vmem:[#allocation5 + $0x1a0] sm:$0xff]
    %v359 = vld [vmem:[#allocation5 + $0x1a8] sm:$0xff]
    %v360 = vld [vmem:[#allocation5 + $0x1b0] sm:$0xff]
    %v361 = vld [vmem:[#allocation5 + $0x1b8] sm:$0xff]
    %v362 = vld [vmem:[#allocation5 + $0x1c0] sm:$0xff]
    %v363 = vld [vmem:[#allocation5 + $0x1c8] sm:$0xff]
    %v364 = vld [vmem:[#allocation5 + $0x1d0] sm:$0xff]
    %v365 = vld [vmem:[#allocation5 + $0x1d8] sm:$0xff]
    %v366 = vld [vmem:[#allocation5 + $0x1e0] sm:$0xff]
    %v367 = vld [vmem:[#allocation5 + $0x1e8] sm:$0xff]
    %v368 = vld [vmem:[#allocation5 + $0x1f0] sm:$0xff]
    %v369 = vld [vmem:[#allocation5 + $0x1f8] sm:$0xff]
    %v370 = vld [vmem:[#allocation5 + $0x200] sm:$0xff]
    %v371 = vld [vmem:[#allocation5 + $0x208] sm:$0xff]
    %v372 = vld [vmem:[#allocation5 + $0x210] sm:$0xff]
    %v373 = vld [vmem:[#allocation5 + $0x218] sm:$0xff]
    %v374 = vld [vmem:[#allocation5 + $0x220] sm:$0xff]
    %v375 = vld [vmem:[#allocation5 + $0x228] sm:$0xff]
    %v376 = vld [vmem:[#allocation5 + $0x230] sm:$0xff]
    %v377 = vld [vmem:[#allocation5 + $0x238] sm:$0xff]
    %v378 = vld [vmem:[#allocation5 + $0x240] sm:$0xff]
    %v379 = vld [vmem:[#allocation5 + $0x248] sm:$0xff]
    %v380 = vld [vmem:[#allocation5 + $0x250] sm:$0xff]
    %v381 = vld [vmem:[#allocation5 + $0x258] sm:$0xff]
    %v382 = vld [vmem:[#allocation5 + $0x260] sm:$0xff]
    %v383 = vld [vmem:[#allocation5 + $0x268] sm:$0xff]
    %v384 = vld [vmem:[#allocation5 + $0x270] sm:$0xff]
    %v385 = vld [vmem:[#allocation5 + $0x278] sm:$0xff]
    %v386 = vld [vmem:[#allocation5 + $0x280] sm:$0xff]
    %v387 = vld [vmem:[#allocation5 + $0x288] sm:$0xff]
    %v388 = vld [vmem:[#allocation5 + $0x290] sm:$0xff]
    %v389 = vld [vmem:[#allocation5 + $0x298] sm:$0xff]
    %v390 = vld [vmem:[#allocation5 + $0x2a0] sm:$0xff]
    %v391 = vld [vmem:[#allocation5 + $0x2a8] sm:$0xff]
    %v392 = vld [vmem:[#allocation5 + $0x2b0] sm:$0xff]
    %v393 = vld [vmem:[#allocation5 + $0x2b8] sm:$0xff]
    %v394 = vld [vmem:[#allocation5 + $0x2c0] sm:$0xff]
    %v395 = vld [vmem:[#allocation5 + $0x2c8] sm:$0xff]
    %v396 = vld [vmem:[#allocation5 + $0x2d0] sm:$0xff]
    %v397 = vld [vmem:[#allocation5 + $0x2d8] sm:$0xff]
    %v398 = vld [vmem:[#allocation5 + $0x2e0] sm:$0xff]
    %v399 = vld [vmem:[#allocation5 + $0x2e8] sm:$0xff]
    %v400 = vld [vmem:[#allocation5 + $0x2f0] sm:$0xff]
    %v401 = vld [vmem:[#allocation5 + $0x2f8] sm:$0xff]
    %v402 = vld [vmem:[#allocation5 + $0x300] sm:$0xff]
    %v403 = vld [vmem:[#allocation5 + $0x308] sm:$0xff]
    %v404 = vld [vmem:[#allocation5 + $0x310] sm:$0xff]
    %v405 = vld [vmem:[#allocation5 + $0x318] sm:$0xff]
    %v406 = vld [vmem:[#allocation5 + $0x320] sm:$0xff]
    %v407 = vld [vmem:[#allocation5 + $0x328] sm:$0xff]
    %v408 = vld [vmem:[#allocation5 + $0x330] sm:$0xff]
    %v409 = vld [vmem:[#allocation5 + $0x338] sm:$0xff]
    %v410 = vld [vmem:[#allocation5 + $0x340] sm:$0xff]
    %v411 = vld [vmem:[#allocation5 + $0x348] sm:$0xff]
    %v412 = vld [vmem:[#allocation5 + $0x350] sm:$0xff]
    %v413 = vld [vmem:[#allocation5 + $0x358] sm:$0xff]
    %v414 = vld [vmem:[#allocation5 + $0x360] sm:$0xff]
    %v415 = vld [vmem:[#allocation5 + $0x368] sm:$0xff]
    %v416 = vld [vmem:[#allocation5 + $0x370] sm:$0xff]
    %v417 = vld [vmem:[#allocation5 + $0x378] sm:$0xff]
    %v418 = vld [vmem:[#allocation5 + $0x380] sm:$0xff]
    %v419 = vld [vmem:[#allocation5 + $0x388] sm:$0xff]
    %v420 = vld [vmem:[#allocation5 + $0x390] sm:$0xff]
    %v421 = vld [vmem:[#allocation5 + $0x398] sm:$0xff]
    %v422 = vld [vmem:[#allocation5 + $0x3a0] sm:$0xff]
    %v423 = vld [vmem:[#allocation5 + $0x3a8] sm:$0xff]
    %v424 = vld [vmem:[#allocation5 + $0x3b0] sm:$0xff]
    %v425 = vld [vmem:[#allocation5 + $0x3b8] sm:$0xff]
    %v426 = vld [vmem:[#allocation5 + $0x3c0] sm:$0xff]
    %v427 = vld [vmem:[#allocation5 + $0x3c8] sm:$0xff]
    %v428 = vld [vmem:[#allocation5 + $0x3d0] sm:$0xff]
    %v429 = vld [vmem:[#allocation5 + $0x3d8] sm:$0xff]
    %v430 = vld [vmem:[#allocation5 + $0x3e0] sm:$0xff]
    %v431 = vld [vmem:[#allocation5 + $0x3e8] sm:$0xff]
    %v432 = vld [vmem:[#allocation5 + $0x3f0] sm:$0xff]
    %v433 = vld [vmem:[#allocation5 + $0x3f8] sm:$0xff]
    %434 = vmatprep.subr.mxu0 0.0
    %435 = vmatpush1.msra.mxu0 %v321
    %436 = vmatprep.subr.mxu0 0.0
    %437 = vmatpush1.msra.mxu0 %v320
    %438 = vmatprep.subr.mxu0 0.0
    %439 = vmatpush1.msra.mxu0 %v319
    %440 = vmatprep.subr.mxu0 0.0
    %441 = vmatpush1.msra.mxu0 %v318
    %442 = vmatprep.subr.mxu0 0.0
    %443 = vmatpush1.msra.mxu0 %v317
    %444 = vmatprep.subr.mxu0 0.0
    %445 = vmatpush1.msra.mxu0 %v316
    %446 = vmatprep.subr.mxu0 0.0
    %447 = vmatpush1.msra.mxu0 %v315
    %448 = vmatprep.subr.mxu0 0.0
    %449 = vmatpush1.msra.mxu0 %v314
    %450 = vmatprep.subr.mxu0 0.0
    %451 = vmatpush1.msra.mxu0 %v313
    %452 = vmatprep.subr.mxu0 0.0
    %453 = vmatpush1.msra.mxu0 %v312
    %454 = vmatprep.subr.mxu0 0.0
    %455 = vmatpush1.msra.mxu0 %v311
    %456 = vmatprep.subr.mxu0 0.0
    %457 = vmatpush1.msra.mxu0 %v310
    %458 = vmatprep.subr.mxu0 0.0
    %459 = vmatpush1.msra.mxu0 %v309
    %460 = vmatprep.subr.mxu0 0.0
    %461 = vmatpush1.msra.mxu0 %v308
    %462 = vmatprep.subr.mxu0 0.0
    %463 = vmatpush1.msra.mxu0 %v307
    %464 = vmatprep.subr.mxu0 0.0
    %465 = vmatpush1.msra.mxu0 %v306
    %466 = vmatprep.subr.mxu0 0.0
    %467 = vmatpush2.msra.mxu0 %v337
    %468 = vmatprep.subr.mxu0 0.0
    %469 = vmatpush2.msra.mxu0 %v336
    %470 = vmatprep.subr.mxu0 0.0
    %471 = vmatpush2.msra.mxu0 %v335
    %472 = vmatprep.subr.mxu0 0.0
    %473 = vmatpush2.msra.mxu0 %v334
    %474 = vmatprep.subr.mxu0 0.0
    %475 = vmatpush2.msra.mxu0 %v333
    %476 = vmatprep.subr.mxu0 0.0
    %477 = vmatpush2.msra.mxu0 %v332
    %478 = vmatprep.subr.mxu0 0.0
    %479 = vmatpush2.msra.mxu0 %v331
    %480 = vmatprep.subr.mxu0 0.0
    %481 = vmatpush2.msra.mxu0 %v330
    %482 = vmatprep.subr.mxu0 0.0
    %483 = vmatpush2.msra.mxu0 %v329
    %484 = vmatprep.subr.mxu0 0.0
    %485 = vmatpush2.msra.mxu0 %v328
    %486 = vmatprep.subr.mxu0 0.0
    %487 = vmatpush2.msra.mxu0 %v327
    %488 = vmatprep.subr.mxu0 0.0
    %489 = vmatpush2.msra.mxu0 %v326
    %490 = vmatprep.subr.mxu0 0.0
    %491 = vmatpush2.msra.mxu0 %v325
    %492 = vmatprep.subr.mxu0 0.0
    %493 = vmatpush2.msra.mxu0 %v324
    %494 = vmatprep.subr.mxu0 0.0
    %495 = vmatpush2.msra.mxu0 %v323
    %496 = vmatprep.subr.mxu0 0.0
    %497 = vmatpush2.msra.mxu0 %v322
    %498 = vmatprep.mubr.f32.mxu0 %v155
    %499 = vmatmul.mubr.f32.gmra.mxu0 %v154
    %v500 = vpop.f32.mrf.mxu0
    %v501 = vadd.f32 0.0, %v500
    %v502 = vpop.f32.mrf.mxu0
    %503 = vmatprep.mubr.f32.mxu0 %v174
    %504 = vmatmul.mubr.f32.gmra.mxu0 %v173
    %v505 = vpop.f32.mrf.mxu0
    %v506 = vadd.f32 0.0, %v505
    %v507 = vpop.f32.mrf.mxu0
    %508 = vmatprep.mubr.f32.mxu0 %v193
    %509 = vmatmul.mubr.f32.gmra.mxu0 %v192
    %v510 = vpop.f32.mrf.mxu0
    %v511 = vadd.f32 0.0, %v510
    %v512 = vpop.f32.mrf.mxu0
    %513 = vmatprep.mubr.f32.mxu0 %v212
    %514 = vmatmul.mubr.f32.gmra.mxu0 %v211
    %v515 = vpop.f32.mrf.mxu0
    %v516 = vadd.f32 0.0, %v515
    %v517 = vpop.f32.mrf.mxu0
    %518 = vmatprep.mubr.f32.mxu0 %v231
    %519 = vmatmul.mubr.f32.gmra.mxu0 %v230
    %v520 = vpop.f32.mrf.mxu0
    %v521 = vadd.f32 0.0, %v520
    %v522 = vpop.f32.mrf.mxu0
    %523 = vmatprep.mubr.f32.mxu0 %v250
    %524 = vmatmul.mubr.f32.gmra.mxu0 %v249
    %v525 = vpop.f32.mrf.mxu0
    %v526 = vadd.f32 0.0, %v525
    %v527 = vpop.f32.mrf.mxu0
    %528 = vmatprep.mubr.f32.mxu0 %v269
    %529 = vmatmul.mubr.f32.gmra.mxu0 %v268
    %v530 = vpop.f32.mrf.mxu0
    %v531 = vadd.f32 0.0, %v530
    %v532 = vpop.f32.mrf.mxu0
    %533 = vmatprep.mubr.f32.mxu0 %v288
    %534 = vmatmul.mubr.f32.gmra.mxu0 %v287
    %v535 = vpop.f32.mrf.mxu0
    %v536 = vadd.f32 0.0, %v535
    %v537 = vpop.f32.mrf.mxu0
    %538 = vdwg.mxu0
    %539 = vmatprep.subr.mxu0 0.0
    %540 = vmatpush1.msra.mxu0 %v353
    %541 = vmatprep.subr.mxu0 0.0
    %542 = vmatpush1.msra.mxu0 %v352
    %543 = vmatprep.subr.mxu0 0.0
    %544 = vmatpush1.msra.mxu0 %v351
    %545 = vmatprep.subr.mxu0 0.0
    %546 = vmatpush1.msra.mxu0 %v350
    %547 = vmatprep.subr.mxu0 0.0
    %548 = vmatpush1.msra.mxu0 %v349
    %549 = vmatprep.subr.mxu0 0.0
    %550 = vmatpush1.msra.mxu0 %v348
    %551 = vmatprep.subr.mxu0 0.0
    %552 = vmatpush1.msra.mxu0 %v347
    %553 = vmatprep.subr.mxu0 0.0
    %554 = vmatpush1.msra.mxu0 %v346
    %555 = vmatprep.subr.mxu0 0.0
    %556 = vmatpush1.msra.mxu0 %v345
    %557 = vmatprep.subr.mxu0 0.0
    %558 = vmatpush1.msra.mxu0 %v344
    %559 = vmatprep.subr.mxu0 0.0
    %560 = vmatpush1.msra.mxu0 %v343
    %561 = vmatprep.subr.mxu0 0.0
    %562 = vmatpush1.msra.mxu0 %v342
    %563 = vmatprep.subr.mxu0 0.0
    %564 = vmatpush1.msra.mxu0 %v341
    %565 = vmatprep.subr.mxu0 0.0
    %566 = vmatpush1.msra.mxu0 %v340
    %567 = vmatprep.subr.mxu0 0.0
    %568 = vmatpush1.msra.mxu0 %v339
    %569 = vmatprep.subr.mxu0 0.0
    %570 = vmatpush1.msra.mxu0 %v338
    %571 = vmatprep.subr.mxu0 0.0
    %572 = vmatpush2.msra.mxu0 %v369
    %573 = vmatprep.subr.mxu0 0.0
    %574 = vmatpush2.msra.mxu0 %v368
    %575 = vmatprep.subr.mxu0 0.0
    %576 = vmatpush2.msra.mxu0 %v367
    %577 = vmatprep.subr.mxu0 0.0
    %578 = vmatpush2.msra.mxu0 %v366
    %579 = vmatprep.subr.mxu0 0.0
    %580 = vmatpush2.msra.mxu0 %v365
    %581 = vmatprep.subr.mxu0 0.0
    %582 = vmatpush2.msra.mxu0 %v364
    %583 = vmatprep.subr.mxu0 0.0
    %584 = vmatpush2.msra.mxu0 %v363
    %585 = vmatprep.subr.mxu0 0.0
    %586 = vmatpush2.msra.mxu0 %v362
    %587 = vmatprep.subr.mxu0 0.0
    %588 = vmatpush2.msra.mxu0 %v361
    %589 = vmatprep.subr.mxu0 0.0
    %590 = vmatpush2.msra.mxu0 %v360
    %591 = vmatprep.subr.mxu0 0.0
    %592 = vmatpush2.msra.mxu0 %v359
    %593 = vmatprep.subr.mxu0 0.0
    %594 = vmatpush2.msra.mxu0 %v358
    %595 = vmatprep.subr.mxu0 0.0
    %596 = vmatpush2.msra.mxu0 %v357
    %597 = vmatprep.subr.mxu0 0.0
    %598 = vmatpush2.msra.mxu0 %v356
    %599 = vmatprep.subr.mxu0 0.0
    %600 = vmatpush2.msra.mxu0 %v355
    %601 = vmatprep.subr.mxu0 0.0
    %602 = vmatpush2.msra.mxu0 %v354
    %603 = vmatprep.mubr.f32.mxu0 %v157
    %604 = vmatmul.mubr.f32.gmra.mxu0 %v156
    %v605 = vpop.f32.mrf.mxu0
    %v606 = vadd.f32 %v501, %v605
    %v607 = vpop.f32.mrf.mxu0
    %608 = vmatprep.mubr.f32.mxu0 %v176
    %609 = vmatmul.mubr.f32.gmra.mxu0 %v175
    %v610 = vpop.f32.mrf.mxu0
    %v611 = vadd.f32 %v506, %v610
    %v612 = vpop.f32.mrf.mxu0
    %613 = vmatprep.mubr.f32.mxu0 %v195
    %614 = vmatmul.mubr.f32.gmra.mxu0 %v194
    %v615 = vpop.f32.mrf.mxu0
    %v616 = vadd.f32 %v511, %v615
    %v617 = vpop.f32.mrf.mxu0
    %618 = vmatprep.mubr.f32.mxu0 %v214
    %619 = vmatmul.mubr.f32.gmra.mxu0 %v213
    %v620 = vpop.f32.mrf.mxu0
    %v621 = vadd.f32 %v516, %v620
    %v622 = vpop.f32.mrf.mxu0
    %623 = vmatprep.mubr.f32.mxu0 %v233
    %624 = vmatmul.mubr.f32.gmra.mxu0 %v232
    %v625 = vpop.f32.mrf.mxu0
    %v626 = vadd.f32 %v521, %v625
    %v627 = vpop.f32.mrf.mxu0
    %628 = vmatprep.mubr.f32.mxu0 %v252
    %629 = vmatmul.mubr.f32.gmra.mxu0 %v251
    %v630 = vpop.f32.mrf.mxu0
    %v631 = vadd.f32 %v526, %v630
    %v632 = vpop.f32.mrf.mxu0
    %633 = vmatprep.mubr.f32.mxu0 %v271
    %634 = vmatmul.mubr.f32.gmra.mxu0 %v270
    %v635 = vpop.f32.mrf.mxu0
    %v636 = vadd.f32 %v531, %v635
    %v637 = vpop.f32.mrf.mxu0
    %638 = vmatprep.mubr.f32.mxu0 %v290
    %639 = vmatmul.mubr.f32.gmra.mxu0 %v289
    %v640 = vpop.f32.mrf.mxu0
    %v641 = vadd.f32 %v536, %v640
    %v642 = vpop.f32.mrf.mxu0
    %643 = vdwg.mxu0
    %644 = vmatprep.subr.mxu0 0.0
    %645 = vmatpush1.msra.mxu0 %v385
    %646 = vmatprep.subr.mxu0 0.0
    %647 = vmatpush1.msra.mxu0 %v384
    %648 = vmatprep.subr.mxu0 0.0
    %649 = vmatpush1.msra.mxu0 %v383
    %650 = vmatprep.subr.mxu0 0.0
    %651 = vmatpush1.msra.mxu0 %v382
    %652 = vmatprep.subr.mxu0 0.0
    %653 = vmatpush1.msra.mxu0 %v381
    %654 = vmatprep.subr.mxu0 0.0
    %655 = vmatpush1.msra.mxu0 %v380
    %656 = vmatprep.subr.mxu0 0.0
    %657 = vmatpush1.msra.mxu0 %v379
    %658 = vmatprep.subr.mxu0 0.0
    %659 = vmatpush1.msra.mxu0 %v378
    %660 = vmatprep.subr.mxu0 0.0
    %661 = vmatpush1.msra.mxu0 %v377
    %662 = vmatprep.subr.mxu0 0.0
    %663 = vmatpush1.msra.mxu0 %v376
    %664 = vmatprep.subr.mxu0 0.0
    %665 = vmatpush1.msra.mxu0 %v375
    %666 = vmatprep.subr.mxu0 0.0
    %667 = vmatpush1.msra.mxu0 %v374
    %668 = vmatprep.subr.mxu0 0.0
    %669 = vmatpush1.msra.mxu0 %v373
    %670 = vmatprep.subr.mxu0 0.0
    %671 = vmatpush1.msra.mxu0 %v372
    %672 = vmatprep.subr.mxu0 0.0
    %673 = vmatpush1.msra.mxu0 %v371
    %674 = vmatprep.subr.mxu0 0.0
    %675 = vmatpush1.msra.mxu0 %v370
    %676 = vmatprep.subr.mxu0 0.0
    %677 = vmatpush2.msra.mxu0 %v401
    %678 = vmatprep.subr.mxu0 0.0
    %679 = vmatpush2.msra.mxu0 %v400
    %680 = vmatprep.subr.mxu0 0.0
    %681 = vmatpush2.msra.mxu0 %v399
    %682 = vmatprep.subr.mxu0 0.0
    %683 = vmatpush2.msra.mxu0 %v398
    %684 = vmatprep.subr.mxu0 0.0
    %685 = vmatpush2.msra.mxu0 %v397
    %686 = vmatprep.subr.mxu0 0.0
    %687 = vmatpush2.msra.mxu0 %v396
    %688 = vmatprep.subr.mxu0 0.0
    %689 = vmatpush2.msra.mxu0 %v395
    %690 = vmatprep.subr.mxu0 0.0
    %691 = vmatpush2.msra.mxu0 %v394
    %692 = vmatprep.subr.mxu0 0.0
    %693 = vmatpush2.msra.mxu0 %v393
    %694 = vmatprep.subr.mxu0 0.0
    %695 = vmatpush2.msra.mxu0 %v392
    %696 = vmatprep.subr.mxu0 0.0
    %697 = vmatpush2.msra.mxu0 %v391
    %698 = vmatprep.subr.mxu0 0.0
    %699 = vmatpush2.msra.mxu0 %v390
    %700 = vmatprep.subr.mxu0 0.0
    %701 = vmatpush2.msra.mxu0 %v389
    %702 = vmatprep.subr.mxu0 0.0
    %703 = vmatpush2.msra.mxu0 %v388
    %704 = vmatprep.subr.mxu0 0.0
    %705 = vmatpush2.msra.mxu0 %v387
    %706 = vmatprep.subr.mxu0 0.0
    %707 = vmatpush2.msra.mxu0 %v386
    %708 = vmatprep.mubr.f32.mxu0 %v159
    %709 = vmatmul.mubr.f32.gmra.mxu0 %v158
    %v710 = vpop.f32.mrf.mxu0
    %v711 = vadd.f32 %v606, %v710
    %v712 = vpop.f32.mrf.mxu0
    %713 = vmatprep.mubr.f32.mxu0 %v178
    %714 = vmatmul.mubr.f32.gmra.mxu0 %v177
    %v715 = vpop.f32.mrf.mxu0
    %v716 = vadd.f32 %v611, %v715
    %v717 = vpop.f32.mrf.mxu0
    %718 = vmatprep.mubr.f32.mxu0 %v197
    %719 = vmatmul.mubr.f32.gmra.mxu0 %v196
    %v720 = vpop.f32.mrf.mxu0
    %v721 = vadd.f32 %v616, %v720
    %v722 = vpop.f32.mrf.mxu0
    %723 = vmatprep.mubr.f32.mxu0 %v216
    %724 = vmatmul.mubr.f32.gmra.mxu0 %v215
    %v725 = vpop.f32.mrf.mxu0
    %v726 = vadd.f32 %v621, %v725
    %v727 = vpop.f32.mrf.mxu0
    %728 = vmatprep.mubr.f32.mxu0 %v235
    %729 = vmatmul.mubr.f32.gmra.mxu0 %v234
    %v730 = vpop.f32.mrf.mxu0
    %v731 = vadd.f32 %v626, %v730
    %v732 = vpop.f32.mrf.mxu0
    %733 = vmatprep.mubr.f32.mxu0 %v254
    %734 = vmatmul.mubr.f32.gmra.mxu0 %v253
    %v735 = vpop.f32.mrf.mxu0
    %v736 = vadd.f32 %v631, %v735
    %v737 = vpop.f32.mrf.mxu0
    %738 = vmatprep.mubr.f32.mxu0 %v273
    %739 = vmatmul.mubr.f32.gmra.mxu0 %v272
    %v740 = vpop.f32.mrf.mxu0
    %v741 = vadd.f32 %v636, %v740
    %v742 = vpop.f32.mrf.mxu0
    %743 = vmatprep.mubr.f32.mxu0 %v292
    %744 = vmatmul.mubr.f32.gmra.mxu0 %v291
    %v745 = vpop.f32.mrf.mxu0
    %v746 = vadd.f32 %v641, %v745
    %v747 = vpop.f32.mrf.mxu0
    %748 = vdwg.mxu0
    %749 = vmatprep.subr.mxu0 0.0
    %750 = vmatpush1.msra.mxu0 %v417
    %751 = vmatprep.subr.mxu0 0.0
    %752 = vmatpush1.msra.mxu0 %v416
    %753 = vmatprep.subr.mxu0 0.0
    %754 = vmatpush1.msra.mxu0 %v415
    %755 = vmatprep.subr.mxu0 0.0
    %756 = vmatpush1.msra.mxu0 %v414
    %757 = vmatprep.subr.mxu0 0.0
    %758 = vmatpush1.msra.mxu0 %v413
    %759 = vmatprep.subr.mxu0 0.0
    %760 = vmatpush1.msra.mxu0 %v412
    %761 = vmatprep.subr.mxu0 0.0
    %762 = vmatpush1.msra.mxu0 %v411
    %763 = vmatprep.subr.mxu0 0.0
    %764 = vmatpush1.msra.mxu0 %v410
    %765 = vmatprep.subr.mxu0 0.0
    %766 = vmatpush1.msra.mxu0 %v409
    %767 = vmatprep.subr.mxu0 0.0
    %768 = vmatpush1.msra.mxu0 %v408
    %769 = vmatprep.subr.mxu0 0.0
    %770 = vmatpush1.msra.mxu0 %v407
    %771 = vmatprep.subr.mxu0 0.0
    %772 = vmatpush1.msra.mxu0 %v406
    %773 = vmatprep.subr.mxu0 0.0
    %774 = vmatpush1.msra.mxu0 %v405
    %775 = vmatprep.subr.mxu0 0.0
    %776 = vmatpush1.msra.mxu0 %v404
    %777 = vmatprep.subr.mxu0 0.0
    %778 = vmatpush1.msra.mxu0 %v403
    %779 = vmatprep.subr.mxu0 0.0
    %780 = vmatpush1.msra.mxu0 %v402
    %781 = vmatprep.subr.mxu0 0.0
    %782 = vmatpush2.msra.mxu0 %v433
    %783 = vmatprep.subr.mxu0 0.0
    %784 = vmatpush2.msra.mxu0 %v432
    %785 = vmatprep.subr.mxu0 0.0
    %786 = vmatpush2.msra.mxu0 %v431
    %787 = vmatprep.subr.mxu0 0.0
    %788 = vmatpush2.msra.mxu0 %v430
    %789 = vmatprep.subr.mxu0 0.0
    %790 = vmatpush2.msra.mxu0 %v429
    %791 = vmatprep.subr.mxu0 0.0
    %792 = vmatpush2.msra.mxu0 %v428
    %793 = vmatprep.subr.mxu0 0.0
    %794 = vmatpush2.msra.mxu0 %v427
    %795 = vmatprep.subr.mxu0 0.0
    %796 = vmatpush2.msra.mxu0 %v426
    %797 = vmatprep.subr.mxu0 0.0
    %798 = vmatpush2.msra.mxu0 %v425
    %799 = vmatprep.subr.mxu0 0.0
    %800 = vmatpush2.msra.mxu0 %v424
    %801 = vmatprep.subr.mxu0 0.0
    %802 = vmatpush2.msra.mxu0 %v423
    %803 = vmatprep.subr.mxu0 0.0
    %804 = vmatpush2.msra.mxu0 %v422
    %805 = vmatprep.subr.mxu0 0.0
    %806 = vmatpush2.msra.mxu0 %v421
    %807 = vmatprep.subr.mxu0 0.0
    %808 = vmatpush2.msra.mxu0 %v420
    %809 = vmatprep.subr.mxu0 0.0
    %810 = vmatpush2.msra.mxu0 %v419
    %811 = vmatprep.subr.mxu0 0.0
    %812 = vmatpush2.msra.mxu0 %v418
    %813 = vmatprep.mubr.f32.mxu0 %v161
    %814 = vmatmul.mubr.f32.gmra.mxu0 %v160
    %v815 = vpop.f32.mrf.mxu0
    %v816 = vadd.f32 %v711, %v815
    %v817 = vpop.f32.mrf.mxu0
    %818 = vmatprep.mubr.f32.mxu0 %v180
    %819 = vmatmul.mubr.f32.gmra.mxu0 %v179
    %v820 = vpop.f32.mrf.mxu0
    %v821 = vadd.f32 %v716, %v820
    %v822 = vpop.f32.mrf.mxu0
    %823 = vmatprep.mubr.f32.mxu0 %v199
    %824 = vmatmul.mubr.f32.gmra.mxu0 %v198
    %v825 = vpop.f32.mrf.mxu0
    %v826 = vadd.f32 %v721, %v825
    %v827 = vpop.f32.mrf.mxu0
    %828 = vmatprep.mubr.f32.mxu0 %v218
    %829 = vmatmul.mubr.f32.gmra.mxu0 %v217
    %v830 = vpop.f32.mrf.mxu0
    %v831 = vadd.f32 %v726, %v830
    %v832 = vpop.f32.mrf.mxu0
    %833 = vmatprep.mubr.f32.mxu0 %v237
    %834 = vmatmul.mubr.f32.gmra.mxu0 %v236
    %v835 = vpop.f32.mrf.mxu0
    %v836 = vadd.f32 %v731, %v835
    %v837 = vpop.f32.mrf.mxu0
    %838 = vmatprep.mubr.f32.mxu0 %v256
    %839 = vmatmul.mubr.f32.gmra.mxu0 %v255
    %v840 = vpop.f32.mrf.mxu0
    %v841 = vadd.f32 %v736, %v840
    %v842 = vpop.f32.mrf.mxu0
    %843 = vmatprep.mubr.f32.mxu0 %v275
    %844 = vmatmul.mubr.f32.gmra.mxu0 %v274
    %v845 = vpop.f32.mrf.mxu0
    %v846 = vadd.f32 %v741, %v845
    %v847 = vpop.f32.mrf.mxu0
    %848 = vmatprep.mubr.f32.mxu0 %v294
    %849 = vmatmul.mubr.f32.gmra.mxu0 %v293
    %v850 = vpop.f32.mrf.mxu0
    %v851 = vadd.f32 %v746, %v850
    %v852 = vpop.f32.mrf.mxu0
    %853 = vdwg.mxu0
    %v854 = vld [vmem:[#allocation7] sm:$0xff]
    %v855 = vld [vmem:[#allocation7 + $0x8] sm:$0xff]
    %v856 = vld [vmem:[#allocation7 + $0x10] sm:$0xff]
    %v857 = vld [vmem:[#allocation7 + $0x18] sm:$0xff]
    %v858 = vld [vmem:[#allocation7 + $0x20] sm:$0xff]
    %v859 = vld [vmem:[#allocation7 + $0x28] sm:$0xff]
    %v860 = vld [vmem:[#allocation7 + $0x30] sm:$0xff]
    %v861 = vld [vmem:[#allocation7 + $0x38] sm:$0xff]
    %v862 = vld [vmem:[#allocation7 + $0x40] sm:$0xff]
    %v863 = vld [vmem:[#allocation7 + $0x48] sm:$0xff]
    %v864 = vld [vmem:[#allocation7 + $0x50] sm:$0xff]
    %v865 = vld [vmem:[#allocation7 + $0x58] sm:$0xff]
    %v866 = vld [vmem:[#allocation7 + $0x60] sm:$0xff]
    %v867 = vld [vmem:[#allocation7 + $0x68] sm:$0xff]
    %v868 = vld [vmem:[#allocation7 + $0x70] sm:$0xff]
    %v869 = vld [vmem:[#allocation7 + $0x78] sm:$0xff]
    %v870 = vld [vmem:[#allocation7 + $0x80] sm:$0xff]
    %v871 = vld [vmem:[#allocation7 + $0x88] sm:$0xff]
    %v872 = vld [vmem:[#allocation7 + $0x90] sm:$0xff]
    %v873 = vld [vmem:[#allocation7 + $0x98] sm:$0xff]
    %v874 = vld [vmem:[#allocation7 + $0xa0] sm:$0xff]
    %v875 = vld [vmem:[#allocation7 + $0xa8] sm:$0xff]
    %v876 = vld [vmem:[#allocation7 + $0xb0] sm:$0xff]
    %v877 = vld [vmem:[#allocation7 + $0xb8] sm:$0xff]
    %v878 = vld [vmem:[#allocation7 + $0xc0] sm:$0xff]
    %v879 = vld [vmem:[#allocation7 + $0xc8] sm:$0xff]
    %v880 = vld [vmem:[#allocation7 + $0xd0] sm:$0xff]
    %v881 = vld [vmem:[#allocation7 + $0xd8] sm:$0xff]
    %v882 = vld [vmem:[#allocation7 + $0xe0] sm:$0xff]
    %v883 = vld [vmem:[#allocation7 + $0xe8] sm:$0xff]
    %v884 = vld [vmem:[#allocation7 + $0xf0] sm:$0xff]
    %v885 = vld [vmem:[#allocation7 + $0xf8] sm:$0xff]
    %v886 = vld [vmem:[#allocation7 + $0x100] sm:$0xff]
    %v887 = vld [vmem:[#allocation7 + $0x108] sm:$0xff]
    %v888 = vld [vmem:[#allocation7 + $0x110] sm:$0xff]
    %v889 = vld [vmem:[#allocation7 + $0x118] sm:$0xff]
    %v890 = vld [vmem:[#allocation7 + $0x120] sm:$0xff]
    %v891 = vld [vmem:[#allocation7 + $0x128] sm:$0xff]
    %v892 = vld [vmem:[#allocation7 + $0x130] sm:$0xff]
    %v893 = vld [vmem:[#allocation7 + $0x138] sm:$0xff]
    %v894 = vld [vmem:[#allocation7 + $0x140] sm:$0xff]
    %v895 = vld [vmem:[#allocation7 + $0x148] sm:$0xff]
    %v896 = vld [vmem:[#allocation7 + $0x150] sm:$0xff]
    %v897 = vld [vmem:[#allocation7 + $0x158] sm:$0xff]
    %v898 = vld [vmem:[#allocation7 + $0x160] sm:$0xff]
    %v899 = vld [vmem:[#allocation7 + $0x168] sm:$0xff]
    %v900 = vld [vmem:[#allocation7 + $0x170] sm:$0xff]
    %v901 = vld [vmem:[#allocation7 + $0x178] sm:$0xff]
    %v902 = vld [vmem:[#allocation7 + $0x180] sm:$0xff]
    %v903 = vld [vmem:[#allocation7 + $0x188] sm:$0xff]
    %v904 = vld [vmem:[#allocation7 + $0x190] sm:$0xff]
    %v905 = vld [vmem:[#allocation7 + $0x198] sm:$0xff]
    %v906 = vld [vmem:[#allocation7 + $0x1a0] sm:$0xff]
    %v907 = vld [vmem:[#allocation7 + $0x1a8] sm:$0xff]
    %v908 = vld [vmem:[#allocation7 + $0x1b0] sm:$0xff]
    %v909 = vld [vmem:[#allocation7 + $0x1b8] sm:$0xff]
    %v910 = vld [vmem:[#allocation7 + $0x1c0] sm:$0xff]
    %v911 = vld [vmem:[#allocation7 + $0x1c8] sm:$0xff]
    %v912 = vld [vmem:[#allocation7 + $0x1d0] sm:$0xff]
    %v913 = vld [vmem:[#allocation7 + $0x1d8] sm:$0xff]
    %v914 = vld [vmem:[#allocation7 + $0x1e0] sm:$0xff]
    %v915 = vld [vmem:[#allocation7 + $0x1e8] sm:$0xff]
    %v916 = vld [vmem:[#allocation7 + $0x1f0] sm:$0xff]
    %v917 = vld [vmem:[#allocation7 + $0x1f8] sm:$0xff]
    %v918 = vld [vmem:[#allocation7 + $0x200] sm:$0xff]
    %v919 = vld [vmem:[#allocation7 + $0x208] sm:$0xff]
    %v920 = vld [vmem:[#allocation7 + $0x210] sm:$0xff]
    %v921 = vld [vmem:[#allocation7 + $0x218] sm:$0xff]
    %v922 = vld [vmem:[#allocation7 + $0x220] sm:$0xff]
    %v923 = vld [vmem:[#allocation7 + $0x228] sm:$0xff]
    %v924 = vld [vmem:[#allocation7 + $0x230] sm:$0xff]
    %v925 = vld [vmem:[#allocation7 + $0x238] sm:$0xff]
    %v926 = vld [vmem:[#allocation7 + $0x240] sm:$0xff]
    %v927 = vld [vmem:[#allocation7 + $0x248] sm:$0xff]
    %v928 = vld [vmem:[#allocation7 + $0x250] sm:$0xff]
    %v929 = vld [vmem:[#allocation7 + $0x258] sm:$0xff]
    %v930 = vld [vmem:[#allocation7 + $0x260] sm:$0xff]
    %v931 = vld [vmem:[#allocation7 + $0x268] sm:$0xff]
    %v932 = vld [vmem:[#allocation7 + $0x270] sm:$0xff]
    %v933 = vld [vmem:[#allocation7 + $0x278] sm:$0xff]
    %v934 = vld [vmem:[#allocation7 + $0x280] sm:$0xff]
    %v935 = vld [vmem:[#allocation7 + $0x288] sm:$0xff]
    %v936 = vld [vmem:[#allocation7 + $0x290] sm:$0xff]
    %v937 = vld [vmem:[#allocation7 + $0x298] sm:$0xff]
    %v938 = vld [vmem:[#allocation7 + $0x2a0] sm:$0xff]
    %v939 = vld [vmem:[#allocation7 + $0x2a8] sm:$0xff]
    %v940 = vld [vmem:[#allocation7 + $0x2b0] sm:$0xff]
    %v941 = vld [vmem:[#allocation7 + $0x2b8] sm:$0xff]
    %v942 = vld [vmem:[#allocation7 + $0x2c0] sm:$0xff]
    %v943 = vld [vmem:[#allocation7 + $0x2c8] sm:$0xff]
    %v944 = vld [vmem:[#allocation7 + $0x2d0] sm:$0xff]
    %v945 = vld [vmem:[#allocation7 + $0x2d8] sm:$0xff]
    %v946 = vld [vmem:[#allocation7 + $0x2e0] sm:$0xff]
    %v947 = vld [vmem:[#allocation7 + $0x2e8] sm:$0xff]
    %v948 = vld [vmem:[#allocation7 + $0x2f0] sm:$0xff]
    %v949 = vld [vmem:[#allocation7 + $0x2f8] sm:$0xff]
    %v950 = vld [vmem:[#allocation7 + $0x300] sm:$0xff]
    %v951 = vld [vmem:[#allocation7 + $0x308] sm:$0xff]
    %v952 = vld [vmem:[#allocation7 + $0x310] sm:$0xff]
    %v953 = vld [vmem:[#allocation7 + $0x318] sm:$0xff]
    %v954 = vld [vmem:[#allocation7 + $0x320] sm:$0xff]
    %v955 = vld [vmem:[#allocation7 + $0x328] sm:$0xff]
    %v956 = vld [vmem:[#allocation7 + $0x330] sm:$0xff]
    %v957 = vld [vmem:[#allocation7 + $0x338] sm:$0xff]
    %v958 = vld [vmem:[#allocation7 + $0x340] sm:$0xff]
    %v959 = vld [vmem:[#allocation7 + $0x348] sm:$0xff]
    %v960 = vld [vmem:[#allocation7 + $0x350] sm:$0xff]
    %v961 = vld [vmem:[#allocation7 + $0x358] sm:$0xff]
    %v962 = vld [vmem:[#allocation7 + $0x360] sm:$0xff]
    %v963 = vld [vmem:[#allocation7 + $0x368] sm:$0xff]
    %v964 = vld [vmem:[#allocation7 + $0x370] sm:$0xff]
    %v965 = vld [vmem:[#allocation7 + $0x378] sm:$0xff]
    %v966 = vld [vmem:[#allocation7 + $0x380] sm:$0xff]
    %v967 = vld [vmem:[#allocation7 + $0x388] sm:$0xff]
    %v968 = vld [vmem:[#allocation7 + $0x390] sm:$0xff]
    %v969 = vld [vmem:[#allocation7 + $0x398] sm:$0xff]
    %v970 = vld [vmem:[#allocation7 + $0x3a0] sm:$0xff]
    %v971 = vld [vmem:[#allocation7 + $0x3a8] sm:$0xff]
    %v972 = vld [vmem:[#allocation7 + $0x3b0] sm:$0xff]
    %v973 = vld [vmem:[#allocation7 + $0x3b8] sm:$0xff]
    %v974 = vld [vmem:[#allocation7 + $0x3c0] sm:$0xff]
    %v975 = vld [vmem:[#allocation7 + $0x3c8] sm:$0xff]
    %v976 = vld [vmem:[#allocation7 + $0x3d0] sm:$0xff]
    %v977 = vld [vmem:[#allocation7 + $0x3d8] sm:$0xff]
    %v978 = vld [vmem:[#allocation7 + $0x3e0] sm:$0xff]
    %v979 = vld [vmem:[#allocation7 + $0x3e8] sm:$0xff]
    %v980 = vld [vmem:[#allocation7 + $0x3f0] sm:$0xff]
    %v981 = vld [vmem:[#allocation7 + $0x3f8] sm:$0xff]
    %v982 = vld [vmem:[#allocation7 + $0x400] sm:$0xff]
    %v983 = vld [vmem:[#allocation7 + $0x408] sm:$0xff]
    %v984 = vld [vmem:[#allocation7 + $0x410] sm:$0xff]
    %v985 = vld [vmem:[#allocation7 + $0x418] sm:$0xff]
    %v986 = vld [vmem:[#allocation7 + $0x420] sm:$0xff]
    %v987 = vld [vmem:[#allocation7 + $0x428] sm:$0xff]
    %v988 = vld [vmem:[#allocation7 + $0x430] sm:$0xff]
    %v989 = vld [vmem:[#allocation7 + $0x438] sm:$0xff]
    %v990 = vld [vmem:[#allocation7 + $0x440] sm:$0xff]
    %v991 = vld [vmem:[#allocation7 + $0x448] sm:$0xff]
    %v992 = vld [vmem:[#allocation7 + $0x450] sm:$0xff]
    %v993 = vld [vmem:[#allocation7 + $0x458] sm:$0xff]
    %v994 = vld [vmem:[#allocation7 + $0x460] sm:$0xff]
    %v995 = vld [vmem:[#allocation7 + $0x468] sm:$0xff]
    %v996 = vld [vmem:[#allocation7 + $0x470] sm:$0xff]
    %v997 = vld [vmem:[#allocation7 + $0x478] sm:$0xff]
    %998 = vmatprep.subr.mxu0 0.0
    %999 = vmatpush1.msra.mxu0 %v869
    %1000 = vmatprep.subr.mxu0 0.0
    %1001 = vmatpush1.msra.mxu0 %v868
    %1002 = vmatprep.subr.mxu0 0.0
    %1003 = vmatpush1.msra.mxu0 %v867
    %1004 = vmatprep.subr.mxu0 0.0
    %1005 = vmatpush1.msra.mxu0 %v866
    %1006 = vmatprep.subr.mxu0 0.0
    %1007 = vmatpush1.msra.mxu0 %v865
    %1008 = vmatprep.subr.mxu0 0.0
    %1009 = vmatpush1.msra.mxu0 %v864
    %1010 = vmatprep.subr.mxu0 0.0
    %1011 = vmatpush1.msra.mxu0 %v863
    %1012 = vmatprep.subr.mxu0 0.0
    %1013 = vmatpush1.msra.mxu0 %v862
    %1014 = vmatprep.subr.mxu0 0.0
    %1015 = vmatpush1.msra.mxu0 %v861
    %1016 = vmatprep.subr.mxu0 0.0
    %1017 = vmatpush1.msra.mxu0 %v860
    %1018 = vmatprep.subr.mxu0 0.0
    %1019 = vmatpush1.msra.mxu0 %v859
    %1020 = vmatprep.subr.mxu0 0.0
    %1021 = vmatpush1.msra.mxu0 %v858
    %1022 = vmatprep.subr.mxu0 0.0
    %1023 = vmatpush1.msra.mxu0 %v857
    %1024 = vmatprep.subr.mxu0 0.0
    %1025 = vmatpush1.msra.mxu0 %v856
    %1026 = vmatprep.subr.mxu0 0.0
    %1027 = vmatpush1.msra.mxu0 %v855
    %1028 = vmatprep.subr.mxu0 0.0
    %1029 = vmatpush1.msra.mxu0 %v854
    %1030 = vmatprep.subr.mxu0 0.0
    %1031 = vmatpush2.msra.mxu0 %v885
    %1032 = vmatprep.subr.mxu0 0.0
    %1033 = vmatpush2.msra.mxu0 %v884
    %1034 = vmatprep.subr.mxu0 0.0
    %1035 = vmatpush2.msra.mxu0 %v883
    %1036 = vmatprep.subr.mxu0 0.0
    %1037 = vmatpush2.msra.mxu0 %v882
    %1038 = vmatprep.subr.mxu0 0.0
    %1039 = vmatpush2.msra.mxu0 %v881
    %1040 = vmatprep.subr.mxu0 0.0
    %1041 = vmatpush2.msra.mxu0 %v880
    %1042 = vmatprep.subr.mxu0 0.0
    %1043 = vmatpush2.msra.mxu0 %v879
    %1044 = vmatprep.subr.mxu0 0.0
    %1045 = vmatpush2.msra.mxu0 %v878
    %1046 = vmatprep.subr.mxu0 0.0
    %1047 = vmatpush2.msra.mxu0 %v877
    %1048 = vmatprep.subr.mxu0 0.0
    %1049 = vmatpush2.msra.mxu0 %v876
    %1050 = vmatprep.subr.mxu0 0.0
    %1051 = vmatpush2.msra.mxu0 %v875
    %1052 = vmatprep.subr.mxu0 0.0
    %1053 = vmatpush2.msra.mxu0 %v874
    %1054 = vmatprep.subr.mxu0 0.0
    %1055 = vmatpush2.msra.mxu0 %v873
    %1056 = vmatprep.subr.mxu0 0.0
    %1057 = vmatpush2.msra.mxu0 %v872
    %1058 = vmatprep.subr.mxu0 0.0
    %1059 = vmatpush2.msra.mxu0 %v871
    %1060 = vmatprep.subr.mxu0 0.0
    %1061 = vmatpush2.msra.mxu0 %v870
    %1062 = vmatprep.mubr.f32.mxu0 %v161
    %1063 = vmatmul.mubr.f32.gmra.mxu0 %v160
    %v1064 = vpop.f32.mrf.mxu0
    %v1065 = vadd.f32 0.0, %v1064
    %v1066 = vpop.f32.mrf.mxu0
    %1067 = vmatprep.mubr.f32.mxu0 %v180
    %1068 = vmatmul.mubr.f32.gmra.mxu0 %v179
    %v1069 = vpop.f32.mrf.mxu0
    %v1070 = vadd.f32 0.0, %v1069
    %v1071 = vpop.f32.mrf.mxu0
    %1072 = vmatprep.mubr.f32.mxu0 %v199
    %1073 = vmatmul.mubr.f32.gmra.mxu0 %v198
    %v1074 = vpop.f32.mrf.mxu0
    %v1075 = vadd.f32 0.0, %v1074
    %v1076 = vpop.f32.mrf.mxu0
    %1077 = vmatprep.mubr.f32.mxu0 %v218
    %1078 = vmatmul.mubr.f32.gmra.mxu0 %v217
    %v1079 = vpop.f32.mrf.mxu0
    %v1080 = vadd.f32 0.0, %v1079
    %v1081 = vpop.f32.mrf.mxu0
    %1082 = vmatprep.mubr.f32.mxu0 %v237
    %1083 = vmatmul.mubr.f32.gmra.mxu0 %v236
    %v1084 = vpop.f32.mrf.mxu0
    %v1085 = vadd.f32 0.0, %v1084
    %v1086 = vpop.f32.mrf.mxu0
    %1087 = vmatprep.mubr.f32.mxu0 %v256
    %1088 = vmatmul.mubr.f32.gmra.mxu0 %v255
    %v1089 = vpop.f32.mrf.mxu0
    %v1090 = vadd.f32 0.0, %v1089
    %v1091 = vpop.f32.mrf.mxu0
    %1092 = vmatprep.mubr.f32.mxu0 %v275
    %1093 = vmatmul.mubr.f32.gmra.mxu0 %v274
    %v1094 = vpop.f32.mrf.mxu0
    %v1095 = vadd.f32 0.0, %v1094
    %v1096 = vpop.f32.mrf.mxu0
    %1097 = vmatprep.mubr.f32.mxu0 %v294
    %1098 = vmatmul.mubr.f32.gmra.mxu0 %v293
    %v1099 = vpop.f32.mrf.mxu0
    %v1100 = vadd.f32 0.0, %v1099
    %v1101 = vpop.f32.mrf.mxu0
    %1102 = vdwg.mxu0
    %1103 = vmatprep.subr.mxu0 0.0
    %1104 = vmatpush1.msra.mxu0 %v901
    %1105 = vmatprep.subr.mxu0 0.0
    %1106 = vmatpush1.msra.mxu0 %v900
    %1107 = vmatprep.subr.mxu0 0.0
    %1108 = vmatpush1.msra.mxu0 %v899
    %1109 = vmatprep.subr.mxu0 0.0
    %1110 = vmatpush1.msra.mxu0 %v898
    %1111 = vmatprep.subr.mxu0 0.0
    %1112 = vmatpush1.msra.mxu0 %v897
    %1113 = vmatprep.subr.mxu0 0.0
    %1114 = vmatpush1.msra.mxu0 %v896
    %1115 = vmatprep.subr.mxu0 0.0
    %1116 = vmatpush1.msra.mxu0 %v895
    %1117 = vmatprep.subr.mxu0 0.0
    %1118 = vmatpush1.msra.mxu0 %v894
    %1119 = vmatprep.subr.mxu0 0.0
    %1120 = vmatpush1.msra.mxu0 %v893
    %1121 = vmatprep.subr.mxu0 0.0
    %1122 = vmatpush1.msra.mxu0 %v892
    %1123 = vmatprep.subr.mxu0 0.0
    %1124 = vmatpush1.msra.mxu0 %v891
    %1125 = vmatprep.subr.mxu0 0.0
    %1126 = vmatpush1.msra.mxu0 %v890
    %1127 = vmatprep.subr.mxu0 0.0
    %1128 = vmatpush1.msra.mxu0 %v889
    %1129 = vmatprep.subr.mxu0 0.0
    %1130 = vmatpush1.msra.mxu0 %v888
    %1131 = vmatprep.subr.mxu0 0.0
    %1132 = vmatpush1.msra.mxu0 %v887
    %1133 = vmatprep.subr.mxu0 0.0
    %1134 = vmatpush1.msra.mxu0 %v886
    %1135 = vmatprep.subr.mxu0 0.0
    %1136 = vmatpush2.msra.mxu0 %v917
    %1137 = vmatprep.subr.mxu0 0.0
    %1138 = vmatpush2.msra.mxu0 %v916
    %1139 = vmatprep.subr.mxu0 0.0
    %1140 = vmatpush2.msra.mxu0 %v915
    %1141 = vmatprep.subr.mxu0 0.0
    %1142 = vmatpush2.msra.mxu0 %v914
    %1143 = vmatprep.subr.mxu0 0.0
    %1144 = vmatpush2.msra.mxu0 %v913
    %1145 = vmatprep.subr.mxu0 0.0
    %1146 = vmatpush2.msra.mxu0 %v912
    %1147 = vmatprep.subr.mxu0 0.0
    %1148 = vmatpush2.msra.mxu0 %v911
    %1149 = vmatprep.subr.mxu0 0.0
    %1150 = vmatpush2.msra.mxu0 %v910
    %1151 = vmatprep.subr.mxu0 0.0
    %1152 = vmatpush2.msra.mxu0 %v909
    %1153 = vmatprep.subr.mxu0 0.0
    %1154 = vmatpush2.msra.mxu0 %v908
    %1155 = vmatprep.subr.mxu0 0.0
    %1156 = vmatpush2.msra.mxu0 %v907
    %1157 = vmatprep.subr.mxu0 0.0
    %1158 = vmatpush2.msra.mxu0 %v906
    %1159 = vmatprep.subr.mxu0 0.0
    %1160 = vmatpush2.msra.mxu0 %v905
    %1161 = vmatprep.subr.mxu0 0.0
    %1162 = vmatpush2.msra.mxu0 %v904
    %1163 = vmatprep.subr.mxu0 0.0
    %1164 = vmatpush2.msra.mxu0 %v903
    %1165 = vmatprep.subr.mxu0 0.0
    %1166 = vmatpush2.msra.mxu0 %v902
    %1167 = vmatprep.mubr.f32.mxu0 %v163
    %1168 = vmatmul.mubr.f32.gmra.mxu0 %v162
    %v1169 = vpop.f32.mrf.mxu0
    %v1170 = vadd.f32 %v1065, %v1169
    %v1171 = vpop.f32.mrf.mxu0
    %1172 = vmatprep.mubr.f32.mxu0 %v182
    %1173 = vmatmul.mubr.f32.gmra.mxu0 %v181
    %v1174 = vpop.f32.mrf.mxu0
    %v1175 = vadd.f32 %v1070, %v1174
    %v1176 = vpop.f32.mrf.mxu0
    %1177 = vmatprep.mubr.f32.mxu0 %v201
    %1178 = vmatmul.mubr.f32.gmra.mxu0 %v200
    %v1179 = vpop.f32.mrf.mxu0
    %v1180 = vadd.f32 %v1075, %v1179
    %v1181 = vpop.f32.mrf.mxu0
    %1182 = vmatprep.mubr.f32.mxu0 %v220
    %1183 = vmatmul.mubr.f32.gmra.mxu0 %v219
    %v1184 = vpop.f32.mrf.mxu0
    %v1185 = vadd.f32 %v1080, %v1184
    %v1186 = vpop.f32.mrf.mxu0
    %1187 = vmatprep.mubr.f32.mxu0 %v239
    %1188 = vmatmul.mubr.f32.gmra.mxu0 %v238
    %v1189 = vpop.f32.mrf.mxu0
    %v1190 = vadd.f32 %v1085, %v1189
    %v1191 = vpop.f32.mrf.mxu0
    %1192 = vmatprep.mubr.f32.mxu0 %v258
    %1193 = vmatmul.mubr.f32.gmra.mxu0 %v257
    %v1194 = vpop.f32.mrf.mxu0
    %v1195 = vadd.f32 %v1090, %v1194
    %v1196 = vpop.f32.mrf.mxu0
    %1197 = vmatprep.mubr.f32.mxu0 %v277
    %1198 = vmatmul.mubr.f32.gmra.mxu0 %v276
    %v1199 = vpop.f32.mrf.mxu0
    %v1200 = vadd.f32 %v1095, %v1199
    %v1201 = vpop.f32.mrf.mxu0
    %1202 = vmatprep.mubr.f32.mxu0 %v296
    %1203 = vmatmul.mubr.f32.gmra.mxu0 %v295
    %v1204 = vpop.f32.mrf.mxu0
    %v1205 = vadd.f32 %v1100, %v1204
    %v1206 = vpop.f32.mrf.mxu0
    %1207 = vdwg.mxu0
    %1208 = vmatprep.subr.mxu0 0.0
    %1209 = vmatpush1.msra.mxu0 %v933
    %1210 = vmatprep.subr.mxu0 0.0
    %1211 = vmatpush1.msra.mxu0 %v932
    %1212 = vmatprep.subr.mxu0 0.0
    %1213 = vmatpush1.msra.mxu0 %v931
    %1214 = vmatprep.subr.mxu0 0.0
    %1215 = vmatpush1.msra.mxu0 %v930
    %1216 = vmatprep.subr.mxu0 0.0
    %1217 = vmatpush1.msra.mxu0 %v929
    %1218 = vmatprep.subr.mxu0 0.0
    %1219 = vmatpush1.msra.mxu0 %v928
    %1220 = vmatprep.subr.mxu0 0.0
    %1221 = vmatpush1.msra.mxu0 %v927
    %1222 = vmatprep.subr.mxu0 0.0
    %1223 = vmatpush1.msra.mxu0 %v926
    %1224 = vmatprep.subr.mxu0 0.0
    %1225 = vmatpush1.msra.mxu0 %v925
    %1226 = vmatprep.subr.mxu0 0.0
    %1227 = vmatpush1.msra.mxu0 %v924
    %1228 = vmatprep.subr.mxu0 0.0
    %1229 = vmatpush1.msra.mxu0 %v923
    %1230 = vmatprep.subr.mxu0 0.0
    %1231 = vmatpush1.msra.mxu0 %v922
    %1232 = vmatprep.subr.mxu0 0.0
    %1233 = vmatpush1.msra.mxu0 %v921
    %1234 = vmatprep.subr.mxu0 0.0
    %1235 = vmatpush1.msra.mxu0 %v920
    %1236 = vmatprep.subr.mxu0 0.0
    %1237 = vmatpush1.msra.mxu0 %v919
    %1238 = vmatprep.subr.mxu0 0.0
    %1239 = vmatpush1.msra.mxu0 %v918
    %1240 = vmatprep.subr.mxu0 0.0
    %1241 = vmatpush2.msra.mxu0 %v949
    %1242 = vmatprep.subr.mxu0 0.0
    %1243 = vmatpush2.msra.mxu0 %v948
    %1244 = vmatprep.subr.mxu0 0.0
    %1245 = vmatpush2.msra.mxu0 %v947
    %1246 = vmatprep.subr.mxu0 0.0
    %1247 = vmatpush2.msra.mxu0 %v946
    %1248 = vmatprep.subr.mxu0 0.0
    %1249 = vmatpush2.msra.mxu0 %v945
    %1250 = vmatprep.subr.mxu0 0.0
    %1251 = vmatpush2.msra.mxu0 %v944
    %1252 = vmatprep.subr.mxu0 0.0
    %1253 = vmatpush2.msra.mxu0 %v943
    %1254 = vmatprep.subr.mxu0 0.0
    %1255 = vmatpush2.msra.mxu0 %v942
    %1256 = vmatprep.subr.mxu0 0.0
    %1257 = vmatpush2.msra.mxu0 %v941
    %1258 = vmatprep.subr.mxu0 0.0
    %1259 = vmatpush2.msra.mxu0 %v940
    %1260 = vmatprep.subr.mxu0 0.0
    %1261 = vmatpush2.msra.mxu0 %v939
    %1262 = vmatprep.subr.mxu0 0.0
    %1263 = vmatpush2.msra.mxu0 %v938
    %1264 = vmatprep.subr.mxu0 0.0
    %1265 = vmatpush2.msra.mxu0 %v937
    %1266 = vmatprep.subr.mxu0 0.0
    %1267 = vmatpush2.msra.mxu0 %v936
    %1268 = vmatprep.subr.mxu0 0.0
    %1269 = vmatpush2.msra.mxu0 %v935
    %1270 = vmatprep.subr.mxu0 0.0
    %1271 = vmatpush2.msra.mxu0 %v934
    %1272 = vmatprep.mubr.f32.mxu0 %v165
    %1273 = vmatmul.mubr.f32.gmra.mxu0 %v164
    %v1274 = vpop.f32.mrf.mxu0
    %v1275 = vadd.f32 %v1170, %v1274
    %v1276 = vpop.f32.mrf.mxu0
    %1277 = vmatprep.mubr.f32.mxu0 %v184
    %1278 = vmatmul.mubr.f32.gmra.mxu0 %v183
    %v1279 = vpop.f32.mrf.mxu0
    %v1280 = vadd.f32 %v1175, %v1279
    %v1281 = vpop.f32.mrf.mxu0
    %1282 = vmatprep.mubr.f32.mxu0 %v203
    %1283 = vmatmul.mubr.f32.gmra.mxu0 %v202
    %v1284 = vpop.f32.mrf.mxu0
    %v1285 = vadd.f32 %v1180, %v1284
    %v1286 = vpop.f32.mrf.mxu0
    %1287 = vmatprep.mubr.f32.mxu0 %v222
    %1288 = vmatmul.mubr.f32.gmra.mxu0 %v221
    %v1289 = vpop.f32.mrf.mxu0
    %v1290 = vadd.f32 %v1185, %v1289
    %v1291 = vpop.f32.mrf.mxu0
    %1292 = vmatprep.mubr.f32.mxu0 %v241
    %1293 = vmatmul.mubr.f32.gmra.mxu0 %v240
    %v1294 = vpop.f32.mrf.mxu0
    %v1295 = vadd.f32 %v1190, %v1294
    %v1296 = vpop.f32.mrf.mxu0
    %1297 = vmatprep.mubr.f32.mxu0 %v260
    %1298 = vmatmul.mubr.f32.gmra.mxu0 %v259
    %v1299 = vpop.f32.mrf.mxu0
    %v1300 = vadd.f32 %v1195, %v1299
    %v1301 = vpop.f32.mrf.mxu0
    %1302 = vmatprep.mubr.f32.mxu0 %v279
    %1303 = vmatmul.mubr.f32.gmra.mxu0 %v278
    %v1304 = vpop.f32.mrf.mxu0
    %v1305 = vadd.f32 %v1200, %v1304
    %v1306 = vpop.f32.mrf.mxu0
    %1307 = vmatprep.mubr.f32.mxu0 %v298
    %1308 = vmatmul.mubr.f32.gmra.mxu0 %v297
    %v1309 = vpop.f32.mrf.mxu0
    %v1310 = vadd.f32 %v1205, %v1309
    %v1311 = vpop.f32.mrf.mxu0
    %1312 = vdwg.mxu0
    %1313 = vmatprep.subr.mxu0 0.0
    %1314 = vmatpush1.msra.mxu0 %v965
    %1315 = vmatprep.subr.mxu0 0.0
    %1316 = vmatpush1.msra.mxu0 %v964
    %1317 = vmatprep.subr.mxu0 0.0
    %1318 = vmatpush1.msra.mxu0 %v963
    %1319 = vmatprep.subr.mxu0 0.0
    %1320 = vmatpush1.msra.mxu0 %v962
    %1321 = vmatprep.subr.mxu0 0.0
    %1322 = vmatpush1.msra.mxu0 %v961
    %1323 = vmatprep.subr.mxu0 0.0
    %1324 = vmatpush1.msra.mxu0 %v960
    %1325 = vmatprep.subr.mxu0 0.0
    %1326 = vmatpush1.msra.mxu0 %v959
    %1327 = vmatprep.subr.mxu0 0.0
    %1328 = vmatpush1.msra.mxu0 %v958
    %1329 = vmatprep.subr.mxu0 0.0
    %1330 = vmatpush1.msra.mxu0 %v957
    %1331 = vmatprep.subr.mxu0 0.0
    %1332 = vmatpush1.msra.mxu0 %v956
    %1333 = vmatprep.subr.mxu0 0.0
    %1334 = vmatpush1.msra.mxu0 %v955
    %1335 = vmatprep.subr.mxu0 0.0
    %1336 = vmatpush1.msra.mxu0 %v954
    %1337 = vmatprep.subr.mxu0 0.0
    %1338 = vmatpush1.msra.mxu0 %v953
    %1339 = vmatprep.subr.mxu0 0.0
    %1340 = vmatpush1.msra.mxu0 %v952
    %1341 = vmatprep.subr.mxu0 0.0
    %1342 = vmatpush1.msra.mxu0 %v951
    %1343 = vmatprep.subr.mxu0 0.0
    %1344 = vmatpush1.msra.mxu0 %v950
    %1345 = vmatprep.subr.mxu0 0.0
    %1346 = vmatpush2.msra.mxu0 %v981
    %1347 = vmatprep.subr.mxu0 0.0
    %1348 = vmatpush2.msra.mxu0 %v980
    %1349 = vmatprep.subr.mxu0 0.0
    %1350 = vmatpush2.msra.mxu0 %v979
    %1351 = vmatprep.subr.mxu0 0.0
    %1352 = vmatpush2.msra.mxu0 %v978
    %1353 = vmatprep.subr.mxu0 0.0
    %1354 = vmatpush2.msra.mxu0 %v977
    %1355 = vmatprep.subr.mxu0 0.0
    %1356 = vmatpush2.msra.mxu0 %v976
    %1357 = vmatprep.subr.mxu0 0.0
    %1358 = vmatpush2.msra.mxu0 %v975
    %1359 = vmatprep.subr.mxu0 0.0
    %1360 = vmatpush2.msra.mxu0 %v974
    %1361 = vmatprep.subr.mxu0 0.0
    %1362 = vmatpush2.msra.mxu0 %v973
    %1363 = vmatprep.subr.mxu0 0.0
    %1364 = vmatpush2.msra.mxu0 %v972
    %1365 = vmatprep.subr.mxu0 0.0
    %1366 = vmatpush2.msra.mxu0 %v971
    %1367 = vmatprep.subr.mxu0 0.0
    %1368 = vmatpush2.msra.mxu0 %v970
    %1369 = vmatprep.subr.mxu0 0.0
    %1370 = vmatpush2.msra.mxu0 %v969
    %1371 = vmatprep.subr.mxu0 0.0
    %1372 = vmatpush2.msra.mxu0 %v968
    %1373 = vmatprep.subr.mxu0 0.0
    %1374 = vmatpush2.msra.mxu0 %v967
    %1375 = vmatprep.subr.mxu0 0.0
    %1376 = vmatpush2.msra.mxu0 %v966
    %1377 = vmatprep.mubr.f32.mxu0 %v167
    %1378 = vmatmul.mubr.f32.gmra.mxu0 %v166
    %v1379 = vpop.f32.mrf.mxu0
    %v1380 = vadd.f32 %v1275, %v1379
    %v1381 = vpop.f32.mrf.mxu0
    %1382 = vmatprep.mubr.f32.mxu0 %v186
    %1383 = vmatmul.mubr.f32.gmra.mxu0 %v185
    %v1384 = vpop.f32.mrf.mxu0
    %v1385 = vadd.f32 %v1280, %v1384
    %v1386 = vpop.f32.mrf.mxu0
    %1387 = vmatprep.mubr.f32.mxu0 %v205
    %1388 = vmatmul.mubr.f32.gmra.mxu0 %v204
    %v1389 = vpop.f32.mrf.mxu0
    %v1390 = vadd.f32 %v1285, %v1389
    %v1391 = vpop.f32.mrf.mxu0
    %1392 = vmatprep.mubr.f32.mxu0 %v224
    %1393 = vmatmul.mubr.f32.gmra.mxu0 %v223
    %v1394 = vpop.f32.mrf.mxu0
    %v1395 = vadd.f32 %v1290, %v1394
    %v1396 = vpop.f32.mrf.mxu0
    %1397 = vmatprep.mubr.f32.mxu0 %v243
    %1398 = vmatmul.mubr.f32.gmra.mxu0 %v242
    %v1399 = vpop.f32.mrf.mxu0
    %v1400 = vadd.f32 %v1295, %v1399
    %v1401 = vpop.f32.mrf.mxu0
    %1402 = vmatprep.mubr.f32.mxu0 %v262
    %1403 = vmatmul.mubr.f32.gmra.mxu0 %v261
    %v1404 = vpop.f32.mrf.mxu0
    %v1405 = vadd.f32 %v1300, %v1404
    %v1406 = vpop.f32.mrf.mxu0
    %1407 = vmatprep.mubr.f32.mxu0 %v281
    %1408 = vmatmul.mubr.f32.gmra.mxu0 %v280
    %v1409 = vpop.f32.mrf.mxu0
    %v1410 = vadd.f32 %v1305, %v1409
    %v1411 = vpop.f32.mrf.mxu0
    %1412 = vmatprep.mubr.f32.mxu0 %v300
    %1413 = vmatmul.mubr.f32.gmra.mxu0 %v299
    %v1414 = vpop.f32.mrf.mxu0
    %v1415 = vadd.f32 %v1310, %v1414
    %v1416 = vpop.f32.mrf.mxu0
    %1417 = vdwg.mxu0
    %1418 = vmatprep.subr.mxu0 0.0
    %1419 = vmatpush1.msra.mxu0 %v997
    %1420 = vmatprep.subr.mxu0 0.0
    %1421 = vmatpush1.msra.mxu0 %v996
    %1422 = vmatprep.subr.mxu0 0.0
    %1423 = vmatpush1.msra.mxu0 %v995
    %1424 = vmatprep.subr.mxu0 0.0
    %1425 = vmatpush1.msra.mxu0 %v994
    %1426 = vmatprep.subr.mxu0 0.0
    %1427 = vmatpush1.msra.mxu0 %v993
    %1428 = vmatprep.subr.mxu0 0.0
    %1429 = vmatpush1.msra.mxu0 %v992
    %1430 = vmatprep.subr.mxu0 0.0
    %1431 = vmatpush1.msra.mxu0 %v991
    %1432 = vmatprep.subr.mxu0 0.0
    %1433 = vmatpush1.msra.mxu0 %v990
    %1434 = vmatprep.subr.mxu0 0.0
    %1435 = vmatpush1.msra.mxu0 %v989
    %1436 = vmatprep.subr.mxu0 0.0
    %1437 = vmatpush1.msra.mxu0 %v988
    %1438 = vmatprep.subr.mxu0 0.0
    %1439 = vmatpush1.msra.mxu0 %v987
    %1440 = vmatprep.subr.mxu0 0.0
    %1441 = vmatpush1.msra.mxu0 %v986
    %1442 = vmatprep.subr.mxu0 0.0
    %1443 = vmatpush1.msra.mxu0 %v985
    %1444 = vmatprep.subr.mxu0 0.0
    %1445 = vmatpush1.msra.mxu0 %v984
    %1446 = vmatprep.subr.mxu0 0.0
    %1447 = vmatpush1.msra.mxu0 %v983
    %1448 = vmatprep.subr.mxu0 0.0
    %1449 = vmatpush1.msra.mxu0 %v982
    %1450 = vmatprep.subr.mxu0 0.0
    %1451 = vmatpush2.msra.mxu0 0.0
    %1452 = vmatprep.subr.mxu0 0.0
    %1453 = vmatpush2.msra.mxu0 0.0
    %1454 = vmatprep.subr.mxu0 0.0
    %1455 = vmatpush2.msra.mxu0 0.0
    %1456 = vmatprep.subr.mxu0 0.0
    %1457 = vmatpush2.msra.mxu0 0.0
    %1458 = vmatprep.subr.mxu0 0.0
    %1459 = vmatpush2.msra.mxu0 0.0
    %1460 = vmatprep.subr.mxu0 0.0
    %1461 = vmatpush2.msra.mxu0 0.0
    %1462 = vmatprep.subr.mxu0 0.0
    %1463 = vmatpush2.msra.mxu0 0.0
    %1464 = vmatprep.subr.mxu0 0.0
    %1465 = vmatpush2.msra.mxu0 0.0
    %1466 = vmatprep.subr.mxu0 0.0
    %1467 = vmatpush2.msra.mxu0 0.0
    %1468 = vmatprep.subr.mxu0 0.0
    %1469 = vmatpush2.msra.mxu0 0.0
    %1470 = vmatprep.subr.mxu0 0.0
    %1471 = vmatpush2.msra.mxu0 0.0
    %1472 = vmatprep.subr.mxu0 0.0
    %1473 = vmatpush2.msra.mxu0 0.0
    %1474 = vmatprep.subr.mxu0 0.0
    %1475 = vmatpush2.msra.mxu0 0.0
    %1476 = vmatprep.subr.mxu0 0.0
    %1477 = vmatpush2.msra.mxu0 0.0
    %1478 = vmatprep.subr.mxu0 0.0
    %1479 = vmatpush2.msra.mxu0 0.0
    %1480 = vmatprep.subr.mxu0 0.0
    %1481 = vmatpush2.msra.mxu0 0.0
    %1482 = vmatprep.mubr.f32.mxu0 0.0
    %1483 = vmatmul.mubr.f32.gmra.mxu0 %v168
    %v1484 = vpop.f32.mrf.mxu0
    %v1485 = vadd.f32 %v1380, %v1484
    %v1486 = vpop.f32.mrf.mxu0
    %1487 = vmatprep.mubr.f32.mxu0 0.0
    %1488 = vmatmul.mubr.f32.gmra.mxu0 %v187
    %v1489 = vpop.f32.mrf.mxu0
    %v1490 = vadd.f32 %v1385, %v1489
    %v1491 = vpop.f32.mrf.mxu0
    %1492 = vmatprep.mubr.f32.mxu0 0.0
    %1493 = vmatmul.mubr.f32.gmra.mxu0 %v206
    %v1494 = vpop.f32.mrf.mxu0
    %v1495 = vadd.f32 %v1390, %v1494
    %v1496 = vpop.f32.mrf.mxu0
    %1497 = vmatprep.mubr.f32.mxu0 0.0
    %1498 = vmatmul.mubr.f32.gmra.mxu0 %v225
    %v1499 = vpop.f32.mrf.mxu0
    %v1500 = vadd.f32 %v1395, %v1499
    %v1501 = vpop.f32.mrf.mxu0
    %1502 = vmatprep.mubr.f32.mxu0 0.0
    %1503 = vmatmul.mubr.f32.gmra.mxu0 %v244
    %v1504 = vpop.f32.mrf.mxu0
    %v1505 = vadd.f32 %v1400, %v1504
    %v1506 = vpop.f32.mrf.mxu0
    %1507 = vmatprep.mubr.f32.mxu0 0.0
    %1508 = vmatmul.mubr.f32.gmra.mxu0 %v263
    %v1509 = vpop.f32.mrf.mxu0
    %v1510 = vadd.f32 %v1405, %v1509
    %v1511 = vpop.f32.mrf.mxu0
    %1512 = vmatprep.mubr.f32.mxu0 0.0
    %1513 = vmatmul.mubr.f32.gmra.mxu0 %v282
    %v1514 = vpop.f32.mrf.mxu0
    %v1515 = vadd.f32 %v1410, %v1514
    %v1516 = vpop.f32.mrf.mxu0
    %1517 = vmatprep.mubr.f32.mxu0 0.0
    %1518 = vmatmul.mubr.f32.gmra.mxu0 %v301
    %v1519 = vpop.f32.mrf.mxu0
    %v1520 = vadd.f32 %v1415, %v1519
    %v1521 = vpop.f32.mrf.mxu0
    %1522 = vdwg.mxu0
    %v1523 = vld [vmem:[#allocation8] sm:$0xff]
    %v1524 = vld [vmem:[#allocation8 + $0x8] sm:$0xff]
    %v1525 = vld [vmem:[#allocation8 + $0x10] sm:$0xff]
    %v1526 = vld [vmem:[#allocation8 + $0x18] sm:$0xff]
    %v1527 = vld [vmem:[#allocation8 + $0x20] sm:$0xff]
    %v1528 = vld [vmem:[#allocation8 + $0x28] sm:$0xff]
    %v1529 = vld [vmem:[#allocation8 + $0x30] sm:$0xff]
    %v1530 = vld [vmem:[#allocation8 + $0x38] sm:$0xff]
    %v1531 = vld [vmem:[#allocation8 + $0x40] sm:$0xff]
    %v1532 = vld [vmem:[#allocation8 + $0x48] sm:$0xff]
    %v1533 = vld [vmem:[#allocation8 + $0x50] sm:$0xff]
    %v1534 = vld [vmem:[#allocation8 + $0x58] sm:$0xff]
    %v1535 = vld [vmem:[#allocation8 + $0x60] sm:$0xff]
    %v1536 = vld [vmem:[#allocation8 + $0x68] sm:$0xff]
    %v1537 = vld [vmem:[#allocation8 + $0x70] sm:$0xff]
    %v1538 = vld [vmem:[#allocation8 + $0x78] sm:$0xff]
    %v1539 = vld [vmem:[#allocation8 + $0x80] sm:$0xff]
    %v1540 = vld [vmem:[#allocation8 + $0x88] sm:$0xff]
    %v1541 = vld [vmem:[#allocation8 + $0x90] sm:$0xff]
    %v1542 = vld [vmem:[#allocation8 + $0x98] sm:$0xff]
    %v1543 = vld [vmem:[#allocation8 + $0xa0] sm:$0xff]
    %v1544 = vld [vmem:[#allocation8 + $0xa8] sm:$0xff]
    %v1545 = vld [vmem:[#allocation8 + $0xb0] sm:$0xff]
    %v1546 = vld [vmem:[#allocation8 + $0xb8] sm:$0xff]
    %v1547 = vld [vmem:[#allocation8 + $0xc0] sm:$0xff]
    %v1548 = vld [vmem:[#allocation8 + $0xc8] sm:$0xff]
    %v1549 = vld [vmem:[#allocation8 + $0xd0] sm:$0xff]
    %v1550 = vld [vmem:[#allocation8 + $0xd8] sm:$0xff]
    %v1551 = vld [vmem:[#allocation8 + $0xe0] sm:$0xff]
    %v1552 = vld [vmem:[#allocation8 + $0xe8] sm:$0xff]
    %v1553 = vld [vmem:[#allocation8 + $0xf0] sm:$0xff]
    %v1554 = vld [vmem:[#allocation8 + $0xf8] sm:$0xff]
    %v1555 = vld [vmem:[#allocation8 + $0x100] sm:$0xff]
    %v1556 = vld [vmem:[#allocation8 + $0x108] sm:$0xff]
    %v1557 = vld [vmem:[#allocation8 + $0x110] sm:$0xff]
    %v1558 = vld [vmem:[#allocation8 + $0x118] sm:$0xff]
    %v1559 = vld [vmem:[#allocation8 + $0x120] sm:$0xff]
    %v1560 = vld [vmem:[#allocation8 + $0x128] sm:$0xff]
    %v1561 = vld [vmem:[#allocation8 + $0x130] sm:$0xff]
    %v1562 = vld [vmem:[#allocation8 + $0x138] sm:$0xff]
    %v1563 = vld [vmem:[#allocation8 + $0x140] sm:$0xff]
    %v1564 = vld [vmem:[#allocation8 + $0x148] sm:$0xff]
    %v1565 = vld [vmem:[#allocation8 + $0x150] sm:$0xff]
    %v1566 = vld [vmem:[#allocation8 + $0x158] sm:$0xff]
    %v1567 = vld [vmem:[#allocation8 + $0x160] sm:$0xff]
    %v1568 = vld [vmem:[#allocation8 + $0x168] sm:$0xff]
    %v1569 = vld [vmem:[#allocation8 + $0x170] sm:$0xff]
    %v1570 = vld [vmem:[#allocation8 + $0x178] sm:$0xff]
    %v1571 = vld [vmem:[#allocation8 + $0x180] sm:$0xff]
    %v1572 = vld [vmem:[#allocation8 + $0x188] sm:$0xff]
    %v1573 = vld [vmem:[#allocation8 + $0x190] sm:$0xff]
    %v1574 = vld [vmem:[#allocation8 + $0x198] sm:$0xff]
    %v1575 = vld [vmem:[#allocation8 + $0x1a0] sm:$0xff]
    %v1576 = vld [vmem:[#allocation8 + $0x1a8] sm:$0xff]
    %v1577 = vld [vmem:[#allocation8 + $0x1b0] sm:$0xff]
    %v1578 = vld [vmem:[#allocation8 + $0x1b8] sm:$0xff]
    %v1579 = vld [vmem:[#allocation8 + $0x1c0] sm:$0xff]
    %v1580 = vld [vmem:[#allocation8 + $0x1c8] sm:$0xff]
    %v1581 = vld [vmem:[#allocation8 + $0x1d0] sm:$0xff]
    %v1582 = vld [vmem:[#allocation8 + $0x1d8] sm:$0xff]
    %v1583 = vld [vmem:[#allocation8 + $0x1e0] sm:$0xff]
    %v1584 = vld [vmem:[#allocation8 + $0x1e8] sm:$0xff]
    %v1585 = vld [vmem:[#allocation8 + $0x1f0] sm:$0xff]
    %v1586 = vld [vmem:[#allocation8 + $0x1f8] sm:$0xff]
    %v1587 = vld [vmem:[#allocation8 + $0x200] sm:$0xff]
    %v1588 = vld [vmem:[#allocation8 + $0x208] sm:$0xff]
    %v1589 = vld [vmem:[#allocation8 + $0x210] sm:$0xff]
    %v1590 = vld [vmem:[#allocation8 + $0x218] sm:$0xff]
    %v1591 = vld [vmem:[#allocation8 + $0x220] sm:$0xff]
    %v1592 = vld [vmem:[#allocation8 + $0x228] sm:$0xff]
    %v1593 = vld [vmem:[#allocation8 + $0x230] sm:$0xff]
    %v1594 = vld [vmem:[#allocation8 + $0x238] sm:$0xff]
    %v1595 = vld [vmem:[#allocation8 + $0x240] sm:$0xff]
    %v1596 = vld [vmem:[#allocation8 + $0x248] sm:$0xff]
    %v1597 = vld [vmem:[#allocation8 + $0x250] sm:$0xff]
    %v1598 = vld [vmem:[#allocation8 + $0x258] sm:$0xff]
    %v1599 = vld [vmem:[#allocation8 + $0x260] sm:$0xff]
    %v1600 = vld [vmem:[#allocation8 + $0x268] sm:$0xff]
    %v1601 = vld [vmem:[#allocation8 + $0x270] sm:$0xff]
    %v1602 = vld [vmem:[#allocation8 + $0x278] sm:$0xff]
    %v1603 = vld [vmem:[#allocation8 + $0x280] sm:$0xff]
    %v1604 = vld [vmem:[#allocation8 + $0x288] sm:$0xff]
    %v1605 = vld [vmem:[#allocation8 + $0x290] sm:$0xff]
    %v1606 = vld [vmem:[#allocation8 + $0x298] sm:$0xff]
    %v1607 = vld [vmem:[#allocation8 + $0x2a0] sm:$0xff]
    %v1608 = vld [vmem:[#allocation8 + $0x2a8] sm:$0xff]
    %v1609 = vld [vmem:[#allocation8 + $0x2b0] sm:$0xff]
    %v1610 = vld [vmem:[#allocation8 + $0x2b8] sm:$0xff]
    %v1611 = vld [vmem:[#allocation8 + $0x2c0] sm:$0xff]
    %v1612 = vld [vmem:[#allocation8 + $0x2c8] sm:$0xff]
    %v1613 = vld [vmem:[#allocation8 + $0x2d0] sm:$0xff]
    %v1614 = vld [vmem:[#allocation8 + $0x2d8] sm:$0xff]
    %v1615 = vld [vmem:[#allocation8 + $0x2e0] sm:$0xff]
    %v1616 = vld [vmem:[#allocation8 + $0x2e8] sm:$0xff]
    %v1617 = vld [vmem:[#allocation8 + $0x2f0] sm:$0xff]
    %v1618 = vld [vmem:[#allocation8 + $0x2f8] sm:$0xff]
    %v1619 = vld [vmem:[#allocation8 + $0x300] sm:$0xff]
    %v1620 = vld [vmem:[#allocation8 + $0x308] sm:$0xff]
    %v1621 = vld [vmem:[#allocation8 + $0x310] sm:$0xff]
    %v1622 = vld [vmem:[#allocation8 + $0x318] sm:$0xff]
    %v1623 = vld [vmem:[#allocation8 + $0x320] sm:$0xff]
    %v1624 = vld [vmem:[#allocation8 + $0x328] sm:$0xff]
    %v1625 = vld [vmem:[#allocation8 + $0x330] sm:$0xff]
    %v1626 = vld [vmem:[#allocation8 + $0x338] sm:$0xff]
    %v1627 = vld [vmem:[#allocation8 + $0x340] sm:$0xff]
    %v1628 = vld [vmem:[#allocation8 + $0x348] sm:$0xff]
    %v1629 = vld [vmem:[#allocation8 + $0x350] sm:$0xff]
    %v1630 = vld [vmem:[#allocation8 + $0x358] sm:$0xff]
    %v1631 = vld [vmem:[#allocation8 + $0x360] sm:$0xff]
    %v1632 = vld [vmem:[#allocation8 + $0x368] sm:$0xff]
    %v1633 = vld [vmem:[#allocation8 + $0x370] sm:$0xff]
    %v1634 = vld [vmem:[#allocation8 + $0x378] sm:$0xff]
    %1635 = vmatprep.subr.mxu0 0.0
    %1636 = vmatpush1.msra.mxu0 %v1538
    %1637 = vmatprep.subr.mxu0 0.0
    %1638 = vmatpush1.msra.mxu0 %v1537
    %1639 = vmatprep.subr.mxu0 0.0
    %1640 = vmatpush1.msra.mxu0 %v1536
    %1641 = vmatprep.subr.mxu0 0.0
    %1642 = vmatpush1.msra.mxu0 %v1535
    %1643 = vmatprep.subr.mxu0 0.0
    %1644 = vmatpush1.msra.mxu0 %v1534
    %1645 = vmatprep.subr.mxu0 0.0
    %1646 = vmatpush1.msra.mxu0 %v1533
    %1647 = vmatprep.subr.mxu0 0.0
    %1648 = vmatpush1.msra.mxu0 %v1532
    %1649 = vmatprep.subr.mxu0 0.0
    %1650 = vmatpush1.msra.mxu0 %v1531
    %1651 = vmatprep.subr.mxu0 0.0
    %1652 = vmatpush1.msra.mxu0 %v1530
    %1653 = vmatprep.subr.mxu0 0.0
    %1654 = vmatpush1.msra.mxu0 %v1529
    %1655 = vmatprep.subr.mxu0 0.0
    %1656 = vmatpush1.msra.mxu0 %v1528
    %1657 = vmatprep.subr.mxu0 0.0
    %1658 = vmatpush1.msra.mxu0 %v1527
    %1659 = vmatprep.subr.mxu0 0.0
    %1660 = vmatpush1.msra.mxu0 %v1526
    %1661 = vmatprep.subr.mxu0 0.0
    %1662 = vmatpush1.msra.mxu0 %v1525
    %1663 = vmatprep.subr.mxu0 0.0
    %1664 = vmatpush1.msra.mxu0 %v1524
    %1665 = vmatprep.subr.mxu0 0.0
    %1666 = vmatpush1.msra.mxu0 %v1523
    %1667 = vmatprep.subr.mxu0 0.0
    %1668 = vmatpush2.msra.mxu0 %v1554
    %1669 = vmatprep.subr.mxu0 0.0
    %1670 = vmatpush2.msra.mxu0 %v1553
    %1671 = vmatprep.subr.mxu0 0.0
    %1672 = vmatpush2.msra.mxu0 %v1552
    %1673 = vmatprep.subr.mxu0 0.0
    %1674 = vmatpush2.msra.mxu0 %v1551
    %1675 = vmatprep.subr.mxu0 0.0
    %1676 = vmatpush2.msra.mxu0 %v1550
    %1677 = vmatprep.subr.mxu0 0.0
    %1678 = vmatpush2.msra.mxu0 %v1549
    %1679 = vmatprep.subr.mxu0 0.0
    %1680 = vmatpush2.msra.mxu0 %v1548
    %1681 = vmatprep.subr.mxu0 0.0
    %1682 = vmatpush2.msra.mxu0 %v1547
    %1683 = vmatprep.subr.mxu0 0.0
    %1684 = vmatpush2.msra.mxu0 %v1546
    %1685 = vmatprep.subr.mxu0 0.0
    %1686 = vmatpush2.msra.mxu0 %v1545
    %1687 = vmatprep.subr.mxu0 0.0
    %1688 = vmatpush2.msra.mxu0 %v1544
    %1689 = vmatprep.subr.mxu0 0.0
    %1690 = vmatpush2.msra.mxu0 %v1543
    %1691 = vmatprep.subr.mxu0 0.0
    %1692 = vmatpush2.msra.mxu0 %v1542
    %1693 = vmatprep.subr.mxu0 0.0
    %1694 = vmatpush2.msra.mxu0 %v1541
    %1695 = vmatprep.subr.mxu0 0.0
    %1696 = vmatpush2.msra.mxu0 %v1540
    %1697 = vmatprep.subr.mxu0 0.0
    %1698 = vmatpush2.msra.mxu0 %v1539
    %1699 = vmatprep.mubr.f32.mxu0 %v167
    %1700 = vmatmul.mubr.f32.gmra.mxu0 %v166
    %v1701 = vpop.f32.mrf.mxu0
    %v1702 = vadd.f32 0.0, %v1701
    %v1703 = vpop.f32.mrf.mxu0
    %1704 = vmatprep.mubr.f32.mxu0 %v186
    %1705 = vmatmul.mubr.f32.gmra.mxu0 %v185
    %v1706 = vpop.f32.mrf.mxu0
    %v1707 = vadd.f32 0.0, %v1706
    %v1708 = vpop.f32.mrf.mxu0
    %1709 = vmatprep.mubr.f32.mxu0 %v205
    %1710 = vmatmul.mubr.f32.gmra.mxu0 %v204
    %v1711 = vpop.f32.mrf.mxu0
    %v1712 = vadd.f32 0.0, %v1711
    %v1713 = vpop.f32.mrf.mxu0
    %1714 = vmatprep.mubr.f32.mxu0 %v224
    %1715 = vmatmul.mubr.f32.gmra.mxu0 %v223
    %v1716 = vpop.f32.mrf.mxu0
    %v1717 = vadd.f32 0.0, %v1716
    %v1718 = vpop.f32.mrf.mxu0
    %1719 = vmatprep.mubr.f32.mxu0 %v243
    %1720 = vmatmul.mubr.f32.gmra.mxu0 %v242
    %v1721 = vpop.f32.mrf.mxu0
    %v1722 = vadd.f32 0.0, %v1721
    %v1723 = vpop.f32.mrf.mxu0
    %1724 = vmatprep.mubr.f32.mxu0 %v262
    %1725 = vmatmul.mubr.f32.gmra.mxu0 %v261
    %v1726 = vpop.f32.mrf.mxu0
    %v1727 = vadd.f32 0.0, %v1726
    %v1728 = vpop.f32.mrf.mxu0
    %1729 = vmatprep.mubr.f32.mxu0 %v281
    %1730 = vmatmul.mubr.f32.gmra.mxu0 %v280
    %v1731 = vpop.f32.mrf.mxu0
    %v1732 = vadd.f32 0.0, %v1731
    %v1733 = vpop.f32.mrf.mxu0
    %1734 = vmatprep.mubr.f32.mxu0 %v300
    %1735 = vmatmul.mubr.f32.gmra.mxu0 %v299
    %v1736 = vpop.f32.mrf.mxu0
    %v1737 = vadd.f32 0.0, %v1736
    %v1738 = vpop.f32.mrf.mxu0
    %1739 = vdwg.mxu0
    %1740 = vmatprep.subr.mxu0 0.0
    %1741 = vmatpush1.msra.mxu0 %v1570
    %1742 = vmatprep.subr.mxu0 0.0
    %1743 = vmatpush1.msra.mxu0 %v1569
    %1744 = vmatprep.subr.mxu0 0.0
    %1745 = vmatpush1.msra.mxu0 %v1568
    %1746 = vmatprep.subr.mxu0 0.0
    %1747 = vmatpush1.msra.mxu0 %v1567
    %1748 = vmatprep.subr.mxu0 0.0
    %1749 = vmatpush1.msra.mxu0 %v1566
    %1750 = vmatprep.subr.mxu0 0.0
    %1751 = vmatpush1.msra.mxu0 %v1565
    %1752 = vmatprep.subr.mxu0 0.0
    %1753 = vmatpush1.msra.mxu0 %v1564
    %1754 = vmatprep.subr.mxu0 0.0
    %1755 = vmatpush1.msra.mxu0 %v1563
    %1756 = vmatprep.subr.mxu0 0.0
    %1757 = vmatpush1.msra.mxu0 %v1562
    %1758 = vmatprep.subr.mxu0 0.0
    %1759 = vmatpush1.msra.mxu0 %v1561
    %1760 = vmatprep.subr.mxu0 0.0
    %1761 = vmatpush1.msra.mxu0 %v1560
    %1762 = vmatprep.subr.mxu0 0.0
    %1763 = vmatpush1.msra.mxu0 %v1559
    %1764 = vmatprep.subr.mxu0 0.0
    %1765 = vmatpush1.msra.mxu0 %v1558
    %1766 = vmatprep.subr.mxu0 0.0
    %1767 = vmatpush1.msra.mxu0 %v1557
    %1768 = vmatprep.subr.mxu0 0.0
    %1769 = vmatpush1.msra.mxu0 %v1556
    %1770 = vmatprep.subr.mxu0 0.0
    %1771 = vmatpush1.msra.mxu0 %v1555
    %1772 = vmatprep.subr.mxu0 0.0
    %1773 = vmatpush2.msra.mxu0 %v1586
    %1774 = vmatprep.subr.mxu0 0.0
    %1775 = vmatpush2.msra.mxu0 %v1585
    %1776 = vmatprep.subr.mxu0 0.0
    %1777 = vmatpush2.msra.mxu0 %v1584
    %1778 = vmatprep.subr.mxu0 0.0
    %1779 = vmatpush2.msra.mxu0 %v1583
    %1780 = vmatprep.subr.mxu0 0.0
    %1781 = vmatpush2.msra.mxu0 %v1582
    %1782 = vmatprep.subr.mxu0 0.0
    %1783 = vmatpush2.msra.mxu0 %v1581
    %1784 = vmatprep.subr.mxu0 0.0
    %1785 = vmatpush2.msra.mxu0 %v1580
    %1786 = vmatprep.subr.mxu0 0.0
    %1787 = vmatpush2.msra.mxu0 %v1579
    %1788 = vmatprep.subr.mxu0 0.0
    %1789 = vmatpush2.msra.mxu0 %v1578
    %1790 = vmatprep.subr.mxu0 0.0
    %1791 = vmatpush2.msra.mxu0 %v1577
    %1792 = vmatprep.subr.mxu0 0.0
    %1793 = vmatpush2.msra.mxu0 %v1576
    %1794 = vmatprep.subr.mxu0 0.0
    %1795 = vmatpush2.msra.mxu0 %v1575
    %1796 = vmatprep.subr.mxu0 0.0
    %1797 = vmatpush2.msra.mxu0 %v1574
    %1798 = vmatprep.subr.mxu0 0.0
    %1799 = vmatpush2.msra.mxu0 %v1573
    %1800 = vmatprep.subr.mxu0 0.0
    %1801 = vmatpush2.msra.mxu0 %v1572
    %1802 = vmatprep.subr.mxu0 0.0
    %1803 = vmatpush2.msra.mxu0 %v1571
    %1804 = vmatprep.mubr.f32.mxu0 %v169
    %1805 = vmatmul.mubr.f32.gmra.mxu0 %v168
    %v1806 = vpop.f32.mrf.mxu0
    %v1807 = vadd.f32 %v1702, %v1806
    %v1808 = vpop.f32.mrf.mxu0
    %1809 = vmatprep.mubr.f32.mxu0 %v188
    %1810 = vmatmul.mubr.f32.gmra.mxu0 %v187
    %v1811 = vpop.f32.mrf.mxu0
    %v1812 = vadd.f32 %v1707, %v1811
    %v1813 = vpop.f32.mrf.mxu0
    %1814 = vmatprep.mubr.f32.mxu0 %v207
    %1815 = vmatmul.mubr.f32.gmra.mxu0 %v206
    %v1816 = vpop.f32.mrf.mxu0
    %v1817 = vadd.f32 %v1712, %v1816
    %v1818 = vpop.f32.mrf.mxu0
    %1819 = vmatprep.mubr.f32.mxu0 %v226
    %1820 = vmatmul.mubr.f32.gmra.mxu0 %v225
    %v1821 = vpop.f32.mrf.mxu0
    %v1822 = vadd.f32 %v1717, %v1821
    %v1823 = vpop.f32.mrf.mxu0
    %1824 = vmatprep.mubr.f32.mxu0 %v245
    %1825 = vmatmul.mubr.f32.gmra.mxu0 %v244
    %v1826 = vpop.f32.mrf.mxu0
    %v1827 = vadd.f32 %v1722, %v1826
    %v1828 = vpop.f32.mrf.mxu0
    %1829 = vmatprep.mubr.f32.mxu0 %v264
    %1830 = vmatmul.mubr.f32.gmra.mxu0 %v263
    %v1831 = vpop.f32.mrf.mxu0
    %v1832 = vadd.f32 %v1727, %v1831
    %v1833 = vpop.f32.mrf.mxu0
    %1834 = vmatprep.mubr.f32.mxu0 %v283
    %1835 = vmatmul.mubr.f32.gmra.mxu0 %v282
    %v1836 = vpop.f32.mrf.mxu0
    %v1837 = vadd.f32 %v1732, %v1836
    %v1838 = vpop.f32.mrf.mxu0
    %1839 = vmatprep.mubr.f32.mxu0 %v302
    %1840 = vmatmul.mubr.f32.gmra.mxu0 %v301
    %v1841 = vpop.f32.mrf.mxu0
    %v1842 = vadd.f32 %v1737, %v1841
    %v1843 = vpop.f32.mrf.mxu0
    %1844 = vdwg.mxu0
    %1845 = vmatprep.subr.mxu0 0.0
    %1846 = vmatpush1.msra.mxu0 %v1602
    %1847 = vmatprep.subr.mxu0 0.0
    %1848 = vmatpush1.msra.mxu0 %v1601
    %1849 = vmatprep.subr.mxu0 0.0
    %1850 = vmatpush1.msra.mxu0 %v1600
    %1851 = vmatprep.subr.mxu0 0.0
    %1852 = vmatpush1.msra.mxu0 %v1599
    %1853 = vmatprep.subr.mxu0 0.0
    %1854 = vmatpush1.msra.mxu0 %v1598
    %1855 = vmatprep.subr.mxu0 0.0
    %1856 = vmatpush1.msra.mxu0 %v1597
    %1857 = vmatprep.subr.mxu0 0.0
    %1858 = vmatpush1.msra.mxu0 %v1596
    %1859 = vmatprep.subr.mxu0 0.0
    %1860 = vmatpush1.msra.mxu0 %v1595
    %1861 = vmatprep.subr.mxu0 0.0
    %1862 = vmatpush1.msra.mxu0 %v1594
    %1863 = vmatprep.subr.mxu0 0.0
    %1864 = vmatpush1.msra.mxu0 %v1593
    %1865 = vmatprep.subr.mxu0 0.0
    %1866 = vmatpush1.msra.mxu0 %v1592
    %1867 = vmatprep.subr.mxu0 0.0
    %1868 = vmatpush1.msra.mxu0 %v1591
    %1869 = vmatprep.subr.mxu0 0.0
    %1870 = vmatpush1.msra.mxu0 %v1590
    %1871 = vmatprep.subr.mxu0 0.0
    %1872 = vmatpush1.msra.mxu0 %v1589
    %1873 = vmatprep.subr.mxu0 0.0
    %1874 = vmatpush1.msra.mxu0 %v1588
    %1875 = vmatprep.subr.mxu0 0.0
    %1876 = vmatpush1.msra.mxu0 %v1587
    %1877 = vmatprep.subr.mxu0 0.0
    %1878 = vmatpush2.msra.mxu0 %v1618
    %1879 = vmatprep.subr.mxu0 0.0
    %1880 = vmatpush2.msra.mxu0 %v1617
    %1881 = vmatprep.subr.mxu0 0.0
    %1882 = vmatpush2.msra.mxu0 %v1616
    %1883 = vmatprep.subr.mxu0 0.0
    %1884 = vmatpush2.msra.mxu0 %v1615
    %1885 = vmatprep.subr.mxu0 0.0
    %1886 = vmatpush2.msra.mxu0 %v1614
    %1887 = vmatprep.subr.mxu0 0.0
    %1888 = vmatpush2.msra.mxu0 %v1613
    %1889 = vmatprep.subr.mxu0 0.0
    %1890 = vmatpush2.msra.mxu0 %v1612
    %1891 = vmatprep.subr.mxu0 0.0
    %1892 = vmatpush2.msra.mxu0 %v1611
    %1893 = vmatprep.subr.mxu0 0.0
    %1894 = vmatpush2.msra.mxu0 %v1610
    %1895 = vmatprep.subr.mxu0 0.0
    %1896 = vmatpush2.msra.mxu0 %v1609
    %1897 = vmatprep.subr.mxu0 0.0
    %1898 = vmatpush2.msra.mxu0 %v1608
    %1899 = vmatprep.subr.mxu0 0.0
    %1900 = vmatpush2.msra.mxu0 %v1607
    %1901 = vmatprep.subr.mxu0 0.0
    %1902 = vmatpush2.msra.mxu0 %v1606
    %1903 = vmatprep.subr.mxu0 0.0
    %1904 = vmatpush2.msra.mxu0 %v1605
    %1905 = vmatprep.subr.mxu0 0.0
    %1906 = vmatpush2.msra.mxu0 %v1604
    %1907 = vmatprep.subr.mxu0 0.0
    %1908 = vmatpush2.msra.mxu0 %v1603
    %1909 = vmatprep.mubr.f32.mxu0 %v171
    %1910 = vmatmul.mubr.f32.gmra.mxu0 %v170
    %v1911 = vpop.f32.mrf.mxu0
    %v1912 = vadd.f32 %v1807, %v1911
    %v1913 = vpop.f32.mrf.mxu0
    %1914 = vmatprep.mubr.f32.mxu0 %v190
    %1915 = vmatmul.mubr.f32.gmra.mxu0 %v189
    %v1916 = vpop.f32.mrf.mxu0
    %v1917 = vadd.f32 %v1812, %v1916
    %v1918 = vpop.f32.mrf.mxu0
    %1919 = vmatprep.mubr.f32.mxu0 %v209
    %1920 = vmatmul.mubr.f32.gmra.mxu0 %v208
    %v1921 = vpop.f32.mrf.mxu0
    %v1922 = vadd.f32 %v1817, %v1921
    %v1923 = vpop.f32.mrf.mxu0
    %1924 = vmatprep.mubr.f32.mxu0 %v228
    %1925 = vmatmul.mubr.f32.gmra.mxu0 %v227
    %v1926 = vpop.f32.mrf.mxu0
    %v1927 = vadd.f32 %v1822, %v1926
    %v1928 = vpop.f32.mrf.mxu0
    %1929 = vmatprep.mubr.f32.mxu0 %v247
    %1930 = vmatmul.mubr.f32.gmra.mxu0 %v246
    %v1931 = vpop.f32.mrf.mxu0
    %v1932 = vadd.f32 %v1827, %v1931
    %v1933 = vpop.f32.mrf.mxu0
    %1934 = vmatprep.mubr.f32.mxu0 %v266
    %1935 = vmatmul.mubr.f32.gmra.mxu0 %v265
    %v1936 = vpop.f32.mrf.mxu0
    %v1937 = vadd.f32 %v1832, %v1936
    %v1938 = vpop.f32.mrf.mxu0
    %1939 = vmatprep.mubr.f32.mxu0 %v285
    %1940 = vmatmul.mubr.f32.gmra.mxu0 %v284
    %v1941 = vpop.f32.mrf.mxu0
    %v1942 = vadd.f32 %v1837, %v1941
    %v1943 = vpop.f32.mrf.mxu0
    %1944 = vmatprep.mubr.f32.mxu0 %v304
    %1945 = vmatmul.mubr.f32.gmra.mxu0 %v303
    %v1946 = vpop.f32.mrf.mxu0
    %v1947 = vadd.f32 %v1842, %v1946
    %v1948 = vpop.f32.mrf.mxu0
    %1949 = vdwg.mxu0
    %1950 = vmatprep.subr.mxu0 0.0
    %1951 = vmatpush1.msra.mxu0 %v1634
    %1952 = vmatprep.subr.mxu0 0.0
    %1953 = vmatpush1.msra.mxu0 %v1633
    %1954 = vmatprep.subr.mxu0 0.0
    %1955 = vmatpush1.msra.mxu0 %v1632
    %1956 = vmatprep.subr.mxu0 0.0
    %1957 = vmatpush1.msra.mxu0 %v1631
    %1958 = vmatprep.subr.mxu0 0.0
    %1959 = vmatpush1.msra.mxu0 %v1630
    %1960 = vmatprep.subr.mxu0 0.0
    %1961 = vmatpush1.msra.mxu0 %v1629
    %1962 = vmatprep.subr.mxu0 0.0
    %1963 = vmatpush1.msra.mxu0 %v1628
    %1964 = vmatprep.subr.mxu0 0.0
    %1965 = vmatpush1.msra.mxu0 %v1627
    %1966 = vmatprep.subr.mxu0 0.0
    %1967 = vmatpush1.msra.mxu0 %v1626
    %1968 = vmatprep.subr.mxu0 0.0
    %1969 = vmatpush1.msra.mxu0 %v1625
    %1970 = vmatprep.subr.mxu0 0.0
    %1971 = vmatpush1.msra.mxu0 %v1624
    %1972 = vmatprep.subr.mxu0 0.0
    %1973 = vmatpush1.msra.mxu0 %v1623
    %1974 = vmatprep.subr.mxu0 0.0
    %1975 = vmatpush1.msra.mxu0 %v1622
    %1976 = vmatprep.subr.mxu0 0.0
    %1977 = vmatpush1.msra.mxu0 %v1621
    %1978 = vmatprep.subr.mxu0 0.0
    %1979 = vmatpush1.msra.mxu0 %v1620
    %1980 = vmatprep.subr.mxu0 0.0
    %1981 = vmatpush1.msra.mxu0 %v1619
    %1982 = vmatprep.subr.mxu0 0.0
    %1983 = vmatpush2.msra.mxu0 0.0
    %1984 = vmatprep.subr.mxu0 0.0
    %1985 = vmatpush2.msra.mxu0 0.0
    %1986 = vmatprep.subr.mxu0 0.0
    %1987 = vmatpush2.msra.mxu0 0.0
    %1988 = vmatprep.subr.mxu0 0.0
    %1989 = vmatpush2.msra.mxu0 0.0
    %1990 = vmatprep.subr.mxu0 0.0
    %1991 = vmatpush2.msra.mxu0 0.0
    %1992 = vmatprep.subr.mxu0 0.0
    %1993 = vmatpush2.msra.mxu0 0.0
    %1994 = vmatprep.subr.mxu0 0.0
    %1995 = vmatpush2.msra.mxu0 0.0
    %1996 = vmatprep.subr.mxu0 0.0
    %1997 = vmatpush2.msra.mxu0 0.0
    %1998 = vmatprep.subr.mxu0 0.0
    %1999 = vmatpush2.msra.mxu0 0.0
    %2000 = vmatprep.subr.mxu0 0.0
    %2001 = vmatpush2.msra.mxu0 0.0
    %2002 = vmatprep.subr.mxu0 0.0
    %2003 = vmatpush2.msra.mxu0 0.0
    %2004 = vmatprep.subr.mxu0 0.0
    %2005 = vmatpush2.msra.mxu0 0.0
    %2006 = vmatprep.subr.mxu0 0.0
    %2007 = vmatpush2.msra.mxu0 0.0
    %2008 = vmatprep.subr.mxu0 0.0
    %2009 = vmatpush2.msra.mxu0 0.0
    %2010 = vmatprep.subr.mxu0 0.0
    %2011 = vmatpush2.msra.mxu0 0.0
    %2012 = vmatprep.subr.mxu0 0.0
    %2013 = vmatpush2.msra.mxu0 0.0
    %2014 = vmatprep.mubr.f32.mxu0 0.0
    %2015 = vmatmul.mubr.f32.gmra.mxu0 %v172
    %v2016 = vpop.f32.mrf.mxu0
    %v2017 = vadd.f32 %v1912, %v2016
    %v2018 = vpop.f32.mrf.mxu0
    %2019 = vmatprep.mubr.f32.mxu0 0.0
    %2020 = vmatmul.mubr.f32.gmra.mxu0 %v191
    %v2021 = vpop.f32.mrf.mxu0
    %v2022 = vadd.f32 %v1917, %v2021
    %v2023 = vpop.f32.mrf.mxu0
    %2024 = vmatprep.mubr.f32.mxu0 0.0
    %2025 = vmatmul.mubr.f32.gmra.mxu0 %v210
    %v2026 = vpop.f32.mrf.mxu0
    %v2027 = vadd.f32 %v1922, %v2026
    %v2028 = vpop.f32.mrf.mxu0
    %2029 = vmatprep.mubr.f32.mxu0 0.0
    %2030 = vmatmul.mubr.f32.gmra.mxu0 %v229
    %v2031 = vpop.f32.mrf.mxu0
    %v2032 = vadd.f32 %v1927, %v2031
    %v2033 = vpop.f32.mrf.mxu0
    %2034 = vmatprep.mubr.f32.mxu0 0.0
    %2035 = vmatmul.mubr.f32.gmra.mxu0 %v248
    %v2036 = vpop.f32.mrf.mxu0
    %v2037 = vadd.f32 %v1932, %v2036
    %v2038 = vpop.f32.mrf.mxu0
    %2039 = vmatprep.mubr.f32.mxu0 0.0
    %2040 = vmatmul.mubr.f32.gmra.mxu0 %v267
    %v2041 = vpop.f32.mrf.mxu0
    %v2042 = vadd.f32 %v1937, %v2041
    %v2043 = vpop.f32.mrf.mxu0
    %2044 = vmatprep.mubr.f32.mxu0 0.0
    %2045 = vmatmul.mubr.f32.gmra.mxu0 %v286
    %v2046 = vpop.f32.mrf.mxu0
    %v2047 = vadd.f32 %v1942, %v2046
    %v2048 = vpop.f32.mrf.mxu0
    %2049 = vmatprep.mubr.f32.mxu0 0.0
    %2050 = vmatmul.mubr.f32.gmra.mxu0 %v305
    %v2051 = vpop.f32.mrf.mxu0
    %v2052 = vadd.f32 %v1947, %v2051
    %v2053 = vpop.f32.mrf.mxu0
    %2054 = vdwg.mxu0
    %v2055 = vld [vmem:[%s4] sm:$0x7]
    %v2057 = vlaneseq
    %v2058 = vshrl.u32 %v2057, 7
    %v2059 = vsub.s32 0, %v2058
    %v2060 = vrot.slane %v2055, %v2059
    %v2061 = vlaneseq
    %v2062 = vshrl.u32 %v2061, 7
    %v2063 = vsub.s32 1, %v2062
    %v2064 = vrot.slane %v2055, %v2063
    %v2065 = vlaneseq
    %v2066 = vshrl.u32 %v2065, 7
    %v2067 = vsub.s32 2, %v2066
    %v2068 = vrot.slane %v2055, %v2067
    %v2072 = vadd.f32 %v816, %v2060
    %v2073 = vadd.f32 %v1485, %v2064
    %v2074 = vadd.f32 %v2017, %v2068
    %v2075 = vadd.f32 %v821, %v2060
    %v2076 = vadd.f32 %v1490, %v2064
    %v2077 = vadd.f32 %v2022, %v2068
    %v2078 = vadd.f32 %v826, %v2060
    %v2079 = vadd.f32 %v1495, %v2064
    %v2080 = vadd.f32 %v2027, %v2068
    %v2081 = vadd.f32 %v831, %v2060
    %v2082 = vadd.f32 %v1500, %v2064
    %v2083 = vadd.f32 %v2032, %v2068
    %v2084 = vadd.f32 %v836, %v2060
    %v2085 = vadd.f32 %v1505, %v2064
    %v2086 = vadd.f32 %v2037, %v2068
    %v2087 = vadd.f32 %v841, %v2060
    %v2088 = vadd.f32 %v1510, %v2064
    %v2089 = vadd.f32 %v2042, %v2068
    %v2090 = vadd.f32 %v846, %v2060
    %v2091 = vadd.f32 %v1515, %v2064
    %v2092 = vadd.f32 %v2047, %v2068
    %v2093 = vadd.f32 %v851, %v2060
    %v2094 = vadd.f32 %v1520, %v2064
    %v2095 = vadd.f32 %v2052, %v2068
    %v2096 = vmax.f32 %v2072, 0.0
    %v2097 = vmax.f32 %v2073, 0.0
    %v2098 = vmax.f32 %v2074, 0.0
    %v2099 = vmax.f32 %v2075, 0.0
    %v2100 = vmax.f32 %v2076, 0.0
    %v2101 = vmax.f32 %v2077, 0.0
    %v2102 = vmax.f32 %v2078, 0.0
    %v2103 = vmax.f32 %v2079, 0.0
    %v2104 = vmax.f32 %v2080, 0.0
    %v2105 = vmax.f32 %v2081, 0.0
    %v2106 = vmax.f32 %v2082, 0.0
    %v2107 = vmax.f32 %v2083, 0.0
    %v2108 = vmax.f32 %v2084, 0.0
    %v2109 = vmax.f32 %v2085, 0.0
    %v2110 = vmax.f32 %v2086, 0.0
    %v2111 = vmax.f32 %v2087, 0.0
    %v2112 = vmax.f32 %v2088, 0.0
    %v2113 = vmax.f32 %v2089, 0.0
    %v2114 = vmax.f32 %v2090, 0.0
    %v2115 = vmax.f32 %v2091, 0.0
    %v2116 = vmax.f32 %v2092, 0.0
    %v2117 = vmax.f32 %v2093, 0.0
    %v2118 = vmax.f32 %v2094, 0.0
    %v2119 = vmax.f32 %v2095, 0.0
    %v2120 = vld [vmem:[#allocation10] sm:$0xff]
    %v2121 = vld [vmem:[#allocation10 + $0x8] sm:$0xff]
    %v2122 = vld [vmem:[#allocation10 + $0x10] sm:$0xff]
    %v2123 = vld [vmem:[#allocation10 + $0x18] sm:$0xff]
    %v2124 = vld [vmem:[#allocation10 + $0x20] sm:$0xff]
    %v2125 = vld [vmem:[#allocation10 + $0x28] sm:$0xff]
    %v2126 = vld [vmem:[#allocation10 + $0x30] sm:$0xff]
    %v2127 = vld [vmem:[#allocation10 + $0x38] sm:$0xff]
    %v2128 = vld [vmem:[#allocation10 + $0x40] sm:$0xff]
    %v2129 = vld [vmem:[#allocation10 + $0x48] sm:$0xff]
    %v2130 = vld [vmem:[#allocation10 + $0x50] sm:$0xff]
    %v2131 = vld [vmem:[#allocation10 + $0x58] sm:$0xff]
    %v2132 = vld [vmem:[#allocation10 + $0x60] sm:$0xff]
    %v2133 = vld [vmem:[#allocation10 + $0x68] sm:$0xff]
    %v2134 = vld [vmem:[#allocation10 + $0x70] sm:$0xff]
    %v2135 = vld [vmem:[#allocation10 + $0x78] sm:$0xff]
    %v2136 = vld [vmem:[#allocation10 + $0x80] sm:$0xff]
    %v2137 = vld [vmem:[#allocation10 + $0x88] sm:$0xff]
    %v2138 = vld [vmem:[#allocation10 + $0x90] sm:$0xff]
    %v2139 = vld [vmem:[#allocation10 + $0x98] sm:$0xff]
    %v2140 = vld [vmem:[#allocation10 + $0xa0] sm:$0xff]
    %v2141 = vld [vmem:[#allocation10 + $0xa8] sm:$0xff]
    %v2142 = vld [vmem:[#allocation10 + $0xb0] sm:$0xff]
    %v2143 = vld [vmem:[#allocation10 + $0xb8] sm:$0xff]
    %v2144 = vld [vmem:[#allocation10 + $0xc0] sm:$0xff]
    %v2145 = vld [vmem:[#allocation10 + $0xc8] sm:$0xff]
    %v2146 = vld [vmem:[#allocation10 + $0xd0] sm:$0xff]
    %v2147 = vld [vmem:[#allocation10 + $0xd8] sm:$0xff]
    %v2148 = vld [vmem:[#allocation10 + $0xe0] sm:$0xff]
    %v2149 = vld [vmem:[#allocation10 + $0xe8] sm:$0xff]
    %v2150 = vld [vmem:[#allocation10 + $0xf0] sm:$0xff]
    %v2151 = vld [vmem:[#allocation10 + $0xf8] sm:$0xff]
    %v2152 = vld [vmem:[#allocation10 + $0x100] sm:$0xff]
    %v2153 = vld [vmem:[#allocation10 + $0x108] sm:$0xff]
    %v2154 = vld [vmem:[#allocation10 + $0x110] sm:$0xff]
    %v2155 = vld [vmem:[#allocation10 + $0x118] sm:$0xff]
    %v2156 = vld [vmem:[#allocation10 + $0x120] sm:$0xff]
    %v2157 = vld [vmem:[#allocation10 + $0x128] sm:$0xff]
    %v2158 = vld [vmem:[#allocation10 + $0x130] sm:$0xff]
    %v2159 = vld [vmem:[#allocation10 + $0x138] sm:$0xff]
    %v2160 = vld [vmem:[#allocation10 + $0x140] sm:$0xff]
    %v2161 = vld [vmem:[#allocation10 + $0x148] sm:$0xff]
    %v2162 = vld [vmem:[#allocation10 + $0x150] sm:$0xff]
    %v2163 = vld [vmem:[#allocation10 + $0x158] sm:$0xff]
    %v2164 = vld [vmem:[#allocation10 + $0x160] sm:$0xff]
    %v2165 = vld [vmem:[#allocation10 + $0x168] sm:$0xff]
    %v2166 = vld [vmem:[#allocation10 + $0x170] sm:$0xff]
    %v2167 = vld [vmem:[#allocation10 + $0x178] sm:$0xff]
    %v2168 = vld [vmem:[#allocation10 + $0x180] sm:$0xff]
    %v2169 = vld [vmem:[#allocation10 + $0x188] sm:$0xff]
    %v2170 = vld [vmem:[#allocation10 + $0x190] sm:$0xff]
    %v2171 = vld [vmem:[#allocation10 + $0x198] sm:$0xff]
    %v2172 = vld [vmem:[#allocation10 + $0x1a0] sm:$0xff]
    %v2173 = vld [vmem:[#allocation10 + $0x1a8] sm:$0xff]
    %v2174 = vld [vmem:[#allocation10 + $0x1b0] sm:$0xff]
    %v2175 = vld [vmem:[#allocation10 + $0x1b8] sm:$0xff]
    %v2176 = vld [vmem:[#allocation10 + $0x1c0] sm:$0xff]
    %v2177 = vld [vmem:[#allocation10 + $0x1c8] sm:$0xff]
    %v2178 = vld [vmem:[#allocation10 + $0x1d0] sm:$0xff]
    %v2179 = vld [vmem:[#allocation10 + $0x1d8] sm:$0xff]
    %v2180 = vld [vmem:[#allocation10 + $0x1e0] sm:$0xff]
    %v2181 = vld [vmem:[#allocation10 + $0x1e8] sm:$0xff]
    %v2182 = vld [vmem:[#allocation10 + $0x1f0] sm:$0xff]
    %v2183 = vld [vmem:[#allocation10 + $0x1f8] sm:$0xff]
    %v2184 = vld [vmem:[#allocation10 + $0x200] sm:$0xff]
    %v2185 = vld [vmem:[#allocation10 + $0x208] sm:$0xff]
    %v2186 = vld [vmem:[#allocation10 + $0x210] sm:$0xff]
    %v2187 = vld [vmem:[#allocation10 + $0x218] sm:$0xff]
    %v2188 = vld [vmem:[#allocation10 + $0x220] sm:$0xff]
    %v2189 = vld [vmem:[#allocation10 + $0x228] sm:$0xff]
    %v2190 = vld [vmem:[#allocation10 + $0x230] sm:$0xff]
    %v2191 = vld [vmem:[#allocation10 + $0x238] sm:$0xff]
    %v2192 = vld [vmem:[#allocation10 + $0x240] sm:$0xff]
    %v2193 = vld [vmem:[#allocation10 + $0x248] sm:$0xff]
    %v2194 = vld [vmem:[#allocation10 + $0x250] sm:$0xff]
    %v2195 = vld [vmem:[#allocation10 + $0x258] sm:$0xff]
    %v2196 = vld [vmem:[#allocation10 + $0x260] sm:$0xff]
    %v2197 = vld [vmem:[#allocation10 + $0x268] sm:$0xff]
    %v2198 = vld [vmem:[#allocation10 + $0x270] sm:$0xff]
    %v2199 = vld [vmem:[#allocation10 + $0x278] sm:$0xff]
    %v2200 = vld [vmem:[#allocation10 + $0x280] sm:$0xff]
    %v2201 = vld [vmem:[#allocation10 + $0x288] sm:$0xff]
    %v2202 = vld [vmem:[#allocation10 + $0x290] sm:$0xff]
    %v2203 = vld [vmem:[#allocation10 + $0x298] sm:$0xff]
    %v2204 = vld [vmem:[#allocation10 + $0x2a0] sm:$0xff]
    %v2205 = vld [vmem:[#allocation10 + $0x2a8] sm:$0xff]
    %v2206 = vld [vmem:[#allocation10 + $0x2b0] sm:$0xff]
    %v2207 = vld [vmem:[#allocation10 + $0x2b8] sm:$0xff]
    %v2208 = vld [vmem:[#allocation10 + $0x2c0] sm:$0xff]
    %v2209 = vld [vmem:[#allocation10 + $0x2c8] sm:$0xff]
    %v2210 = vld [vmem:[#allocation10 + $0x2d0] sm:$0xff]
    %v2211 = vld [vmem:[#allocation10 + $0x2d8] sm:$0xff]
    %v2212 = vld [vmem:[#allocation10 + $0x2e0] sm:$0xff]
    %v2213 = vld [vmem:[#allocation10 + $0x2e8] sm:$0xff]
    %v2214 = vld [vmem:[#allocation10 + $0x2f0] sm:$0xff]
    %v2215 = vld [vmem:[#allocation10 + $0x2f8] sm:$0xff]
    %v2216 = vld [vmem:[%s6] sm:$0x3]
    %v2218 = vlaneseq
    %v2219 = vshrl.u32 %v2218, 7
    %v2220 = vsub.s32 0, %v2219
    %v2221 = vrot.slane %v2216, %v2220
    %v2222 = vlaneseq
    %v2223 = vshrl.u32 %v2222, 7
    %v2224 = vsub.s32 1, %v2223
    %v2225 = vrot.slane %v2216, %v2224
    %2228 = vmatprep.subr.mxu0 %v2151
    %2229 = vmatpush1.msra.mxu0 %v2150
    %2230 = vmatprep.subr.mxu0 %v2149
    %2231 = vmatpush1.msra.mxu0 %v2148
    %2232 = vmatprep.subr.mxu0 %v2147
    %2233 = vmatpush1.msra.mxu0 %v2146
    %2234 = vmatprep.subr.mxu0 %v2145
    %2235 = vmatpush1.msra.mxu0 %v2144
    %2236 = vmatprep.subr.mxu0 %v2143
    %2237 = vmatpush1.msra.mxu0 %v2142
    %2238 = vmatprep.subr.mxu0 %v2141
    %2239 = vmatpush1.msra.mxu0 %v2140
    %2240 = vmatprep.subr.mxu0 %v2139
    %2241 = vmatpush1.msra.mxu0 %v2138
    %2242 = vmatprep.subr.mxu0 %v2137
    %2243 = vmatpush1.msra.mxu0 %v2136
    %2244 = vmatprep.subr.mxu0 %v2135
    %2245 = vmatpush1.msra.mxu0 %v2134
    %2246 = vmatprep.subr.mxu0 %v2133
    %2247 = vmatpush1.msra.mxu0 %v2132
    %2248 = vmatprep.subr.mxu0 %v2131
    %2249 = vmatpush1.msra.mxu0 %v2130
    %2250 = vmatprep.subr.mxu0 %v2129
    %2251 = vmatpush1.msra.mxu0 %v2128
    %2252 = vmatprep.subr.mxu0 %v2127
    %2253 = vmatpush1.msra.mxu0 %v2126
    %2254 = vmatprep.subr.mxu0 %v2125
    %2255 = vmatpush1.msra.mxu0 %v2124
    %2256 = vmatprep.subr.mxu0 %v2123
    %2257 = vmatpush1.msra.mxu0 %v2122
    %2258 = vmatprep.subr.mxu0 %v2121
    %2259 = vmatpush1.msra.mxu0 %v2120
    %2260 = vmatprep.subr.mxu0 %v2183
    %2261 = vmatpush2.msra.mxu0 %v2182
    %2262 = vmatprep.subr.mxu0 %v2181
    %2263 = vmatpush2.msra.mxu0 %v2180
    %2264 = vmatprep.subr.mxu0 %v2179
    %2265 = vmatpush2.msra.mxu0 %v2178
    %2266 = vmatprep.subr.mxu0 %v2177
    %2267 = vmatpush2.msra.mxu0 %v2176
    %2268 = vmatprep.subr.mxu0 %v2175
    %2269 = vmatpush2.msra.mxu0 %v2174
    %2270 = vmatprep.subr.mxu0 %v2173
    %2271 = vmatpush2.msra.mxu0 %v2172
    %2272 = vmatprep.subr.mxu0 %v2171
    %2273 = vmatpush2.msra.mxu0 %v2170
    %2274 = vmatprep.subr.mxu0 %v2169
    %2275 = vmatpush2.msra.mxu0 %v2168
    %2276 = vmatprep.subr.mxu0 %v2167
    %2277 = vmatpush2.msra.mxu0 %v2166
    %2278 = vmatprep.subr.mxu0 %v2165
    %2279 = vmatpush2.msra.mxu0 %v2164
    %2280 = vmatprep.subr.mxu0 %v2163
    %2281 = vmatpush2.msra.mxu0 %v2162
    %2282 = vmatprep.subr.mxu0 %v2161
    %2283 = vmatpush2.msra.mxu0 %v2160
    %2284 = vmatprep.subr.mxu0 %v2159
    %2285 = vmatpush2.msra.mxu0 %v2158
    %2286 = vmatprep.subr.mxu0 %v2157
    %2287 = vmatpush2.msra.mxu0 %v2156
    %2288 = vmatprep.subr.mxu0 %v2155
    %2289 = vmatpush2.msra.mxu0 %v2154
    %2290 = vmatprep.subr.mxu0 %v2153
    %2291 = vmatpush2.msra.mxu0 %v2152
    %2292 = vmatprep.mubr.f32.mxu0 %v2097
    %2293 = vmatmul.mubr.f32.gmra.mxu0 %v2096
    %v2294 = vpop.f32.mrf.mxu0
    %v2295 = vadd.f32 %v2221, %v2294
    %v2296 = vpop.f32.mrf.mxu0
    %v2297 = vadd.f32 %v2225, %v2296
    %2298 = vmatprep.mubr.f32.mxu0 %v2100
    %2299 = vmatmul.mubr.f32.gmra.mxu0 %v2099
    %v2300 = vpop.f32.mrf.mxu0
    %v2301 = vadd.f32 %v2221, %v2300
    %v2302 = vpop.f32.mrf.mxu0
    %v2303 = vadd.f32 %v2225, %v2302
    %2304 = vmatprep.mubr.f32.mxu0 %v2103
    %2305 = vmatmul.mubr.f32.gmra.mxu0 %v2102
    %v2306 = vpop.f32.mrf.mxu0
    %v2307 = vadd.f32 %v2221, %v2306
    %v2308 = vpop.f32.mrf.mxu0
    %v2309 = vadd.f32 %v2225, %v2308
    %2310 = vmatprep.mubr.f32.mxu0 %v2106
    %2311 = vmatmul.mubr.f32.gmra.mxu0 %v2105
    %v2312 = vpop.f32.mrf.mxu0
    %v2313 = vadd.f32 %v2221, %v2312
    %v2314 = vpop.f32.mrf.mxu0
    %v2315 = vadd.f32 %v2225, %v2314
    %2316 = vmatprep.mubr.f32.mxu0 %v2109
    %2317 = vmatmul.mubr.f32.gmra.mxu0 %v2108
    %v2318 = vpop.f32.mrf.mxu0
    %v2319 = vadd.f32 %v2221, %v2318
    %v2320 = vpop.f32.mrf.mxu0
    %v2321 = vadd.f32 %v2225, %v2320
    %2322 = vmatprep.mubr.f32.mxu0 %v2112
    %2323 = vmatmul.mubr.f32.gmra.mxu0 %v2111
    %v2324 = vpop.f32.mrf.mxu0
    %v2325 = vadd.f32 %v2221, %v2324
    %v2326 = vpop.f32.mrf.mxu0
    %v2327 = vadd.f32 %v2225, %v2326
    %2328 = vmatprep.mubr.f32.mxu0 %v2115
    %2329 = vmatmul.mubr.f32.gmra.mxu0 %v2114
    %v2330 = vpop.f32.mrf.mxu0
    %v2331 = vadd.f32 %v2221, %v2330
    %v2332 = vpop.f32.mrf.mxu0
    %v2333 = vadd.f32 %v2225, %v2332
    %2334 = vmatprep.mubr.f32.mxu0 %v2118
    %2335 = vmatmul.mubr.f32.gmra.mxu0 %v2117
    %v2336 = vpop.f32.mrf.mxu0
    %v2337 = vadd.f32 %v2221, %v2336
    %v2338 = vpop.f32.mrf.mxu0
    %v2339 = vadd.f32 %v2225, %v2338
    %2340 = vdwg.mxu0
    %2341 = vmatprep.subr.mxu0 %v2215
    %2342 = vmatpush1.msra.mxu0 %v2214
    %2343 = vmatprep.subr.mxu0 %v2213
    %2344 = vmatpush1.msra.mxu0 %v2212
    %2345 = vmatprep.subr.mxu0 %v2211
    %2346 = vmatpush1.msra.mxu0 %v2210
    %2347 = vmatprep.subr.mxu0 %v2209
    %2348 = vmatpush1.msra.mxu0 %v2208
    %2349 = vmatprep.subr.mxu0 %v2207
    %2350 = vmatpush1.msra.mxu0 %v2206
    %2351 = vmatprep.subr.mxu0 %v2205
    %2352 = vmatpush1.msra.mxu0 %v2204
    %2353 = vmatprep.subr.mxu0 %v2203
    %2354 = vmatpush1.msra.mxu0 %v2202
    %2355 = vmatprep.subr.mxu0 %v2201
    %2356 = vmatpush1.msra.mxu0 %v2200
    %2357 = vmatprep.subr.mxu0 %v2199
    %2358 = vmatpush1.msra.mxu0 %v2198
    %2359 = vmatprep.subr.mxu0 %v2197
    %2360 = vmatpush1.msra.mxu0 %v2196
    %2361 = vmatprep.subr.mxu0 %v2195
    %2362 = vmatpush1.msra.mxu0 %v2194
    %2363 = vmatprep.subr.mxu0 %v2193
    %2364 = vmatpush1.msra.mxu0 %v2192
    %2365 = vmatprep.subr.mxu0 %v2191
    %2366 = vmatpush1.msra.mxu0 %v2190
    %2367 = vmatprep.subr.mxu0 %v2189
    %2368 = vmatpush1.msra.mxu0 %v2188
    %2369 = vmatprep.subr.mxu0 %v2187
    %2370 = vmatpush1.msra.mxu0 %v2186
    %2371 = vmatprep.subr.mxu0 %v2185
    %2372 = vmatpush1.msra.mxu0 %v2184
    %2373 = vmatprep.subr.mxu0 0.0
    %2374 = vmatpush2.msra.mxu0 0.0
    %2375 = vmatprep.subr.mxu0 0.0
    %2376 = vmatpush2.msra.mxu0 0.0
    %2377 = vmatprep.subr.mxu0 0.0
    %2378 = vmatpush2.msra.mxu0 0.0
    %2379 = vmatprep.subr.mxu0 0.0
    %2380 = vmatpush2.msra.mxu0 0.0
    %2381 = vmatprep.subr.mxu0 0.0
    %2382 = vmatpush2.msra.mxu0 0.0
    %2383 = vmatprep.subr.mxu0 0.0
    %2384 = vmatpush2.msra.mxu0 0.0
    %2385 = vmatprep.subr.mxu0 0.0
    %2386 = vmatpush2.msra.mxu0 0.0
    %2387 = vmatprep.subr.mxu0 0.0
    %2388 = vmatpush2.msra.mxu0 0.0
    %2389 = vmatprep.subr.mxu0 0.0
    %2390 = vmatpush2.msra.mxu0 0.0
    %2391 = vmatprep.subr.mxu0 0.0
    %2392 = vmatpush2.msra.mxu0 0.0
    %2393 = vmatprep.subr.mxu0 0.0
    %2394 = vmatpush2.msra.mxu0 0.0
    %2395 = vmatprep.subr.mxu0 0.0
    %2396 = vmatpush2.msra.mxu0 0.0
    %2397 = vmatprep.subr.mxu0 0.0
    %2398 = vmatpush2.msra.mxu0 0.0
    %2399 = vmatprep.subr.mxu0 0.0
    %2400 = vmatpush2.msra.mxu0 0.0
    %2401 = vmatprep.subr.mxu0 0.0
    %2402 = vmatpush2.msra.mxu0 0.0
    %2403 = vmatprep.subr.mxu0 0.0
    %2404 = vmatpush2.msra.mxu0 0.0
    %2405 = vmatprep.mubr.f32.mxu0 0.0
    %2406 = vmatmul.mubr.f32.gmra.mxu0 %v2098
    %v2407 = vpop.f32.mrf.mxu0
    %v2408 = vadd.f32 %v2295, %v2407
    %v2409 = vpop.f32.mrf.mxu0
    %v2410 = vadd.f32 %v2297, %v2409
    %2411 = vmatprep.mubr.f32.mxu0 0.0
    %2412 = vmatmul.mubr.f32.gmra.mxu0 %v2101
    %v2413 = vpop.f32.mrf.mxu0
    %v2414 = vadd.f32 %v2301, %v2413
    %v2415 = vpop.f32.mrf.mxu0
    %v2416 = vadd.f32 %v2303, %v2415
    %2417 = vmatprep.mubr.f32.mxu0 0.0
    %2418 = vmatmul.mubr.f32.gmra.mxu0 %v2104
    %v2419 = vpop.f32.mrf.mxu0
    %v2420 = vadd.f32 %v2307, %v2419
    %v2421 = vpop.f32.mrf.mxu0
    %v2422 = vadd.f32 %v2309, %v2421
    %2423 = vmatprep.mubr.f32.mxu0 0.0
    %2424 = vmatmul.mubr.f32.gmra.mxu0 %v2107
    %v2425 = vpop.f32.mrf.mxu0
    %v2426 = vadd.f32 %v2313, %v2425
    %v2427 = vpop.f32.mrf.mxu0
    %v2428 = vadd.f32 %v2315, %v2427
    %2429 = vmatprep.mubr.f32.mxu0 0.0
    %2430 = vmatmul.mubr.f32.gmra.mxu0 %v2110
    %v2431 = vpop.f32.mrf.mxu0
    %v2432 = vadd.f32 %v2319, %v2431
    %v2433 = vpop.f32.mrf.mxu0
    %v2434 = vadd.f32 %v2321, %v2433
    %2435 = vmatprep.mubr.f32.mxu0 0.0
    %2436 = vmatmul.mubr.f32.gmra.mxu0 %v2113
    %v2437 = vpop.f32.mrf.mxu0
    %v2438 = vadd.f32 %v2325, %v2437
    %v2439 = vpop.f32.mrf.mxu0
    %v2440 = vadd.f32 %v2327, %v2439
    %2441 = vmatprep.mubr.f32.mxu0 0.0
    %2442 = vmatmul.mubr.f32.gmra.mxu0 %v2116
    %v2443 = vpop.f32.mrf.mxu0
    %v2444 = vadd.f32 %v2331, %v2443
    %v2445 = vpop.f32.mrf.mxu0
    %v2446 = vadd.f32 %v2333, %v2445
    %2447 = vmatprep.mubr.f32.mxu0 0.0
    %2448 = vmatmul.mubr.f32.gmra.mxu0 %v2119
    %v2449 = vpop.f32.mrf.mxu0
    %v2450 = vadd.f32 %v2337, %v2449
    %v2451 = vpop.f32.mrf.mxu0
    %v2452 = vadd.f32 %v2339, %v2451
    %2453 = vdwg.mxu0
    %v2454 = vmax.f32 %v2408, 0.0
    %v2455 = vmax.f32 %v2410, 0.0
    %v2456 = vmax.f32 %v2414, 0.0
    %v2457 = vmax.f32 %v2416, 0.0
    %v2458 = vmax.f32 %v2420, 0.0
    %v2459 = vmax.f32 %v2422, 0.0
    %v2460 = vmax.f32 %v2426, 0.0
    %v2461 = vmax.f32 %v2428, 0.0
    %v2462 = vmax.f32 %v2432, 0.0
    %v2463 = vmax.f32 %v2434, 0.0
    %v2464 = vmax.f32 %v2438, 0.0
    %v2465 = vmax.f32 %v2440, 0.0
    %v2466 = vmax.f32 %v2444, 0.0
    %v2467 = vmax.f32 %v2446, 0.0
    %v2468 = vmax.f32 %v2450, 0.0
    %v2469 = vmax.f32 %v2452, 0.0
    %v2470 = vld [vmem:[#allocation11] sm:$0xff]
    %v2471 = vld [vmem:[#allocation11 + $0x8] sm:$0xff]
    %v2472 = vld [vmem:[#allocation11 + $0x10] sm:$0xff]
    %v2473 = vld [vmem:[#allocation11 + $0x18] sm:$0xff]
    %v2474 = vld [vmem:[#allocation11 + $0x20] sm:$0xff]
    %v2475 = vld [vmem:[#allocation11 + $0x28] sm:$0xff]
    %v2476 = vld [vmem:[#allocation11 + $0x30] sm:$0xff]
    %v2477 = vld [vmem:[#allocation11 + $0x38] sm:$0xff]
    %v2478 = vld [vmem:[#allocation11 + $0x40] sm:$0xff]
    %v2479 = vld [vmem:[#allocation11 + $0x48] sm:$0xff]
    %v2480 = vld [vmem:[#allocation11 + $0x50] sm:$0xff]
    %v2481 = vld [vmem:[#allocation11 + $0x58] sm:$0xff]
    %v2482 = vld [vmem:[#allocation11 + $0x60] sm:$0xff]
    %v2483 = vld [vmem:[#allocation11 + $0x68] sm:$0xff]
    %v2484 = vld [vmem:[#allocation11 + $0x70] sm:$0xff]
    %v2485 = vld [vmem:[#allocation11 + $0x78] sm:$0xff]
    %v2486 = vld [vmem:[#allocation11 + $0x80] sm:$0xff]
    %v2487 = vld [vmem:[#allocation11 + $0x88] sm:$0xff]
    %v2488 = vld [vmem:[#allocation11 + $0x90] sm:$0xff]
    %v2489 = vld [vmem:[#allocation11 + $0x98] sm:$0xff]
    %v2490 = vld [vmem:[#allocation11 + $0xa0] sm:$0xff]
    %v2491 = vld [vmem:[#allocation11 + $0xa8] sm:$0xff]
    %v2492 = vld [vmem:[#allocation11 + $0xb0] sm:$0xff]
    %v2493 = vld [vmem:[#allocation11 + $0xb8] sm:$0xff]
    %v2494 = vld [vmem:[#allocation11 + $0xc0] sm:$0xff]
    %v2495 = vld [vmem:[#allocation11 + $0xc8] sm:$0xff]
    %v2496 = vld [vmem:[#allocation11 + $0xd0] sm:$0xff]
    %v2497 = vld [vmem:[#allocation11 + $0xd8] sm:$0xff]
    %v2498 = vld [vmem:[#allocation11 + $0xe0] sm:$0xff]
    %v2499 = vld [vmem:[#allocation11 + $0xe8] sm:$0xff]
    %v2500 = vld [vmem:[#allocation11 + $0xf0] sm:$0xff]
    %v2501 = vld [vmem:[#allocation11 + $0xf8] sm:$0xff]
    %v2502 = vld [vmem:[%s8] sm:$0x1]
    %v2504 = vlaneseq
    %v2505 = vshrl.u32 %v2504, 7
    %v2506 = vsub.s32 0, %v2505
    %v2507 = vrot.slane %v2502, %v2506
    %2509 = vmatprep.subr.mxu0 0.0
    %2510 = vmatpush1.msra.mxu0 %v2485
    %2511 = vmatprep.subr.mxu0 0.0
    %2512 = vmatpush1.msra.mxu0 %v2484
    %2513 = vmatprep.subr.mxu0 0.0
    %2514 = vmatpush1.msra.mxu0 %v2483
    %2515 = vmatprep.subr.mxu0 0.0
    %2516 = vmatpush1.msra.mxu0 %v2482
    %2517 = vmatprep.subr.mxu0 0.0
    %2518 = vmatpush1.msra.mxu0 %v2481
    %2519 = vmatprep.subr.mxu0 0.0
    %2520 = vmatpush1.msra.mxu0 %v2480
    %2521 = vmatprep.subr.mxu0 0.0
    %2522 = vmatpush1.msra.mxu0 %v2479
    %2523 = vmatprep.subr.mxu0 0.0
    %2524 = vmatpush1.msra.mxu0 %v2478
    %2525 = vmatprep.subr.mxu0 0.0
    %2526 = vmatpush1.msra.mxu0 %v2477
    %2527 = vmatprep.subr.mxu0 0.0
    %2528 = vmatpush1.msra.mxu0 %v2476
    %2529 = vmatprep.subr.mxu0 0.0
    %2530 = vmatpush1.msra.mxu0 %v2475
    %2531 = vmatprep.subr.mxu0 0.0
    %2532 = vmatpush1.msra.mxu0 %v2474
    %2533 = vmatprep.subr.mxu0 0.0
    %2534 = vmatpush1.msra.mxu0 %v2473
    %2535 = vmatprep.subr.mxu0 0.0
    %2536 = vmatpush1.msra.mxu0 %v2472
    %2537 = vmatprep.subr.mxu0 0.0
    %2538 = vmatpush1.msra.mxu0 %v2471
    %2539 = vmatprep.subr.mxu0 0.0
    %2540 = vmatpush1.msra.mxu0 %v2470
    %2541 = vmatprep.subr.mxu0 0.0
    %2542 = vmatpush2.msra.mxu0 %v2501
    %2543 = vmatprep.subr.mxu0 0.0
    %2544 = vmatpush2.msra.mxu0 %v2500
    %2545 = vmatprep.subr.mxu0 0.0
    %2546 = vmatpush2.msra.mxu0 %v2499
    %2547 = vmatprep.subr.mxu0 0.0
    %2548 = vmatpush2.msra.mxu0 %v2498
    %2549 = vmatprep.subr.mxu0 0.0
    %2550 = vmatpush2.msra.mxu0 %v2497
    %2551 = vmatprep.subr.mxu0 0.0
    %2552 = vmatpush2.msra.mxu0 %v2496
    %2553 = vmatprep.subr.mxu0 0.0
    %2554 = vmatpush2.msra.mxu0 %v2495
    %2555 = vmatprep.subr.mxu0 0.0
    %2556 = vmatpush2.msra.mxu0 %v2494
    %2557 = vmatprep.subr.mxu0 0.0
    %2558 = vmatpush2.msra.mxu0 %v2493
    %2559 = vmatprep.subr.mxu0 0.0
    %2560 = vmatpush2.msra.mxu0 %v2492
    %2561 = vmatprep.subr.mxu0 0.0
    %2562 = vmatpush2.msra.mxu0 %v2491
    %2563 = vmatprep.subr.mxu0 0.0
    %2564 = vmatpush2.msra.mxu0 %v2490
    %2565 = vmatprep.subr.mxu0 0.0
    %2566 = vmatpush2.msra.mxu0 %v2489
    %2567 = vmatprep.subr.mxu0 0.0
    %2568 = vmatpush2.msra.mxu0 %v2488
    %2569 = vmatprep.subr.mxu0 0.0
    %2570 = vmatpush2.msra.mxu0 %v2487
    %2571 = vmatprep.subr.mxu0 0.0
    %2572 = vmatpush2.msra.mxu0 %v2486
    %2573 = vmatprep.mubr.f32.mxu0 %v2455
    %2574 = vmatmul.mubr.f32.gmra.mxu0 %v2454
    %v2575 = vpop.f32.mrf.mxu0
    %v2576 = vadd.f32 %v2507, %v2575
    %v2577 = vpop.f32.mrf.mxu0
    %2578 = vmatprep.mubr.f32.mxu0 %v2457
    %2579 = vmatmul.mubr.f32.gmra.mxu0 %v2456
    %v2580 = vpop.f32.mrf.mxu0
    %v2581 = vadd.f32 %v2507, %v2580
    %v2582 = vpop.f32.mrf.mxu0
    %2583 = vmatprep.mubr.f32.mxu0 %v2459
    %2584 = vmatmul.mubr.f32.gmra.mxu0 %v2458
    %v2585 = vpop.f32.mrf.mxu0
    %v2586 = vadd.f32 %v2507, %v2585
    %v2587 = vpop.f32.mrf.mxu0
    %2588 = vmatprep.mubr.f32.mxu0 %v2461
    %2589 = vmatmul.mubr.f32.gmra.mxu0 %v2460
    %v2590 = vpop.f32.mrf.mxu0
    %v2591 = vadd.f32 %v2507, %v2590
    %v2592 = vpop.f32.mrf.mxu0
    %2593 = vmatprep.mubr.f32.mxu0 %v2463
    %2594 = vmatmul.mubr.f32.gmra.mxu0 %v2462
    %v2595 = vpop.f32.mrf.mxu0
    %v2596 = vadd.f32 %v2507, %v2595
    %v2597 = vpop.f32.mrf.mxu0
    %2598 = vmatprep.mubr.f32.mxu0 %v2465
    %2599 = vmatmul.mubr.f32.gmra.mxu0 %v2464
    %v2600 = vpop.f32.mrf.mxu0
    %v2601 = vadd.f32 %v2507, %v2600
    %v2602 = vpop.f32.mrf.mxu0
    %2603 = vmatprep.mubr.f32.mxu0 %v2467
    %2604 = vmatmul.mubr.f32.gmra.mxu0 %v2466
    %v2605 = vpop.f32.mrf.mxu0
    %v2606 = vadd.f32 %v2507, %v2605
    %v2607 = vpop.f32.mrf.mxu0
    %2608 = vmatprep.mubr.f32.mxu0 %v2469
    %2609 = vmatmul.mubr.f32.gmra.mxu0 %v2468
    %v2610 = vpop.f32.mrf.mxu0
    %v2611 = vadd.f32 %v2507, %v2610
    %v2612 = vpop.f32.mrf.mxu0
    %2613 = vdwg.mxu0
    %v2614 = vmax.f32 %v2576, 0.0
    %v2615 = vmax.f32 %v2581, 0.0
    %v2616 = vmax.f32 %v2586, 0.0
    %v2617 = vmax.f32 %v2591, 0.0
    %v2618 = vmax.f32 %v2596, 0.0
    %v2619 = vmax.f32 %v2601, 0.0
    %v2620 = vmax.f32 %v2606, 0.0
    %v2621 = vmax.f32 %v2611, 0.0
    %v2622 = vld [vmem:[#allocation13] sm:$0xff]
    %v2623 = vld [vmem:[#allocation13 + $0x8] sm:$0xff]
    %v2624 = vld [vmem:[#allocation13 + $0x10] sm:$0xff]
    %v2625 = vld [vmem:[#allocation13 + $0x18] sm:$0xff]
    %v2626 = vld [vmem:[#allocation13 + $0x20] sm:$0xff]
    %v2627 = vld [vmem:[#allocation13 + $0x28] sm:$0xff]
    %v2628 = vld [vmem:[#allocation13 + $0x30] sm:$0xff]
    %v2629 = vld [vmem:[#allocation13 + $0x38] sm:$0xff]
    %v2630 = vld [vmem:[#allocation13 + $0x40] sm:$0xff]
    %v2631 = vld [vmem:[#allocation13 + $0x48] sm:$0xff]
    %v2632 = vld [vmem:[#allocation13 + $0x50] sm:$0xff]
    %v2633 = vld [vmem:[#allocation13 + $0x58] sm:$0xff]
    %v2634 = vld [vmem:[#allocation13 + $0x60] sm:$0xff]
    %v2635 = vld [vmem:[#allocation13 + $0x68] sm:$0xff]
    %v2636 = vld [vmem:[#allocation13 + $0x70] sm:$0xff]
    %v2637 = vld [vmem:[#allocation13 + $0x78] sm:$0xff]
    %v2638 = vld [vmem:[%s10] sm:$0x1]
    %v2640 = vlaneseq
    %v2641 = vshrl.u32 %v2640, 7
    %v2642 = vsub.s32 0, %v2641
    %v2643 = vrot.slane %v2638, %v2642
    %2645 = vmatprep.subr.mxu0 0.0
    %2646 = vmatpush1.msra.mxu0 %v2637
    %2647 = vmatprep.subr.mxu0 0.0
    %2648 = vmatpush1.msra.mxu0 %v2636
    %2649 = vmatprep.subr.mxu0 0.0
    %2650 = vmatpush1.msra.mxu0 %v2635
    %2651 = vmatprep.subr.mxu0 0.0
    %2652 = vmatpush1.msra.mxu0 %v2634
    %2653 = vmatprep.subr.mxu0 0.0
    %2654 = vmatpush1.msra.mxu0 %v2633
    %2655 = vmatprep.subr.mxu0 0.0
    %2656 = vmatpush1.msra.mxu0 %v2632
    %2657 = vmatprep.subr.mxu0 0.0
    %2658 = vmatpush1.msra.mxu0 %v2631
    %2659 = vmatprep.subr.mxu0 0.0
    %2660 = vmatpush1.msra.mxu0 %v2630
    %2661 = vmatprep.subr.mxu0 0.0
    %2662 = vmatpush1.msra.mxu0 %v2629
    %2663 = vmatprep.subr.mxu0 0.0
    %2664 = vmatpush1.msra.mxu0 %v2628
    %2665 = vmatprep.subr.mxu0 0.0
    %2666 = vmatpush1.msra.mxu0 %v2627
    %2667 = vmatprep.subr.mxu0 0.0
    %2668 = vmatpush1.msra.mxu0 %v2626
    %2669 = vmatprep.subr.mxu0 0.0
    %2670 = vmatpush1.msra.mxu0 %v2625
    %2671 = vmatprep.subr.mxu0 0.0
    %2672 = vmatpush1.msra.mxu0 %v2624
    %2673 = vmatprep.subr.mxu0 0.0
    %2674 = vmatpush1.msra.mxu0 %v2623
    %2675 = vmatprep.subr.mxu0 0.0
    %2676 = vmatpush1.msra.mxu0 %v2622
    %2677 = vmatprep.subr.mxu0 0.0
    %2678 = vmatpush2.msra.mxu0 0.0
    %2679 = vmatprep.subr.mxu0 0.0
    %2680 = vmatpush2.msra.mxu0 0.0
    %2681 = vmatprep.subr.mxu0 0.0
    %2682 = vmatpush2.msra.mxu0 0.0
    %2683 = vmatprep.subr.mxu0 0.0
    %2684 = vmatpush2.msra.mxu0 0.0
    %2685 = vmatprep.subr.mxu0 0.0
    %2686 = vmatpush2.msra.mxu0 0.0
    %2687 = vmatprep.subr.mxu0 0.0
    %2688 = vmatpush2.msra.mxu0 0.0
    %2689 = vmatprep.subr.mxu0 0.0
    %2690 = vmatpush2.msra.mxu0 0.0
    %2691 = vmatprep.subr.mxu0 0.0
    %2692 = vmatpush2.msra.mxu0 0.0
    %2693 = vmatprep.subr.mxu0 0.0
    %2694 = vmatpush2.msra.mxu0 0.0
    %2695 = vmatprep.subr.mxu0 0.0
    %2696 = vmatpush2.msra.mxu0 0.0
    %2697 = vmatprep.subr.mxu0 0.0
    %2698 = vmatpush2.msra.mxu0 0.0
    %2699 = vmatprep.subr.mxu0 0.0
    %2700 = vmatpush2.msra.mxu0 0.0
    %2701 = vmatprep.subr.mxu0 0.0
    %2702 = vmatpush2.msra.mxu0 0.0
    %2703 = vmatprep.subr.mxu0 0.0
    %2704 = vmatpush2.msra.mxu0 0.0
    %2705 = vmatprep.subr.mxu0 0.0
    %2706 = vmatpush2.msra.mxu0 0.0
    %2707 = vmatprep.subr.mxu0 0.0
    %2708 = vmatpush2.msra.mxu0 0.0
    %2709 = vmatprep.mubr.f32.mxu0 0.0
    %2710 = vmatmul.mubr.f32.gmra.mxu0 %v2614
    %v2711 = vpop.f32.mrf.mxu0
    %v2712 = vadd.f32 %v2643, %v2711
    %v2713 = vpop.f32.mrf.mxu0
    %2714 = vmatprep.mubr.f32.mxu0 0.0
    %2715 = vmatmul.mubr.f32.gmra.mxu0 %v2615
    %v2716 = vpop.f32.mrf.mxu0
    %v2717 = vadd.f32 %v2643, %v2716
    %v2718 = vpop.f32.mrf.mxu0
    %2719 = vmatprep.mubr.f32.mxu0 0.0
    %2720 = vmatmul.mubr.f32.gmra.mxu0 %v2616
    %v2721 = vpop.f32.mrf.mxu0
    %v2722 = vadd.f32 %v2643, %v2721
    %v2723 = vpop.f32.mrf.mxu0
    %2724 = vmatprep.mubr.f32.mxu0 0.0
    %2725 = vmatmul.mubr.f32.gmra.mxu0 %v2617
    %v2726 = vpop.f32.mrf.mxu0
    %v2727 = vadd.f32 %v2643, %v2726
    %v2728 = vpop.f32.mrf.mxu0
    %2729 = vmatprep.mubr.f32.mxu0 0.0
    %2730 = vmatmul.mubr.f32.gmra.mxu0 %v2618
    %v2731 = vpop.f32.mrf.mxu0
    %v2732 = vadd.f32 %v2643, %v2731
    %v2733 = vpop.f32.mrf.mxu0
    %2734 = vmatprep.mubr.f32.mxu0 0.0
    %2735 = vmatmul.mubr.f32.gmra.mxu0 %v2619
    %v2736 = vpop.f32.mrf.mxu0
    %v2737 = vadd.f32 %v2643, %v2736
    %v2738 = vpop.f32.mrf.mxu0
    %2739 = vmatprep.mubr.f32.mxu0 0.0
    %2740 = vmatmul.mubr.f32.gmra.mxu0 %v2620
    %v2741 = vpop.f32.mrf.mxu0
    %v2742 = vadd.f32 %v2643, %v2741
    %v2743 = vpop.f32.mrf.mxu0
    %2744 = vmatprep.mubr.f32.mxu0 0.0
    %2745 = vmatmul.mubr.f32.gmra.mxu0 %v2621
    %v2746 = vpop.f32.mrf.mxu0
    %v2747 = vadd.f32 %v2643, %v2746
    %v2748 = vpop.f32.mrf.mxu0
    %2749 = vdwg.mxu0
    %v2750 = vmax.f32 %v2712, 0.0
    %v2751 = vmax.f32 %v2717, 0.0
    %v2752 = vmax.f32 %v2722, 0.0
    %v2753 = vmax.f32 %v2727, 0.0
    %v2754 = vmax.f32 %v2732, 0.0
    %v2755 = vmax.f32 %v2737, 0.0
    %v2756 = vmax.f32 %v2742, 0.0
    %v2757 = vmax.f32 %v2747, 0.0
    %v2758 = vld [vmem:[#allocation14] sm:$0xff]
    %v2759 = vld [vmem:[#allocation14 + $0x8] sm:$0xff]
    %v2760 = vld [vmem:[#allocation14 + $0x10] sm:$0xff]
    %v2761 = vld [vmem:[#allocation14 + $0x18] sm:$0xff]
    %v2762 = vld [vmem:[#allocation14 + $0x20] sm:$0xff]
    %v2763 = vld [vmem:[#allocation14 + $0x28] sm:$0xff]
    %v2764 = vld [vmem:[#allocation14 + $0x30] sm:$0xff]
    %v2765 = vld [vmem:[#allocation14 + $0x38] sm:$0xff]
    %v2766 = vld [vmem:[#allocation14 + $0x40] sm:$0xff]
    %v2767 = vld [vmem:[#allocation14 + $0x48] sm:$0xff]
    %v2768 = vld [vmem:[#allocation14 + $0x50] sm:$0xff]
    %v2769 = vld [vmem:[#allocation14 + $0x58] sm:$0xff]
    %v2770 = vld [vmem:[#allocation14 + $0x60] sm:$0xff]
    %v2771 = vld [vmem:[#allocation14 + $0x68] sm:$0xff]
    %v2772 = vld [vmem:[#allocation14 + $0x70] sm:$0xff]
    %v2773 = vld [vmem:[#allocation14 + $0x78] sm:$0xff]
    %v2774 = vld [vmem:[%s12] sm:$0x1]
    %v2776 = vlaneseq
    %v2777 = vshrl.u32 %v2776, 7
    %v2778 = vsub.s32 0, %v2777
    %v2779 = vrot.slane %v2774, %v2778
    %2781 = vmatprep.subr.mxu0 0.0
    %2782 = vmatpush1.msra.mxu0 %v2773
    %2783 = vmatprep.subr.mxu0 0.0
    %2784 = vmatpush1.msra.mxu0 %v2772
    %2785 = vmatprep.subr.mxu0 0.0
    %2786 = vmatpush1.msra.mxu0 %v2771
    %2787 = vmatprep.subr.mxu0 0.0
    %2788 = vmatpush1.msra.mxu0 %v2770
    %2789 = vmatprep.subr.mxu0 0.0
    %2790 = vmatpush1.msra.mxu0 %v2769
    %2791 = vmatprep.subr.mxu0 0.0
    %2792 = vmatpush1.msra.mxu0 %v2768
    %2793 = vmatprep.subr.mxu0 0.0
    %2794 = vmatpush1.msra.mxu0 %v2767
    %2795 = vmatprep.subr.mxu0 0.0
    %2796 = vmatpush1.msra.mxu0 %v2766
    %2797 = vmatprep.subr.mxu0 0.0
    %2798 = vmatpush1.msra.mxu0 %v2765
    %2799 = vmatprep.subr.mxu0 0.0
    %2800 = vmatpush1.msra.mxu0 %v2764
    %2801 = vmatprep.subr.mxu0 0.0
    %2802 = vmatpush1.msra.mxu0 %v2763
    %2803 = vmatprep.subr.mxu0 0.0
    %2804 = vmatpush1.msra.mxu0 %v2762
    %2805 = vmatprep.subr.mxu0 0.0
    %2806 = vmatpush1.msra.mxu0 %v2761
    %2807 = vmatprep.subr.mxu0 0.0
    %2808 = vmatpush1.msra.mxu0 %v2760
    %2809 = vmatprep.subr.mxu0 0.0
    %2810 = vmatpush1.msra.mxu0 %v2759
    %2811 = vmatprep.subr.mxu0 0.0
    %2812 = vmatpush1.msra.mxu0 %v2758
    %2813 = vmatprep.subr.mxu0 0.0
    %2814 = vmatpush2.msra.mxu0 0.0
    %2815 = vmatprep.subr.mxu0 0.0
    %2816 = vmatpush2.msra.mxu0 0.0
    %2817 = vmatprep.subr.mxu0 0.0
    %2818 = vmatpush2.msra.mxu0 0.0
    %2819 = vmatprep.subr.mxu0 0.0
    %2820 = vmatpush2.msra.mxu0 0.0
    %2821 = vmatprep.subr.mxu0 0.0
    %2822 = vmatpush2.msra.mxu0 0.0
    %2823 = vmatprep.subr.mxu0 0.0
    %2824 = vmatpush2.msra.mxu0 0.0
    %2825 = vmatprep.subr.mxu0 0.0
    %2826 = vmatpush2.msra.mxu0 0.0
    %2827 = vmatprep.subr.mxu0 0.0
    %2828 = vmatpush2.msra.mxu0 0.0
    %2829 = vmatprep.subr.mxu0 0.0
    %2830 = vmatpush2.msra.mxu0 0.0
    %2831 = vmatprep.subr.mxu0 0.0
    %2832 = vmatpush2.msra.mxu0 0.0
    %2833 = vmatprep.subr.mxu0 0.0
    %2834 = vmatpush2.msra.mxu0 0.0
    %2835 = vmatprep.subr.mxu0 0.0
    %2836 = vmatpush2.msra.mxu0 0.0
    %2837 = vmatprep.subr.mxu0 0.0
    %2838 = vmatpush2.msra.mxu0 0.0
    %2839 = vmatprep.subr.mxu0 0.0
    %2840 = vmatpush2.msra.mxu0 0.0
    %2841 = vmatprep.subr.mxu0 0.0
    %2842 = vmatpush2.msra.mxu0 0.0
    %2843 = vmatprep.subr.mxu0 0.0
    %2844 = vmatpush2.msra.mxu0 0.0
    %2845 = vmatprep.mubr.f32.mxu0 0.0
    %2846 = vmatmul.mubr.f32.gmra.mxu0 %v2750
    %v2847 = vpop.f32.mrf.mxu0
    %v2848 = vadd.f32 %v2779, %v2847
    %v2849 = vpop.f32.mrf.mxu0
    %2850 = vmatprep.mubr.f32.mxu0 0.0
    %2851 = vmatmul.mubr.f32.gmra.mxu0 %v2751
    %v2852 = vpop.f32.mrf.mxu0
    %v2853 = vadd.f32 %v2779, %v2852
    %v2854 = vpop.f32.mrf.mxu0
    %2855 = vmatprep.mubr.f32.mxu0 0.0
    %2856 = vmatmul.mubr.f32.gmra.mxu0 %v2752
    %v2857 = vpop.f32.mrf.mxu0
    %v2858 = vadd.f32 %v2779, %v2857
    %v2859 = vpop.f32.mrf.mxu0
    %2860 = vmatprep.mubr.f32.mxu0 0.0
    %2861 = vmatmul.mubr.f32.gmra.mxu0 %v2753
    %v2862 = vpop.f32.mrf.mxu0
    %v2863 = vadd.f32 %v2779, %v2862
    %v2864 = vpop.f32.mrf.mxu0
    %2865 = vmatprep.mubr.f32.mxu0 0.0
    %2866 = vmatmul.mubr.f32.gmra.mxu0 %v2754
    %v2867 = vpop.f32.mrf.mxu0
    %v2868 = vadd.f32 %v2779, %v2867
    %v2869 = vpop.f32.mrf.mxu0
    %2870 = vmatprep.mubr.f32.mxu0 0.0
    %2871 = vmatmul.mubr.f32.gmra.mxu0 %v2755
    %v2872 = vpop.f32.mrf.mxu0
    %v2873 = vadd.f32 %v2779, %v2872
    %v2874 = vpop.f32.mrf.mxu0
    %2875 = vmatprep.mubr.f32.mxu0 0.0
    %2876 = vmatmul.mubr.f32.gmra.mxu0 %v2756
    %v2877 = vpop.f32.mrf.mxu0
    %v2878 = vadd.f32 %v2779, %v2877
    %v2879 = vpop.f32.mrf.mxu0
    %2880 = vmatprep.mubr.f32.mxu0 0.0
    %2881 = vmatmul.mubr.f32.gmra.mxu0 %v2757
    %v2882 = vpop.f32.mrf.mxu0
    %v2883 = vadd.f32 %v2779, %v2882
    %v2884 = vpop.f32.mrf.mxu0
    %2885 = vdwg.mxu0
    %2886 = vst [vmem:[#allocation16] sm:$0xff] %v2848
    %2887 = vst [vmem:[#allocation16 + $0x8] sm:$0xff] %v2853
    %2888 = vst [vmem:[#allocation16 + $0x10] sm:$0xff] %v2858
    %2889 = vst [vmem:[#allocation16 + $0x18] sm:$0xff] %v2863
    %2890 = vst [vmem:[#allocation16 + $0x20] sm:$0xff] %v2868
    %2891 = vst [vmem:[#allocation16 + $0x28] sm:$0xff] %v2873
    %2892 = vst [vmem:[#allocation16 + $0x30] sm:$0xff] %v2878
    %2893 = vst [vmem:[#allocation16 + $0x38] sm:$0xff] %v2883
    // Predicated region
    $region86: #{tpu_custom_call.1} parent=1 // pred_check
      _
    $region87: #{tpu_custom_call.1} parent=1 // pred_check_branch
      %2895 = sbr.rel (0) target = $region89
    $region88: #{tpu_custom_call.1} parent=1 // pred_region
      %s2897 = ssub.s32 1024, 1024
      %2898 = vsyncadd [#allocation4], %s2897
      %s2899 = sshll.u32 [#allocation16], 4
      %s2900 = int_to_ptr.vmem [resolvable:$true] %s2899
      %2905 = dma.vmem_to_hbm [thread:$0]  %s2900, 1024, %s13, [#allocation4], 128, 128, 8
    $region89: #{tpu_custom_call.1} parent=1 // pred_fallthru
      _
    // Predicated region
    $region90: #{tpu_custom_call.1} parent=1 // pred_check
      _
    $region91: #{tpu_custom_call.1} parent=1 // pred_check_branch
      %2907 = sbr.rel (0) target = $region93
    $region92: #{tpu_custom_call.1} parent=1 // pred_region
      %2908 = dma.done [#allocation4], 1024
    $region93: #{tpu_custom_call.1} parent=1 // pred_fallthru
      _
    %2909 = vsyncpa [#allocation3], 1
    %2910 = vsyncpa [#allocation6], 1
    %2911 = vsyncpa [#allocation9], 1
    %2912 = vsyncpa [#allocation12], 1
    %2913 = vsyncpa [#allocation15], 1
    %2914 = vsyncpa [#allocation4], 1

// kernel: tpu_custom_call.1
$region0: #{tpu_custom_call.1}
  #allocation0 [shape = 'u32[]', space=smem, size = 0x4, offset = 0x4, fixed_abs, tag = 'smem constant byte address 0x4 - core index']
  #allocation1 [shape = 'u32[144,128]{1,0:T(1,128)}', space=vmem, size = 0x12000, scoped, tag = 'internal scratch']
  %s0 = inlined_call_operand.hbm [shape: f32[64,2500], index: 0, kind: input, shape index: {}]
  %s1 = inlined_call_operand.hbm [shape: f32[1024,128], index: 1, kind: input, shape index: {}]
  %s2 = inlined_call_operand.hbm [shape: f32[1152,128], index: 2, kind: input, shape index: {}]
  %s3 = inlined_call_operand.hbm [shape: f32[896,128], index: 3, kind: input, shape index: {}]
  %s4 = inlined_call_operand.vmem [shape: f32[1,384], index: 4, kind: input, shape index: {}]
  %s5 = inlined_call_operand.hbm [shape: f32[384,256], index: 5, kind: input, shape index: {}]
  %s6 = inlined_call_operand.vmem [shape: f32[1,256], index: 6, kind: input, shape index: {}]
  %s7 = inlined_call_operand.hbm [shape: f32[256,128], index: 7, kind: input, shape index: {}]
  %s8 = inlined_call_operand.vmem [shape: f32[1,128], index: 8, kind: input, shape index: {}]
  %s9 = inlined_call_operand.hbm [shape: f32[128,128], index: 9, kind: input, shape index: {}]
  %s10 = inlined_call_operand.vmem [shape: f32[1,128], index: 10, kind: input, shape index: {}]
  %s11 = inlined_call_operand.hbm [shape: f32[128,128], index: 11, kind: input, shape index: {}]
  %s12 = inlined_call_operand.vmem [shape: f32[1,128], index: 12, kind: input, shape index: {}]
  %s13 = inlined_call_operand.hbm [shape: f32[64,128], index: 13, kind: output, shape index: {}]
  %s14 = sld [smem:[#allocation0]]
  $region94: #{tpu_custom_call.1} parent=0
    _
  %s16 = ssub.s32 1, %s14
  %s17 = scalar_select 0, %s16, %s14
  $region1: #{tpu_custom_call.1} parent=0
    #allocation2 [shape = 'u8[622592]{0}', space=vmem, size = 0x98000, scoped, tag = 'input window, operand 0, single buffered']
    #allocation3 [shape = 's32[1]{0}', space=sflag, size = 0x4, scoped, tag = 'scoped memory for tpu_custom_call.1']
    #allocation4 [shape = 's32[1]{0}', space=sflag, size = 0x4, scoped, tag = 'scoped memory for tpu_custom_call.1']
    #allocation5 [shape = 'u8[524288]{0}', space=vmem, size = 0x80000, scoped, tag = 'input window, operand 1, single buffered']
    #allocation6 [shape = 's32[1]{0}', space=sflag, size = 0x4, scoped, tag = 'scoped memory for tpu_custom_call.1']
    #allocation7 [shape = 'u8[589824]{0}', space=vmem, size = 0x90000, scoped, tag = 'input window, operand 2, single buffered']
    #allocation8 [shape = 'u8[458752]{0}', space=vmem, size = 0x70000, scoped, tag = 'input window, operand 3, single buffered']
    #allocation9 [shape = 's32[1]{0}', space=sflag, size = 0x4, scoped, tag = 'scoped memory for tpu_custom_call.1']
    #allocation10 [shape = 'u8[393216]{0}', space=vmem, size = 0x60000, scoped, tag = 'input window, operand 5, single buffered']
    #allocation11 [shape = 'u8[131072]{0}', space=vmem, size = 0x20000, scoped, tag = 'input window, operand 7, single buffered']
    #allocation12 [shape = 's32[1]{0}', space=sflag, size = 0x4, scoped, tag = 'scoped memory for tpu_custom_call.1']
    #allocation13 [shape = 'u8[65536]{0}', space=vmem, size = 0x10000, scoped, tag = 'input window, operand 9, single buffered']
    #allocation14 [shape = 'u8[65536]{0}', space=vmem, size = 0x10000, scoped, tag = 'input window, operand 11, single buffered']
    #allocation15 [shape = 's32[1]{0}', space=sflag, size = 0x4, scoped, tag = 'scoped memory for tpu_custom_call.1']
    #allocation16 [shape = 'u8[32768]{0}', space=vmem, size = 0x8000, scoped, tag = 'output window, operand 0, single buffered']
    %18 = vsyncpa [#allocation3], 0
    %19 = vsyncpa [#allocation6], 0
    %20 = vsyncpa [#allocation9], 0
    %21 = vsyncpa [#allocation12], 0
    %22 = vsyncpa [#allocation15], 0
    %23 = vsyncpa [#allocation4], 0
    // Predicated region
    $region2: #{tpu_custom_call.1} parent=1 // pred_check
      _
    $region3: #{tpu_custom_call.1} parent=1 // pred_check_branch
      %25 = sbr.rel (0) target = $region5
    $region4: #{tpu_custom_call.1} parent=1 // pred_region
      %s27 = ssub.s32 19456, 19456
      %28 = vsyncadd [#allocation3], %s27
      %s29 = sshll.u32 [#allocation2], 4
      %s30 = int_to_ptr.vmem [resolvable:$true] %s29
      %35 = dma.hbm_to_vmem [thread:$0]  %s0, 19456, %s30, [#allocation3], 2560, 2432, 152
    $region5: #{tpu_custom_call.1} parent=1 // pred_fallthru
      _
    // Predicated region
    $region6: #{tpu_custom_call.1} parent=1 // pred_check
      _
    $region7: #{tpu_custom_call.1} parent=1 // pred_check_branch
      %37 = sbr.rel (0) target = $region9
    $region8: #{tpu_custom_call.1} parent=1 // pred_region
      %s39 = ssub.s32 16384, 16384
      %40 = vsyncadd [#allocation6], %s39
      %s41 = sshll.u32 [#allocation5], 4
      %s42 = int_to_ptr.vmem [resolvable:$true] %s41
      %47 = dma.hbm_to_vmem [thread:$0]  %s1, 16384, %s42, [#allocation6], 128, 128, 8
    $region9: #{tpu_custom_call.1} parent=1 // pred_fallthru
      _
    // Predicated region
    $region10: #{tpu_custom_call.1} parent=1 // pred_check
      _
    $region11: #{tpu_custom_call.1} parent=1 // pred_check_branch
      %49 = sbr.rel (0) target = $region13
    $region12: #{tpu_custom_call.1} parent=1 // pred_region
      %s51 = ssub.s32 18432, 18432
      %52 = vsyncadd [#allocation6], %s51
      %s53 = sshll.u32 [#allocation7], 4
      %s54 = int_to_ptr.vmem [resolvable:$true] %s53
      %59 = dma.hbm_to_vmem [thread:$0]  %s2, 18432, %s54, [#allocation6], 128, 128, 8
    $region13: #{tpu_custom_call.1} parent=1 // pred_fallthru
      _
    // Predicated region
    $region14: #{tpu_custom_call.1} parent=1 // pred_check
      _
    $region15: #{tpu_custom_call.1} parent=1 // pred_check_branch
      %61 = sbr.rel (0) target = $region17
    $region16: #{tpu_custom_call.1} parent=1 // pred_region
      %s63 = ssub.s32 14336, 14336
      %64 = vsyncadd [#allocation9], %s63
      %s65 = sshll.u32 [#allocation8], 4
      %s66 = int_to_ptr.vmem [resolvable:$true] %s65
      %71 = dma.hbm_to_vmem [thread:$0]  %s3, 14336, %s66, [#allocation9], 128, 128, 8
    $region17: #{tpu_custom_call.1} parent=1 // pred_fallthru
      _
    // Predicated region
    $region18: #{tpu_custom_call.1} parent=1 // pred_check
      _
    $region19: #{tpu_custom_call.1} parent=1 // pred_check_branch
      %73 = sbr.rel (0) target = $region21
    $region20: #{tpu_custom_call.1} parent=1 // pred_region
      _
    $region21: #{tpu_custom_call.1} parent=1 // pred_fallthru
      _
    // Predicated region
    $region22: #{tpu_custom_call.1} parent=1 // pred_check
      _
    $region23: #{tpu_custom_call.1} parent=1 // pred_check_branch
      %75 = sbr.rel (0) target = $region25
    $region24: #{tpu_custom_call.1} parent=1 // pred_region
      %s77 = ssub.s32 12288, 12288
      %78 = vsyncadd [#allocation9], %s77
      %s79 = sshll.u32 [#allocation10], 4
      %s80 = int_to_ptr.vmem [resolvable:$true] %s79
      %85 = dma.hbm_to_vmem [thread:$0]  %s5, 12288, %s80, [#allocation9], 256, 256, 16
    $region25: #{tpu_custom_call.1} parent=1 // pred_fallthru
      _
    // Predicated region
    $region26: #{tpu_custom_call.1} parent=1 // pred_check
      _
    $region27: #{tpu_custom_call.1} parent=1 // pred_check_branch
      %87 = sbr.rel (0) target = $region29
    $region28: #{tpu_custom_call.1} parent=1 // pred_region
      _
    $region29: #{tpu_custom_call.1} parent=1 // pred_fallthru
      _
    // Predicated region
    $region30: #{tpu_custom_call.1} parent=1 // pred_check
      _
    $region31: #{tpu_custom_call.1} parent=1 // pred_check_branch
      %89 = sbr.rel (0) target = $region33
    $region32: #{tpu_custom_call.1} parent=1 // pred_region
      %s91 = ssub.s32 4096, 4096
      %92 = vsyncadd [#allocation12], %s91
      %s93 = sshll.u32 [#allocation11], 4
      %s94 = int_to_ptr.vmem [resolvable:$true] %s93
      %99 = dma.hbm_to_vmem [thread:$0]  %s7, 4096, %s94, [#allocation12], 128, 128, 8
    $region33: #{tpu_custom_call.1} parent=1 // pred_fallthru
      _
    // Predicated region
    $region34: #{tpu_custom_call.1} parent=1 // pred_check
      _
    $region35: #{tpu_custom_call.1} parent=1 // pred_check_branch
      %101 = sbr.rel (0) target = $region37
    $region36: #{tpu_custom_call.1} parent=1 // pred_region
      _
    $region37: #{tpu_custom_call.1} parent=1 // pred_fallthru
      _
    // Predicated region
    $region38: #{tpu_custom_call.1} parent=1 // pred_check
      _
    $region39: #{tpu_custom_call.1} parent=1 // pred_check_branch
      %103 = sbr.rel (0) target = $region41
    $region40: #{tpu_custom_call.1} parent=1 // pred_region
      %s105 = ssub.s32 2048, 2048
      %106 = vsyncadd [#allocation12], %s105
      %s107 = sshll.u32 [#allocation13], 4
      %s108 = int_to_ptr.vmem [resolvable:$true] %s107
      %113 = dma.hbm_to_vmem [thread:$0]  %s9, 2048, %s108, [#allocation12], 128, 128, 8
    $region41: #{tpu_custom_call.1} parent=1 // pred_fallthru
      _
    // Predicated region
    $region42: #{tpu_custom_call.1} parent=1 // pred_check
      _
    $region43: #{tpu_custom_call.1} parent=1 // pred_check_branch
      %115 = sbr.rel (0) target = $region45
    $region44: #{tpu_custom_call.1} parent=1 // pred_region
      _
    $region45: #{tpu_custom_call.1} parent=1 // pred_fallthru
      _
    // Predicated region
    $region46: #{tpu_custom_call.1} parent=1 // pred_check
      _
    $region47: #{tpu_custom_call.1} parent=1 // pred_check_branch
      %117 = sbr.rel (0) target = $region49
    $region48: #{tpu_custom_call.1} parent=1 // pred_region
      %s119 = ssub.s32 2048, 2048
      %120 = vsyncadd [#allocation15], %s119
      %s121 = sshll.u32 [#allocation14], 4
      %s122 = int_to_ptr.vmem [resolvable:$true] %s121
      %127 = dma.hbm_to_vmem [thread:$0]  %s11, 2048, %s122, [#allocation15], 128, 128, 8
    $region49: #{tpu_custom_call.1} parent=1 // pred_fallthru
      _
    // Predicated region
    $region50: #{tpu_custom_call.1} parent=1 // pred_check
      _
    $region51: #{tpu_custom_call.1} parent=1 // pred_check_branch
      %129 = sbr.rel (0) target = $region53
    $region52: #{tpu_custom_call.1} parent=1 // pred_region
      _
    $region53: #{tpu_custom_call.1} parent=1 // pred_fallthru
      _
    // Predicated region
    $region54: #{tpu_custom_call.1} parent=1 // pred_check
      _
    $region55: #{tpu_custom_call.1} parent=1 // pred_check_branch
      %131 = sbr.rel (0) target = $region57
    $region56: #{tpu_custom_call.1} parent=1 // pred_region
      %132 = dma.done [#allocation3], 19456
    $region57: #{tpu_custom_call.1} parent=1 // pred_fallthru
      _
    // Predicated region
    $region58: #{tpu_custom_call.1} parent=1 // pred_check
      _
    $region59: #{tpu_custom_call.1} parent=1 // pred_check_branch
      %134 = sbr.rel (0) target = $region61
    $region60: #{tpu_custom_call.1} parent=1 // pred_region
      %135 = dma.done [#allocation6], 16384
    $region61: #{tpu_custom_call.1} parent=1 // pred_fallthru
      _
    // Predicated region
    $region62: #{tpu_custom_call.1} parent=1 // pred_check
      _
    $region63: #{tpu_custom_call.1} parent=1 // pred_check_branch
      %137 = sbr.rel (0) target = $region65
    $region64: #{tpu_custom_call.1} parent=1 // pred_region
      %138 = dma.done [#allocation6], 18432
    $region65: #{tpu_custom_call.1} parent=1 // pred_fallthru
      _
    // Predicated region
    $region66: #{tpu_custom_call.1} parent=1 // pred_check
      _
    $region67: #{tpu_custom_call.1} parent=1 // pred_check_branch
      %140 = sbr.rel (0) target = $region69
    $region68: #{tpu_custom_call.1} parent=1 // pred_region
      %141 = dma.done [#allocation9], 14336
    $region69: #{tpu_custom_call.1} parent=1 // pred_fallthru
      _
    // Predicated region
    $region70: #{tpu_custom_call.1} parent=1 // pred_check
      _
    $region71: #{tpu_custom_call.1} parent=1 // pred_check_branch
      %143 = sbr.rel (0) target = $region73
    $region72: #{tpu_custom_call.1} parent=1 // pred_region
      %144 = dma.done [#allocation9], 12288
    $region73: #{tpu_custom_call.1} parent=1 // pred_fallthru
      _
    // Predicated region
    $region74: #{tpu_custom_call.1} parent=1 // pred_check
      _
    $region75: #{tpu_custom_call.1} parent=1 // pred_check_branch
      %146 = sbr.rel (0) target = $region77
    $region76: #{tpu_custom_call.1} parent=1 // pred_region
      %147 = dma.done [#allocation12], 4096
    $region77: #{tpu_custom_call.1} parent=1 // pred_fallthru
      _
    // Predicated region
    $region78: #{tpu_custom_call.1} parent=1 // pred_check
      _
    $region79: #{tpu_custom_call.1} parent=1 // pred_check_branch
      %149 = sbr.rel (0) target = $region81
    $region80: #{tpu_custom_call.1} parent=1 // pred_region
      %150 = dma.done [#allocation12], 2048
    $region81: #{tpu_custom_call.1} parent=1 // pred_fallthru
      _
    // Predicated region
    $region82: #{tpu_custom_call.1} parent=1 // pred_check
      _
    $region83: #{tpu_custom_call.1} parent=1 // pred_check_branch
      %152 = sbr.rel (0) target = $region85
    $region84: #{tpu_custom_call.1} parent=1 // pred_region
      %153 = dma.done [#allocation15], 2048
    $region85: #{tpu_custom_call.1} parent=1 // pred_fallthru
      _
    %v154 = vld [vmem:[#allocation2] sm:$0xff]
    %v155 = vld [vmem:[#allocation2 + $0x8] sm:$0xff]
    %v156 = vld [vmem:[#allocation2 + $0x10] sm:$0xff]
    %v157 = vld [vmem:[#allocation2 + $0x18] sm:$0xff]
    %v158 = vld [vmem:[#allocation2 + $0x20] sm:$0xff]
    %v159 = vld [vmem:[#allocation2 + $0x28] sm:$0xff]
    %v160 = vld [vmem:[#allocation2 + $0x30] sm:$0xff]
    %v161 = vld [vmem:[#allocation2 + $0x38] sm:$0xff]
    %v162 = vld [vmem:[#allocation2 + $0x40] sm:$0xff]
    %v163 = vld [vmem:[#allocation2 + $0x48] sm:$0xff]
    %v164 = vld [vmem:[#allocation2 + $0x50] sm:$0xff]
    %v165 = vld [vmem:[#allocation2 + $0x58] sm:$0xff]
    %v166 = vld [vmem:[#allocation2 + $0x60] sm:$0xff]
    %v167 = vld [vmem:[#allocation2 + $0x68] sm:$0xff]
    %v168 = vld [vmem:[#allocation2 + $0x70] sm:$0xff]
    %v169 = vld [vmem:[#allocation2 + $0x78] sm:$0xff]
    %v170 = vld [vmem:[#allocation2 + $0x80] sm:$0xff]
    %v171 = vld [vmem:[#allocation2 + $0x88] sm:$0xff]
    %v172 = vld [vmem:[#allocation2 + $0x90] sm:$0xff]
    %v173 = vld [vmem:[#allocation2 + $0x98] sm:$0xff]
    %v174 = vld [vmem:[#allocation2 + $0xa0] sm:$0xff]
    %v175 = vld [vmem:[#allocation2 + $0xa8] sm:$0xff]
    %v176 = vld [vmem:[#allocation2 + $0xb0] sm:$0xff]
    %v177 = vld [vmem:[#allocation2 + $0xb8] sm:$0xff]
    %v178 = vld [vmem:[#allocation2 + $0xc0] sm:$0xff]
    %v179 = vld [vmem:[#allocation2 + $0xc8] sm:$0xff]
    %v180 = vld [vmem:[#allocation2 + $0xd0] sm:$0xff]
    %v181 = vld [vmem:[#allocation2 + $0xd8] sm:$0xff]
    %v182 = vld [vmem:[#allocation2 + $0xe0] sm:$0xff]
    %v183 = vld [vmem:[#allocation2 + $0xe8] sm:$0xff]
    %v184 = vld [vmem:[#allocation2 + $0xf0] sm:$0xff]
    %v185 = vld [vmem:[#allocation2 + $0xf8] sm:$0xff]
    %v186 = vld [vmem:[#allocation2 + $0x100] sm:$0xff]
    %v187 = vld [vmem:[#allocation2 + $0x108] sm:$0xff]
    %v188 = vld [vmem:[#allocation2 + $0x110] sm:$0xff]
    %v189 = vld [vmem:[#allocation2 + $0x118] sm:$0xff]
    %v190 = vld [vmem:[#allocation2 + $0x120] sm:$0xff]
    %v191 = vld [vmem:[#allocation2 + $0x128] sm:$0xff]
    %v192 = vld [vmem:[#allocation2 + $0x130] sm:$0xff]
    %v193 = vld [vmem:[#allocation2 + $0x138] sm:$0xff]
    %v194 = vld [vmem:[#allocation2 + $0x140] sm:$0xff]
    %v195 = vld [vmem:[#allocation2 + $0x148] sm:$0xff]
    %v196 = vld [vmem:[#allocation2 + $0x150] sm:$0xff]
    %v197 = vld [vmem:[#allocation2 + $0x158] sm:$0xff]
    %v198 = vld [vmem:[#allocation2 + $0x160] sm:$0xff]
    %v199 = vld [vmem:[#allocation2 + $0x168] sm:$0xff]
    %v200 = vld [vmem:[#allocation2 + $0x170] sm:$0xff]
    %v201 = vld [vmem:[#allocation2 + $0x178] sm:$0xff]
    %v202 = vld [vmem:[#allocation2 + $0x180] sm:$0xff]
    %v203 = vld [vmem:[#allocation2 + $0x188] sm:$0xff]
    %v204 = vld [vmem:[#allocation2 + $0x190] sm:$0xff]
    %v205 = vld [vmem:[#allocation2 + $0x198] sm:$0xff]
    %v206 = vld [vmem:[#allocation2 + $0x1a0] sm:$0xff]
    %v207 = vld [vmem:[#allocation2 + $0x1a8] sm:$0xff]
    %v208 = vld [vmem:[#allocation2 + $0x1b0] sm:$0xff]
    %v209 = vld [vmem:[#allocation2 + $0x1b8] sm:$0xff]
    %v210 = vld [vmem:[#allocation2 + $0x1c0] sm:$0xff]
    %v211 = vld [vmem:[#allocation2 + $0x1c8] sm:$0xff]
    %v212 = vld [vmem:[#allocation2 + $0x1d0] sm:$0xff]
    %v213 = vld [vmem:[#allocation2 + $0x1d8] sm:$0xff]
    %v214 = vld [vmem:[#allocation2 + $0x1e0] sm:$0xff]
    %v215 = vld [vmem:[#allocation2 + $0x1e8] sm:$0xff]
    %v216 = vld [vmem:[#allocation2 + $0x1f0] sm:$0xff]
    %v217 = vld [vmem:[#allocation2 + $0x1f8] sm:$0xff]
    %v218 = vld [vmem:[#allocation2 + $0x200] sm:$0xff]
    %v219 = vld [vmem:[#allocation2 + $0x208] sm:$0xff]
    %v220 = vld [vmem:[#allocation2 + $0x210] sm:$0xff]
    %v221 = vld [vmem:[#allocation2 + $0x218] sm:$0xff]
    %v222 = vld [vmem:[#allocation2 + $0x220] sm:$0xff]
    %v223 = vld [vmem:[#allocation2 + $0x228] sm:$0xff]
    %v224 = vld [vmem:[#allocation2 + $0x230] sm:$0xff]
    %v225 = vld [vmem:[#allocation2 + $0x238] sm:$0xff]
    %v226 = vld [vmem:[#allocation2 + $0x240] sm:$0xff]
    %v227 = vld [vmem:[#allocation2 + $0x248] sm:$0xff]
    %v228 = vld [vmem:[#allocation2 + $0x250] sm:$0xff]
    %v229 = vld [vmem:[#allocation2 + $0x258] sm:$0xff]
    %v230 = vld [vmem:[#allocation2 + $0x260] sm:$0xff]
    %v231 = vld [vmem:[#allocation2 + $0x268] sm:$0xff]
    %v232 = vld [vmem:[#allocation2 + $0x270] sm:$0xff]
    %v233 = vld [vmem:[#allocation2 + $0x278] sm:$0xff]
    %v234 = vld [vmem:[#allocation2 + $0x280] sm:$0xff]
    %v235 = vld [vmem:[#allocation2 + $0x288] sm:$0xff]
    %v236 = vld [vmem:[#allocation2 + $0x290] sm:$0xff]
    %v237 = vld [vmem:[#allocation2 + $0x298] sm:$0xff]
    %v238 = vld [vmem:[#allocation2 + $0x2a0] sm:$0xff]
    %v239 = vld [vmem:[#allocation2 + $0x2a8] sm:$0xff]
    %v240 = vld [vmem:[#allocation2 + $0x2b0] sm:$0xff]
    %v241 = vld [vmem:[#allocation2 + $0x2b8] sm:$0xff]
    %v242 = vld [vmem:[#allocation2 + $0x2c0] sm:$0xff]
    %v243 = vld [vmem:[#allocation2 + $0x2c8] sm:$0xff]
    %v244 = vld [vmem:[#allocation2 + $0x2d0] sm:$0xff]
    %v245 = vld [vmem:[#allocation2 + $0x2d8] sm:$0xff]
    %v246 = vld [vmem:[#allocation2 + $0x2e0] sm:$0xff]
    %v247 = vld [vmem:[#allocation2 + $0x2e8] sm:$0xff]
    %v248 = vld [vmem:[#allocation2 + $0x2f0] sm:$0xff]
    %v249 = vld [vmem:[#allocation2 + $0x2f8] sm:$0xff]
    %v250 = vld [vmem:[#allocation2 + $0x300] sm:$0xff]
    %v251 = vld [vmem:[#allocation2 + $0x308] sm:$0xff]
    %v252 = vld [vmem:[#allocation2 + $0x310] sm:$0xff]
    %v253 = vld [vmem:[#allocation2 + $0x318] sm:$0xff]
    %v254 = vld [vmem:[#allocation2 + $0x320] sm:$0xff]
    %v255 = vld [vmem:[#allocation2 + $0x328] sm:$0xff]
    %v256 = vld [vmem:[#allocation2 + $0x330] sm:$0xff]
    %v257 = vld [vmem:[#allocation2 + $0x338] sm:$0xff]
    %v258 = vld [vmem:[#allocation2 + $0x340] sm:$0xff]
    %v259 = vld [vmem:[#allocation2 + $0x348] sm:$0xff]
    %v260 = vld [vmem:[#allocation2 + $0x350] sm:$0xff]
    %v261 = vld [vmem:[#allocation2 + $0x358] sm:$0xff]
    %v262 = vld [vmem:[#allocation2 + $0x360] sm:$0xff]
    %v263 = vld [vmem:[#allocation2 + $0x368] sm:$0xff]
    %v264 = vld [vmem:[#allocation2 + $0x370] sm:$0xff]
    %v265 = vld [vmem:[#allocation2 + $0x378] sm:$0xff]
    %v266 = vld [vmem:[#allocation2 + $0x380] sm:$0xff]
    %v267 = vld [vmem:[#allocation2 + $0x388] sm:$0xff]
    %v268 = vld [vmem:[#allocation2 + $0x390] sm:$0xff]
    %v269 = vld [vmem:[#allocation2 + $0x398] sm:$0xff]
    %v270 = vld [vmem:[#allocation2 + $0x3a0] sm:$0xff]
    %v271 = vld [vmem:[#allocation2 + $0x3a8] sm:$0xff]
    %v272 = vld [vmem:[#allocation2 + $0x3b0] sm:$0xff]
    %v273 = vld [vmem:[#allocation2 + $0x3b8] sm:$0xff]
    %v274 = vld [vmem:[#allocation2 + $0x3c0] sm:$0xff]
    %v275 = vld [vmem:[#allocation2 + $0x3c8] sm:$0xff]
    %v276 = vld [vmem:[#allocation2 + $0x3d0] sm:$0xff]
    %v277 = vld [vmem:[#allocation2 + $0x3d8] sm:$0xff]
    %v278 = vld [vmem:[#allocation2 + $0x3e0] sm:$0xff]
    %v279 = vld [vmem:[#allocation2 + $0x3e8] sm:$0xff]
    %v280 = vld [vmem:[#allocation2 + $0x3f0] sm:$0xff]
    %v281 = vld [vmem:[#allocation2 + $0x3f8] sm:$0xff]
    %v282 = vld [vmem:[#allocation2 + $0x400] sm:$0xff]
    %v283 = vld [vmem:[#allocation2 + $0x408] sm:$0xff]
    %v284 = vld [vmem:[#allocation2 + $0x410] sm:$0xff]
    %v285 = vld [vmem:[#allocation2 + $0x418] sm:$0xff]
    %v286 = vld [vmem:[#allocation2 + $0x420] sm:$0xff]
    %v287 = vld [vmem:[#allocation2 + $0x428] sm:$0xff]
    %v288 = vld [vmem:[#allocation2 + $0x430] sm:$0xff]
    %v289 = vld [vmem:[#allocation2 + $0x438] sm:$0xff]
    %v290 = vld [vmem:[#allocation2 + $0x440] sm:$0xff]
    %v291 = vld [vmem:[#allocation2 + $0x448] sm:$0xff]
    %v292 = vld [vmem:[#allocation2 + $0x450] sm:$0xff]
    %v293 = vld [vmem:[#allocation2 + $0x458] sm:$0xff]
    %v294 = vld [vmem:[#allocation2 + $0x460] sm:$0xff]
    %v295 = vld [vmem:[#allocation2 + $0x468] sm:$0xff]
    %v296 = vld [vmem:[#allocation2 + $0x470] sm:$0xff]
    %v297 = vld [vmem:[#allocation2 + $0x478] sm:$0xff]
    %v298 = vld [vmem:[#allocation2 + $0x480] sm:$0xff]
    %v299 = vld [vmem:[#allocation2 + $0x488] sm:$0xff]
    %v300 = vld [vmem:[#allocation2 + $0x490] sm:$0xff]
    %v301 = vld [vmem:[#allocation2 + $0x498] sm:$0xff]
    %v302 = vld [vmem:[#allocation2 + $0x4a0] sm:$0xff]
    %v303 = vld [vmem:[#allocation2 + $0x4a8] sm:$0xff]
    %v304 = vld [vmem:[#allocation2 + $0x4b0] sm:$0xff]
    %v305 = vld [vmem:[#allocation2 + $0x4b8] sm:$0xff]
    %v306 = vld [vmem:[#allocation5] sm:$0xff]
    %v307 = vld [vmem:[#allocation5 + $0x8] sm:$0xff]
    %v308 = vld [vmem:[#allocation5 + $0x10] sm:$0xff]
    %v309 = vld [vmem:[#allocation5 + $0x18] sm:$0xff]
    %v310 = vld [vmem:[#allocation5 + $0x20] sm:$0xff]
    %v311 = vld [vmem:[#allocation5 + $0x28] sm:$0xff]
    %v312 = vld [vmem:[#allocation5 + $0x30] sm:$0xff]
    %v313 = vld [vmem:[#allocation5 + $0x38] sm:$0xff]
    %v314 = vld [vmem:[#allocation5 + $0x40] sm:$0xff]
    %v315 = vld [vmem:[#allocation5 + $0x48] sm:$0xff]
    %v316 = vld [vmem:[#allocation5 + $0x50] sm:$0xff]
    %v317 = vld [vmem:[#allocation5 + $0x58] sm:$0xff]
    %v318 = vld [vmem:[#allocation5 + $0x60] sm:$0xff]
    %v319 = vld [vmem:[#allocation5 + $0x68] sm:$0xff]
    %v320 = vld [vmem:[#allocation5 + $0x70] sm:$0xff]
    %v321 = vld [vmem:[#allocation5 + $0x78] sm:$0xff]
    %v322 = vld [vmem:[#allocation5 + $0x80] sm:$0xff]
    %v323 = vld [vmem:[#allocation5 + $0x88] sm:$0xff]
    %v324 = vld [vmem:[#allocation5 + $0x90] sm:$0xff]
    %v325 = vld [vmem:[#allocation5 + $0x98] sm:$0xff]
    %v326 = vld [vmem:[#allocation5 + $0xa0] sm:$0xff]
    %v327 = vld [vmem:[#allocation5 + $0xa8] sm:$0xff]
    %v328 = vld [vmem:[#allocation5 + $0xb0] sm:$0xff]
    %v329 = vld [vmem:[#allocation5 + $0xb8] sm:$0xff]
    %v330 = vld [vmem:[#allocation5 + $0xc0] sm:$0xff]
    %v331 = vld [vmem:[#allocation5 + $0xc8] sm:$0xff]
    %v332 = vld [vmem:[#allocation5 + $0xd0] sm:$0xff]
    %v333 = vld [vmem:[#allocation5 + $0xd8] sm:$0xff]
    %v334 = vld [vmem:[#allocation5 + $0xe0] sm:$0xff]
    %v335 = vld [vmem:[#allocation5 + $0xe8] sm:$0xff]
    %v336 = vld [vmem:[#allocation5 + $0xf0] sm:$0xff]
    %v337 = vld [vmem:[#allocation5 + $0xf8] sm:$0xff]
    %v338 = vld [vmem:[#allocation5 + $0x100] sm:$0xff]
    %v339 = vld [vmem:[#allocation5 + $0x108] sm:$0xff]
    %v340 = vld [vmem:[#allocation5 + $0x110] sm:$0xff]
    %v341 = vld [vmem:[#allocation5 + $0x118] sm:$0xff]
    %v342 = vld [vmem:[#allocation5 + $0x120] sm:$0xff]
    %v343 = vld [vmem:[#allocation5 + $0x128] sm:$0xff]
    %v344 = vld [vmem:[#allocation5 + $0x130] sm:$0xff]
    %v345 = vld [vmem:[#allocation5 + $0x138] sm:$0xff]
    %v346 = vld [vmem:[#allocation5 + $0x140] sm:$0xff]
    %v347 = vld [vmem:[#allocation5 + $0x148] sm:$0xff]
    %v348 = vld [vmem:[#allocation5 + $0x150] sm:$0xff]
    %v349 = vld [vmem:[#allocation5 + $0x158] sm:$0xff]
    %v350 = vld [vmem:[#allocation5 + $0x160] sm:$0xff]
    %v351 = vld [vmem:[#allocation5 + $0x168] sm:$0xff]
    %v352 = vld [vmem:[#allocation5 + $0x170] sm:$0xff]
    %v353 = vld [vmem:[#allocation5 + $0x178] sm:$0xff]
    %v354 = vld [vmem:[#allocation5 + $0x180] sm:$0xff]
    %v355 = vld [vmem:[#allocation5 + $0x188] sm:$0xff]
    %v356 = vld [vmem:[#allocation5 + $0x190] sm:$0xff]
    %v357 = vld [vmem:[#allocation5 + $0x198] sm:$0xff]
    %v358 = vld [vmem:[#allocation5 + $0x1a0] sm:$0xff]
    %v359 = vld [vmem:[#allocation5 + $0x1a8] sm:$0xff]
    %v360 = vld [vmem:[#allocation5 + $0x1b0] sm:$0xff]
    %v361 = vld [vmem:[#allocation5 + $0x1b8] sm:$0xff]
    %v362 = vld [vmem:[#allocation5 + $0x1c0] sm:$0xff]
    %v363 = vld [vmem:[#allocation5 + $0x1c8] sm:$0xff]
    %v364 = vld [vmem:[#allocation5 + $0x1d0] sm:$0xff]
    %v365 = vld [vmem:[#allocation5 + $0x1d8] sm:$0xff]
    %v366 = vld [vmem:[#allocation5 + $0x1e0] sm:$0xff]
    %v367 = vld [vmem:[#allocation5 + $0x1e8] sm:$0xff]
    %v368 = vld [vmem:[#allocation5 + $0x1f0] sm:$0xff]
    %v369 = vld [vmem:[#allocation5 + $0x1f8] sm:$0xff]
    %v370 = vld [vmem:[#allocation5 + $0x200] sm:$0xff]
    %v371 = vld [vmem:[#allocation5 + $0x208] sm:$0xff]
    %v372 = vld [vmem:[#allocation5 + $0x210] sm:$0xff]
    %v373 = vld [vmem:[#allocation5 + $0x218] sm:$0xff]
    %v374 = vld [vmem:[#allocation5 + $0x220] sm:$0xff]
    %v375 = vld [vmem:[#allocation5 + $0x228] sm:$0xff]
    %v376 = vld [vmem:[#allocation5 + $0x230] sm:$0xff]
    %v377 = vld [vmem:[#allocation5 + $0x238] sm:$0xff]
    %v378 = vld [vmem:[#allocation5 + $0x240] sm:$0xff]
    %v379 = vld [vmem:[#allocation5 + $0x248] sm:$0xff]
    %v380 = vld [vmem:[#allocation5 + $0x250] sm:$0xff]
    %v381 = vld [vmem:[#allocation5 + $0x258] sm:$0xff]
    %v382 = vld [vmem:[#allocation5 + $0x260] sm:$0xff]
    %v383 = vld [vmem:[#allocation5 + $0x268] sm:$0xff]
    %v384 = vld [vmem:[#allocation5 + $0x270] sm:$0xff]
    %v385 = vld [vmem:[#allocation5 + $0x278] sm:$0xff]
    %v386 = vld [vmem:[#allocation5 + $0x280] sm:$0xff]
    %v387 = vld [vmem:[#allocation5 + $0x288] sm:$0xff]
    %v388 = vld [vmem:[#allocation5 + $0x290] sm:$0xff]
    %v389 = vld [vmem:[#allocation5 + $0x298] sm:$0xff]
    %v390 = vld [vmem:[#allocation5 + $0x2a0] sm:$0xff]
    %v391 = vld [vmem:[#allocation5 + $0x2a8] sm:$0xff]
    %v392 = vld [vmem:[#allocation5 + $0x2b0] sm:$0xff]
    %v393 = vld [vmem:[#allocation5 + $0x2b8] sm:$0xff]
    %v394 = vld [vmem:[#allocation5 + $0x2c0] sm:$0xff]
    %v395 = vld [vmem:[#allocation5 + $0x2c8] sm:$0xff]
    %v396 = vld [vmem:[#allocation5 + $0x2d0] sm:$0xff]
    %v397 = vld [vmem:[#allocation5 + $0x2d8] sm:$0xff]
    %v398 = vld [vmem:[#allocation5 + $0x2e0] sm:$0xff]
    %v399 = vld [vmem:[#allocation5 + $0x2e8] sm:$0xff]
    %v400 = vld [vmem:[#allocation5 + $0x2f0] sm:$0xff]
    %v401 = vld [vmem:[#allocation5 + $0x2f8] sm:$0xff]
    %v402 = vld [vmem:[#allocation5 + $0x300] sm:$0xff]
    %v403 = vld [vmem:[#allocation5 + $0x308] sm:$0xff]
    %v404 = vld [vmem:[#allocation5 + $0x310] sm:$0xff]
    %v405 = vld [vmem:[#allocation5 + $0x318] sm:$0xff]
    %v406 = vld [vmem:[#allocation5 + $0x320] sm:$0xff]
    %v407 = vld [vmem:[#allocation5 + $0x328] sm:$0xff]
    %v408 = vld [vmem:[#allocation5 + $0x330] sm:$0xff]
    %v409 = vld [vmem:[#allocation5 + $0x338] sm:$0xff]
    %v410 = vld [vmem:[#allocation5 + $0x340] sm:$0xff]
    %v411 = vld [vmem:[#allocation5 + $0x348] sm:$0xff]
    %v412 = vld [vmem:[#allocation5 + $0x350] sm:$0xff]
    %v413 = vld [vmem:[#allocation5 + $0x358] sm:$0xff]
    %v414 = vld [vmem:[#allocation5 + $0x360] sm:$0xff]
    %v415 = vld [vmem:[#allocation5 + $0x368] sm:$0xff]
    %v416 = vld [vmem:[#allocation5 + $0x370] sm:$0xff]
    %v417 = vld [vmem:[#allocation5 + $0x378] sm:$0xff]
    %v418 = vld [vmem:[#allocation5 + $0x380] sm:$0xff]
    %v419 = vld [vmem:[#allocation5 + $0x388] sm:$0xff]
    %v420 = vld [vmem:[#allocation5 + $0x390] sm:$0xff]
    %v421 = vld [vmem:[#allocation5 + $0x398] sm:$0xff]
    %v422 = vld [vmem:[#allocation5 + $0x3a0] sm:$0xff]
    %v423 = vld [vmem:[#allocation5 + $0x3a8] sm:$0xff]
    %v424 = vld [vmem:[#allocation5 + $0x3b0] sm:$0xff]
    %v425 = vld [vmem:[#allocation5 + $0x3b8] sm:$0xff]
    %v426 = vld [vmem:[#allocation5 + $0x3c0] sm:$0xff]
    %v427 = vld [vmem:[#allocation5 + $0x3c8] sm:$0xff]
    %v428 = vld [vmem:[#allocation5 + $0x3d0] sm:$0xff]
    %v429 = vld [vmem:[#allocation5 + $0x3d8] sm:$0xff]
    %v430 = vld [vmem:[#allocation5 + $0x3e0] sm:$0xff]
    %v431 = vld [vmem:[#allocation5 + $0x3e8] sm:$0xff]
    %v432 = vld [vmem:[#allocation5 + $0x3f0] sm:$0xff]
    %v433 = vld [vmem:[#allocation5 + $0x3f8] sm:$0xff]
    %434 = vmatprep.subr.mxu0 0.0
    %435 = vmatpush1.msra.mxu0 %v321
    %436 = vmatprep.subr.mxu0 0.0
    %437 = vmatpush1.msra.mxu0 %v320
    %438 = vmatprep.subr.mxu0 0.0
    %439 = vmatpush1.msra.mxu0 %v319
    %440 = vmatprep.subr.mxu0 0.0
    %441 = vmatpush1.msra.mxu0 %v318
    %442 = vmatprep.subr.mxu0 0.0
    %443 = vmatpush1.msra.mxu0 %v317
    %444 = vmatprep.subr.mxu0 0.0
    %445 = vmatpush1.msra.mxu0 %v316
    %446 = vmatprep.subr.mxu0 0.0
    %447 = vmatpush1.msra.mxu0 %v315
    %448 = vmatprep.subr.mxu0 0.0
    %449 = vmatpush1.msra.mxu0 %v314
    %450 = vmatprep.subr.mxu0 0.0
    %451 = vmatpush1.msra.mxu0 %v313
    %452 = vmatprep.subr.mxu0 0.0
    %453 = vmatpush1.msra.mxu0 %v312
    %454 = vmatprep.subr.mxu0 0.0
    %455 = vmatpush1.msra.mxu0 %v311
    %456 = vmatprep.subr.mxu0 0.0
    %457 = vmatpush1.msra.mxu0 %v310
    %458 = vmatprep.subr.mxu0 0.0
    %459 = vmatpush1.msra.mxu0 %v309
    %460 = vmatprep.subr.mxu0 0.0
    %461 = vmatpush1.msra.mxu0 %v308
    %462 = vmatprep.subr.mxu0 0.0
    %463 = vmatpush1.msra.mxu0 %v307
    %464 = vmatprep.subr.mxu0 0.0
    %465 = vmatpush1.msra.mxu0 %v306
    %466 = vmatprep.subr.mxu0 0.0
    %467 = vmatpush2.msra.mxu0 %v337
    %468 = vmatprep.subr.mxu0 0.0
    %469 = vmatpush2.msra.mxu0 %v336
    %470 = vmatprep.subr.mxu0 0.0
    %471 = vmatpush2.msra.mxu0 %v335
    %472 = vmatprep.subr.mxu0 0.0
    %473 = vmatpush2.msra.mxu0 %v334
    %474 = vmatprep.subr.mxu0 0.0
    %475 = vmatpush2.msra.mxu0 %v333
    %476 = vmatprep.subr.mxu0 0.0
    %477 = vmatpush2.msra.mxu0 %v332
    %478 = vmatprep.subr.mxu0 0.0
    %479 = vmatpush2.msra.mxu0 %v331
    %480 = vmatprep.subr.mxu0 0.0
    %481 = vmatpush2.msra.mxu0 %v330
    %482 = vmatprep.subr.mxu0 0.0
    %483 = vmatpush2.msra.mxu0 %v329
    %484 = vmatprep.subr.mxu0 0.0
    %485 = vmatpush2.msra.mxu0 %v328
    %486 = vmatprep.subr.mxu0 0.0
    %487 = vmatpush2.msra.mxu0 %v327
    %488 = vmatprep.subr.mxu0 0.0
    %489 = vmatpush2.msra.mxu0 %v326
    %490 = vmatprep.subr.mxu0 0.0
    %491 = vmatpush2.msra.mxu0 %v325
    %492 = vmatprep.subr.mxu0 0.0
    %493 = vmatpush2.msra.mxu0 %v324
    %494 = vmatprep.subr.mxu0 0.0
    %495 = vmatpush2.msra.mxu0 %v323
    %496 = vmatprep.subr.mxu0 0.0
    %497 = vmatpush2.msra.mxu0 %v322
    %498 = vmatprep.mubr.f32.mxu0 %v155
    %499 = vmatmul.mubr.f32.gmra.mxu0 %v154
    %v500 = vpop.f32.mrf.mxu0
    %v501 = vadd.f32 0.0, %v500
    %v502 = vpop.f32.mrf.mxu0
    %503 = vmatprep.mubr.f32.mxu0 %v174
    %504 = vmatmul.mubr.f32.gmra.mxu0 %v173
    %v505 = vpop.f32.mrf.mxu0
    %v506 = vadd.f32 0.0, %v505
    %v507 = vpop.f32.mrf.mxu0
    %508 = vmatprep.mubr.f32.mxu0 %v193
    %509 = vmatmul.mubr.f32.gmra.mxu0 %v192
    %v510 = vpop.f32.mrf.mxu0
    %v511 = vadd.f32 0.0, %v510
    %v512 = vpop.f32.mrf.mxu0
    %513 = vmatprep.mubr.f32.mxu0 %v212
    %514 = vmatmul.mubr.f32.gmra.mxu0 %v211
    %v515 = vpop.f32.mrf.mxu0
    %v516 = vadd.f32 0.0, %v515
    %v517 = vpop.f32.mrf.mxu0
    %518 = vmatprep.mubr.f32.mxu0 %v231
    %519 = vmatmul.mubr.f32.gmra.mxu0 %v230
    %v520 = vpop.f32.mrf.mxu0
    %v521 = vadd.f32 0.0, %v520
    %v522 = vpop.f32.mrf.mxu0
    %523 = vmatprep.mubr.f32.mxu0 %v250
    %524 = vmatmul.mubr.f32.gmra.mxu0 %v249
    %v525 = vpop.f32.mrf.mxu0
    %v526 = vadd.f32 0.0, %v525
    %v527 = vpop.f32.mrf.mxu0
    %528 = vmatprep.mubr.f32.mxu0 %v269
    %529 = vmatmul.mubr.f32.gmra.mxu0 %v268
    %v530 = vpop.f32.mrf.mxu0
    %v531 = vadd.f32 0.0, %v530
    %v532 = vpop.f32.mrf.mxu0
    %533 = vmatprep.mubr.f32.mxu0 %v288
    %534 = vmatmul.mubr.f32.gmra.mxu0 %v287
    %v535 = vpop.f32.mrf.mxu0
    %v536 = vadd.f32 0.0, %v535
    %v537 = vpop.f32.mrf.mxu0
    %538 = vdwg.mxu0
    %539 = vmatprep.subr.mxu0 0.0
    %540 = vmatpush1.msra.mxu0 %v353
    %541 = vmatprep.subr.mxu0 0.0
    %542 = vmatpush1.msra.mxu0 %v352
    %543 = vmatprep.subr.mxu0 0.0
    %544 = vmatpush1.msra.mxu0 %v351
    %545 = vmatprep.subr.mxu0 0.0
    %546 = vmatpush1.msra.mxu0 %v350
    %547 = vmatprep.subr.mxu0 0.0
    %548 = vmatpush1.msra.mxu0 %v349
    %549 = vmatprep.subr.mxu0 0.0
    %550 = vmatpush1.msra.mxu0 %v348
    %551 = vmatprep.subr.mxu0 0.0
    %552 = vmatpush1.msra.mxu0 %v347
    %553 = vmatprep.subr.mxu0 0.0
    %554 = vmatpush1.msra.mxu0 %v346
    %555 = vmatprep.subr.mxu0 0.0
    %556 = vmatpush1.msra.mxu0 %v345
    %557 = vmatprep.subr.mxu0 0.0
    %558 = vmatpush1.msra.mxu0 %v344
    %559 = vmatprep.subr.mxu0 0.0
    %560 = vmatpush1.msra.mxu0 %v343
    %561 = vmatprep.subr.mxu0 0.0
    %562 = vmatpush1.msra.mxu0 %v342
    %563 = vmatprep.subr.mxu0 0.0
    %564 = vmatpush1.msra.mxu0 %v341
    %565 = vmatprep.subr.mxu0 0.0
    %566 = vmatpush1.msra.mxu0 %v340
    %567 = vmatprep.subr.mxu0 0.0
    %568 = vmatpush1.msra.mxu0 %v339
    %569 = vmatprep.subr.mxu0 0.0
    %570 = vmatpush1.msra.mxu0 %v338
    %571 = vmatprep.subr.mxu0 0.0
    %572 = vmatpush2.msra.mxu0 %v369
    %573 = vmatprep.subr.mxu0 0.0
    %574 = vmatpush2.msra.mxu0 %v368
    %575 = vmatprep.subr.mxu0 0.0
    %576 = vmatpush2.msra.mxu0 %v367
    %577 = vmatprep.subr.mxu0 0.0
    %578 = vmatpush2.msra.mxu0 %v366
    %579 = vmatprep.subr.mxu0 0.0
    %580 = vmatpush2.msra.mxu0 %v365
    %581 = vmatprep.subr.mxu0 0.0
    %582 = vmatpush2.msra.mxu0 %v364
    %583 = vmatprep.subr.mxu0 0.0
    %584 = vmatpush2.msra.mxu0 %v363
    %585 = vmatprep.subr.mxu0 0.0
    %586 = vmatpush2.msra.mxu0 %v362
    %587 = vmatprep.subr.mxu0 0.0
    %588 = vmatpush2.msra.mxu0 %v361
    %589 = vmatprep.subr.mxu0 0.0
    %590 = vmatpush2.msra.mxu0 %v360
    %591 = vmatprep.subr.mxu0 0.0
    %592 = vmatpush2.msra.mxu0 %v359
    %593 = vmatprep.subr.mxu0 0.0
    %594 = vmatpush2.msra.mxu0 %v358
    %595 = vmatprep.subr.mxu0 0.0
    %596 = vmatpush2.msra.mxu0 %v357
    %597 = vmatprep.subr.mxu0 0.0
    %598 = vmatpush2.msra.mxu0 %v356
    %599 = vmatprep.subr.mxu0 0.0
    %600 = vmatpush2.msra.mxu0 %v355
    %601 = vmatprep.subr.mxu0 0.0
    %602 = vmatpush2.msra.mxu0 %v354
    %603 = vmatprep.mubr.f32.mxu0 %v157
    %604 = vmatmul.mubr.f32.gmra.mxu0 %v156
    %v605 = vpop.f32.mrf.mxu0
    %v606 = vadd.f32 %v501, %v605
    %v607 = vpop.f32.mrf.mxu0
    %608 = vmatprep.mubr.f32.mxu0 %v176
    %609 = vmatmul.mubr.f32.gmra.mxu0 %v175
    %v610 = vpop.f32.mrf.mxu0
    %v611 = vadd.f32 %v506, %v610
    %v612 = vpop.f32.mrf.mxu0
    %613 = vmatprep.mubr.f32.mxu0 %v195
    %614 = vmatmul.mubr.f32.gmra.mxu0 %v194
    %v615 = vpop.f32.mrf.mxu0
    %v616 = vadd.f32 %v511, %v615
    %v617 = vpop.f32.mrf.mxu0
    %618 = vmatprep.mubr.f32.mxu0 %v214
    %619 = vmatmul.mubr.f32.gmra.mxu0 %v213
    %v620 = vpop.f32.mrf.mxu0
    %v621 = vadd.f32 %v516, %v620
    %v622 = vpop.f32.mrf.mxu0
    %623 = vmatprep.mubr.f32.mxu0 %v233
    %624 = vmatmul.mubr.f32.gmra.mxu0 %v232
    %v625 = vpop.f32.mrf.mxu0
    %v626 = vadd.f32 %v521, %v625
    %v627 = vpop.f32.mrf.mxu0
    %628 = vmatprep.mubr.f32.mxu0 %v252
    %629 = vmatmul.mubr.f32.gmra.mxu0 %v251
    %v630 = vpop.f32.mrf.mxu0
    %v631 = vadd.f32 %v526, %v630
    %v632 = vpop.f32.mrf.mxu0
    %633 = vmatprep.mubr.f32.mxu0 %v271
    %634 = vmatmul.mubr.f32.gmra.mxu0 %v270
    %v635 = vpop.f32.mrf.mxu0
    %v636 = vadd.f32 %v531, %v635
    %v637 = vpop.f32.mrf.mxu0
    %638 = vmatprep.mubr.f32.mxu0 %v290
    %639 = vmatmul.mubr.f32.gmra.mxu0 %v289
    %v640 = vpop.f32.mrf.mxu0
    %v641 = vadd.f32 %v536, %v640
    %v642 = vpop.f32.mrf.mxu0
    %643 = vdwg.mxu0
    %644 = vmatprep.subr.mxu0 0.0
    %645 = vmatpush1.msra.mxu0 %v385
    %646 = vmatprep.subr.mxu0 0.0
    %647 = vmatpush1.msra.mxu0 %v384
    %648 = vmatprep.subr.mxu0 0.0
    %649 = vmatpush1.msra.mxu0 %v383
    %650 = vmatprep.subr.mxu0 0.0
    %651 = vmatpush1.msra.mxu0 %v382
    %652 = vmatprep.subr.mxu0 0.0
    %653 = vmatpush1.msra.mxu0 %v381
    %654 = vmatprep.subr.mxu0 0.0
    %655 = vmatpush1.msra.mxu0 %v380
    %656 = vmatprep.subr.mxu0 0.0
    %657 = vmatpush1.msra.mxu0 %v379
    %658 = vmatprep.subr.mxu0 0.0
    %659 = vmatpush1.msra.mxu0 %v378
    %660 = vmatprep.subr.mxu0 0.0
    %661 = vmatpush1.msra.mxu0 %v377
    %662 = vmatprep.subr.mxu0 0.0
    %663 = vmatpush1.msra.mxu0 %v376
    %664 = vmatprep.subr.mxu0 0.0
    %665 = vmatpush1.msra.mxu0 %v375
    %666 = vmatprep.subr.mxu0 0.0
    %667 = vmatpush1.msra.mxu0 %v374
    %668 = vmatprep.subr.mxu0 0.0
    %669 = vmatpush1.msra.mxu0 %v373
    %670 = vmatprep.subr.mxu0 0.0
    %671 = vmatpush1.msra.mxu0 %v372
    %672 = vmatprep.subr.mxu0 0.0
    %673 = vmatpush1.msra.mxu0 %v371
    %674 = vmatprep.subr.mxu0 0.0
    %675 = vmatpush1.msra.mxu0 %v370
    %676 = vmatprep.subr.mxu0 0.0
    %677 = vmatpush2.msra.mxu0 %v401
    %678 = vmatprep.subr.mxu0 0.0
    %679 = vmatpush2.msra.mxu0 %v400
    %680 = vmatprep.subr.mxu0 0.0
    %681 = vmatpush2.msra.mxu0 %v399
    %682 = vmatprep.subr.mxu0 0.0
    %683 = vmatpush2.msra.mxu0 %v398
    %684 = vmatprep.subr.mxu0 0.0
    %685 = vmatpush2.msra.mxu0 %v397
    %686 = vmatprep.subr.mxu0 0.0
    %687 = vmatpush2.msra.mxu0 %v396
    %688 = vmatprep.subr.mxu0 0.0
    %689 = vmatpush2.msra.mxu0 %v395
    %690 = vmatprep.subr.mxu0 0.0
    %691 = vmatpush2.msra.mxu0 %v394
    %692 = vmatprep.subr.mxu0 0.0
    %693 = vmatpush2.msra.mxu0 %v393
    %694 = vmatprep.subr.mxu0 0.0
    %695 = vmatpush2.msra.mxu0 %v392
    %696 = vmatprep.subr.mxu0 0.0
    %697 = vmatpush2.msra.mxu0 %v391
    %698 = vmatprep.subr.mxu0 0.0
    %699 = vmatpush2.msra.mxu0 %v390
    %700 = vmatprep.subr.mxu0 0.0
    %701 = vmatpush2.msra.mxu0 %v389
    %702 = vmatprep.subr.mxu0 0.0
    %703 = vmatpush2.msra.mxu0 %v388
    %704 = vmatprep.subr.mxu0 0.0
    %705 = vmatpush2.msra.mxu0 %v387
    %706 = vmatprep.subr.mxu0 0.0
    %707 = vmatpush2.msra.mxu0 %v386
    %708 = vmatprep.mubr.f32.mxu0 %v159
    %709 = vmatmul.mubr.f32.gmra.mxu0 %v158
    %v710 = vpop.f32.mrf.mxu0
    %v711 = vadd.f32 %v606, %v710
    %v712 = vpop.f32.mrf.mxu0
    %713 = vmatprep.mubr.f32.mxu0 %v178
    %714 = vmatmul.mubr.f32.gmra.mxu0 %v177
    %v715 = vpop.f32.mrf.mxu0
    %v716 = vadd.f32 %v611, %v715
    %v717 = vpop.f32.mrf.mxu0
    %718 = vmatprep.mubr.f32.mxu0 %v197
    %719 = vmatmul.mubr.f32.gmra.mxu0 %v196
    %v720 = vpop.f32.mrf.mxu0
    %v721 = vadd.f32 %v616, %v720
    %v722 = vpop.f32.mrf.mxu0
    %723 = vmatprep.mubr.f32.mxu0 %v216
    %724 = vmatmul.mubr.f32.gmra.mxu0 %v215
    %v725 = vpop.f32.mrf.mxu0
    %v726 = vadd.f32 %v621, %v725
    %v727 = vpop.f32.mrf.mxu0
    %728 = vmatprep.mubr.f32.mxu0 %v235
    %729 = vmatmul.mubr.f32.gmra.mxu0 %v234
    %v730 = vpop.f32.mrf.mxu0
    %v731 = vadd.f32 %v626, %v730
    %v732 = vpop.f32.mrf.mxu0
    %733 = vmatprep.mubr.f32.mxu0 %v254
    %734 = vmatmul.mubr.f32.gmra.mxu0 %v253
    %v735 = vpop.f32.mrf.mxu0
    %v736 = vadd.f32 %v631, %v735
    %v737 = vpop.f32.mrf.mxu0
    %738 = vmatprep.mubr.f32.mxu0 %v273
    %739 = vmatmul.mubr.f32.gmra.mxu0 %v272
    %v740 = vpop.f32.mrf.mxu0
    %v741 = vadd.f32 %v636, %v740
    %v742 = vpop.f32.mrf.mxu0
    %743 = vmatprep.mubr.f32.mxu0 %v292
    %744 = vmatmul.mubr.f32.gmra.mxu0 %v291
    %v745 = vpop.f32.mrf.mxu0
    %v746 = vadd.f32 %v641, %v745
    %v747 = vpop.f32.mrf.mxu0
    %748 = vdwg.mxu0
    %749 = vmatprep.subr.mxu0 0.0
    %750 = vmatpush1.msra.mxu0 %v417
    %751 = vmatprep.subr.mxu0 0.0
    %752 = vmatpush1.msra.mxu0 %v416
    %753 = vmatprep.subr.mxu0 0.0
    %754 = vmatpush1.msra.mxu0 %v415
    %755 = vmatprep.subr.mxu0 0.0
    %756 = vmatpush1.msra.mxu0 %v414
    %757 = vmatprep.subr.mxu0 0.0
    %758 = vmatpush1.msra.mxu0 %v413
    %759 = vmatprep.subr.mxu0 0.0
    %760 = vmatpush1.msra.mxu0 %v412
    %761 = vmatprep.subr.mxu0 0.0
    %762 = vmatpush1.msra.mxu0 %v411
    %763 = vmatprep.subr.mxu0 0.0
    %764 = vmatpush1.msra.mxu0 %v410
    %765 = vmatprep.subr.mxu0 0.0
    %766 = vmatpush1.msra.mxu0 %v409
    %767 = vmatprep.subr.mxu0 0.0
    %768 = vmatpush1.msra.mxu0 %v408
    %769 = vmatprep.subr.mxu0 0.0
    %770 = vmatpush1.msra.mxu0 %v407
    %771 = vmatprep.subr.mxu0 0.0
    %772 = vmatpush1.msra.mxu0 %v406
    %773 = vmatprep.subr.mxu0 0.0
    %774 = vmatpush1.msra.mxu0 %v405
    %775 = vmatprep.subr.mxu0 0.0
    %776 = vmatpush1.msra.mxu0 %v404
    %777 = vmatprep.subr.mxu0 0.0
    %778 = vmatpush1.msra.mxu0 %v403
    %779 = vmatprep.subr.mxu0 0.0
    %780 = vmatpush1.msra.mxu0 %v402
    %781 = vmatprep.subr.mxu0 0.0
    %782 = vmatpush2.msra.mxu0 %v433
    %783 = vmatprep.subr.mxu0 0.0
    %784 = vmatpush2.msra.mxu0 %v432
    %785 = vmatprep.subr.mxu0 0.0
    %786 = vmatpush2.msra.mxu0 %v431
    %787 = vmatprep.subr.mxu0 0.0
    %788 = vmatpush2.msra.mxu0 %v430
    %789 = vmatprep.subr.mxu0 0.0
    %790 = vmatpush2.msra.mxu0 %v429
    %791 = vmatprep.subr.mxu0 0.0
    %792 = vmatpush2.msra.mxu0 %v428
    %793 = vmatprep.subr.mxu0 0.0
    %794 = vmatpush2.msra.mxu0 %v427
    %795 = vmatprep.subr.mxu0 0.0
    %796 = vmatpush2.msra.mxu0 %v426
    %797 = vmatprep.subr.mxu0 0.0
    %798 = vmatpush2.msra.mxu0 %v425
    %799 = vmatprep.subr.mxu0 0.0
    %800 = vmatpush2.msra.mxu0 %v424
    %801 = vmatprep.subr.mxu0 0.0
    %802 = vmatpush2.msra.mxu0 %v423
    %803 = vmatprep.subr.mxu0 0.0
    %804 = vmatpush2.msra.mxu0 %v422
    %805 = vmatprep.subr.mxu0 0.0
    %806 = vmatpush2.msra.mxu0 %v421
    %807 = vmatprep.subr.mxu0 0.0
    %808 = vmatpush2.msra.mxu0 %v420
    %809 = vmatprep.subr.mxu0 0.0
    %810 = vmatpush2.msra.mxu0 %v419
    %811 = vmatprep.subr.mxu0 0.0
    %812 = vmatpush2.msra.mxu0 %v418
    %813 = vmatprep.mubr.f32.mxu0 %v161
    %814 = vmatmul.mubr.f32.gmra.mxu0 %v160
    %v815 = vpop.f32.mrf.mxu0
    %v816 = vadd.f32 %v711, %v815
    %v817 = vpop.f32.mrf.mxu0
    %818 = vmatprep.mubr.f32.mxu0 %v180
    %819 = vmatmul.mubr.f32.gmra.mxu0 %v179
    %v820 = vpop.f32.mrf.mxu0
    %v821 = vadd.f32 %v716, %v820
    %v822 = vpop.f32.mrf.mxu0
    %823 = vmatprep.mubr.f32.mxu0 %v199
    %824 = vmatmul.mubr.f32.gmra.mxu0 %v198
    %v825 = vpop.f32.mrf.mxu0
    %v826 = vadd.f32 %v721, %v825
    %v827 = vpop.f32.mrf.mxu0
    %828 = vmatprep.mubr.f32.mxu0 %v218
    %829 = vmatmul.mubr.f32.gmra.mxu0 %v217
    %v830 = vpop.f32.mrf.mxu0
    %v831 = vadd.f32 %v726, %v830
    %v832 = vpop.f32.mrf.mxu0
    %833 = vmatprep.mubr.f32.mxu0 %v237
    %834 = vmatmul.mubr.f32.gmra.mxu0 %v236
    %v835 = vpop.f32.mrf.mxu0
    %v836 = vadd.f32 %v731, %v835
    %v837 = vpop.f32.mrf.mxu0
    %838 = vmatprep.mubr.f32.mxu0 %v256
    %839 = vmatmul.mubr.f32.gmra.mxu0 %v255
    %v840 = vpop.f32.mrf.mxu0
    %v841 = vadd.f32 %v736, %v840
    %v842 = vpop.f32.mrf.mxu0
    %843 = vmatprep.mubr.f32.mxu0 %v275
    %844 = vmatmul.mubr.f32.gmra.mxu0 %v274
    %v845 = vpop.f32.mrf.mxu0
    %v846 = vadd.f32 %v741, %v845
    %v847 = vpop.f32.mrf.mxu0
    %848 = vmatprep.mubr.f32.mxu0 %v294
    %849 = vmatmul.mubr.f32.gmra.mxu0 %v293
    %v850 = vpop.f32.mrf.mxu0
    %v851 = vadd.f32 %v746, %v850
    %v852 = vpop.f32.mrf.mxu0
    %853 = vdwg.mxu0
    %v854 = vld [vmem:[#allocation7] sm:$0xff]
    %v855 = vld [vmem:[#allocation7 + $0x8] sm:$0xff]
    %v856 = vld [vmem:[#allocation7 + $0x10] sm:$0xff]
    %v857 = vld [vmem:[#allocation7 + $0x18] sm:$0xff]
    %v858 = vld [vmem:[#allocation7 + $0x20] sm:$0xff]
    %v859 = vld [vmem:[#allocation7 + $0x28] sm:$0xff]
    %v860 = vld [vmem:[#allocation7 + $0x30] sm:$0xff]
    %v861 = vld [vmem:[#allocation7 + $0x38] sm:$0xff]
    %v862 = vld [vmem:[#allocation7 + $0x40] sm:$0xff]
    %v863 = vld [vmem:[#allocation7 + $0x48] sm:$0xff]
    %v864 = vld [vmem:[#allocation7 + $0x50] sm:$0xff]
    %v865 = vld [vmem:[#allocation7 + $0x58] sm:$0xff]
    %v866 = vld [vmem:[#allocation7 + $0x60] sm:$0xff]
    %v867 = vld [vmem:[#allocation7 + $0x68] sm:$0xff]
    %v868 = vld [vmem:[#allocation7 + $0x70] sm:$0xff]
    %v869 = vld [vmem:[#allocation7 + $0x78] sm:$0xff]
    %v870 = vld [vmem:[#allocation7 + $0x80] sm:$0xff]
    %v871 = vld [vmem:[#allocation7 + $0x88] sm:$0xff]
    %v872 = vld [vmem:[#allocation7 + $0x90] sm:$0xff]
    %v873 = vld [vmem:[#allocation7 + $0x98] sm:$0xff]
    %v874 = vld [vmem:[#allocation7 + $0xa0] sm:$0xff]
    %v875 = vld [vmem:[#allocation7 + $0xa8] sm:$0xff]
    %v876 = vld [vmem:[#allocation7 + $0xb0] sm:$0xff]
    %v877 = vld [vmem:[#allocation7 + $0xb8] sm:$0xff]
    %v878 = vld [vmem:[#allocation7 + $0xc0] sm:$0xff]
    %v879 = vld [vmem:[#allocation7 + $0xc8] sm:$0xff]
    %v880 = vld [vmem:[#allocation7 + $0xd0] sm:$0xff]
    %v881 = vld [vmem:[#allocation7 + $0xd8] sm:$0xff]
    %v882 = vld [vmem:[#allocation7 + $0xe0] sm:$0xff]
    %v883 = vld [vmem:[#allocation7 + $0xe8] sm:$0xff]
    %v884 = vld [vmem:[#allocation7 + $0xf0] sm:$0xff]
    %v885 = vld [vmem:[#allocation7 + $0xf8] sm:$0xff]
    %v886 = vld [vmem:[#allocation7 + $0x100] sm:$0xff]
    %v887 = vld [vmem:[#allocation7 + $0x108] sm:$0xff]
    %v888 = vld [vmem:[#allocation7 + $0x110] sm:$0xff]
    %v889 = vld [vmem:[#allocation7 + $0x118] sm:$0xff]
    %v890 = vld [vmem:[#allocation7 + $0x120] sm:$0xff]
    %v891 = vld [vmem:[#allocation7 + $0x128] sm:$0xff]
    %v892 = vld [vmem:[#allocation7 + $0x130] sm:$0xff]
    %v893 = vld [vmem:[#allocation7 + $0x138] sm:$0xff]
    %v894 = vld [vmem:[#allocation7 + $0x140] sm:$0xff]
    %v895 = vld [vmem:[#allocation7 + $0x148] sm:$0xff]
    %v896 = vld [vmem:[#allocation7 + $0x150] sm:$0xff]
    %v897 = vld [vmem:[#allocation7 + $0x158] sm:$0xff]
    %v898 = vld [vmem:[#allocation7 + $0x160] sm:$0xff]
    %v899 = vld [vmem:[#allocation7 + $0x168] sm:$0xff]
    %v900 = vld [vmem:[#allocation7 + $0x170] sm:$0xff]
    %v901 = vld [vmem:[#allocation7 + $0x178] sm:$0xff]
    %v902 = vld [vmem:[#allocation7 + $0x180] sm:$0xff]
    %v903 = vld [vmem:[#allocation7 + $0x188] sm:$0xff]
    %v904 = vld [vmem:[#allocation7 + $0x190] sm:$0xff]
    %v905 = vld [vmem:[#allocation7 + $0x198] sm:$0xff]
    %v906 = vld [vmem:[#allocation7 + $0x1a0] sm:$0xff]
    %v907 = vld [vmem:[#allocation7 + $0x1a8] sm:$0xff]
    %v908 = vld [vmem:[#allocation7 + $0x1b0] sm:$0xff]
    %v909 = vld [vmem:[#allocation7 + $0x1b8] sm:$0xff]
    %v910 = vld [vmem:[#allocation7 + $0x1c0] sm:$0xff]
    %v911 = vld [vmem:[#allocation7 + $0x1c8] sm:$0xff]
    %v912 = vld [vmem:[#allocation7 + $0x1d0] sm:$0xff]
    %v913 = vld [vmem:[#allocation7 + $0x1d8] sm:$0xff]
    %v914 = vld [vmem:[#allocation7 + $0x1e0] sm:$0xff]
    %v915 = vld [vmem:[#allocation7 + $0x1e8] sm:$0xff]
    %v916 = vld [vmem:[#allocation7 + $0x1f0] sm:$0xff]
    %v917 = vld [vmem:[#allocation7 + $0x1f8] sm:$0xff]
    %v918 = vld [vmem:[#allocation7 + $0x200] sm:$0xff]
    %v919 = vld [vmem:[#allocation7 + $0x208] sm:$0xff]
    %v920 = vld [vmem:[#allocation7 + $0x210] sm:$0xff]
    %v921 = vld [vmem:[#allocation7 + $0x218] sm:$0xff]
    %v922 = vld [vmem:[#allocation7 + $0x220] sm:$0xff]
    %v923 = vld [vmem:[#allocation7 + $0x228] sm:$0xff]
    %v924 = vld [vmem:[#allocation7 + $0x230] sm:$0xff]
    %v925 = vld [vmem:[#allocation7 + $0x238] sm:$0xff]
    %v926 = vld [vmem:[#allocation7 + $0x240] sm:$0xff]
    %v927 = vld [vmem:[#allocation7 + $0x248] sm:$0xff]
    %v928 = vld [vmem:[#allocation7 + $0x250] sm:$0xff]
    %v929 = vld [vmem:[#allocation7 + $0x258] sm:$0xff]
    %v930 = vld [vmem:[#allocation7 + $0x260] sm:$0xff]
    %v931 = vld [vmem:[#allocation7 + $0x268] sm:$0xff]
    %v932 = vld [vmem:[#allocation7 + $0x270] sm:$0xff]
    %v933 = vld [vmem:[#allocation7 + $0x278] sm:$0xff]
    %v934 = vld [vmem:[#allocation7 + $0x280] sm:$0xff]
    %v935 = vld [vmem:[#allocation7 + $0x288] sm:$0xff]
    %v936 = vld [vmem:[#allocation7 + $0x290] sm:$0xff]
    %v937 = vld [vmem:[#allocation7 + $0x298] sm:$0xff]
    %v938 = vld [vmem:[#allocation7 + $0x2a0] sm:$0xff]
    %v939 = vld [vmem:[#allocation7 + $0x2a8] sm:$0xff]
    %v940 = vld [vmem:[#allocation7 + $0x2b0] sm:$0xff]
    %v941 = vld [vmem:[#allocation7 + $0x2b8] sm:$0xff]
    %v942 = vld [vmem:[#allocation7 + $0x2c0] sm:$0xff]
    %v943 = vld [vmem:[#allocation7 + $0x2c8] sm:$0xff]
    %v944 = vld [vmem:[#allocation7 + $0x2d0] sm:$0xff]
    %v945 = vld [vmem:[#allocation7 + $0x2d8] sm:$0xff]
    %v946 = vld [vmem:[#allocation7 + $0x2e0] sm:$0xff]
    %v947 = vld [vmem:[#allocation7 + $0x2e8] sm:$0xff]
    %v948 = vld [vmem:[#allocation7 + $0x2f0] sm:$0xff]
    %v949 = vld [vmem:[#allocation7 + $0x2f8] sm:$0xff]
    %v950 = vld [vmem:[#allocation7 + $0x300] sm:$0xff]
    %v951 = vld [vmem:[#allocation7 + $0x308] sm:$0xff]
    %v952 = vld [vmem:[#allocation7 + $0x310] sm:$0xff]
    %v953 = vld [vmem:[#allocation7 + $0x318] sm:$0xff]
    %v954 = vld [vmem:[#allocation7 + $0x320] sm:$0xff]
    %v955 = vld [vmem:[#allocation7 + $0x328] sm:$0xff]
    %v956 = vld [vmem:[#allocation7 + $0x330] sm:$0xff]
    %v957 = vld [vmem:[#allocation7 + $0x338] sm:$0xff]
    %v958 = vld [vmem:[#allocation7 + $0x340] sm:$0xff]
    %v959 = vld [vmem:[#allocation7 + $0x348] sm:$0xff]
    %v960 = vld [vmem:[#allocation7 + $0x350] sm:$0xff]
    %v961 = vld [vmem:[#allocation7 + $0x358] sm:$0xff]
    %v962 = vld [vmem:[#allocation7 + $0x360] sm:$0xff]
    %v963 = vld [vmem:[#allocation7 + $0x368] sm:$0xff]
    %v964 = vld [vmem:[#allocation7 + $0x370] sm:$0xff]
    %v965 = vld [vmem:[#allocation7 + $0x378] sm:$0xff]
    %v966 = vld [vmem:[#allocation7 + $0x380] sm:$0xff]
    %v967 = vld [vmem:[#allocation7 + $0x388] sm:$0xff]
    %v968 = vld [vmem:[#allocation7 + $0x390] sm:$0xff]
    %v969 = vld [vmem:[#allocation7 + $0x398] sm:$0xff]
    %v970 = vld [vmem:[#allocation7 + $0x3a0] sm:$0xff]
    %v971 = vld [vmem:[#allocation7 + $0x3a8] sm:$0xff]
    %v972 = vld [vmem:[#allocation7 + $0x3b0] sm:$0xff]
    %v973 = vld [vmem:[#allocation7 + $0x3b8] sm:$0xff]
    %v974 = vld [vmem:[#allocation7 + $0x3c0] sm:$0xff]
    %v975 = vld [vmem:[#allocation7 + $0x3c8] sm:$0xff]
    %v976 = vld [vmem:[#allocation7 + $0x3d0] sm:$0xff]
    %v977 = vld [vmem:[#allocation7 + $0x3d8] sm:$0xff]
    %v978 = vld [vmem:[#allocation7 + $0x3e0] sm:$0xff]
    %v979 = vld [vmem:[#allocation7 + $0x3e8] sm:$0xff]
    %v980 = vld [vmem:[#allocation7 + $0x3f0] sm:$0xff]
    %v981 = vld [vmem:[#allocation7 + $0x3f8] sm:$0xff]
    %v982 = vld [vmem:[#allocation7 + $0x400] sm:$0xff]
    %v983 = vld [vmem:[#allocation7 + $0x408] sm:$0xff]
    %v984 = vld [vmem:[#allocation7 + $0x410] sm:$0xff]
    %v985 = vld [vmem:[#allocation7 + $0x418] sm:$0xff]
    %v986 = vld [vmem:[#allocation7 + $0x420] sm:$0xff]
    %v987 = vld [vmem:[#allocation7 + $0x428] sm:$0xff]
    %v988 = vld [vmem:[#allocation7 + $0x430] sm:$0xff]
    %v989 = vld [vmem:[#allocation7 + $0x438] sm:$0xff]
    %v990 = vld [vmem:[#allocation7 + $0x440] sm:$0xff]
    %v991 = vld [vmem:[#allocation7 + $0x448] sm:$0xff]
    %v992 = vld [vmem:[#allocation7 + $0x450] sm:$0xff]
    %v993 = vld [vmem:[#allocation7 + $0x458] sm:$0xff]
    %v994 = vld [vmem:[#allocation7 + $0x460] sm:$0xff]
    %v995 = vld [vmem:[#allocation7 + $0x468] sm:$0xff]
    %v996 = vld [vmem:[#allocation7 + $0x470] sm:$0xff]
    %v997 = vld [vmem:[#allocation7 + $0x478] sm:$0xff]
    %998 = vmatprep.subr.mxu0 0.0
    %999 = vmatpush1.msra.mxu0 %v869
    %1000 = vmatprep.subr.mxu0 0.0
    %1001 = vmatpush1.msra.mxu0 %v868
    %1002 = vmatprep.subr.mxu0 0.0
    %1003 = vmatpush1.msra.mxu0 %v867
    %1004 = vmatprep.subr.mxu0 0.0
    %1005 = vmatpush1.msra.mxu0 %v866
    %1006 = vmatprep.subr.mxu0 0.0
    %1007 = vmatpush1.msra.mxu0 %v865
    %1008 = vmatprep.subr.mxu0 0.0
    %1009 = vmatpush1.msra.mxu0 %v864
    %1010 = vmatprep.subr.mxu0 0.0
    %1011 = vmatpush1.msra.mxu0 %v863
    %1012 = vmatprep.subr.mxu0 0.0
    %1013 = vmatpush1.msra.mxu0 %v862
    %1014 = vmatprep.subr.mxu0 0.0
    %1015 = vmatpush1.msra.mxu0 %v861
    %1016 = vmatprep.subr.mxu0 0.0
    %1017 = vmatpush1.msra.mxu0 %v860
    %1018 = vmatprep.subr.mxu0 0.0
    %1019 = vmatpush1.msra.mxu0 %v859
    %1020 = vmatprep.subr.mxu0 0.0
    %1021 = vmatpush1.msra.mxu0 %v858
    %1022 = vmatprep.subr.mxu0 0.0
    %1023 = vmatpush1.msra.mxu0 %v857
    %1024 = vmatprep.subr.mxu0 0.0
    %1025 = vmatpush1.msra.mxu0 %v856
    %1026 = vmatprep.subr.mxu0 0.0
    %1027 = vmatpush1.msra.mxu0 %v855
    %1028 = vmatprep.subr.mxu0 0.0
    %1029 = vmatpush1.msra.mxu0 %v854
    %1030 = vmatprep.subr.mxu0 0.0
    %1031 = vmatpush2.msra.mxu0 %v885
    %1032 = vmatprep.subr.mxu0 0.0
    %1033 = vmatpush2.msra.mxu0 %v884
    %1034 = vmatprep.subr.mxu0 0.0
    %1035 = vmatpush2.msra.mxu0 %v883
    %1036 = vmatprep.subr.mxu0 0.0
    %1037 = vmatpush2.msra.mxu0 %v882
    %1038 = vmatprep.subr.mxu0 0.0
    %1039 = vmatpush2.msra.mxu0 %v881
    %1040 = vmatprep.subr.mxu0 0.0
    %1041 = vmatpush2.msra.mxu0 %v880
    %1042 = vmatprep.subr.mxu0 0.0
    %1043 = vmatpush2.msra.mxu0 %v879
    %1044 = vmatprep.subr.mxu0 0.0
    %1045 = vmatpush2.msra.mxu0 %v878
    %1046 = vmatprep.subr.mxu0 0.0
    %1047 = vmatpush2.msra.mxu0 %v877
    %1048 = vmatprep.subr.mxu0 0.0
    %1049 = vmatpush2.msra.mxu0 %v876
    %1050 = vmatprep.subr.mxu0 0.0
    %1051 = vmatpush2.msra.mxu0 %v875
    %1052 = vmatprep.subr.mxu0 0.0
    %1053 = vmatpush2.msra.mxu0 %v874
    %1054 = vmatprep.subr.mxu0 0.0
    %1055 = vmatpush2.msra.mxu0 %v873
    %1056 = vmatprep.subr.mxu0 0.0
    %1057 = vmatpush2.msra.mxu0 %v872
    %1058 = vmatprep.subr.mxu0 0.0
    %1059 = vmatpush2.msra.mxu0 %v871
    %1060 = vmatprep.subr.mxu0 0.0
    %1061 = vmatpush2.msra.mxu0 %v870
    %1062 = vmatprep.mubr.f32.mxu0 %v161
    %1063 = vmatmul.mubr.f32.gmra.mxu0 %v160
    %v1064 = vpop.f32.mrf.mxu0
    %v1065 = vadd.f32 0.0, %v1064
    %v1066 = vpop.f32.mrf.mxu0
    %1067 = vmatprep.mubr.f32.mxu0 %v180
    %1068 = vmatmul.mubr.f32.gmra.mxu0 %v179
    %v1069 = vpop.f32.mrf.mxu0
    %v1070 = vadd.f32 0.0, %v1069
    %v1071 = vpop.f32.mrf.mxu0
    %1072 = vmatprep.mubr.f32.mxu0 %v199
    %1073 = vmatmul.mubr.f32.gmra.mxu0 %v198
    %v1074 = vpop.f32.mrf.mxu0
    %v1075 = vadd.f32 0.0, %v1074
    %v1076 = vpop.f32.mrf.mxu0
    %1077 = vmatprep.mubr.f32.mxu0 %v218
    %1078 = vmatmul.mubr.f32.gmra.mxu0 %v217
    %v1079 = vpop.f32.mrf.mxu0
    %v1080 = vadd.f32 0.0, %v1079
    %v1081 = vpop.f32.mrf.mxu0
    %1082 = vmatprep.mubr.f32.mxu0 %v237
    %1083 = vmatmul.mubr.f32.gmra.mxu0 %v236
    %v1084 = vpop.f32.mrf.mxu0
    %v1085 = vadd.f32 0.0, %v1084
    %v1086 = vpop.f32.mrf.mxu0
    %1087 = vmatprep.mubr.f32.mxu0 %v256
    %1088 = vmatmul.mubr.f32.gmra.mxu0 %v255
    %v1089 = vpop.f32.mrf.mxu0
    %v1090 = vadd.f32 0.0, %v1089
    %v1091 = vpop.f32.mrf.mxu0
    %1092 = vmatprep.mubr.f32.mxu0 %v275
    %1093 = vmatmul.mubr.f32.gmra.mxu0 %v274
    %v1094 = vpop.f32.mrf.mxu0
    %v1095 = vadd.f32 0.0, %v1094
    %v1096 = vpop.f32.mrf.mxu0
    %1097 = vmatprep.mubr.f32.mxu0 %v294
    %1098 = vmatmul.mubr.f32.gmra.mxu0 %v293
    %v1099 = vpop.f32.mrf.mxu0
    %v1100 = vadd.f32 0.0, %v1099
    %v1101 = vpop.f32.mrf.mxu0
    %1102 = vdwg.mxu0
    %1103 = vmatprep.subr.mxu0 0.0
    %1104 = vmatpush1.msra.mxu0 %v901
    %1105 = vmatprep.subr.mxu0 0.0
    %1106 = vmatpush1.msra.mxu0 %v900
    %1107 = vmatprep.subr.mxu0 0.0
    %1108 = vmatpush1.msra.mxu0 %v899
    %1109 = vmatprep.subr.mxu0 0.0
    %1110 = vmatpush1.msra.mxu0 %v898
    %1111 = vmatprep.subr.mxu0 0.0
    %1112 = vmatpush1.msra.mxu0 %v897
    %1113 = vmatprep.subr.mxu0 0.0
    %1114 = vmatpush1.msra.mxu0 %v896
    %1115 = vmatprep.subr.mxu0 0.0
    %1116 = vmatpush1.msra.mxu0 %v895
    %1117 = vmatprep.subr.mxu0 0.0
    %1118 = vmatpush1.msra.mxu0 %v894
    %1119 = vmatprep.subr.mxu0 0.0
    %1120 = vmatpush1.msra.mxu0 %v893
    %1121 = vmatprep.subr.mxu0 0.0
    %1122 = vmatpush1.msra.mxu0 %v892
    %1123 = vmatprep.subr.mxu0 0.0
    %1124 = vmatpush1.msra.mxu0 %v891
    %1125 = vmatprep.subr.mxu0 0.0
    %1126 = vmatpush1.msra.mxu0 %v890
    %1127 = vmatprep.subr.mxu0 0.0
    %1128 = vmatpush1.msra.mxu0 %v889
    %1129 = vmatprep.subr.mxu0 0.0
    %1130 = vmatpush1.msra.mxu0 %v888
    %1131 = vmatprep.subr.mxu0 0.0
    %1132 = vmatpush1.msra.mxu0 %v887
    %1133 = vmatprep.subr.mxu0 0.0
    %1134 = vmatpush1.msra.mxu0 %v886
    %1135 = vmatprep.subr.mxu0 0.0
    %1136 = vmatpush2.msra.mxu0 %v917
    %1137 = vmatprep.subr.mxu0 0.0
    %1138 = vmatpush2.msra.mxu0 %v916
    %1139 = vmatprep.subr.mxu0 0.0
    %1140 = vmatpush2.msra.mxu0 %v915
    %1141 = vmatprep.subr.mxu0 0.0
    %1142 = vmatpush2.msra.mxu0 %v914
    %1143 = vmatprep.subr.mxu0 0.0
    %1144 = vmatpush2.msra.mxu0 %v913
    %1145 = vmatprep.subr.mxu0 0.0
    %1146 = vmatpush2.msra.mxu0 %v912
    %1147 = vmatprep.subr.mxu0 0.0
    %1148 = vmatpush2.msra.mxu0 %v911
    %1149 = vmatprep.subr.mxu0 0.0
    %1150 = vmatpush2.msra.mxu0 %v910
    %1151 = vmatprep.subr.mxu0 0.0
    %1152 = vmatpush2.msra.mxu0 %v909
    %1153 = vmatprep.subr.mxu0 0.0
    %1154 = vmatpush2.msra.mxu0 %v908
    %1155 = vmatprep.subr.mxu0 0.0
    %1156 = vmatpush2.msra.mxu0 %v907
    %1157 = vmatprep.subr.mxu0 0.0
    %1158 = vmatpush2.msra.mxu0 %v906
    %1159 = vmatprep.subr.mxu0 0.0
    %1160 = vmatpush2.msra.mxu0 %v905
    %1161 = vmatprep.subr.mxu0 0.0
    %1162 = vmatpush2.msra.mxu0 %v904
    %1163 = vmatprep.subr.mxu0 0.0
    %1164 = vmatpush2.msra.mxu0 %v903
    %1165 = vmatprep.subr.mxu0 0.0
    %1166 = vmatpush2.msra.mxu0 %v902
    %1167 = vmatprep.mubr.f32.mxu0 %v163
    %1168 = vmatmul.mubr.f32.gmra.mxu0 %v162
    %v1169 = vpop.f32.mrf.mxu0
    %v1170 = vadd.f32 %v1065, %v1169
    %v1171 = vpop.f32.mrf.mxu0
    %1172 = vmatprep.mubr.f32.mxu0 %v182
    %1173 = vmatmul.mubr.f32.gmra.mxu0 %v181
    %v1174 = vpop.f32.mrf.mxu0
    %v1175 = vadd.f32 %v1070, %v1174
    %v1176 = vpop.f32.mrf.mxu0
    %1177 = vmatprep.mubr.f32.mxu0 %v201
    %1178 = vmatmul.mubr.f32.gmra.mxu0 %v200
    %v1179 = vpop.f32.mrf.mxu0
    %v1180 = vadd.f32 %v1075, %v1179
    %v1181 = vpop.f32.mrf.mxu0
    %1182 = vmatprep.mubr.f32.mxu0 %v220
    %1183 = vmatmul.mubr.f32.gmra.mxu0 %v219
    %v1184 = vpop.f32.mrf.mxu0
    %v1185 = vadd.f32 %v1080, %v1184
    %v1186 = vpop.f32.mrf.mxu0
    %1187 = vmatprep.mubr.f32.mxu0 %v239
    %1188 = vmatmul.mubr.f32.gmra.mxu0 %v238
    %v1189 = vpop.f32.mrf.mxu0
    %v1190 = vadd.f32 %v1085, %v1189
    %v1191 = vpop.f32.mrf.mxu0
    %1192 = vmatprep.mubr.f32.mxu0 %v258
    %1193 = vmatmul.mubr.f32.gmra.mxu0 %v257
    %v1194 = vpop.f32.mrf.mxu0
    %v1195 = vadd.f32 %v1090, %v1194
    %v1196 = vpop.f32.mrf.mxu0
    %1197 = vmatprep.mubr.f32.mxu0 %v277
    %1198 = vmatmul.mubr.f32.gmra.mxu0 %v276
    %v1199 = vpop.f32.mrf.mxu0
    %v1200 = vadd.f32 %v1095, %v1199
    %v1201 = vpop.f32.mrf.mxu0
    %1202 = vmatprep.mubr.f32.mxu0 %v296
    %1203 = vmatmul.mubr.f32.gmra.mxu0 %v295
    %v1204 = vpop.f32.mrf.mxu0
    %v1205 = vadd.f32 %v1100, %v1204
    %v1206 = vpop.f32.mrf.mxu0
    %1207 = vdwg.mxu0
    %1208 = vmatprep.subr.mxu0 0.0
    %1209 = vmatpush1.msra.mxu0 %v933
    %1210 = vmatprep.subr.mxu0 0.0
    %1211 = vmatpush1.msra.mxu0 %v932
    %1212 = vmatprep.subr.mxu0 0.0
    %1213 = vmatpush1.msra.mxu0 %v931
    %1214 = vmatprep.subr.mxu0 0.0
    %1215 = vmatpush1.msra.mxu0 %v930
    %1216 = vmatprep.subr.mxu0 0.0
    %1217 = vmatpush1.msra.mxu0 %v929
    %1218 = vmatprep.subr.mxu0 0.0
    %1219 = vmatpush1.msra.mxu0 %v928
    %1220 = vmatprep.subr.mxu0 0.0
    %1221 = vmatpush1.msra.mxu0 %v927
    %1222 = vmatprep.subr.mxu0 0.0
    %1223 = vmatpush1.msra.mxu0 %v926
    %1224 = vmatprep.subr.mxu0 0.0
    %1225 = vmatpush1.msra.mxu0 %v925
    %1226 = vmatprep.subr.mxu0 0.0
    %1227 = vmatpush1.msra.mxu0 %v924
    %1228 = vmatprep.subr.mxu0 0.0
    %1229 = vmatpush1.msra.mxu0 %v923
    %1230 = vmatprep.subr.mxu0 0.0
    %1231 = vmatpush1.msra.mxu0 %v922
    %1232 = vmatprep.subr.mxu0 0.0
    %1233 = vmatpush1.msra.mxu0 %v921
    %1234 = vmatprep.subr.mxu0 0.0
    %1235 = vmatpush1.msra.mxu0 %v920
    %1236 = vmatprep.subr.mxu0 0.0
    %1237 = vmatpush1.msra.mxu0 %v919
    %1238 = vmatprep.subr.mxu0 0.0
    %1239 = vmatpush1.msra.mxu0 %v918
    %1240 = vmatprep.subr.mxu0 0.0
    %1241 = vmatpush2.msra.mxu0 %v949
    %1242 = vmatprep.subr.mxu0 0.0
    %1243 = vmatpush2.msra.mxu0 %v948
    %1244 = vmatprep.subr.mxu0 0.0
    %1245 = vmatpush2.msra.mxu0 %v947
    %1246 = vmatprep.subr.mxu0 0.0
    %1247 = vmatpush2.msra.mxu0 %v946
    %1248 = vmatprep.subr.mxu0 0.0
    %1249 = vmatpush2.msra.mxu0 %v945
    %1250 = vmatprep.subr.mxu0 0.0
    %1251 = vmatpush2.msra.mxu0 %v944
    %1252 = vmatprep.subr.mxu0 0.0
    %1253 = vmatpush2.msra.mxu0 %v943
    %1254 = vmatprep.subr.mxu0 0.0
    %1255 = vmatpush2.msra.mxu0 %v942
    %1256 = vmatprep.subr.mxu0 0.0
    %1257 = vmatpush2.msra.mxu0 %v941
    %1258 = vmatprep.subr.mxu0 0.0
    %1259 = vmatpush2.msra.mxu0 %v940
    %1260 = vmatprep.subr.mxu0 0.0
    %1261 = vmatpush2.msra.mxu0 %v939
    %1262 = vmatprep.subr.mxu0 0.0
    %1263 = vmatpush2.msra.mxu0 %v938
    %1264 = vmatprep.subr.mxu0 0.0
    %1265 = vmatpush2.msra.mxu0 %v937
    %1266 = vmatprep.subr.mxu0 0.0
    %1267 = vmatpush2.msra.mxu0 %v936
    %1268 = vmatprep.subr.mxu0 0.0
    %1269 = vmatpush2.msra.mxu0 %v935
    %1270 = vmatprep.subr.mxu0 0.0
    %1271 = vmatpush2.msra.mxu0 %v934
    %1272 = vmatprep.mubr.f32.mxu0 %v165
    %1273 = vmatmul.mubr.f32.gmra.mxu0 %v164
    %v1274 = vpop.f32.mrf.mxu0
    %v1275 = vadd.f32 %v1170, %v1274
    %v1276 = vpop.f32.mrf.mxu0
    %1277 = vmatprep.mubr.f32.mxu0 %v184
    %1278 = vmatmul.mubr.f32.gmra.mxu0 %v183
    %v1279 = vpop.f32.mrf.mxu0
    %v1280 = vadd.f32 %v1175, %v1279
    %v1281 = vpop.f32.mrf.mxu0
    %1282 = vmatprep.mubr.f32.mxu0 %v203
    %1283 = vmatmul.mubr.f32.gmra.mxu0 %v202
    %v1284 = vpop.f32.mrf.mxu0
    %v1285 = vadd.f32 %v1180, %v1284
    %v1286 = vpop.f32.mrf.mxu0
    %1287 = vmatprep.mubr.f32.mxu0 %v222
    %1288 = vmatmul.mubr.f32.gmra.mxu0 %v221
    %v1289 = vpop.f32.mrf.mxu0
    %v1290 = vadd.f32 %v1185, %v1289
    %v1291 = vpop.f32.mrf.mxu0
    %1292 = vmatprep.mubr.f32.mxu0 %v241
    %1293 = vmatmul.mubr.f32.gmra.mxu0 %v240
    %v1294 = vpop.f32.mrf.mxu0
    %v1295 = vadd.f32 %v1190, %v1294
    %v1296 = vpop.f32.mrf.mxu0
    %1297 = vmatprep.mubr.f32.mxu0 %v260
    %1298 = vmatmul.mubr.f32.gmra.mxu0 %v259
    %v1299 = vpop.f32.mrf.mxu0
    %v1300 = vadd.f32 %v1195, %v1299
    %v1301 = vpop.f32.mrf.mxu0
    %1302 = vmatprep.mubr.f32.mxu0 %v279
    %1303 = vmatmul.mubr.f32.gmra.mxu0 %v278
    %v1304 = vpop.f32.mrf.mxu0
    %v1305 = vadd.f32 %v1200, %v1304
    %v1306 = vpop.f32.mrf.mxu0
    %1307 = vmatprep.mubr.f32.mxu0 %v298
    %1308 = vmatmul.mubr.f32.gmra.mxu0 %v297
    %v1309 = vpop.f32.mrf.mxu0
    %v1310 = vadd.f32 %v1205, %v1309
    %v1311 = vpop.f32.mrf.mxu0
    %1312 = vdwg.mxu0
    %1313 = vmatprep.subr.mxu0 0.0
    %1314 = vmatpush1.msra.mxu0 %v965
    %1315 = vmatprep.subr.mxu0 0.0
    %1316 = vmatpush1.msra.mxu0 %v964
    %1317 = vmatprep.subr.mxu0 0.0
    %1318 = vmatpush1.msra.mxu0 %v963
    %1319 = vmatprep.subr.mxu0 0.0
    %1320 = vmatpush1.msra.mxu0 %v962
    %1321 = vmatprep.subr.mxu0 0.0
    %1322 = vmatpush1.msra.mxu0 %v961
    %1323 = vmatprep.subr.mxu0 0.0
    %1324 = vmatpush1.msra.mxu0 %v960
    %1325 = vmatprep.subr.mxu0 0.0
    %1326 = vmatpush1.msra.mxu0 %v959
    %1327 = vmatprep.subr.mxu0 0.0
    %1328 = vmatpush1.msra.mxu0 %v958
    %1329 = vmatprep.subr.mxu0 0.0
    %1330 = vmatpush1.msra.mxu0 %v957
    %1331 = vmatprep.subr.mxu0 0.0
    %1332 = vmatpush1.msra.mxu0 %v956
    %1333 = vmatprep.subr.mxu0 0.0
    %1334 = vmatpush1.msra.mxu0 %v955
    %1335 = vmatprep.subr.mxu0 0.0
    %1336 = vmatpush1.msra.mxu0 %v954
    %1337 = vmatprep.subr.mxu0 0.0
    %1338 = vmatpush1.msra.mxu0 %v953
    %1339 = vmatprep.subr.mxu0 0.0
    %1340 = vmatpush1.msra.mxu0 %v952
    %1341 = vmatprep.subr.mxu0 0.0
    %1342 = vmatpush1.msra.mxu0 %v951
    %1343 = vmatprep.subr.mxu0 0.0
    %1344 = vmatpush1.msra.mxu0 %v950
    %1345 = vmatprep.subr.mxu0 0.0
    %1346 = vmatpush2.msra.mxu0 %v981
    %1347 = vmatprep.subr.mxu0 0.0
    %1348 = vmatpush2.msra.mxu0 %v980
    %1349 = vmatprep.subr.mxu0 0.0
    %1350 = vmatpush2.msra.mxu0 %v979
    %1351 = vmatprep.subr.mxu0 0.0
    %1352 = vmatpush2.msra.mxu0 %v978
    %1353 = vmatprep.subr.mxu0 0.0
    %1354 = vmatpush2.msra.mxu0 %v977
    %1355 = vmatprep.subr.mxu0 0.0
    %1356 = vmatpush2.msra.mxu0 %v976
    %1357 = vmatprep.subr.mxu0 0.0
    %1358 = vmatpush2.msra.mxu0 %v975
    %1359 = vmatprep.subr.mxu0 0.0
    %1360 = vmatpush2.msra.mxu0 %v974
    %1361 = vmatprep.subr.mxu0 0.0
    %1362 = vmatpush2.msra.mxu0 %v973
    %1363 = vmatprep.subr.mxu0 0.0
    %1364 = vmatpush2.msra.mxu0 %v972
    %1365 = vmatprep.subr.mxu0 0.0
    %1366 = vmatpush2.msra.mxu0 %v971
    %1367 = vmatprep.subr.mxu0 0.0
    %1368 = vmatpush2.msra.mxu0 %v970
    %1369 = vmatprep.subr.mxu0 0.0
    %1370 = vmatpush2.msra.mxu0 %v969
    %1371 = vmatprep.subr.mxu0 0.0
    %1372 = vmatpush2.msra.mxu0 %v968
    %1373 = vmatprep.subr.mxu0 0.0
    %1374 = vmatpush2.msra.mxu0 %v967
    %1375 = vmatprep.subr.mxu0 0.0
    %1376 = vmatpush2.msra.mxu0 %v966
    %1377 = vmatprep.mubr.f32.mxu0 %v167
    %1378 = vmatmul.mubr.f32.gmra.mxu0 %v166
    %v1379 = vpop.f32.mrf.mxu0
    %v1380 = vadd.f32 %v1275, %v1379
    %v1381 = vpop.f32.mrf.mxu0
    %1382 = vmatprep.mubr.f32.mxu0 %v186
    %1383 = vmatmul.mubr.f32.gmra.mxu0 %v185
    %v1384 = vpop.f32.mrf.mxu0
    %v1385 = vadd.f32 %v1280, %v1384
    %v1386 = vpop.f32.mrf.mxu0
    %1387 = vmatprep.mubr.f32.mxu0 %v205
    %1388 = vmatmul.mubr.f32.gmra.mxu0 %v204
    %v1389 = vpop.f32.mrf.mxu0
    %v1390 = vadd.f32 %v1285, %v1389
    %v1391 = vpop.f32.mrf.mxu0
    %1392 = vmatprep.mubr.f32.mxu0 %v224
    %1393 = vmatmul.mubr.f32.gmra.mxu0 %v223
    %v1394 = vpop.f32.mrf.mxu0
    %v1395 = vadd.f32 %v1290, %v1394
    %v1396 = vpop.f32.mrf.mxu0
    %1397 = vmatprep.mubr.f32.mxu0 %v243
    %1398 = vmatmul.mubr.f32.gmra.mxu0 %v242
    %v1399 = vpop.f32.mrf.mxu0
    %v1400 = vadd.f32 %v1295, %v1399
    %v1401 = vpop.f32.mrf.mxu0
    %1402 = vmatprep.mubr.f32.mxu0 %v262
    %1403 = vmatmul.mubr.f32.gmra.mxu0 %v261
    %v1404 = vpop.f32.mrf.mxu0
    %v1405 = vadd.f32 %v1300, %v1404
    %v1406 = vpop.f32.mrf.mxu0
    %1407 = vmatprep.mubr.f32.mxu0 %v281
    %1408 = vmatmul.mubr.f32.gmra.mxu0 %v280
    %v1409 = vpop.f32.mrf.mxu0
    %v1410 = vadd.f32 %v1305, %v1409
    %v1411 = vpop.f32.mrf.mxu0
    %1412 = vmatprep.mubr.f32.mxu0 %v300
    %1413 = vmatmul.mubr.f32.gmra.mxu0 %v299
    %v1414 = vpop.f32.mrf.mxu0
    %v1415 = vadd.f32 %v1310, %v1414
    %v1416 = vpop.f32.mrf.mxu0
    %1417 = vdwg.mxu0
    %1418 = vmatprep.subr.mxu0 0.0
    %1419 = vmatpush1.msra.mxu0 %v997
    %1420 = vmatprep.subr.mxu0 0.0
    %1421 = vmatpush1.msra.mxu0 %v996
    %1422 = vmatprep.subr.mxu0 0.0
    %1423 = vmatpush1.msra.mxu0 %v995
    %1424 = vmatprep.subr.mxu0 0.0
    %1425 = vmatpush1.msra.mxu0 %v994
    %1426 = vmatprep.subr.mxu0 0.0
    %1427 = vmatpush1.msra.mxu0 %v993
    %1428 = vmatprep.subr.mxu0 0.0
    %1429 = vmatpush1.msra.mxu0 %v992
    %1430 = vmatprep.subr.mxu0 0.0
    %1431 = vmatpush1.msra.mxu0 %v991
    %1432 = vmatprep.subr.mxu0 0.0
    %1433 = vmatpush1.msra.mxu0 %v990
    %1434 = vmatprep.subr.mxu0 0.0
    %1435 = vmatpush1.msra.mxu0 %v989
    %1436 = vmatprep.subr.mxu0 0.0
    %1437 = vmatpush1.msra.mxu0 %v988
    %1438 = vmatprep.subr.mxu0 0.0
    %1439 = vmatpush1.msra.mxu0 %v987
    %1440 = vmatprep.subr.mxu0 0.0
    %1441 = vmatpush1.msra.mxu0 %v986
    %1442 = vmatprep.subr.mxu0 0.0
    %1443 = vmatpush1.msra.mxu0 %v985
    %1444 = vmatprep.subr.mxu0 0.0
    %1445 = vmatpush1.msra.mxu0 %v984
    %1446 = vmatprep.subr.mxu0 0.0
    %1447 = vmatpush1.msra.mxu0 %v983
    %1448 = vmatprep.subr.mxu0 0.0
    %1449 = vmatpush1.msra.mxu0 %v982
    %1450 = vmatprep.subr.mxu0 0.0
    %1451 = vmatpush2.msra.mxu0 0.0
    %1452 = vmatprep.subr.mxu0 0.0
    %1453 = vmatpush2.msra.mxu0 0.0
    %1454 = vmatprep.subr.mxu0 0.0
    %1455 = vmatpush2.msra.mxu0 0.0
    %1456 = vmatprep.subr.mxu0 0.0
    %1457 = vmatpush2.msra.mxu0 0.0
    %1458 = vmatprep.subr.mxu0 0.0
    %1459 = vmatpush2.msra.mxu0 0.0
    %1460 = vmatprep.subr.mxu0 0.0
    %1461 = vmatpush2.msra.mxu0 0.0
    %1462 = vmatprep.subr.mxu0 0.0
    %1463 = vmatpush2.msra.mxu0 0.0
    %1464 = vmatprep.subr.mxu0 0.0
    %1465 = vmatpush2.msra.mxu0 0.0
    %1466 = vmatprep.subr.mxu0 0.0
    %1467 = vmatpush2.msra.mxu0 0.0
    %1468 = vmatprep.subr.mxu0 0.0
    %1469 = vmatpush2.msra.mxu0 0.0
    %1470 = vmatprep.subr.mxu0 0.0
    %1471 = vmatpush2.msra.mxu0 0.0
    %1472 = vmatprep.subr.mxu0 0.0
    %1473 = vmatpush2.msra.mxu0 0.0
    %1474 = vmatprep.subr.mxu0 0.0
    %1475 = vmatpush2.msra.mxu0 0.0
    %1476 = vmatprep.subr.mxu0 0.0
    %1477 = vmatpush2.msra.mxu0 0.0
    %1478 = vmatprep.subr.mxu0 0.0
    %1479 = vmatpush2.msra.mxu0 0.0
    %1480 = vmatprep.subr.mxu0 0.0
    %1481 = vmatpush2.msra.mxu0 0.0
    %1482 = vmatprep.mubr.f32.mxu0 0.0
    %1483 = vmatmul.mubr.f32.gmra.mxu0 %v168
    %v1484 = vpop.f32.mrf.mxu0
    %v1485 = vadd.f32 %v1380, %v1484
    %v1486 = vpop.f32.mrf.mxu0
    %1487 = vmatprep.mubr.f32.mxu0 0.0
    %1488 = vmatmul.mubr.f32.gmra.mxu0 %v187
    %v1489 = vpop.f32.mrf.mxu0
    %v1490 = vadd.f32 %v1385, %v1489
    %v1491 = vpop.f32.mrf.mxu0
    %1492 = vmatprep.mubr.f32.mxu0 0.0
    %1493 = vmatmul.mubr.f32.gmra.mxu0 %v206
    %v1494 = vpop.f32.mrf.mxu0
    %v1495 = vadd.f32 %v1390, %v1494
    %v1496 = vpop.f32.mrf.mxu0
    %1497 = vmatprep.mubr.f32.mxu0 0.0
    %1498 = vmatmul.mubr.f32.gmra.mxu0 %v225
    %v1499 = vpop.f32.mrf.mxu0
    %v1500 = vadd.f32 %v1395, %v1499
    %v1501 = vpop.f32.mrf.mxu0
    %1502 = vmatprep.mubr.f32.mxu0 0.0
    %1503 = vmatmul.mubr.f32.gmra.mxu0 %v244
    %v1504 = vpop.f32.mrf.mxu0
    %v1505 = vadd.f32 %v1400, %v1504
    %v1506 = vpop.f32.mrf.mxu0
    %1507 = vmatprep.mubr.f32.mxu0 0.0
    %1508 = vmatmul.mubr.f32.gmra.mxu0 %v263
    %v1509 = vpop.f32.mrf.mxu0
    %v1510 = vadd.f32 %v1405, %v1509
    %v1511 = vpop.f32.mrf.mxu0
    %1512 = vmatprep.mubr.f32.mxu0 0.0
    %1513 = vmatmul.mubr.f32.gmra.mxu0 %v282
    %v1514 = vpop.f32.mrf.mxu0
    %v1515 = vadd.f32 %v1410, %v1514
    %v1516 = vpop.f32.mrf.mxu0
    %1517 = vmatprep.mubr.f32.mxu0 0.0
    %1518 = vmatmul.mubr.f32.gmra.mxu0 %v301
    %v1519 = vpop.f32.mrf.mxu0
    %v1520 = vadd.f32 %v1415, %v1519
    %v1521 = vpop.f32.mrf.mxu0
    %1522 = vdwg.mxu0
    %v1523 = vld [vmem:[#allocation8] sm:$0xff]
    %v1524 = vld [vmem:[#allocation8 + $0x8] sm:$0xff]
    %v1525 = vld [vmem:[#allocation8 + $0x10] sm:$0xff]
    %v1526 = vld [vmem:[#allocation8 + $0x18] sm:$0xff]
    %v1527 = vld [vmem:[#allocation8 + $0x20] sm:$0xff]
    %v1528 = vld [vmem:[#allocation8 + $0x28] sm:$0xff]
    %v1529 = vld [vmem:[#allocation8 + $0x30] sm:$0xff]
    %v1530 = vld [vmem:[#allocation8 + $0x38] sm:$0xff]
    %v1531 = vld [vmem:[#allocation8 + $0x40] sm:$0xff]
    %v1532 = vld [vmem:[#allocation8 + $0x48] sm:$0xff]
    %v1533 = vld [vmem:[#allocation8 + $0x50] sm:$0xff]
    %v1534 = vld [vmem:[#allocation8 + $0x58] sm:$0xff]
    %v1535 = vld [vmem:[#allocation8 + $0x60] sm:$0xff]
    %v1536 = vld [vmem:[#allocation8 + $0x68] sm:$0xff]
    %v1537 = vld [vmem:[#allocation8 + $0x70] sm:$0xff]
    %v1538 = vld [vmem:[#allocation8 + $0x78] sm:$0xff]
    %v1539 = vld [vmem:[#allocation8 + $0x80] sm:$0xff]
    %v1540 = vld [vmem:[#allocation8 + $0x88] sm:$0xff]
    %v1541 = vld [vmem:[#allocation8 + $0x90] sm:$0xff]
    %v1542 = vld [vmem:[#allocation8 + $0x98] sm:$0xff]
    %v1543 = vld [vmem:[#allocation8 + $0xa0] sm:$0xff]
    %v1544 = vld [vmem:[#allocation8 + $0xa8] sm:$0xff]
    %v1545 = vld [vmem:[#allocation8 + $0xb0] sm:$0xff]
    %v1546 = vld [vmem:[#allocation8 + $0xb8] sm:$0xff]
    %v1547 = vld [vmem:[#allocation8 + $0xc0] sm:$0xff]
    %v1548 = vld [vmem:[#allocation8 + $0xc8] sm:$0xff]
    %v1549 = vld [vmem:[#allocation8 + $0xd0] sm:$0xff]
    %v1550 = vld [vmem:[#allocation8 + $0xd8] sm:$0xff]
    %v1551 = vld [vmem:[#allocation8 + $0xe0] sm:$0xff]
    %v1552 = vld [vmem:[#allocation8 + $0xe8] sm:$0xff]
    %v1553 = vld [vmem:[#allocation8 + $0xf0] sm:$0xff]
    %v1554 = vld [vmem:[#allocation8 + $0xf8] sm:$0xff]
    %v1555 = vld [vmem:[#allocation8 + $0x100] sm:$0xff]
    %v1556 = vld [vmem:[#allocation8 + $0x108] sm:$0xff]
    %v1557 = vld [vmem:[#allocation8 + $0x110] sm:$0xff]
    %v1558 = vld [vmem:[#allocation8 + $0x118] sm:$0xff]
    %v1559 = vld [vmem:[#allocation8 + $0x120] sm:$0xff]
    %v1560 = vld [vmem:[#allocation8 + $0x128] sm:$0xff]
    %v1561 = vld [vmem:[#allocation8 + $0x130] sm:$0xff]
    %v1562 = vld [vmem:[#allocation8 + $0x138] sm:$0xff]
    %v1563 = vld [vmem:[#allocation8 + $0x140] sm:$0xff]
    %v1564 = vld [vmem:[#allocation8 + $0x148] sm:$0xff]
    %v1565 = vld [vmem:[#allocation8 + $0x150] sm:$0xff]
    %v1566 = vld [vmem:[#allocation8 + $0x158] sm:$0xff]
    %v1567 = vld [vmem:[#allocation8 + $0x160] sm:$0xff]
    %v1568 = vld [vmem:[#allocation8 + $0x168] sm:$0xff]
    %v1569 = vld [vmem:[#allocation8 + $0x170] sm:$0xff]
    %v1570 = vld [vmem:[#allocation8 + $0x178] sm:$0xff]
    %v1571 = vld [vmem:[#allocation8 + $0x180] sm:$0xff]
    %v1572 = vld [vmem:[#allocation8 + $0x188] sm:$0xff]
    %v1573 = vld [vmem:[#allocation8 + $0x190] sm:$0xff]
    %v1574 = vld [vmem:[#allocation8 + $0x198] sm:$0xff]
    %v1575 = vld [vmem:[#allocation8 + $0x1a0] sm:$0xff]
    %v1576 = vld [vmem:[#allocation8 + $0x1a8] sm:$0xff]
    %v1577 = vld [vmem:[#allocation8 + $0x1b0] sm:$0xff]
    %v1578 = vld [vmem:[#allocation8 + $0x1b8] sm:$0xff]
    %v1579 = vld [vmem:[#allocation8 + $0x1c0] sm:$0xff]
    %v1580 = vld [vmem:[#allocation8 + $0x1c8] sm:$0xff]
    %v1581 = vld [vmem:[#allocation8 + $0x1d0] sm:$0xff]
    %v1582 = vld [vmem:[#allocation8 + $0x1d8] sm:$0xff]
    %v1583 = vld [vmem:[#allocation8 + $0x1e0] sm:$0xff]
    %v1584 = vld [vmem:[#allocation8 + $0x1e8] sm:$0xff]
    %v1585 = vld [vmem:[#allocation8 + $0x1f0] sm:$0xff]
    %v1586 = vld [vmem:[#allocation8 + $0x1f8] sm:$0xff]
    %v1587 = vld [vmem:[#allocation8 + $0x200] sm:$0xff]
    %v1588 = vld [vmem:[#allocation8 + $0x208] sm:$0xff]
    %v1589 = vld [vmem:[#allocation8 + $0x210] sm:$0xff]
    %v1590 = vld [vmem:[#allocation8 + $0x218] sm:$0xff]
    %v1591 = vld [vmem:[#allocation8 + $0x220] sm:$0xff]
    %v1592 = vld [vmem:[#allocation8 + $0x228] sm:$0xff]
    %v1593 = vld [vmem:[#allocation8 + $0x230] sm:$0xff]
    %v1594 = vld [vmem:[#allocation8 + $0x238] sm:$0xff]
    %v1595 = vld [vmem:[#allocation8 + $0x240] sm:$0xff]
    %v1596 = vld [vmem:[#allocation8 + $0x248] sm:$0xff]
    %v1597 = vld [vmem:[#allocation8 + $0x250] sm:$0xff]
    %v1598 = vld [vmem:[#allocation8 + $0x258] sm:$0xff]
    %v1599 = vld [vmem:[#allocation8 + $0x260] sm:$0xff]
    %v1600 = vld [vmem:[#allocation8 + $0x268] sm:$0xff]
    %v1601 = vld [vmem:[#allocation8 + $0x270] sm:$0xff]
    %v1602 = vld [vmem:[#allocation8 + $0x278] sm:$0xff]
    %v1603 = vld [vmem:[#allocation8 + $0x280] sm:$0xff]
    %v1604 = vld [vmem:[#allocation8 + $0x288] sm:$0xff]
    %v1605 = vld [vmem:[#allocation8 + $0x290] sm:$0xff]
    %v1606 = vld [vmem:[#allocation8 + $0x298] sm:$0xff]
    %v1607 = vld [vmem:[#allocation8 + $0x2a0] sm:$0xff]
    %v1608 = vld [vmem:[#allocation8 + $0x2a8] sm:$0xff]
    %v1609 = vld [vmem:[#allocation8 + $0x2b0] sm:$0xff]
    %v1610 = vld [vmem:[#allocation8 + $0x2b8] sm:$0xff]
    %v1611 = vld [vmem:[#allocation8 + $0x2c0] sm:$0xff]
    %v1612 = vld [vmem:[#allocation8 + $0x2c8] sm:$0xff]
    %v1613 = vld [vmem:[#allocation8 + $0x2d0] sm:$0xff]
    %v1614 = vld [vmem:[#allocation8 + $0x2d8] sm:$0xff]
    %v1615 = vld [vmem:[#allocation8 + $0x2e0] sm:$0xff]
    %v1616 = vld [vmem:[#allocation8 + $0x2e8] sm:$0xff]
    %v1617 = vld [vmem:[#allocation8 + $0x2f0] sm:$0xff]
    %v1618 = vld [vmem:[#allocation8 + $0x2f8] sm:$0xff]
    %v1619 = vld [vmem:[#allocation8 + $0x300] sm:$0xff]
    %v1620 = vld [vmem:[#allocation8 + $0x308] sm:$0xff]
    %v1621 = vld [vmem:[#allocation8 + $0x310] sm:$0xff]
    %v1622 = vld [vmem:[#allocation8 + $0x318] sm:$0xff]
    %v1623 = vld [vmem:[#allocation8 + $0x320] sm:$0xff]
    %v1624 = vld [vmem:[#allocation8 + $0x328] sm:$0xff]
    %v1625 = vld [vmem:[#allocation8 + $0x330] sm:$0xff]
    %v1626 = vld [vmem:[#allocation8 + $0x338] sm:$0xff]
    %v1627 = vld [vmem:[#allocation8 + $0x340] sm:$0xff]
    %v1628 = vld [vmem:[#allocation8 + $0x348] sm:$0xff]
    %v1629 = vld [vmem:[#allocation8 + $0x350] sm:$0xff]
    %v1630 = vld [vmem:[#allocation8 + $0x358] sm:$0xff]
    %v1631 = vld [vmem:[#allocation8 + $0x360] sm:$0xff]
    %v1632 = vld [vmem:[#allocation8 + $0x368] sm:$0xff]
    %v1633 = vld [vmem:[#allocation8 + $0x370] sm:$0xff]
    %v1634 = vld [vmem:[#allocation8 + $0x378] sm:$0xff]
    %1635 = vmatprep.subr.mxu0 0.0
    %1636 = vmatpush1.msra.mxu0 %v1538
    %1637 = vmatprep.subr.mxu0 0.0
    %1638 = vmatpush1.msra.mxu0 %v1537
    %1639 = vmatprep.subr.mxu0 0.0
    %1640 = vmatpush1.msra.mxu0 %v1536
    %1641 = vmatprep.subr.mxu0 0.0
    %1642 = vmatpush1.msra.mxu0 %v1535
    %1643 = vmatprep.subr.mxu0 0.0
    %1644 = vmatpush1.msra.mxu0 %v1534
    %1645 = vmatprep.subr.mxu0 0.0
    %1646 = vmatpush1.msra.mxu0 %v1533
    %1647 = vmatprep.subr.mxu0 0.0
    %1648 = vmatpush1.msra.mxu0 %v1532
    %1649 = vmatprep.subr.mxu0 0.0
    %1650 = vmatpush1.msra.mxu0 %v1531
    %1651 = vmatprep.subr.mxu0 0.0
    %1652 = vmatpush1.msra.mxu0 %v1530
    %1653 = vmatprep.subr.mxu0 0.0
    %1654 = vmatpush1.msra.mxu0 %v1529
    %1655 = vmatprep.subr.mxu0 0.0
    %1656 = vmatpush1.msra.mxu0 %v1528
    %1657 = vmatprep.subr.mxu0 0.0
    %1658 = vmatpush1.msra.mxu0 %v1527
    %1659 = vmatprep.subr.mxu0 0.0
    %1660 = vmatpush1.msra.mxu0 %v1526
    %1661 = vmatprep.subr.mxu0 0.0
    %1662 = vmatpush1.msra.mxu0 %v1525
    %1663 = vmatprep.subr.mxu0 0.0
    %1664 = vmatpush1.msra.mxu0 %v1524
    %1665 = vmatprep.subr.mxu0 0.0
    %1666 = vmatpush1.msra.mxu0 %v1523
    %1667 = vmatprep.subr.mxu0 0.0
    %1668 = vmatpush2.msra.mxu0 %v1554
    %1669 = vmatprep.subr.mxu0 0.0
    %1670 = vmatpush2.msra.mxu0 %v1553
    %1671 = vmatprep.subr.mxu0 0.0
    %1672 = vmatpush2.msra.mxu0 %v1552
    %1673 = vmatprep.subr.mxu0 0.0
    %1674 = vmatpush2.msra.mxu0 %v1551
    %1675 = vmatprep.subr.mxu0 0.0
    %1676 = vmatpush2.msra.mxu0 %v1550
    %1677 = vmatprep.subr.mxu0 0.0
    %1678 = vmatpush2.msra.mxu0 %v1549
    %1679 = vmatprep.subr.mxu0 0.0
    %1680 = vmatpush2.msra.mxu0 %v1548
    %1681 = vmatprep.subr.mxu0 0.0
    %1682 = vmatpush2.msra.mxu0 %v1547
    %1683 = vmatprep.subr.mxu0 0.0
    %1684 = vmatpush2.msra.mxu0 %v1546
    %1685 = vmatprep.subr.mxu0 0.0
    %1686 = vmatpush2.msra.mxu0 %v1545
    %1687 = vmatprep.subr.mxu0 0.0
    %1688 = vmatpush2.msra.mxu0 %v1544
    %1689 = vmatprep.subr.mxu0 0.0
    %1690 = vmatpush2.msra.mxu0 %v1543
    %1691 = vmatprep.subr.mxu0 0.0
    %1692 = vmatpush2.msra.mxu0 %v1542
    %1693 = vmatprep.subr.mxu0 0.0
    %1694 = vmatpush2.msra.mxu0 %v1541
    %1695 = vmatprep.subr.mxu0 0.0
    %1696 = vmatpush2.msra.mxu0 %v1540
    %1697 = vmatprep.subr.mxu0 0.0
    %1698 = vmatpush2.msra.mxu0 %v1539
    %1699 = vmatprep.mubr.f32.mxu0 %v167
    %1700 = vmatmul.mubr.f32.gmra.mxu0 %v166
    %v1701 = vpop.f32.mrf.mxu0
    %v1702 = vadd.f32 0.0, %v1701
    %v1703 = vpop.f32.mrf.mxu0
    %1704 = vmatprep.mubr.f32.mxu0 %v186
    %1705 = vmatmul.mubr.f32.gmra.mxu0 %v185
    %v1706 = vpop.f32.mrf.mxu0
    %v1707 = vadd.f32 0.0, %v1706
    %v1708 = vpop.f32.mrf.mxu0
    %1709 = vmatprep.mubr.f32.mxu0 %v205
    %1710 = vmatmul.mubr.f32.gmra.mxu0 %v204
    %v1711 = vpop.f32.mrf.mxu0
    %v1712 = vadd.f32 0.0, %v1711
    %v1713 = vpop.f32.mrf.mxu0
    %1714 = vmatprep.mubr.f32.mxu0 %v224
    %1715 = vmatmul.mubr.f32.gmra.mxu0 %v223
    %v1716 = vpop.f32.mrf.mxu0
    %v1717 = vadd.f32 0.0, %v1716
    %v1718 = vpop.f32.mrf.mxu0
    %1719 = vmatprep.mubr.f32.mxu0 %v243
    %1720 = vmatmul.mubr.f32.gmra.mxu0 %v242
    %v1721 = vpop.f32.mrf.mxu0
    %v1722 = vadd.f32 0.0, %v1721
    %v1723 = vpop.f32.mrf.mxu0
    %1724 = vmatprep.mubr.f32.mxu0 %v262
    %1725 = vmatmul.mubr.f32.gmra.mxu0 %v261
    %v1726 = vpop.f32.mrf.mxu0
    %v1727 = vadd.f32 0.0, %v1726
    %v1728 = vpop.f32.mrf.mxu0
    %1729 = vmatprep.mubr.f32.mxu0 %v281
    %1730 = vmatmul.mubr.f32.gmra.mxu0 %v280
    %v1731 = vpop.f32.mrf.mxu0
    %v1732 = vadd.f32 0.0, %v1731
    %v1733 = vpop.f32.mrf.mxu0
    %1734 = vmatprep.mubr.f32.mxu0 %v300
    %1735 = vmatmul.mubr.f32.gmra.mxu0 %v299
    %v1736 = vpop.f32.mrf.mxu0
    %v1737 = vadd.f32 0.0, %v1736
    %v1738 = vpop.f32.mrf.mxu0
    %1739 = vdwg.mxu0
    %1740 = vmatprep.subr.mxu0 0.0
    %1741 = vmatpush1.msra.mxu0 %v1570
    %1742 = vmatprep.subr.mxu0 0.0
    %1743 = vmatpush1.msra.mxu0 %v1569
    %1744 = vmatprep.subr.mxu0 0.0
    %1745 = vmatpush1.msra.mxu0 %v1568
    %1746 = vmatprep.subr.mxu0 0.0
    %1747 = vmatpush1.msra.mxu0 %v1567
    %1748 = vmatprep.subr.mxu0 0.0
    %1749 = vmatpush1.msra.mxu0 %v1566
    %1750 = vmatprep.subr.mxu0 0.0
    %1751 = vmatpush1.msra.mxu0 %v1565
    %1752 = vmatprep.subr.mxu0 0.0
    %1753 = vmatpush1.msra.mxu0 %v1564
    %1754 = vmatprep.subr.mxu0 0.0
    %1755 = vmatpush1.msra.mxu0 %v1563
    %1756 = vmatprep.subr.mxu0 0.0
    %1757 = vmatpush1.msra.mxu0 %v1562
    %1758 = vmatprep.subr.mxu0 0.0
    %1759 = vmatpush1.msra.mxu0 %v1561
    %1760 = vmatprep.subr.mxu0 0.0
    %1761 = vmatpush1.msra.mxu0 %v1560
    %1762 = vmatprep.subr.mxu0 0.0
    %1763 = vmatpush1.msra.mxu0 %v1559
    %1764 = vmatprep.subr.mxu0 0.0
    %1765 = vmatpush1.msra.mxu0 %v1558
    %1766 = vmatprep.subr.mxu0 0.0
    %1767 = vmatpush1.msra.mxu0 %v1557
    %1768 = vmatprep.subr.mxu0 0.0
    %1769 = vmatpush1.msra.mxu0 %v1556
    %1770 = vmatprep.subr.mxu0 0.0
    %1771 = vmatpush1.msra.mxu0 %v1555
    %1772 = vmatprep.subr.mxu0 0.0
    %1773 = vmatpush2.msra.mxu0 %v1586
    %1774 = vmatprep.subr.mxu0 0.0
    %1775 = vmatpush2.msra.mxu0 %v1585
    %1776 = vmatprep.subr.mxu0 0.0
    %1777 = vmatpush2.msra.mxu0 %v1584
    %1778 = vmatprep.subr.mxu0 0.0
    %1779 = vmatpush2.msra.mxu0 %v1583
    %1780 = vmatprep.subr.mxu0 0.0
    %1781 = vmatpush2.msra.mxu0 %v1582
    %1782 = vmatprep.subr.mxu0 0.0
    %1783 = vmatpush2.msra.mxu0 %v1581
    %1784 = vmatprep.subr.mxu0 0.0
    %1785 = vmatpush2.msra.mxu0 %v1580
    %1786 = vmatprep.subr.mxu0 0.0
    %1787 = vmatpush2.msra.mxu0 %v1579
    %1788 = vmatprep.subr.mxu0 0.0
    %1789 = vmatpush2.msra.mxu0 %v1578
    %1790 = vmatprep.subr.mxu0 0.0
    %1791 = vmatpush2.msra.mxu0 %v1577
    %1792 = vmatprep.subr.mxu0 0.0
    %1793 = vmatpush2.msra.mxu0 %v1576
    %1794 = vmatprep.subr.mxu0 0.0
    %1795 = vmatpush2.msra.mxu0 %v1575
    %1796 = vmatprep.subr.mxu0 0.0
    %1797 = vmatpush2.msra.mxu0 %v1574
    %1798 = vmatprep.subr.mxu0 0.0
    %1799 = vmatpush2.msra.mxu0 %v1573
    %1800 = vmatprep.subr.mxu0 0.0
    %1801 = vmatpush2.msra.mxu0 %v1572
    %1802 = vmatprep.subr.mxu0 0.0
    %1803 = vmatpush2.msra.mxu0 %v1571
    %1804 = vmatprep.mubr.f32.mxu0 %v169
    %1805 = vmatmul.mubr.f32.gmra.mxu0 %v168
    %v1806 = vpop.f32.mrf.mxu0
    %v1807 = vadd.f32 %v1702, %v1806
    %v1808 = vpop.f32.mrf.mxu0
    %1809 = vmatprep.mubr.f32.mxu0 %v188
    %1810 = vmatmul.mubr.f32.gmra.mxu0 %v187
    %v1811 = vpop.f32.mrf.mxu0
    %v1812 = vadd.f32 %v1707, %v1811
    %v1813 = vpop.f32.mrf.mxu0
    %1814 = vmatprep.mubr.f32.mxu0 %v207
    %1815 = vmatmul.mubr.f32.gmra.mxu0 %v206
    %v1816 = vpop.f32.mrf.mxu0
    %v1817 = vadd.f32 %v1712, %v1816
    %v1818 = vpop.f32.mrf.mxu0
    %1819 = vmatprep.mubr.f32.mxu0 %v226
    %1820 = vmatmul.mubr.f32.gmra.mxu0 %v225
    %v1821 = vpop.f32.mrf.mxu0
    %v1822 = vadd.f32 %v1717, %v1821
    %v1823 = vpop.f32.mrf.mxu0
    %1824 = vmatprep.mubr.f32.mxu0 %v245
    %1825 = vmatmul.mubr.f32.gmra.mxu0 %v244
    %v1826 = vpop.f32.mrf.mxu0
    %v1827 = vadd.f32 %v1722, %v1826
    %v1828 = vpop.f32.mrf.mxu0
    %1829 = vmatprep.mubr.f32.mxu0 %v264
    %1830 = vmatmul.mubr.f32.gmra.mxu0 %v263
    %v1831 = vpop.f32.mrf.mxu0
    %v1832 = vadd.f32 %v1727, %v1831
    %v1833 = vpop.f32.mrf.mxu0
    %1834 = vmatprep.mubr.f32.mxu0 %v283
    %1835 = vmatmul.mubr.f32.gmra.mxu0 %v282
    %v1836 = vpop.f32.mrf.mxu0
    %v1837 = vadd.f32 %v1732, %v1836
    %v1838 = vpop.f32.mrf.mxu0
    %1839 = vmatprep.mubr.f32.mxu0 %v302
    %1840 = vmatmul.mubr.f32.gmra.mxu0 %v301
    %v1841 = vpop.f32.mrf.mxu0
    %v1842 = vadd.f32 %v1737, %v1841
    %v1843 = vpop.f32.mrf.mxu0
    %1844 = vdwg.mxu0
    %1845 = vmatprep.subr.mxu0 0.0
    %1846 = vmatpush1.msra.mxu0 %v1602
    %1847 = vmatprep.subr.mxu0 0.0
    %1848 = vmatpush1.msra.mxu0 %v1601
    %1849 = vmatprep.subr.mxu0 0.0
    %1850 = vmatpush1.msra.mxu0 %v1600
    %1851 = vmatprep.subr.mxu0 0.0
    %1852 = vmatpush1.msra.mxu0 %v1599
    %1853 = vmatprep.subr.mxu0 0.0
    %1854 = vmatpush1.msra.mxu0 %v1598
    %1855 = vmatprep.subr.mxu0 0.0
    %1856 = vmatpush1.msra.mxu0 %v1597
    %1857 = vmatprep.subr.mxu0 0.0
    %1858 = vmatpush1.msra.mxu0 %v1596
    %1859 = vmatprep.subr.mxu0 0.0
    %1860 = vmatpush1.msra.mxu0 %v1595
    %1861 = vmatprep.subr.mxu0 0.0
    %1862 = vmatpush1.msra.mxu0 %v1594
    %1863 = vmatprep.subr.mxu0 0.0
    %1864 = vmatpush1.msra.mxu0 %v1593
    %1865 = vmatprep.subr.mxu0 0.0
    %1866 = vmatpush1.msra.mxu0 %v1592
    %1867 = vmatprep.subr.mxu0 0.0
    %1868 = vmatpush1.msra.mxu0 %v1591
    %1869 = vmatprep.subr.mxu0 0.0
    %1870 = vmatpush1.msra.mxu0 %v1590
    %1871 = vmatprep.subr.mxu0 0.0
    %1872 = vmatpush1.msra.mxu0 %v1589
    %1873 = vmatprep.subr.mxu0 0.0
    %1874 = vmatpush1.msra.mxu0 %v1588
    %1875 = vmatprep.subr.mxu0 0.0
    %1876 = vmatpush1.msra.mxu0 %v1587
    %1877 = vmatprep.subr.mxu0 0.0
    %1878 = vmatpush2.msra.mxu0 %v1618
    %1879 = vmatprep.subr.mxu0 0.0
    %1880 = vmatpush2.msra.mxu0 %v1617
    %1881 = vmatprep.subr.mxu0 0.0
    %1882 = vmatpush2.msra.mxu0 %v1616
    %1883 = vmatprep.subr.mxu0 0.0
    %1884 = vmatpush2.msra.mxu0 %v1615
    %1885 = vmatprep.subr.mxu0 0.0
    %1886 = vmatpush2.msra.mxu0 %v1614
    %1887 = vmatprep.subr.mxu0 0.0
    %1888 = vmatpush2.msra.mxu0 %v1613
    %1889 = vmatprep.subr.mxu0 0.0
    %1890 = vmatpush2.msra.mxu0 %v1612
    %1891 = vmatprep.subr.mxu0 0.0
    %1892 = vmatpush2.msra.mxu0 %v1611
    %1893 = vmatprep.subr.mxu0 0.0
    %1894 = vmatpush2.msra.mxu0 %v1610
    %1895 = vmatprep.subr.mxu0 0.0
    %1896 = vmatpush2.msra.mxu0 %v1609
    %1897 = vmatprep.subr.mxu0 0.0
    %1898 = vmatpush2.msra.mxu0 %v1608
    %1899 = vmatprep.subr.mxu0 0.0
    %1900 = vmatpush2.msra.mxu0 %v1607
    %1901 = vmatprep.subr.mxu0 0.0
    %1902 = vmatpush2.msra.mxu0 %v1606
    %1903 = vmatprep.subr.mxu0 0.0
    %1904 = vmatpush2.msra.mxu0 %v1605
    %1905 = vmatprep.subr.mxu0 0.0
    %1906 = vmatpush2.msra.mxu0 %v1604
    %1907 = vmatprep.subr.mxu0 0.0
    %1908 = vmatpush2.msra.mxu0 %v1603
    %1909 = vmatprep.mubr.f32.mxu0 %v171
    %1910 = vmatmul.mubr.f32.gmra.mxu0 %v170
    %v1911 = vpop.f32.mrf.mxu0
    %v1912 = vadd.f32 %v1807, %v1911
    %v1913 = vpop.f32.mrf.mxu0
    %1914 = vmatprep.mubr.f32.mxu0 %v190
    %1915 = vmatmul.mubr.f32.gmra.mxu0 %v189
    %v1916 = vpop.f32.mrf.mxu0
    %v1917 = vadd.f32 %v1812, %v1916
    %v1918 = vpop.f32.mrf.mxu0
    %1919 = vmatprep.mubr.f32.mxu0 %v209
    %1920 = vmatmul.mubr.f32.gmra.mxu0 %v208
    %v1921 = vpop.f32.mrf.mxu0
    %v1922 = vadd.f32 %v1817, %v1921
    %v1923 = vpop.f32.mrf.mxu0
    %1924 = vmatprep.mubr.f32.mxu0 %v228
    %1925 = vmatmul.mubr.f32.gmra.mxu0 %v227
    %v1926 = vpop.f32.mrf.mxu0
    %v1927 = vadd.f32 %v1822, %v1926
    %v1928 = vpop.f32.mrf.mxu0
    %1929 = vmatprep.mubr.f32.mxu0 %v247
    %1930 = vmatmul.mubr.f32.gmra.mxu0 %v246
    %v1931 = vpop.f32.mrf.mxu0
    %v1932 = vadd.f32 %v1827, %v1931
    %v1933 = vpop.f32.mrf.mxu0
    %1934 = vmatprep.mubr.f32.mxu0 %v266
    %1935 = vmatmul.mubr.f32.gmra.mxu0 %v265
    %v1936 = vpop.f32.mrf.mxu0
    %v1937 = vadd.f32 %v1832, %v1936
    %v1938 = vpop.f32.mrf.mxu0
    %1939 = vmatprep.mubr.f32.mxu0 %v285
    %1940 = vmatmul.mubr.f32.gmra.mxu0 %v284
    %v1941 = vpop.f32.mrf.mxu0
    %v1942 = vadd.f32 %v1837, %v1941
    %v1943 = vpop.f32.mrf.mxu0
    %1944 = vmatprep.mubr.f32.mxu0 %v304
    %1945 = vmatmul.mubr.f32.gmra.mxu0 %v303
    %v1946 = vpop.f32.mrf.mxu0
    %v1947 = vadd.f32 %v1842, %v1946
    %v1948 = vpop.f32.mrf.mxu0
    %1949 = vdwg.mxu0
    %1950 = vmatprep.subr.mxu0 0.0
    %1951 = vmatpush1.msra.mxu0 %v1634
    %1952 = vmatprep.subr.mxu0 0.0
    %1953 = vmatpush1.msra.mxu0 %v1633
    %1954 = vmatprep.subr.mxu0 0.0
    %1955 = vmatpush1.msra.mxu0 %v1632
    %1956 = vmatprep.subr.mxu0 0.0
    %1957 = vmatpush1.msra.mxu0 %v1631
    %1958 = vmatprep.subr.mxu0 0.0
    %1959 = vmatpush1.msra.mxu0 %v1630
    %1960 = vmatprep.subr.mxu0 0.0
    %1961 = vmatpush1.msra.mxu0 %v1629
    %1962 = vmatprep.subr.mxu0 0.0
    %1963 = vmatpush1.msra.mxu0 %v1628
    %1964 = vmatprep.subr.mxu0 0.0
    %1965 = vmatpush1.msra.mxu0 %v1627
    %1966 = vmatprep.subr.mxu0 0.0
    %1967 = vmatpush1.msra.mxu0 %v1626
    %1968 = vmatprep.subr.mxu0 0.0
    %1969 = vmatpush1.msra.mxu0 %v1625
    %1970 = vmatprep.subr.mxu0 0.0
    %1971 = vmatpush1.msra.mxu0 %v1624
    %1972 = vmatprep.subr.mxu0 0.0
    %1973 = vmatpush1.msra.mxu0 %v1623
    %1974 = vmatprep.subr.mxu0 0.0
    %1975 = vmatpush1.msra.mxu0 %v1622
    %1976 = vmatprep.subr.mxu0 0.0
    %1977 = vmatpush1.msra.mxu0 %v1621
    %1978 = vmatprep.subr.mxu0 0.0
    %1979 = vmatpush1.msra.mxu0 %v1620
    %1980 = vmatprep.subr.mxu0 0.0
    %1981 = vmatpush1.msra.mxu0 %v1619
    %1982 = vmatprep.subr.mxu0 0.0
    %1983 = vmatpush2.msra.mxu0 0.0
    %1984 = vmatprep.subr.mxu0 0.0
    %1985 = vmatpush2.msra.mxu0 0.0
    %1986 = vmatprep.subr.mxu0 0.0
    %1987 = vmatpush2.msra.mxu0 0.0
    %1988 = vmatprep.subr.mxu0 0.0
    %1989 = vmatpush2.msra.mxu0 0.0
    %1990 = vmatprep.subr.mxu0 0.0
    %1991 = vmatpush2.msra.mxu0 0.0
    %1992 = vmatprep.subr.mxu0 0.0
    %1993 = vmatpush2.msra.mxu0 0.0
    %1994 = vmatprep.subr.mxu0 0.0
    %1995 = vmatpush2.msra.mxu0 0.0
    %1996 = vmatprep.subr.mxu0 0.0
    %1997 = vmatpush2.msra.mxu0 0.0
    %1998 = vmatprep.subr.mxu0 0.0
    %1999 = vmatpush2.msra.mxu0 0.0
    %2000 = vmatprep.subr.mxu0 0.0
    %2001 = vmatpush2.msra.mxu0 0.0
    %2002 = vmatprep.subr.mxu0 0.0
    %2003 = vmatpush2.msra.mxu0 0.0
    %2004 = vmatprep.subr.mxu0 0.0
    %2005 = vmatpush2.msra.mxu0 0.0
    %2006 = vmatprep.subr.mxu0 0.0
    %2007 = vmatpush2.msra.mxu0 0.0
    %2008 = vmatprep.subr.mxu0 0.0
    %2009 = vmatpush2.msra.mxu0 0.0
    %2010 = vmatprep.subr.mxu0 0.0
    %2011 = vmatpush2.msra.mxu0 0.0
    %2012 = vmatprep.subr.mxu0 0.0
    %2013 = vmatpush2.msra.mxu0 0.0
    %2014 = vmatprep.mubr.f32.mxu0 0.0
    %2015 = vmatmul.mubr.f32.gmra.mxu0 %v172
    %v2016 = vpop.f32.mrf.mxu0
    %v2017 = vadd.f32 %v1912, %v2016
    %v2018 = vpop.f32.mrf.mxu0
    %2019 = vmatprep.mubr.f32.mxu0 0.0
    %2020 = vmatmul.mubr.f32.gmra.mxu0 %v191
    %v2021 = vpop.f32.mrf.mxu0
    %v2022 = vadd.f32 %v1917, %v2021
    %v2023 = vpop.f32.mrf.mxu0
    %2024 = vmatprep.mubr.f32.mxu0 0.0
    %2025 = vmatmul.mubr.f32.gmra.mxu0 %v210
    %v2026 = vpop.f32.mrf.mxu0
    %v2027 = vadd.f32 %v1922, %v2026
    %v2028 = vpop.f32.mrf.mxu0
    %2029 = vmatprep.mubr.f32.mxu0 0.0
    %2030 = vmatmul.mubr.f32.gmra.mxu0 %v229
    %v2031 = vpop.f32.mrf.mxu0
    %v2032 = vadd.f32 %v1927, %v2031
    %v2033 = vpop.f32.mrf.mxu0
    %2034 = vmatprep.mubr.f32.mxu0 0.0
    %2035 = vmatmul.mubr.f32.gmra.mxu0 %v248
    %v2036 = vpop.f32.mrf.mxu0
    %v2037 = vadd.f32 %v1932, %v2036
    %v2038 = vpop.f32.mrf.mxu0
    %2039 = vmatprep.mubr.f32.mxu0 0.0
    %2040 = vmatmul.mubr.f32.gmra.mxu0 %v267
    %v2041 = vpop.f32.mrf.mxu0
    %v2042 = vadd.f32 %v1937, %v2041
    %v2043 = vpop.f32.mrf.mxu0
    %2044 = vmatprep.mubr.f32.mxu0 0.0
    %2045 = vmatmul.mubr.f32.gmra.mxu0 %v286
    %v2046 = vpop.f32.mrf.mxu0
    %v2047 = vadd.f32 %v1942, %v2046
    %v2048 = vpop.f32.mrf.mxu0
    %2049 = vmatprep.mubr.f32.mxu0 0.0
    %2050 = vmatmul.mubr.f32.gmra.mxu0 %v305
    %v2051 = vpop.f32.mrf.mxu0
    %v2052 = vadd.f32 %v1947, %v2051
    %v2053 = vpop.f32.mrf.mxu0
    %2054 = vdwg.mxu0
    %v2055 = vld [vmem:[%s4] sm:$0x7]
    %v2057 = vlaneseq
    %v2058 = vshrl.u32 %v2057, 7
    %v2059 = vsub.s32 0, %v2058
    %v2060 = vrot.slane %v2055, %v2059
    %v2061 = vlaneseq
    %v2062 = vshrl.u32 %v2061, 7
    %v2063 = vsub.s32 1, %v2062
    %v2064 = vrot.slane %v2055, %v2063
    %v2065 = vlaneseq
    %v2066 = vshrl.u32 %v2065, 7
    %v2067 = vsub.s32 2, %v2066
    %v2068 = vrot.slane %v2055, %v2067
    %v2072 = vadd.f32 %v816, %v2060
    %v2073 = vadd.f32 %v1485, %v2064
    %v2074 = vadd.f32 %v2017, %v2068
    %v2075 = vadd.f32 %v821, %v2060
    %v2076 = vadd.f32 %v1490, %v2064
    %v2077 = vadd.f32 %v2022, %v2068
    %v2078 = vadd.f32 %v826, %v2060
    %v2079 = vadd.f32 %v1495, %v2064
    %v2080 = vadd.f32 %v2027, %v2068
    %v2081 = vadd.f32 %v831, %v2060
    %v2082 = vadd.f32 %v1500, %v2064
    %v2083 = vadd.f32 %v2032, %v2068
    %v2084 = vadd.f32 %v836, %v2060
    %v2085 = vadd.f32 %v1505, %v2064
    %v2086 = vadd.f32 %v2037, %v2068
    %v2087 = vadd.f32 %v841, %v2060
    %v2088 = vadd.f32 %v1510, %v2064
    %v2089 = vadd.f32 %v2042, %v2068
    %v2090 = vadd.f32 %v846, %v2060
    %v2091 = vadd.f32 %v1515, %v2064
    %v2092 = vadd.f32 %v2047, %v2068
    %v2093 = vadd.f32 %v851, %v2060
    %v2094 = vadd.f32 %v1520, %v2064
    %v2095 = vadd.f32 %v2052, %v2068
    %v2096 = vmax.f32 %v2072, 0.0
    %v2097 = vmax.f32 %v2073, 0.0
    %v2098 = vmax.f32 %v2074, 0.0
    %v2099 = vmax.f32 %v2075, 0.0
    %v2100 = vmax.f32 %v2076, 0.0
    %v2101 = vmax.f32 %v2077, 0.0
    %v2102 = vmax.f32 %v2078, 0.0
    %v2103 = vmax.f32 %v2079, 0.0
    %v2104 = vmax.f32 %v2080, 0.0
    %v2105 = vmax.f32 %v2081, 0.0
    %v2106 = vmax.f32 %v2082, 0.0
    %v2107 = vmax.f32 %v2083, 0.0
    %v2108 = vmax.f32 %v2084, 0.0
    %v2109 = vmax.f32 %v2085, 0.0
    %v2110 = vmax.f32 %v2086, 0.0
    %v2111 = vmax.f32 %v2087, 0.0
    %v2112 = vmax.f32 %v2088, 0.0
    %v2113 = vmax.f32 %v2089, 0.0
    %v2114 = vmax.f32 %v2090, 0.0
    %v2115 = vmax.f32 %v2091, 0.0
    %v2116 = vmax.f32 %v2092, 0.0
    %v2117 = vmax.f32 %v2093, 0.0
    %v2118 = vmax.f32 %v2094, 0.0
    %v2119 = vmax.f32 %v2095, 0.0
    %v2120 = vld [vmem:[#allocation10] sm:$0xff]
    %v2121 = vld [vmem:[#allocation10 + $0x8] sm:$0xff]
    %v2122 = vld [vmem:[#allocation10 + $0x10] sm:$0xff]
    %v2123 = vld [vmem:[#allocation10 + $0x18] sm:$0xff]
    %v2124 = vld [vmem:[#allocation10 + $0x20] sm:$0xff]
    %v2125 = vld [vmem:[#allocation10 + $0x28] sm:$0xff]
    %v2126 = vld [vmem:[#allocation10 + $0x30] sm:$0xff]
    %v2127 = vld [vmem:[#allocation10 + $0x38] sm:$0xff]
    %v2128 = vld [vmem:[#allocation10 + $0x40] sm:$0xff]
    %v2129 = vld [vmem:[#allocation10 + $0x48] sm:$0xff]
    %v2130 = vld [vmem:[#allocation10 + $0x50] sm:$0xff]
    %v2131 = vld [vmem:[#allocation10 + $0x58] sm:$0xff]
    %v2132 = vld [vmem:[#allocation10 + $0x60] sm:$0xff]
    %v2133 = vld [vmem:[#allocation10 + $0x68] sm:$0xff]
    %v2134 = vld [vmem:[#allocation10 + $0x70] sm:$0xff]
    %v2135 = vld [vmem:[#allocation10 + $0x78] sm:$0xff]
    %v2136 = vld [vmem:[#allocation10 + $0x80] sm:$0xff]
    %v2137 = vld [vmem:[#allocation10 + $0x88] sm:$0xff]
    %v2138 = vld [vmem:[#allocation10 + $0x90] sm:$0xff]
    %v2139 = vld [vmem:[#allocation10 + $0x98] sm:$0xff]
    %v2140 = vld [vmem:[#allocation10 + $0xa0] sm:$0xff]
    %v2141 = vld [vmem:[#allocation10 + $0xa8] sm:$0xff]
    %v2142 = vld [vmem:[#allocation10 + $0xb0] sm:$0xff]
    %v2143 = vld [vmem:[#allocation10 + $0xb8] sm:$0xff]
    %v2144 = vld [vmem:[#allocation10 + $0xc0] sm:$0xff]
    %v2145 = vld [vmem:[#allocation10 + $0xc8] sm:$0xff]
    %v2146 = vld [vmem:[#allocation10 + $0xd0] sm:$0xff]
    %v2147 = vld [vmem:[#allocation10 + $0xd8] sm:$0xff]
    %v2148 = vld [vmem:[#allocation10 + $0xe0] sm:$0xff]
    %v2149 = vld [vmem:[#allocation10 + $0xe8] sm:$0xff]
    %v2150 = vld [vmem:[#allocation10 + $0xf0] sm:$0xff]
    %v2151 = vld [vmem:[#allocation10 + $0xf8] sm:$0xff]
    %v2152 = vld [vmem:[#allocation10 + $0x100] sm:$0xff]
    %v2153 = vld [vmem:[#allocation10 + $0x108] sm:$0xff]
    %v2154 = vld [vmem:[#allocation10 + $0x110] sm:$0xff]
    %v2155 = vld [vmem:[#allocation10 + $0x118] sm:$0xff]
    %v2156 = vld [vmem:[#allocation10 + $0x120] sm:$0xff]
    %v2157 = vld [vmem:[#allocation10 + $0x128] sm:$0xff]
    %v2158 = vld [vmem:[#allocation10 + $0x130] sm:$0xff]
    %v2159 = vld [vmem:[#allocation10 + $0x138] sm:$0xff]
    %v2160 = vld [vmem:[#allocation10 + $0x140] sm:$0xff]
    %v2161 = vld [vmem:[#allocation10 + $0x148] sm:$0xff]
    %v2162 = vld [vmem:[#allocation10 + $0x150] sm:$0xff]
    %v2163 = vld [vmem:[#allocation10 + $0x158] sm:$0xff]
    %v2164 = vld [vmem:[#allocation10 + $0x160] sm:$0xff]
    %v2165 = vld [vmem:[#allocation10 + $0x168] sm:$0xff]
    %v2166 = vld [vmem:[#allocation10 + $0x170] sm:$0xff]
    %v2167 = vld [vmem:[#allocation10 + $0x178] sm:$0xff]
    %v2168 = vld [vmem:[#allocation10 + $0x180] sm:$0xff]
    %v2169 = vld [vmem:[#allocation10 + $0x188] sm:$0xff]
    %v2170 = vld [vmem:[#allocation10 + $0x190] sm:$0xff]
    %v2171 = vld [vmem:[#allocation10 + $0x198] sm:$0xff]
    %v2172 = vld [vmem:[#allocation10 + $0x1a0] sm:$0xff]
    %v2173 = vld [vmem:[#allocation10 + $0x1a8] sm:$0xff]
    %v2174 = vld [vmem:[#allocation10 + $0x1b0] sm:$0xff]
    %v2175 = vld [vmem:[#allocation10 + $0x1b8] sm:$0xff]
    %v2176 = vld [vmem:[#allocation10 + $0x1c0] sm:$0xff]
    %v2177 = vld [vmem:[#allocation10 + $0x1c8] sm:$0xff]
    %v2178 = vld [vmem:[#allocation10 + $0x1d0] sm:$0xff]
    %v2179 = vld [vmem:[#allocation10 + $0x1d8] sm:$0xff]
    %v2180 = vld [vmem:[#allocation10 + $0x1e0] sm:$0xff]
    %v2181 = vld [vmem:[#allocation10 + $0x1e8] sm:$0xff]
    %v2182 = vld [vmem:[#allocation10 + $0x1f0] sm:$0xff]
    %v2183 = vld [vmem:[#allocation10 + $0x1f8] sm:$0xff]
    %v2184 = vld [vmem:[#allocation10 + $0x200] sm:$0xff]
    %v2185 = vld [vmem:[#allocation10 + $0x208] sm:$0xff]
    %v2186 = vld [vmem:[#allocation10 + $0x210] sm:$0xff]
    %v2187 = vld [vmem:[#allocation10 + $0x218] sm:$0xff]
    %v2188 = vld [vmem:[#allocation10 + $0x220] sm:$0xff]
    %v2189 = vld [vmem:[#allocation10 + $0x228] sm:$0xff]
    %v2190 = vld [vmem:[#allocation10 + $0x230] sm:$0xff]
    %v2191 = vld [vmem:[#allocation10 + $0x238] sm:$0xff]
    %v2192 = vld [vmem:[#allocation10 + $0x240] sm:$0xff]
    %v2193 = vld [vmem:[#allocation10 + $0x248] sm:$0xff]
    %v2194 = vld [vmem:[#allocation10 + $0x250] sm:$0xff]
    %v2195 = vld [vmem:[#allocation10 + $0x258] sm:$0xff]
    %v2196 = vld [vmem:[#allocation10 + $0x260] sm:$0xff]
    %v2197 = vld [vmem:[#allocation10 + $0x268] sm:$0xff]
    %v2198 = vld [vmem:[#allocation10 + $0x270] sm:$0xff]
    %v2199 = vld [vmem:[#allocation10 + $0x278] sm:$0xff]
    %v2200 = vld [vmem:[#allocation10 + $0x280] sm:$0xff]
    %v2201 = vld [vmem:[#allocation10 + $0x288] sm:$0xff]
    %v2202 = vld [vmem:[#allocation10 + $0x290] sm:$0xff]
    %v2203 = vld [vmem:[#allocation10 + $0x298] sm:$0xff]
    %v2204 = vld [vmem:[#allocation10 + $0x2a0] sm:$0xff]
    %v2205 = vld [vmem:[#allocation10 + $0x2a8] sm:$0xff]
    %v2206 = vld [vmem:[#allocation10 + $0x2b0] sm:$0xff]
    %v2207 = vld [vmem:[#allocation10 + $0x2b8] sm:$0xff]
    %v2208 = vld [vmem:[#allocation10 + $0x2c0] sm:$0xff]
    %v2209 = vld [vmem:[#allocation10 + $0x2c8] sm:$0xff]
    %v2210 = vld [vmem:[#allocation10 + $0x2d0] sm:$0xff]
    %v2211 = vld [vmem:[#allocation10 + $0x2d8] sm:$0xff]
    %v2212 = vld [vmem:[#allocation10 + $0x2e0] sm:$0xff]
    %v2213 = vld [vmem:[#allocation10 + $0x2e8] sm:$0xff]
    %v2214 = vld [vmem:[#allocation10 + $0x2f0] sm:$0xff]
    %v2215 = vld [vmem:[#allocation10 + $0x2f8] sm:$0xff]
    %v2216 = vld [vmem:[%s6] sm:$0x3]
    %v2218 = vlaneseq
    %v2219 = vshrl.u32 %v2218, 7
    %v2220 = vsub.s32 0, %v2219
    %v2221 = vrot.slane %v2216, %v2220
    %v2222 = vlaneseq
    %v2223 = vshrl.u32 %v2222, 7
    %v2224 = vsub.s32 1, %v2223
    %v2225 = vrot.slane %v2216, %v2224
    %2228 = vmatprep.subr.mxu0 %v2151
    %2229 = vmatpush1.msra.mxu0 %v2150
    %2230 = vmatprep.subr.mxu0 %v2149
    %2231 = vmatpush1.msra.mxu0 %v2148
    %2232 = vmatprep.subr.mxu0 %v2147
    %2233 = vmatpush1.msra.mxu0 %v2146
    %2234 = vmatprep.subr.mxu0 %v2145
    %2235 = vmatpush1.msra.mxu0 %v2144
    %2236 = vmatprep.subr.mxu0 %v2143
    %2237 = vmatpush1.msra.mxu0 %v2142
    %2238 = vmatprep.subr.mxu0 %v2141
    %2239 = vmatpush1.msra.mxu0 %v2140
    %2240 = vmatprep.subr.mxu0 %v2139
    %2241 = vmatpush1.msra.mxu0 %v2138
    %2242 = vmatprep.subr.mxu0 %v2137
    %2243 = vmatpush1.msra.mxu0 %v2136
    %2244 = vmatprep.subr.mxu0 %v2135
    %2245 = vmatpush1.msra.mxu0 %v2134
    %2246 = vmatprep.subr.mxu0 %v2133
    %2247 = vmatpush1.msra.mxu0 %v2132
    %2248 = vmatprep.subr.mxu0 %v2131
    %2249 = vmatpush1.msra.mxu0 %v2130
    %2250 = vmatprep.subr.mxu0 %v2129
    %2251 = vmatpush1.msra.mxu0 %v2128
    %2252 = vmatprep.subr.mxu0 %v2127
    %2253 = vmatpush1.msra.mxu0 %v2126
    %2254 = vmatprep.subr.mxu0 %v2125
    %2255 = vmatpush1.msra.mxu0 %v2124
    %2256 = vmatprep.subr.mxu0 %v2123
    %2257 = vmatpush1.msra.mxu0 %v2122
    %2258 = vmatprep.subr.mxu0 %v2121
    %2259 = vmatpush1.msra.mxu0 %v2120
    %2260 = vmatprep.subr.mxu0 %v2183
    %2261 = vmatpush2.msra.mxu0 %v2182
    %2262 = vmatprep.subr.mxu0 %v2181
    %2263 = vmatpush2.msra.mxu0 %v2180
    %2264 = vmatprep.subr.mxu0 %v2179
    %2265 = vmatpush2.msra.mxu0 %v2178
    %2266 = vmatprep.subr.mxu0 %v2177
    %2267 = vmatpush2.msra.mxu0 %v2176
    %2268 = vmatprep.subr.mxu0 %v2175
    %2269 = vmatpush2.msra.mxu0 %v2174
    %2270 = vmatprep.subr.mxu0 %v2173
    %2271 = vmatpush2.msra.mxu0 %v2172
    %2272 = vmatprep.subr.mxu0 %v2171
    %2273 = vmatpush2.msra.mxu0 %v2170
    %2274 = vmatprep.subr.mxu0 %v2169
    %2275 = vmatpush2.msra.mxu0 %v2168
    %2276 = vmatprep.subr.mxu0 %v2167
    %2277 = vmatpush2.msra.mxu0 %v2166
    %2278 = vmatprep.subr.mxu0 %v2165
    %2279 = vmatpush2.msra.mxu0 %v2164
    %2280 = vmatprep.subr.mxu0 %v2163
    %2281 = vmatpush2.msra.mxu0 %v2162
    %2282 = vmatprep.subr.mxu0 %v2161
    %2283 = vmatpush2.msra.mxu0 %v2160
    %2284 = vmatprep.subr.mxu0 %v2159
    %2285 = vmatpush2.msra.mxu0 %v2158
    %2286 = vmatprep.subr.mxu0 %v2157
    %2287 = vmatpush2.msra.mxu0 %v2156
    %2288 = vmatprep.subr.mxu0 %v2155
    %2289 = vmatpush2.msra.mxu0 %v2154
    %2290 = vmatprep.subr.mxu0 %v2153
    %2291 = vmatpush2.msra.mxu0 %v2152
    %2292 = vmatprep.mubr.f32.mxu0 %v2097
    %2293 = vmatmul.mubr.f32.gmra.mxu0 %v2096
    %v2294 = vpop.f32.mrf.mxu0
    %v2295 = vadd.f32 %v2221, %v2294
    %v2296 = vpop.f32.mrf.mxu0
    %v2297 = vadd.f32 %v2225, %v2296
    %2298 = vmatprep.mubr.f32.mxu0 %v2100
    %2299 = vmatmul.mubr.f32.gmra.mxu0 %v2099
    %v2300 = vpop.f32.mrf.mxu0
    %v2301 = vadd.f32 %v2221, %v2300
    %v2302 = vpop.f32.mrf.mxu0
    %v2303 = vadd.f32 %v2225, %v2302
    %2304 = vmatprep.mubr.f32.mxu0 %v2103
    %2305 = vmatmul.mubr.f32.gmra.mxu0 %v2102
    %v2306 = vpop.f32.mrf.mxu0
    %v2307 = vadd.f32 %v2221, %v2306
    %v2308 = vpop.f32.mrf.mxu0
    %v2309 = vadd.f32 %v2225, %v2308
    %2310 = vmatprep.mubr.f32.mxu0 %v2106
    %2311 = vmatmul.mubr.f32.gmra.mxu0 %v2105
    %v2312 = vpop.f32.mrf.mxu0
    %v2313 = vadd.f32 %v2221, %v2312
    %v2314 = vpop.f32.mrf.mxu0
    %v2315 = vadd.f32 %v2225, %v2314
    %2316 = vmatprep.mubr.f32.mxu0 %v2109
    %2317 = vmatmul.mubr.f32.gmra.mxu0 %v2108
    %v2318 = vpop.f32.mrf.mxu0
    %v2319 = vadd.f32 %v2221, %v2318
    %v2320 = vpop.f32.mrf.mxu0
    %v2321 = vadd.f32 %v2225, %v2320
    %2322 = vmatprep.mubr.f32.mxu0 %v2112
    %2323 = vmatmul.mubr.f32.gmra.mxu0 %v2111
    %v2324 = vpop.f32.mrf.mxu0
    %v2325 = vadd.f32 %v2221, %v2324
    %v2326 = vpop.f32.mrf.mxu0
    %v2327 = vadd.f32 %v2225, %v2326
    %2328 = vmatprep.mubr.f32.mxu0 %v2115
    %2329 = vmatmul.mubr.f32.gmra.mxu0 %v2114
    %v2330 = vpop.f32.mrf.mxu0
    %v2331 = vadd.f32 %v2221, %v2330
    %v2332 = vpop.f32.mrf.mxu0
    %v2333 = vadd.f32 %v2225, %v2332
    %2334 = vmatprep.mubr.f32.mxu0 %v2118
    %2335 = vmatmul.mubr.f32.gmra.mxu0 %v2117
    %v2336 = vpop.f32.mrf.mxu0
    %v2337 = vadd.f32 %v2221, %v2336
    %v2338 = vpop.f32.mrf.mxu0
    %v2339 = vadd.f32 %v2225, %v2338
    %2340 = vdwg.mxu0
    %2341 = vmatprep.subr.mxu0 %v2215
    %2342 = vmatpush1.msra.mxu0 %v2214
    %2343 = vmatprep.subr.mxu0 %v2213
    %2344 = vmatpush1.msra.mxu0 %v2212
    %2345 = vmatprep.subr.mxu0 %v2211
    %2346 = vmatpush1.msra.mxu0 %v2210
    %2347 = vmatprep.subr.mxu0 %v2209
    %2348 = vmatpush1.msra.mxu0 %v2208
    %2349 = vmatprep.subr.mxu0 %v2207
    %2350 = vmatpush1.msra.mxu0 %v2206
    %2351 = vmatprep.subr.mxu0 %v2205
    %2352 = vmatpush1.msra.mxu0 %v2204
    %2353 = vmatprep.subr.mxu0 %v2203
    %2354 = vmatpush1.msra.mxu0 %v2202
    %2355 = vmatprep.subr.mxu0 %v2201
    %2356 = vmatpush1.msra.mxu0 %v2200
    %2357 = vmatprep.subr.mxu0 %v2199
    %2358 = vmatpush1.msra.mxu0 %v2198
    %2359 = vmatprep.subr.mxu0 %v2197
    %2360 = vmatpush1.msra.mxu0 %v2196
    %2361 = vmatprep.subr.mxu0 %v2195
    %2362 = vmatpush1.msra.mxu0 %v2194
    %2363 = vmatprep.subr.mxu0 %v2193
    %2364 = vmatpush1.msra.mxu0 %v2192
    %2365 = vmatprep.subr.mxu0 %v2191
    %2366 = vmatpush1.msra.mxu0 %v2190
    %2367 = vmatprep.subr.mxu0 %v2189
    %2368 = vmatpush1.msra.mxu0 %v2188
    %2369 = vmatprep.subr.mxu0 %v2187
    %2370 = vmatpush1.msra.mxu0 %v2186
    %2371 = vmatprep.subr.mxu0 %v2185
    %2372 = vmatpush1.msra.mxu0 %v2184
    %2373 = vmatprep.subr.mxu0 0.0
    %2374 = vmatpush2.msra.mxu0 0.0
    %2375 = vmatprep.subr.mxu0 0.0
    %2376 = vmatpush2.msra.mxu0 0.0
    %2377 = vmatprep.subr.mxu0 0.0
    %2378 = vmatpush2.msra.mxu0 0.0
    %2379 = vmatprep.subr.mxu0 0.0
    %2380 = vmatpush2.msra.mxu0 0.0
    %2381 = vmatprep.subr.mxu0 0.0
    %2382 = vmatpush2.msra.mxu0 0.0
    %2383 = vmatprep.subr.mxu0 0.0
    %2384 = vmatpush2.msra.mxu0 0.0
    %2385 = vmatprep.subr.mxu0 0.0
    %2386 = vmatpush2.msra.mxu0 0.0
    %2387 = vmatprep.subr.mxu0 0.0
    %2388 = vmatpush2.msra.mxu0 0.0
    %2389 = vmatprep.subr.mxu0 0.0
    %2390 = vmatpush2.msra.mxu0 0.0
    %2391 = vmatprep.subr.mxu0 0.0
    %2392 = vmatpush2.msra.mxu0 0.0
    %2393 = vmatprep.subr.mxu0 0.0
    %2394 = vmatpush2.msra.mxu0 0.0
    %2395 = vmatprep.subr.mxu0 0.0
    %2396 = vmatpush2.msra.mxu0 0.0
    %2397 = vmatprep.subr.mxu0 0.0
    %2398 = vmatpush2.msra.mxu0 0.0
    %2399 = vmatprep.subr.mxu0 0.0
    %2400 = vmatpush2.msra.mxu0 0.0
    %2401 = vmatprep.subr.mxu0 0.0
    %2402 = vmatpush2.msra.mxu0 0.0
    %2403 = vmatprep.subr.mxu0 0.0
    %2404 = vmatpush2.msra.mxu0 0.0
    %2405 = vmatprep.mubr.f32.mxu0 0.0
    %2406 = vmatmul.mubr.f32.gmra.mxu0 %v2098
    %v2407 = vpop.f32.mrf.mxu0
    %v2408 = vadd.f32 %v2295, %v2407
    %v2409 = vpop.f32.mrf.mxu0
    %v2410 = vadd.f32 %v2297, %v2409
    %2411 = vmatprep.mubr.f32.mxu0 0.0
    %2412 = vmatmul.mubr.f32.gmra.mxu0 %v2101
    %v2413 = vpop.f32.mrf.mxu0
    %v2414 = vadd.f32 %v2301, %v2413
    %v2415 = vpop.f32.mrf.mxu0
    %v2416 = vadd.f32 %v2303, %v2415
    %2417 = vmatprep.mubr.f32.mxu0 0.0
    %2418 = vmatmul.mubr.f32.gmra.mxu0 %v2104
    %v2419 = vpop.f32.mrf.mxu0
    %v2420 = vadd.f32 %v2307, %v2419
    %v2421 = vpop.f32.mrf.mxu0
    %v2422 = vadd.f32 %v2309, %v2421
    %2423 = vmatprep.mubr.f32.mxu0 0.0
    %2424 = vmatmul.mubr.f32.gmra.mxu0 %v2107
    %v2425 = vpop.f32.mrf.mxu0
    %v2426 = vadd.f32 %v2313, %v2425
    %v2427 = vpop.f32.mrf.mxu0
    %v2428 = vadd.f32 %v2315, %v2427
    %2429 = vmatprep.mubr.f32.mxu0 0.0
    %2430 = vmatmul.mubr.f32.gmra.mxu0 %v2110
    %v2431 = vpop.f32.mrf.mxu0
    %v2432 = vadd.f32 %v2319, %v2431
    %v2433 = vpop.f32.mrf.mxu0
    %v2434 = vadd.f32 %v2321, %v2433
    %2435 = vmatprep.mubr.f32.mxu0 0.0
    %2436 = vmatmul.mubr.f32.gmra.mxu0 %v2113
    %v2437 = vpop.f32.mrf.mxu0
    %v2438 = vadd.f32 %v2325, %v2437
    %v2439 = vpop.f32.mrf.mxu0
    %v2440 = vadd.f32 %v2327, %v2439
    %2441 = vmatprep.mubr.f32.mxu0 0.0
    %2442 = vmatmul.mubr.f32.gmra.mxu0 %v2116
    %v2443 = vpop.f32.mrf.mxu0
    %v2444 = vadd.f32 %v2331, %v2443
    %v2445 = vpop.f32.mrf.mxu0
    %v2446 = vadd.f32 %v2333, %v2445
    %2447 = vmatprep.mubr.f32.mxu0 0.0
    %2448 = vmatmul.mubr.f32.gmra.mxu0 %v2119
    %v2449 = vpop.f32.mrf.mxu0
    %v2450 = vadd.f32 %v2337, %v2449
    %v2451 = vpop.f32.mrf.mxu0
    %v2452 = vadd.f32 %v2339, %v2451
    %2453 = vdwg.mxu0
    %v2454 = vmax.f32 %v2408, 0.0
    %v2455 = vmax.f32 %v2410, 0.0
    %v2456 = vmax.f32 %v2414, 0.0
    %v2457 = vmax.f32 %v2416, 0.0
    %v2458 = vmax.f32 %v2420, 0.0
    %v2459 = vmax.f32 %v2422, 0.0
    %v2460 = vmax.f32 %v2426, 0.0
    %v2461 = vmax.f32 %v2428, 0.0
    %v2462 = vmax.f32 %v2432, 0.0
    %v2463 = vmax.f32 %v2434, 0.0
    %v2464 = vmax.f32 %v2438, 0.0
    %v2465 = vmax.f32 %v2440, 0.0
    %v2466 = vmax.f32 %v2444, 0.0
    %v2467 = vmax.f32 %v2446, 0.0
    %v2468 = vmax.f32 %v2450, 0.0
    %v2469 = vmax.f32 %v2452, 0.0
    %v2470 = vld [vmem:[#allocation11] sm:$0xff]
    %v2471 = vld [vmem:[#allocation11 + $0x8] sm:$0xff]
    %v2472 = vld [vmem:[#allocation11 + $0x10] sm:$0xff]
    %v2473 = vld [vmem:[#allocation11 + $0x18] sm:$0xff]
    %v2474 = vld [vmem:[#allocation11 + $0x20] sm:$0xff]
    %v2475 = vld [vmem:[#allocation11 + $0x28] sm:$0xff]
    %v2476 = vld [vmem:[#allocation11 + $0x30] sm:$0xff]
    %v2477 = vld [vmem:[#allocation11 + $0x38] sm:$0xff]
    %v2478 = vld [vmem:[#allocation11 + $0x40] sm:$0xff]
    %v2479 = vld [vmem:[#allocation11 + $0x48] sm:$0xff]
    %v2480 = vld [vmem:[#allocation11 + $0x50] sm:$0xff]
    %v2481 = vld [vmem:[#allocation11 + $0x58] sm:$0xff]
    %v2482 = vld [vmem:[#allocation11 + $0x60] sm:$0xff]
    %v2483 = vld [vmem:[#allocation11 + $0x68] sm:$0xff]
    %v2484 = vld [vmem:[#allocation11 + $0x70] sm:$0xff]
    %v2485 = vld [vmem:[#allocation11 + $0x78] sm:$0xff]
    %v2486 = vld [vmem:[#allocation11 + $0x80] sm:$0xff]
    %v2487 = vld [vmem:[#allocation11 + $0x88] sm:$0xff]
    %v2488 = vld [vmem:[#allocation11 + $0x90] sm:$0xff]
    %v2489 = vld [vmem:[#allocation11 + $0x98] sm:$0xff]
    %v2490 = vld [vmem:[#allocation11 + $0xa0] sm:$0xff]
    %v2491 = vld [vmem:[#allocation11 + $0xa8] sm:$0xff]
    %v2492 = vld [vmem:[#allocation11 + $0xb0] sm:$0xff]
    %v2493 = vld [vmem:[#allocation11 + $0xb8] sm:$0xff]
    %v2494 = vld [vmem:[#allocation11 + $0xc0] sm:$0xff]
    %v2495 = vld [vmem:[#allocation11 + $0xc8] sm:$0xff]
    %v2496 = vld [vmem:[#allocation11 + $0xd0] sm:$0xff]
    %v2497 = vld [vmem:[#allocation11 + $0xd8] sm:$0xff]
    %v2498 = vld [vmem:[#allocation11 + $0xe0] sm:$0xff]
    %v2499 = vld [vmem:[#allocation11 + $0xe8] sm:$0xff]
    %v2500 = vld [vmem:[#allocation11 + $0xf0] sm:$0xff]
    %v2501 = vld [vmem:[#allocation11 + $0xf8] sm:$0xff]
    %v2502 = vld [vmem:[%s8] sm:$0x1]
    %v2504 = vlaneseq
    %v2505 = vshrl.u32 %v2504, 7
    %v2506 = vsub.s32 0, %v2505
    %v2507 = vrot.slane %v2502, %v2506
    %2509 = vmatprep.subr.mxu0 0.0
    %2510 = vmatpush1.msra.mxu0 %v2485
    %2511 = vmatprep.subr.mxu0 0.0
    %2512 = vmatpush1.msra.mxu0 %v2484
    %2513 = vmatprep.subr.mxu0 0.0
    %2514 = vmatpush1.msra.mxu0 %v2483
    %2515 = vmatprep.subr.mxu0 0.0
    %2516 = vmatpush1.msra.mxu0 %v2482
    %2517 = vmatprep.subr.mxu0 0.0
    %2518 = vmatpush1.msra.mxu0 %v2481
    %2519 = vmatprep.subr.mxu0 0.0
    %2520 = vmatpush1.msra.mxu0 %v2480
    %2521 = vmatprep.subr.mxu0 0.0
    %2522 = vmatpush1.msra.mxu0 %v2479
    %2523 = vmatprep.subr.mxu0 0.0
    %2524 = vmatpush1.msra.mxu0 %v2478
    %2525 = vmatprep.subr.mxu0 0.0
    %2526 = vmatpush1.msra.mxu0 %v2477
    %2527 = vmatprep.subr.mxu0 0.0
    %2528 = vmatpush1.msra.mxu0 %v2476
    %2529 = vmatprep.subr.mxu0 0.0
    %2530 = vmatpush1.msra.mxu0 %v2475
    %2531 = vmatprep.subr.mxu0 0.0
    %2532 = vmatpush1.msra.mxu0 %v2474
    %2533 = vmatprep.subr.mxu0 0.0
    %2534 = vmatpush1.msra.mxu0 %v2473
    %2535 = vmatprep.subr.mxu0 0.0
    %2536 = vmatpush1.msra.mxu0 %v2472
    %2537 = vmatprep.subr.mxu0 0.0
    %2538 = vmatpush1.msra.mxu0 %v2471
    %2539 = vmatprep.subr.mxu0 0.0
    %2540 = vmatpush1.msra.mxu0 %v2470
    %2541 = vmatprep.subr.mxu0 0.0
    %2542 = vmatpush2.msra.mxu0 %v2501
    %2543 = vmatprep.subr.mxu0 0.0
    %2544 = vmatpush2.msra.mxu0 %v2500
    %2545 = vmatprep.subr.mxu0 0.0
    %2546 = vmatpush2.msra.mxu0 %v2499
    %2547 = vmatprep.subr.mxu0 0.0
    %2548 = vmatpush2.msra.mxu0 %v2498
    %2549 = vmatprep.subr.mxu0 0.0
    %2550 = vmatpush2.msra.mxu0 %v2497
    %2551 = vmatprep.subr.mxu0 0.0
    %2552 = vmatpush2.msra.mxu0 %v2496
    %2553 = vmatprep.subr.mxu0 0.0
    %2554 = vmatpush2.msra.mxu0 %v2495
    %2555 = vmatprep.subr.mxu0 0.0
    %2556 = vmatpush2.msra.mxu0 %v2494
    %2557 = vmatprep.subr.mxu0 0.0
    %2558 = vmatpush2.msra.mxu0 %v2493
    %2559 = vmatprep.subr.mxu0 0.0
    %2560 = vmatpush2.msra.mxu0 %v2492
    %2561 = vmatprep.subr.mxu0 0.0
    %2562 = vmatpush2.msra.mxu0 %v2491
    %2563 = vmatprep.subr.mxu0 0.0
    %2564 = vmatpush2.msra.mxu0 %v2490
    %2565 = vmatprep.subr.mxu0 0.0
    %2566 = vmatpush2.msra.mxu0 %v2489
    %2567 = vmatprep.subr.mxu0 0.0
    %2568 = vmatpush2.msra.mxu0 %v2488
    %2569 = vmatprep.subr.mxu0 0.0
    %2570 = vmatpush2.msra.mxu0 %v2487
    %2571 = vmatprep.subr.mxu0 0.0
    %2572 = vmatpush2.msra.mxu0 %v2486
    %2573 = vmatprep.mubr.f32.mxu0 %v2455
    %2574 = vmatmul.mubr.f32.gmra.mxu0 %v2454
    %v2575 = vpop.f32.mrf.mxu0
    %v2576 = vadd.f32 %v2507, %v2575
    %v2577 = vpop.f32.mrf.mxu0
    %2578 = vmatprep.mubr.f32.mxu0 %v2457
    %2579 = vmatmul.mubr.f32.gmra.mxu0 %v2456
    %v2580 = vpop.f32.mrf.mxu0
    %v2581 = vadd.f32 %v2507, %v2580
    %v2582 = vpop.f32.mrf.mxu0
    %2583 = vmatprep.mubr.f32.mxu0 %v2459
    %2584 = vmatmul.mubr.f32.gmra.mxu0 %v2458
    %v2585 = vpop.f32.mrf.mxu0
    %v2586 = vadd.f32 %v2507, %v2585
    %v2587 = vpop.f32.mrf.mxu0
    %2588 = vmatprep.mubr.f32.mxu0 %v2461
    %2589 = vmatmul.mubr.f32.gmra.mxu0 %v2460
    %v2590 = vpop.f32.mrf.mxu0
    %v2591 = vadd.f32 %v2507, %v2590
    %v2592 = vpop.f32.mrf.mxu0
    %2593 = vmatprep.mubr.f32.mxu0 %v2463
    %2594 = vmatmul.mubr.f32.gmra.mxu0 %v2462
    %v2595 = vpop.f32.mrf.mxu0
    %v2596 = vadd.f32 %v2507, %v2595
    %v2597 = vpop.f32.mrf.mxu0
    %2598 = vmatprep.mubr.f32.mxu0 %v2465
    %2599 = vmatmul.mubr.f32.gmra.mxu0 %v2464
    %v2600 = vpop.f32.mrf.mxu0
    %v2601 = vadd.f32 %v2507, %v2600
    %v2602 = vpop.f32.mrf.mxu0
    %2603 = vmatprep.mubr.f32.mxu0 %v2467
    %2604 = vmatmul.mubr.f32.gmra.mxu0 %v2466
    %v2605 = vpop.f32.mrf.mxu0
    %v2606 = vadd.f32 %v2507, %v2605
    %v2607 = vpop.f32.mrf.mxu0
    %2608 = vmatprep.mubr.f32.mxu0 %v2469
    %2609 = vmatmul.mubr.f32.gmra.mxu0 %v2468
    %v2610 = vpop.f32.mrf.mxu0
    %v2611 = vadd.f32 %v2507, %v2610
    %v2612 = vpop.f32.mrf.mxu0
    %2613 = vdwg.mxu0
    %v2614 = vmax.f32 %v2576, 0.0
    %v2615 = vmax.f32 %v2581, 0.0
    %v2616 = vmax.f32 %v2586, 0.0
    %v2617 = vmax.f32 %v2591, 0.0
    %v2618 = vmax.f32 %v2596, 0.0
    %v2619 = vmax.f32 %v2601, 0.0
    %v2620 = vmax.f32 %v2606, 0.0
    %v2621 = vmax.f32 %v2611, 0.0
    %v2622 = vld [vmem:[#allocation13] sm:$0xff]
    %v2623 = vld [vmem:[#allocation13 + $0x8] sm:$0xff]
    %v2624 = vld [vmem:[#allocation13 + $0x10] sm:$0xff]
    %v2625 = vld [vmem:[#allocation13 + $0x18] sm:$0xff]
    %v2626 = vld [vmem:[#allocation13 + $0x20] sm:$0xff]
    %v2627 = vld [vmem:[#allocation13 + $0x28] sm:$0xff]
    %v2628 = vld [vmem:[#allocation13 + $0x30] sm:$0xff]
    %v2629 = vld [vmem:[#allocation13 + $0x38] sm:$0xff]
    %v2630 = vld [vmem:[#allocation13 + $0x40] sm:$0xff]
    %v2631 = vld [vmem:[#allocation13 + $0x48] sm:$0xff]
    %v2632 = vld [vmem:[#allocation13 + $0x50] sm:$0xff]
    %v2633 = vld [vmem:[#allocation13 + $0x58] sm:$0xff]
    %v2634 = vld [vmem:[#allocation13 + $0x60] sm:$0xff]
    %v2635 = vld [vmem:[#allocation13 + $0x68] sm:$0xff]
    %v2636 = vld [vmem:[#allocation13 + $0x70] sm:$0xff]
    %v2637 = vld [vmem:[#allocation13 + $0x78] sm:$0xff]
    %v2638 = vld [vmem:[%s10] sm:$0x1]
    %v2640 = vlaneseq
    %v2641 = vshrl.u32 %v2640, 7
    %v2642 = vsub.s32 0, %v2641
    %v2643 = vrot.slane %v2638, %v2642
    %2645 = vmatprep.subr.mxu0 0.0
    %2646 = vmatpush1.msra.mxu0 %v2637
    %2647 = vmatprep.subr.mxu0 0.0
    %2648 = vmatpush1.msra.mxu0 %v2636
    %2649 = vmatprep.subr.mxu0 0.0
    %2650 = vmatpush1.msra.mxu0 %v2635
    %2651 = vmatprep.subr.mxu0 0.0
    %2652 = vmatpush1.msra.mxu0 %v2634
    %2653 = vmatprep.subr.mxu0 0.0
    %2654 = vmatpush1.msra.mxu0 %v2633
    %2655 = vmatprep.subr.mxu0 0.0
    %2656 = vmatpush1.msra.mxu0 %v2632
    %2657 = vmatprep.subr.mxu0 0.0
    %2658 = vmatpush1.msra.mxu0 %v2631
    %2659 = vmatprep.subr.mxu0 0.0
    %2660 = vmatpush1.msra.mxu0 %v2630
    %2661 = vmatprep.subr.mxu0 0.0
    %2662 = vmatpush1.msra.mxu0 %v2629
    %2663 = vmatprep.subr.mxu0 0.0
    %2664 = vmatpush1.msra.mxu0 %v2628
    %2665 = vmatprep.subr.mxu0 0.0
    %2666 = vmatpush1.msra.mxu0 %v2627
    %2667 = vmatprep.subr.mxu0 0.0
    %2668 = vmatpush1.msra.mxu0 %v2626
    %2669 = vmatprep.subr.mxu0 0.0
    %2670 = vmatpush1.msra.mxu0 %v2625
    %2671 = vmatprep.subr.mxu0 0.0
    %2672 = vmatpush1.msra.mxu0 %v2624
    %2673 = vmatprep.subr.mxu0 0.0
    %2674 = vmatpush1.msra.mxu0 %v2623
    %2675 = vmatprep.subr.mxu0 0.0
    %2676 = vmatpush1.msra.mxu0 %v2622
    %2677 = vmatprep.subr.mxu0 0.0
    %2678 = vmatpush2.msra.mxu0 0.0
    %2679 = vmatprep.subr.mxu0 0.0
    %2680 = vmatpush2.msra.mxu0 0.0
    %2681 = vmatprep.subr.mxu0 0.0
    %2682 = vmatpush2.msra.mxu0 0.0
    %2683 = vmatprep.subr.mxu0 0.0
    %2684 = vmatpush2.msra.mxu0 0.0
    %2685 = vmatprep.subr.mxu0 0.0
    %2686 = vmatpush2.msra.mxu0 0.0
    %2687 = vmatprep.subr.mxu0 0.0
    %2688 = vmatpush2.msra.mxu0 0.0
    %2689 = vmatprep.subr.mxu0 0.0
    %2690 = vmatpush2.msra.mxu0 0.0
    %2691 = vmatprep.subr.mxu0 0.0
    %2692 = vmatpush2.msra.mxu0 0.0
    %2693 = vmatprep.subr.mxu0 0.0
    %2694 = vmatpush2.msra.mxu0 0.0
    %2695 = vmatprep.subr.mxu0 0.0
    %2696 = vmatpush2.msra.mxu0 0.0
    %2697 = vmatprep.subr.mxu0 0.0
    %2698 = vmatpush2.msra.mxu0 0.0
    %2699 = vmatprep.subr.mxu0 0.0
    %2700 = vmatpush2.msra.mxu0 0.0
    %2701 = vmatprep.subr.mxu0 0.0
    %2702 = vmatpush2.msra.mxu0 0.0
    %2703 = vmatprep.subr.mxu0 0.0
    %2704 = vmatpush2.msra.mxu0 0.0
    %2705 = vmatprep.subr.mxu0 0.0
    %2706 = vmatpush2.msra.mxu0 0.0
    %2707 = vmatprep.subr.mxu0 0.0
    %2708 = vmatpush2.msra.mxu0 0.0
    %2709 = vmatprep.mubr.f32.mxu0 0.0
    %2710 = vmatmul.mubr.f32.gmra.mxu0 %v2614
    %v2711 = vpop.f32.mrf.mxu0
    %v2712 = vadd.f32 %v2643, %v2711
    %v2713 = vpop.f32.mrf.mxu0
    %2714 = vmatprep.mubr.f32.mxu0 0.0
    %2715 = vmatmul.mubr.f32.gmra.mxu0 %v2615
    %v2716 = vpop.f32.mrf.mxu0
    %v2717 = vadd.f32 %v2643, %v2716
    %v2718 = vpop.f32.mrf.mxu0
    %2719 = vmatprep.mubr.f32.mxu0 0.0
    %2720 = vmatmul.mubr.f32.gmra.mxu0 %v2616
    %v2721 = vpop.f32.mrf.mxu0
    %v2722 = vadd.f32 %v2643, %v2721
    %v2723 = vpop.f32.mrf.mxu0
    %2724 = vmatprep.mubr.f32.mxu0 0.0
    %2725 = vmatmul.mubr.f32.gmra.mxu0 %v2617
    %v2726 = vpop.f32.mrf.mxu0
    %v2727 = vadd.f32 %v2643, %v2726
    %v2728 = vpop.f32.mrf.mxu0
    %2729 = vmatprep.mubr.f32.mxu0 0.0
    %2730 = vmatmul.mubr.f32.gmra.mxu0 %v2618
    %v2731 = vpop.f32.mrf.mxu0
    %v2732 = vadd.f32 %v2643, %v2731
    %v2733 = vpop.f32.mrf.mxu0
    %2734 = vmatprep.mubr.f32.mxu0 0.0
    %2735 = vmatmul.mubr.f32.gmra.mxu0 %v2619
    %v2736 = vpop.f32.mrf.mxu0
    %v2737 = vadd.f32 %v2643, %v2736
    %v2738 = vpop.f32.mrf.mxu0
    %2739 = vmatprep.mubr.f32.mxu0 0.0
    %2740 = vmatmul.mubr.f32.gmra.mxu0 %v2620
    %v2741 = vpop.f32.mrf.mxu0
    %v2742 = vadd.f32 %v2643, %v2741
    %v2743 = vpop.f32.mrf.mxu0
    %2744 = vmatprep.mubr.f32.mxu0 0.0
    %2745 = vmatmul.mubr.f32.gmra.mxu0 %v2621
    %v2746 = vpop.f32.mrf.mxu0
    %v2747 = vadd.f32 %v2643, %v2746
    %v2748 = vpop.f32.mrf.mxu0
    %2749 = vdwg.mxu0
    %v2750 = vmax.f32 %v2712, 0.0
    %v2751 = vmax.f32 %v2717, 0.0
    %v2752 = vmax.f32 %v2722, 0.0
    %v2753 = vmax.f32 %v2727, 0.0
    %v2754 = vmax.f32 %v2732, 0.0
    %v2755 = vmax.f32 %v2737, 0.0
    %v2756 = vmax.f32 %v2742, 0.0
    %v2757 = vmax.f32 %v2747, 0.0
    %v2758 = vld [vmem:[#allocation14] sm:$0xff]
    %v2759 = vld [vmem:[#allocation14 + $0x8] sm:$0xff]
    %v2760 = vld [vmem:[#allocation14 + $0x10] sm:$0xff]
    %v2761 = vld [vmem:[#allocation14 + $0x18] sm:$0xff]
    %v2762 = vld [vmem:[#allocation14 + $0x20] sm:$0xff]
    %v2763 = vld [vmem:[#allocation14 + $0x28] sm:$0xff]
    %v2764 = vld [vmem:[#allocation14 + $0x30] sm:$0xff]
    %v2765 = vld [vmem:[#allocation14 + $0x38] sm:$0xff]
    %v2766 = vld [vmem:[#allocation14 + $0x40] sm:$0xff]
    %v2767 = vld [vmem:[#allocation14 + $0x48] sm:$0xff]
    %v2768 = vld [vmem:[#allocation14 + $0x50] sm:$0xff]
    %v2769 = vld [vmem:[#allocation14 + $0x58] sm:$0xff]
    %v2770 = vld [vmem:[#allocation14 + $0x60] sm:$0xff]
    %v2771 = vld [vmem:[#allocation14 + $0x68] sm:$0xff]
    %v2772 = vld [vmem:[#allocation14 + $0x70] sm:$0xff]
    %v2773 = vld [vmem:[#allocation14 + $0x78] sm:$0xff]
    %v2774 = vld [vmem:[%s12] sm:$0x1]
    %v2776 = vlaneseq
    %v2777 = vshrl.u32 %v2776, 7
    %v2778 = vsub.s32 0, %v2777
    %v2779 = vrot.slane %v2774, %v2778
    %2781 = vmatprep.subr.mxu0 0.0
    %2782 = vmatpush1.msra.mxu0 %v2773
    %2783 = vmatprep.subr.mxu0 0.0
    %2784 = vmatpush1.msra.mxu0 %v2772
    %2785 = vmatprep.subr.mxu0 0.0
    %2786 = vmatpush1.msra.mxu0 %v2771
    %2787 = vmatprep.subr.mxu0 0.0
    %2788 = vmatpush1.msra.mxu0 %v2770
    %2789 = vmatprep.subr.mxu0 0.0
    %2790 = vmatpush1.msra.mxu0 %v2769
    %2791 = vmatprep.subr.mxu0 0.0
    %2792 = vmatpush1.msra.mxu0 %v2768
    %2793 = vmatprep.subr.mxu0 0.0
    %2794 = vmatpush1.msra.mxu0 %v2767
    %2795 = vmatprep.subr.mxu0 0.0
    %2796 = vmatpush1.msra.mxu0 %v2766
    %2797 = vmatprep.subr.mxu0 0.0
    %2798 = vmatpush1.msra.mxu0 %v2765
    %2799 = vmatprep.subr.mxu0 0.0
    %2800 = vmatpush1.msra.mxu0 %v2764
    %2801 = vmatprep.subr.mxu0 0.0
    %2802 = vmatpush1.msra.mxu0 %v2763
    %2803 = vmatprep.subr.mxu0 0.0
    %2804 = vmatpush1.msra.mxu0 %v2762
    %2805 = vmatprep.subr.mxu0 0.0
    %2806 = vmatpush1.msra.mxu0 %v2761
    %2807 = vmatprep.subr.mxu0 0.0
    %2808 = vmatpush1.msra.mxu0 %v2760
    %2809 = vmatprep.subr.mxu0 0.0
    %2810 = vmatpush1.msra.mxu0 %v2759
    %2811 = vmatprep.subr.mxu0 0.0
    %2812 = vmatpush1.msra.mxu0 %v2758
    %2813 = vmatprep.subr.mxu0 0.0
    %2814 = vmatpush2.msra.mxu0 0.0
    %2815 = vmatprep.subr.mxu0 0.0
    %2816 = vmatpush2.msra.mxu0 0.0
    %2817 = vmatprep.subr.mxu0 0.0
    %2818 = vmatpush2.msra.mxu0 0.0
    %2819 = vmatprep.subr.mxu0 0.0
    %2820 = vmatpush2.msra.mxu0 0.0
    %2821 = vmatprep.subr.mxu0 0.0
    %2822 = vmatpush2.msra.mxu0 0.0
    %2823 = vmatprep.subr.mxu0 0.0
    %2824 = vmatpush2.msra.mxu0 0.0
    %2825 = vmatprep.subr.mxu0 0.0
    %2826 = vmatpush2.msra.mxu0 0.0
    %2827 = vmatprep.subr.mxu0 0.0
    %2828 = vmatpush2.msra.mxu0 0.0
    %2829 = vmatprep.subr.mxu0 0.0
    %2830 = vmatpush2.msra.mxu0 0.0
    %2831 = vmatprep.subr.mxu0 0.0
    %2832 = vmatpush2.msra.mxu0 0.0
    %2833 = vmatprep.subr.mxu0 0.0
    %2834 = vmatpush2.msra.mxu0 0.0
    %2835 = vmatprep.subr.mxu0 0.0
    %2836 = vmatpush2.msra.mxu0 0.0
    %2837 = vmatprep.subr.mxu0 0.0
    %2838 = vmatpush2.msra.mxu0 0.0
    %2839 = vmatprep.subr.mxu0 0.0
    %2840 = vmatpush2.msra.mxu0 0.0
    %2841 = vmatprep.subr.mxu0 0.0
    %2842 = vmatpush2.msra.mxu0 0.0
    %2843 = vmatprep.subr.mxu0 0.0
    %2844 = vmatpush2.msra.mxu0 0.0
    %2845 = vmatprep.mubr.f32.mxu0 0.0
    %2846 = vmatmul.mubr.f32.gmra.mxu0 %v2750
    %v2847 = vpop.f32.mrf.mxu0
    %v2848 = vadd.f32 %v2779, %v2847
    %v2849 = vpop.f32.mrf.mxu0
    %2850 = vmatprep.mubr.f32.mxu0 0.0
    %2851 = vmatmul.mubr.f32.gmra.mxu0 %v2751
    %v2852 = vpop.f32.mrf.mxu0
    %v2853 = vadd.f32 %v2779, %v2852
    %v2854 = vpop.f32.mrf.mxu0
    %2855 = vmatprep.mubr.f32.mxu0 0.0
    %2856 = vmatmul.mubr.f32.gmra.mxu0 %v2752
    %v2857 = vpop.f32.mrf.mxu0
    %v2858 = vadd.f32 %v2779, %v2857
    %v2859 = vpop.f32.mrf.mxu0
    %2860 = vmatprep.mubr.f32.mxu0 0.0
    %2861 = vmatmul.mubr.f32.gmra.mxu0 %v2753
    %v2862 = vpop.f32.mrf.mxu0
    %v2863 = vadd.f32 %v2779, %v2862
    %v2864 = vpop.f32.mrf.mxu0
    %2865 = vmatprep.mubr.f32.mxu0 0.0
    %2866 = vmatmul.mubr.f32.gmra.mxu0 %v2754
    %v2867 = vpop.f32.mrf.mxu0
    %v2868 = vadd.f32 %v2779, %v2867
    %v2869 = vpop.f32.mrf.mxu0
    %2870 = vmatprep.mubr.f32.mxu0 0.0
    %2871 = vmatmul.mubr.f32.gmra.mxu0 %v2755
    %v2872 = vpop.f32.mrf.mxu0
    %v2873 = vadd.f32 %v2779, %v2872
    %v2874 = vpop.f32.mrf.mxu0
    %2875 = vmatprep.mubr.f32.mxu0 0.0
    %2876 = vmatmul.mubr.f32.gmra.mxu0 %v2756
    %v2877 = vpop.f32.mrf.mxu0
    %v2878 = vadd.f32 %v2779, %v2877
    %v2879 = vpop.f32.mrf.mxu0
    %2880 = vmatprep.mubr.f32.mxu0 0.0
    %2881 = vmatmul.mubr.f32.gmra.mxu0 %v2757
    %v2882 = vpop.f32.mrf.mxu0
    %v2883 = vadd.f32 %v2779, %v2882
    %v2884 = vpop.f32.mrf.mxu0
    %2885 = vdwg.mxu0
    %2886 = vst [vmem:[#allocation16] sm:$0xff] %v2848
    %2887 = vst [vmem:[#allocation16 + $0x8] sm:$0xff] %v2853
    %2888 = vst [vmem:[#allocation16 + $0x10] sm:$0xff] %v2858
    %2889 = vst [vmem:[#allocation16 + $0x18] sm:$0xff] %v2863
    %2890 = vst [vmem:[#allocation16 + $0x20] sm:$0xff] %v2868
    %2891 = vst [vmem:[#allocation16 + $0x28] sm:$0xff] %v2873
    %2892 = vst [vmem:[#allocation16 + $0x30] sm:$0xff] %v2878
    %2893 = vst [vmem:[#allocation16 + $0x38] sm:$0xff] %v2883
    // Predicated region
    $region86: #{tpu_custom_call.1} parent=1 // pred_check
      _
    $region87: #{tpu_custom_call.1} parent=1 // pred_check_branch
      %2895 = sbr.rel (0) target = $region89
    $region88: #{tpu_custom_call.1} parent=1 // pred_region
      %s2897 = ssub.s32 1024, 1024
      %2898 = vsyncadd [#allocation4], %s2897
      %s2899 = sshll.u32 [#allocation16], 4
      %s2900 = int_to_ptr.vmem [resolvable:$true] %s2899
      %2905 = dma.vmem_to_hbm [thread:$0]  %s2900, 1024, %s13, [#allocation4], 128, 128, 8
    $region89: #{tpu_custom_call.1} parent=1 // pred_fallthru
      _
    // Predicated region
    $region90: #{tpu_custom_call.1} parent=1 // pred_check
      _
    $region91: #{tpu_custom_call.1} parent=1 // pred_check_branch
      %2907 = sbr.rel (0) target = $region93
    $region92: #{tpu_custom_call.1} parent=1 // pred_region
      %2908 = dma.done [#allocation4], 1024
    $region93: #{tpu_custom_call.1} parent=1 // pred_fallthru
      _
    %2909 = vsyncpa [#allocation3], 1
    %2910 = vsyncpa [#allocation6], 1
    %2911 = vsyncpa [#allocation9], 1
    %2912 = vsyncpa [#allocation12], 1
    %2913 = vsyncpa [#allocation15], 1
    %2914 = vsyncpa [#allocation4], 1

</llo_original>
